<compile_context>
chip_gen: v7x
topology: tpu7x:2x2x1
jax: 0.10.0
libtpu: 0.0.40
codegen_flags: <defaults>
</compile_context>

<pallas_src>
import functools

import numpy as np
import jax
import jax.numpy as jnp
from jax.experimental import pallas as pl
from jax.experimental.pallas import tpu as pltpu

EPS = 1e-5
LANE_OFF = 128  # lane offset of the "core" flattened image inside the padded buffers


def _round_up(x, m):
    return (x + m - 1) // m * m


def _full_spec(shape):
    nd = len(shape)
    return pl.BlockSpec(shape, lambda i: (0,) * nd)


def _build_kernel(*, k, wp, lcore, lbuf, nvalid, cp):
    """Fused IdentityBlock kernel on channel-major, flattened-spatial buffers."""
    k2 = k * k
    off_c = (k // 2) * wp + (k // 2)  # flat offset of the center tap
    inv_n = 1.0 / nvalid

    def stage(col_ref, src_ref, row_off):
        # Copy the k*k shifted (cp, lcore) views of a zero-padded flat image into
        # contiguous row-blocks of the im2col scratch (vld/vst only, no matmul).
        for t in range(k2):
            kh, kw = t // k, t % k
            start = LANE_OFF - off_c + kh * wp + kw
            col_ref[row_off + t * cp:row_off + (t + 1) * cp, :] = \
                src_ref[:, start:start + lcore]

    def bn_relu(z_nb, mask, b_ref, g_ref, be_ref):
        # Training-mode BatchNorm over the N*H*W valid positions, single statistics
        # pass (sum and sum-of-squares together), then affine + ReLU; pad lanes and
        # padded channels are re-masked to zero.
        z = z_nb + b_ref[...]
        zm = z * mask
        mean = jnp.sum(zm, axis=1, keepdims=True) * inv_n
        ex2 = jnp.sum(zm * z, axis=1, keepdims=True) * inv_n
        var = jnp.maximum(ex2 - mean * mean, 0.0)
        inv = jax.lax.rsqrt(var + EPS)
        return mask * jnp.maximum((z - mean) * inv * g_ref[...] + be_ref[...], 0.0)

    def kernel(x_ref, mask_ref, sel_ref,
               w1_ref, b1_ref, g1_ref, be1_ref,
               w2_ref, b2_ref, g2_ref, be2_ref,
               wf_ref, bf_ref,
               o_ref, h_buf, col_buf):
        mask = mask_ref[...]                                    # (1, lcore)

        # Zero ONLY the halo lanes of the hidden-activation buffer, once.  The
        # interior [LANE_OFF, LANE_OFF+lcore) is fully overwritten by every stage.
        h_buf[:, :LANE_OFF] = jnp.zeros((cp, LANE_OFF), jnp.float32)
        h_buf[:, LANE_OFF + lcore:] = jnp.zeros(
            (cp, lbuf - LANE_OFF - lcore), jnp.float32)

        # Stage the x taps once into rows [k2*cp, 2*k2*cp); reused by conv1 AND the
        # fused final (down2(h2) + down2(x)) stage.
        stage(col_buf, x_ref, k2 * cp)

        # conv1 (single K=k2*cp matmul) -> BN -> ReLU, kept resident in VMEM.
        z1 = jnp.dot(w1_ref[...], col_buf[k2 * cp:, :],
                     preferred_element_type=jnp.float32)
        h_buf[:, LANE_OFF:LANE_OFF + lcore] = bn_relu(z1, mask, b1_ref, g1_ref, be1_ref)

        # conv2: restage h1 taps into rows [0, k2*cp), single matmul, BN, ReLU.
        stage(col_buf, h_buf, 0)
        z2 = jnp.dot(w2_ref[...], col_buf[:k2 * cp, :],
                     preferred_element_type=jnp.float32)
        h_buf[:, LANE_OFF:LANE_OFF + lcore] = bn_relu(z2, mask, b2_ref, g2_ref, be2_ref)

        # Fused final stage: down2(h2)@w3 + down2(x)@wi as ONE K=2*k2*cp matmul
        # (h2 taps restaged into rows [0, k2*cp); x taps still live above them).
        stage(col_buf, h_buf, 0)
        s_full = jnp.dot(wf_ref[...], col_buf[...],
                         preferred_element_type=jnp.float32)       # (cp, lcore)

        # Exact stride-2 subsample via a host-built one-hot matrix -> lane-dense
        # (cp, mpad); combined bias (b3 + bi) added once.
        out = jnp.dot(s_full, sel_ref[...], preferred_element_type=jnp.float32)
        o_ref[...] = out + bf_ref[...]

    return kernel


def identity_block_forward(x_nchw, params, *, k=5, pad=2):
    """Pallas implementation of IdentityBlock.forward; input/output NCHW."""
    n, cin, h, w = x_nchw.shape
    cmid = params["w1"].shape[0]
    cout = params["w3"].shape[0]
    cp = _round_up(max(cin, cmid, cout), 8)       # channel padding (sublane tile)
    k2 = k * k

    hp, wp = h + 2 * pad, w + 2 * pad
    lcore = n * hp * wp                           # flattened padded spatial extent
    off_c = (k // 2) * wp + (k // 2)
    lbuf = _round_up(LANE_OFF + lcore + off_c, 128)
    ho = (h + 2 * pad - k) // 2 + 1
    wo = (w + 2 * pad - k) // 2 + 1
    mds = n * ho * wo
    mpad = _round_up(mds, 128)
    nvalid = float(n * h * w)
    f32 = jnp.float32

    # ---- layout prep (tiny XLA glue): NCHW -> (cp, lbuf), zero padded
    xp = jnp.pad(x_nchw.astype(f32),
                 ((0, 0), (0, cp - cin), (pad, pad), (pad, pad)))
    xf = jnp.transpose(xp, (1, 0, 2, 3)).reshape(cp, lcore)
    x_buf = jnp.pad(xf, ((0, 0), (LANE_OFF, lbuf - LANE_OFF - lcore)))

    # ---- host-side constant tables: interior mask + one-hot stride-2 selection
    q = np.arange(lcore)
    qi = (q % (hp * wp)) // wp
    qj = q % wp
    interior = (qi >= pad) & (qi < pad + h) & (qj >= pad) & (qj < pad + w)
    mask = jnp.asarray(interior.astype(np.float32).reshape(1, lcore))

    m = np.arange(mds)
    mn_ = m // (ho * wo)
    mr = m % (ho * wo)
    mi = mr // wo
    mj = mr % wo
    tgt = mn_ * (hp * wp) + (2 * mi + pad) * wp + (2 * mj + pad)
    sel_np = np.zeros((lcore, mpad), np.float32)
    sel_np[tgt, m] = 1.0
    sel = jnp.asarray(sel_np)

    # ---- weights: (co, ci, k, k) -> stacked (cp, k*k*cp); W[o, t*cp+i] = w[o,i,kh,kw]
    def w_stack(wt):
        co, ci = wt.shape[0], wt.shape[1]
        t = jnp.transpose(wt.astype(f32), (0, 2, 3, 1)).reshape(co, k2, ci)
        t = jnp.pad(t, ((0, cp - co), (0, 0), (0, cp - ci)))
        return t.reshape(cp, k2 * cp)

    def col(v):
        return jnp.pad(v.astype(f32).reshape(-1, 1), ((0, cp - v.shape[0]), (0, 0)))

    wf = jnp.concatenate([w_stack(params["w3"]), w_stack(params["wi"])], axis=1)
    bf = col(params["b3"]) + col(params["bi"])

    kernel = _build_kernel(k=k, wp=wp, lcore=lcore, lbuf=lbuf, nvalid=nvalid, cp=cp)

    args = [
        x_buf, mask, sel,
        w_stack(params["w1"]), col(params["b1"]), col(params["g1"]), col(params["be1"]),
        w_stack(params["w2"]), col(params["b2"]), col(params["g2"]), col(params["be2"]),
        wf, bf,
    ]

    out = pl.pallas_call(
        kernel,
        out_shape=jax.ShapeDtypeStruct((cp, mpad), f32),
        grid=(1,),
        in_specs=[_full_spec(a.shape) for a in args],
        out_specs=pl.BlockSpec((cp, mpad), lambda i: (0, 0)),
        scratch_shapes=[pltpu.VMEM((cp, lbuf), f32),            # h1/h2 (reused)
                        pltpu.VMEM((2 * k2 * cp, lcore), f32)], # im2col tap scratch
        compiler_params=pltpu.CompilerParams(
            dimension_semantics=("arbitrary",)),
    )(*args)

    out = out[:cout, :mds].reshape(cout, n, ho, wo)
    return jnp.transpose(out, (1, 0, 2, 3))       # -> NCHW


# ------------------------- pure-JAX reference (check) ----------------------- #

def _conv_ref(x_nchw, w, b, stride, pad):
    y = jax.lax.conv_general_dilated(
        x_nchw, w, (stride, stride), [(pad, pad), (pad, pad)],
        dimension_numbers=("NCHW", "OIHW", "NCHW"))
    return y + b[None, :, None, None]


def _bn_relu_ref(x_nchw, gamma, beta):
    mean = x_nchw.mean(axis=(0, 2, 3), keepdims=True)
    var = ((x_nchw - mean) ** 2).mean(axis=(0, 2, 3), keepdims=True)
    y = (x_nchw - mean) / jnp.sqrt(var + EPS)
    return jnp.maximum(y * gamma[None, :, None, None] + beta[None, :, None, None], 0.0)


def identity_block_ref(x_nchw, p):
    identity = _conv_ref(x_nchw, p["wi"], p["bi"], 2, 2)
    h = _conv_ref(x_nchw, p["w1"], p["b1"], 1, 2)
    h = _bn_relu_ref(h, p["g1"], p["be1"])
    h = _conv_ref(h, p["w2"], p["b2"], 1, 2)
    h = _bn_relu_ref(h, p["g2"], p["be2"])
    out = _conv_ref(h, p["w3"], p["b3"], 2, 2)
    return out + identity


# ---------------------------------- main ------------------------------------ #

if __name__ == "__main__":
    in_channels, out_channels, k = 4, 8, 5
    mid = round((in_channels + out_channels) / 2)  # 6
    N, H, W = 2, 16, 16

    key = jax.random.PRNGKey(0)
    ks = jax.random.split(key, 12)

    def nrm(kk, shape, scale=0.1):
        return (scale * jax.random.normal(kk, shape)).astype(jnp.float32)

    params = {
        # Convpass
        "w1": nrm(ks[0], (mid, in_channels, k, k)), "b1": nrm(ks[1], (mid,)),
        "g1": 1.0 + nrm(ks[2], (mid,)),             "be1": nrm(ks[3], (mid,)),
        "w2": nrm(ks[4], (out_channels, mid, k, k)), "b2": nrm(ks[5], (out_channels,)),
        "g2": 1.0 + nrm(ks[6], (out_channels,)),     "be2": nrm(ks[7], (out_channels,)),
        "w3": nrm(ks[8], (out_channels, out_channels, k, k)), "b3": nrm(ks[9], (out_channels,)),
        # identityPass
        "wi": nrm(ks[10], (out_channels, in_channels, k, k)), "bi": nrm(ks[11], (out_channels,)),
    }

    x = jax.random.normal(jax.random.PRNGKey(42), (N, in_channels, H, W), dtype=jnp.float32)

    fwd = jax.jit(functools.partial(identity_block_forward, params=params))
    out = jax.block_until_ready(fwd(x))

    ref = identity_block_ref(x, params)
    assert out.shape == (N, out_channels, H // 2, W // 2), out.shape
    err = float(jnp.abs(out - ref).max())
    assert jnp.allclose(out, ref, rtol=5e-4, atol=5e-4), err

    print("KERNEL_OK")
</pallas_src>

<mosaic_0001>
module attributes {stable_mosaic.version = 11 : i64} {
  func.func @kernel(%arg0: i32, %arg1: memref<8x1024xf32, #tpu.memory_space<vmem>>, %arg2: memref<1x800xf32, #tpu.memory_space<vmem>>, %arg3: memref<800x128xf32, #tpu.memory_space<vmem>>, %arg4: memref<8x200xf32, #tpu.memory_space<vmem>>, %arg5: memref<8x1xf32, #tpu.memory_space<vmem>>, %arg6: memref<8x1xf32, #tpu.memory_space<vmem>>, %arg7: memref<8x1xf32, #tpu.memory_space<vmem>>, %arg8: memref<8x200xf32, #tpu.memory_space<vmem>>, %arg9: memref<8x1xf32, #tpu.memory_space<vmem>>, %arg10: memref<8x1xf32, #tpu.memory_space<vmem>>, %arg11: memref<8x1xf32, #tpu.memory_space<vmem>>, %arg12: memref<8x400xf32, #tpu.memory_space<vmem>>, %arg13: memref<8x1xf32, #tpu.memory_space<vmem>>, %arg14: memref<8x128xf32, #tpu.memory_space<vmem>>, %arg15: memref<8x1024xf32, #tpu.memory_space<vmem>>, %arg16: memref<400x800xf32, #tpu.memory_space<vmem>>) attributes {dimension_semantics = [#tpu.dimension_semantics<arbitrary>], iteration_bounds = array<i64: 1>, scalar_prefetch = 0 : i64, scratch_operands = 2 : i64, tpu.core_type = #tpu.core_type<tc>, window_params = [{pipeline_mode = #tpu.pipeline_mode<synchronous>, transform_indices = @transform_0, window_bounds = array<i64: 8, 1024>}, {pipeline_mode = #tpu.pipeline_mode<synchronous>, transform_indices = @transform_1, window_bounds = array<i64: 1, 800>}, {pipeline_mode = #tpu.pipeline_mode<synchronous>, transform_indices = @transform_2, window_bounds = array<i64: 800, 128>}, {pipeline_mode = #tpu.pipeline_mode<synchronous>, transform_indices = @transform_3, window_bounds = array<i64: 8, 200>}, {pipeline_mode = #tpu.pipeline_mode<synchronous>, transform_indices = @transform_4, window_bounds = array<i64: 8, 1>}, {pipeline_mode = #tpu.pipeline_mode<synchronous>, transform_indices = @transform_5, window_bounds = array<i64: 8, 1>}, {pipeline_mode = #tpu.pipeline_mode<synchronous>, transform_indices = @transform_6, window_bounds = array<i64: 8, 1>}, {pipeline_mode = #tpu.pipeline_mode<synchronous>, transform_indices = @transform_7, window_bounds = array<i64: 8, 200>}, {pipeline_mode = #tpu.pipeline_mode<synchronous>, transform_indices = @transform_8, window_bounds = array<i64: 8, 1>}, {pipeline_mode = #tpu.pipeline_mode<synchronous>, transform_indices = @transform_9, window_bounds = array<i64: 8, 1>}, {pipeline_mode = #tpu.pipeline_mode<synchronous>, transform_indices = @transform_10, window_bounds = array<i64: 8, 1>}, {pipeline_mode = #tpu.pipeline_mode<synchronous>, transform_indices = @transform_11, window_bounds = array<i64: 8, 400>}, {pipeline_mode = #tpu.pipeline_mode<synchronous>, transform_indices = @transform_12, window_bounds = array<i64: 8, 1>}, {pipeline_mode = #tpu.pipeline_mode<synchronous>, transform_indices = @transform_13, window_bounds = array<i64: 8, 128>}]} {
    %c0 = arith.constant 0 : index
    %c0_0 = arith.constant 0 : index
    %0 = vector.load %arg2[%c0, %c0_0] : memref<1x800xf32, #tpu.memory_space<vmem>>, vector<1x800xf32>
    %cst = arith.constant 0.000000e+00 : f32
    %1 = vector.broadcast %cst : f32 to vector<8x128xf32>
    %c0_1 = arith.constant 0 : index
    %c0_2 = arith.constant 0 : index
    %2 = vector.load %arg15[%c0_1, %c0_2] : memref<8x1024xf32, #tpu.memory_space<vmem>>, vector<8x128xf32>
    tpu.vector_store %arg15[%c0_1, %c0_2], %1 {strides = array<i32>} : memref<8x1024xf32, #tpu.memory_space<vmem>>, vector<8x128xf32>,
    %cst_3 = arith.constant 0.000000e+00 : f32
    %3 = vector.broadcast %cst_3 : f32 to vector<8x96xf32>
    %c0_4 = arith.constant 0 : index
    %c928 = arith.constant 928 : index
    %4 = vector.load %arg15[%c0_4, %c928] : memref<8x1024xf32, #tpu.memory_space<vmem>>, vector<8x96xf32>
    tpu.vector_store %arg15[%c0_4, %c928], %3 {strides = array<i32>} : memref<8x1024xf32, #tpu.memory_space<vmem>>, vector<8x96xf32>,
    %c0_5 = arith.constant 0 : index
    %c86 = arith.constant 86 : index
    %5 = vector.load %arg1[%c0_5, %c86] : memref<8x1024xf32, #tpu.memory_space<vmem>>, vector<8x800xf32>
    %c200 = arith.constant 200 : index
    %c0_6 = arith.constant 0 : index
    %6 = vector.load %arg16[%c200, %c0_6] : memref<400x800xf32, #tpu.memory_space<vmem>>, vector<8x800xf32>
    tpu.vector_store %arg16[%c200, %c0_6], %5 {strides = array<i32>} : memref<400x800xf32, #tpu.memory_space<vmem>>, vector<8x800xf32>,
    %c0_7 = arith.constant 0 : index
    %c87 = arith.constant 87 : index
    %7 = vector.load %arg1[%c0_7, %c87] : memref<8x1024xf32, #tpu.memory_space<vmem>>, vector<8x800xf32>
    %c208 = arith.constant 208 : index
    %c0_8 = arith.constant 0 : index
    %8 = vector.load %arg16[%c208, %c0_8] : memref<400x800xf32, #tpu.memory_space<vmem>>, vector<8x800xf32>
    tpu.vector_store %arg16[%c208, %c0_8], %7 {strides = array<i32>} : memref<400x800xf32, #tpu.memory_space<vmem>>, vector<8x800xf32>,
    %c0_9 = arith.constant 0 : index
    %c88 = arith.constant 88 : index
    %9 = vector.load %arg1[%c0_9, %c88] : memref<8x1024xf32, #tpu.memory_space<vmem>>, vector<8x800xf32>
    %c216 = arith.constant 216 : index
    %c0_10 = arith.constant 0 : index
    %10 = vector.load %arg16[%c216, %c0_10] : memref<400x800xf32, #tpu.memory_space<vmem>>, vector<8x800xf32>
    tpu.vector_store %arg16[%c216, %c0_10], %9 {strides = array<i32>} : memref<400x800xf32, #tpu.memory_space<vmem>>, vector<8x800xf32>,
    %c0_11 = arith.constant 0 : index
    %c89 = arith.constant 89 : index
    %11 = vector.load %arg1[%c0_11, %c89] : memref<8x1024xf32, #tpu.memory_space<vmem>>, vector<8x800xf32>
    %c224 = arith.constant 224 : index
    %c0_12 = arith.constant 0 : index
    %12 = vector.load %arg16[%c224, %c0_12] : memref<400x800xf32, #tpu.memory_space<vmem>>, vector<8x800xf32>
    tpu.vector_store %arg16[%c224, %c0_12], %11 {strides = array<i32>} : memref<400x800xf32, #tpu.memory_space<vmem>>, vector<8x800xf32>,
    %c0_13 = arith.constant 0 : index
    %c90 = arith.constant 90 : index
    %13 = vector.load %arg1[%c0_13, %c90] : memref<8x1024xf32, #tpu.memory_space<vmem>>, vector<8x800xf32>
    %c232 = arith.constant 232 : index
    %c0_14 = arith.constant 0 : index
    %14 = vector.load %arg16[%c232, %c0_14] : memref<400x800xf32, #tpu.memory_space<vmem>>, vector<8x800xf32>
    tpu.vector_store %arg16[%c232, %c0_14], %13 {strides = array<i32>} : memref<400x800xf32, #tpu.memory_space<vmem>>, vector<8x800xf32>,
    %c0_15 = arith.constant 0 : index
    %c106 = arith.constant 106 : index
    %15 = vector.load %arg1[%c0_15, %c106] : memref<8x1024xf32, #tpu.memory_space<vmem>>, vector<8x800xf32>
    %c240 = arith.constant 240 : index
    %c0_16 = arith.constant 0 : index
    %16 = vector.load %arg16[%c240, %c0_16] : memref<400x800xf32, #tpu.memory_space<vmem>>, vector<8x800xf32>
    tpu.vector_store %arg16[%c240, %c0_16], %15 {strides = array<i32>} : memref<400x800xf32, #tpu.memory_space<vmem>>, vector<8x800xf32>,
    %c0_17 = arith.constant 0 : index
    %c107 = arith.constant 107 : index
    %17 = vector.load %arg1[%c0_17, %c107] : memref<8x1024xf32, #tpu.memory_space<vmem>>, vector<8x800xf32>
    %c248 = arith.constant 248 : index
    %c0_18 = arith.constant 0 : index
    %18 = vector.load %arg16[%c248, %c0_18] : memref<400x800xf32, #tpu.memory_space<vmem>>, vector<8x800xf32>
    tpu.vector_store %arg16[%c248, %c0_18], %17 {strides = array<i32>} : memref<400x800xf32, #tpu.memory_space<vmem>>, vector<8x800xf32>,
    %c0_19 = arith.constant 0 : index
    %c108 = arith.constant 108 : index
    %19 = vector.load %arg1[%c0_19, %c108] : memref<8x1024xf32, #tpu.memory_space<vmem>>, vector<8x800xf32>
    %c256 = arith.constant 256 : index
    %c0_20 = arith.constant 0 : index
    %20 = vector.load %arg16[%c256, %c0_20] : memref<400x800xf32, #tpu.memory_space<vmem>>, vector<8x800xf32>
    tpu.vector_store %arg16[%c256, %c0_20], %19 {strides = array<i32>} : memref<400x800xf32, #tpu.memory_space<vmem>>, vector<8x800xf32>,
    %c0_21 = arith.constant 0 : index
    %c109 = arith.constant 109 : index
    %21 = vector.load %arg1[%c0_21, %c109] : memref<8x1024xf32, #tpu.memory_space<vmem>>, vector<8x800xf32>
    %c264 = arith.constant 264 : index
    %c0_22 = arith.constant 0 : index
    %22 = vector.load %arg16[%c264, %c0_22] : memref<400x800xf32, #tpu.memory_space<vmem>>, vector<8x800xf32>
    tpu.vector_store %arg16[%c264, %c0_22], %21 {strides = array<i32>} : memref<400x800xf32, #tpu.memory_space<vmem>>, vector<8x800xf32>,
    %c0_23 = arith.constant 0 : index
    %c110 = arith.constant 110 : index
    %23 = vector.load %arg1[%c0_23, %c110] : memref<8x1024xf32, #tpu.memory_space<vmem>>, vector<8x800xf32>
    %c272 = arith.constant 272 : index
    %c0_24 = arith.constant 0 : index
    %24 = vector.load %arg16[%c272, %c0_24] : memref<400x800xf32, #tpu.memory_space<vmem>>, vector<8x800xf32>
    tpu.vector_store %arg16[%c272, %c0_24], %23 {strides = array<i32>} : memref<400x800xf32, #tpu.memory_space<vmem>>, vector<8x800xf32>,
    %c0_25 = arith.constant 0 : index
    %c126 = arith.constant 126 : index
    %25 = vector.load %arg1[%c0_25, %c126] : memref<8x1024xf32, #tpu.memory_space<vmem>>, vector<8x800xf32>
    %c280 = arith.constant 280 : index
    %c0_26 = arith.constant 0 : index
    %26 = vector.load %arg16[%c280, %c0_26] : memref<400x800xf32, #tpu.memory_space<vmem>>, vector<8x800xf32>
    tpu.vector_store %arg16[%c280, %c0_26], %25 {strides = array<i32>} : memref<400x800xf32, #tpu.memory_space<vmem>>, vector<8x800xf32>,
    %c0_27 = arith.constant 0 : index
    %c127 = arith.constant 127 : index
    %27 = vector.load %arg1[%c0_27, %c127] : memref<8x1024xf32, #tpu.memory_space<vmem>>, vector<8x800xf32>
    %c288 = arith.constant 288 : index
    %c0_28 = arith.constant 0 : index
    %28 = vector.load %arg16[%c288, %c0_28] : memref<400x800xf32, #tpu.memory_space<vmem>>, vector<8x800xf32>
    tpu.vector_store %arg16[%c288, %c0_28], %27 {strides = array<i32>} : memref<400x800xf32, #tpu.memory_space<vmem>>, vector<8x800xf32>,
    %c0_29 = arith.constant 0 : index
    %c128 = arith.constant 128 : index
    %29 = vector.load %arg1[%c0_29, %c128] : memref<8x1024xf32, #tpu.memory_space<vmem>>, vector<8x800xf32>
    %c296 = arith.constant 296 : index
    %c0_30 = arith.constant 0 : index
    %30 = vector.load %arg16[%c296, %c0_30] : memref<400x800xf32, #tpu.memory_space<vmem>>, vector<8x800xf32>
    tpu.vector_store %arg16[%c296, %c0_30], %29 {strides = array<i32>} : memref<400x800xf32, #tpu.memory_space<vmem>>, vector<8x800xf32>,
    %c0_31 = arith.constant 0 : index
    %c129 = arith.constant 129 : index
    %31 = vector.load %arg1[%c0_31, %c129] : memref<8x1024xf32, #tpu.memory_space<vmem>>, vector<8x800xf32>
    %c304 = arith.constant 304 : index
    %c0_32 = arith.constant 0 : index
    %32 = vector.load %arg16[%c304, %c0_32] : memref<400x800xf32, #tpu.memory_space<vmem>>, vector<8x800xf32>
    tpu.vector_store %arg16[%c304, %c0_32], %31 {strides = array<i32>} : memref<400x800xf32, #tpu.memory_space<vmem>>, vector<8x800xf32>,
    %c0_33 = arith.constant 0 : index
    %c130 = arith.constant 130 : index
    %33 = vector.load %arg1[%c0_33, %c130] : memref<8x1024xf32, #tpu.memory_space<vmem>>, vector<8x800xf32>
    %c312 = arith.constant 312 : index
    %c0_34 = arith.constant 0 : index
    %34 = vector.load %arg16[%c312, %c0_34] : memref<400x800xf32, #tpu.memory_space<vmem>>, vector<8x800xf32>
    tpu.vector_store %arg16[%c312, %c0_34], %33 {strides = array<i32>} : memref<400x800xf32, #tpu.memory_space<vmem>>, vector<8x800xf32>,
    %c0_35 = arith.constant 0 : index
    %c146 = arith.constant 146 : index
    %35 = vector.load %arg1[%c0_35, %c146] : memref<8x1024xf32, #tpu.memory_space<vmem>>, vector<8x800xf32>
    %c320 = arith.constant 320 : index
    %c0_36 = arith.constant 0 : index
    %36 = vector.load %arg16[%c320, %c0_36] : memref<400x800xf32, #tpu.memory_space<vmem>>, vector<8x800xf32>
    tpu.vector_store %arg16[%c320, %c0_36], %35 {strides = array<i32>} : memref<400x800xf32, #tpu.memory_space<vmem>>, vector<8x800xf32>,
    %c0_37 = arith.constant 0 : index
    %c147 = arith.constant 147 : index
    %37 = vector.load %arg1[%c0_37, %c147] : memref<8x1024xf32, #tpu.memory_space<vmem>>, vector<8x800xf32>
    %c328 = arith.constant 328 : index
    %c0_38 = arith.constant 0 : index
    %38 = vector.load %arg16[%c328, %c0_38] : memref<400x800xf32, #tpu.memory_space<vmem>>, vector<8x800xf32>
    tpu.vector_store %arg16[%c328, %c0_38], %37 {strides = array<i32>} : memref<400x800xf32, #tpu.memory_space<vmem>>, vector<8x800xf32>,
    %c0_39 = arith.constant 0 : index
    %c148 = arith.constant 148 : index
    %39 = vector.load %arg1[%c0_39, %c148] : memref<8x1024xf32, #tpu.memory_space<vmem>>, vector<8x800xf32>
    %c336 = arith.constant 336 : index
    %c0_40 = arith.constant 0 : index
    %40 = vector.load %arg16[%c336, %c0_40] : memref<400x800xf32, #tpu.memory_space<vmem>>, vector<8x800xf32>
    tpu.vector_store %arg16[%c336, %c0_40], %39 {strides = array<i32>} : memref<400x800xf32, #tpu.memory_space<vmem>>, vector<8x800xf32>,
    %c0_41 = arith.constant 0 : index
    %c149 = arith.constant 149 : index
    %41 = vector.load %arg1[%c0_41, %c149] : memref<8x1024xf32, #tpu.memory_space<vmem>>, vector<8x800xf32>
    %c344 = arith.constant 344 : index
    %c0_42 = arith.constant 0 : index
    %42 = vector.load %arg16[%c344, %c0_42] : memref<400x800xf32, #tpu.memory_space<vmem>>, vector<8x800xf32>
    tpu.vector_store %arg16[%c344, %c0_42], %41 {strides = array<i32>} : memref<400x800xf32, #tpu.memory_space<vmem>>, vector<8x800xf32>,
    %c0_43 = arith.constant 0 : index
    %c150 = arith.constant 150 : index
    %43 = vector.load %arg1[%c0_43, %c150] : memref<8x1024xf32, #tpu.memory_space<vmem>>, vector<8x800xf32>
    %c352 = arith.constant 352 : index
    %c0_44 = arith.constant 0 : index
    %44 = vector.load %arg16[%c352, %c0_44] : memref<400x800xf32, #tpu.memory_space<vmem>>, vector<8x800xf32>
    tpu.vector_store %arg16[%c352, %c0_44], %43 {strides = array<i32>} : memref<400x800xf32, #tpu.memory_space<vmem>>, vector<8x800xf32>,
    %c0_45 = arith.constant 0 : index
    %c166 = arith.constant 166 : index
    %45 = vector.load %arg1[%c0_45, %c166] : memref<8x1024xf32, #tpu.memory_space<vmem>>, vector<8x800xf32>
    %c360 = arith.constant 360 : index
    %c0_46 = arith.constant 0 : index
    %46 = vector.load %arg16[%c360, %c0_46] : memref<400x800xf32, #tpu.memory_space<vmem>>, vector<8x800xf32>
    tpu.vector_store %arg16[%c360, %c0_46], %45 {strides = array<i32>} : memref<400x800xf32, #tpu.memory_space<vmem>>, vector<8x800xf32>,
    %c0_47 = arith.constant 0 : index
    %c167 = arith.constant 167 : index
    %47 = vector.load %arg1[%c0_47, %c167] : memref<8x1024xf32, #tpu.memory_space<vmem>>, vector<8x800xf32>
    %c368 = arith.constant 368 : index
    %c0_48 = arith.constant 0 : index
    %48 = vector.load %arg16[%c368, %c0_48] : memref<400x800xf32, #tpu.memory_space<vmem>>, vector<8x800xf32>
    tpu.vector_store %arg16[%c368, %c0_48], %47 {strides = array<i32>} : memref<400x800xf32, #tpu.memory_space<vmem>>, vector<8x800xf32>,
    %c0_49 = arith.constant 0 : index
    %c168 = arith.constant 168 : index
    %49 = vector.load %arg1[%c0_49, %c168] : memref<8x1024xf32, #tpu.memory_space<vmem>>, vector<8x800xf32>
    %c376 = arith.constant 376 : index
    %c0_50 = arith.constant 0 : index
    %50 = vector.load %arg16[%c376, %c0_50] : memref<400x800xf32, #tpu.memory_space<vmem>>, vector<8x800xf32>
    tpu.vector_store %arg16[%c376, %c0_50], %49 {strides = array<i32>} : memref<400x800xf32, #tpu.memory_space<vmem>>, vector<8x800xf32>,
    %c0_51 = arith.constant 0 : index
    %c169 = arith.constant 169 : index
    %51 = vector.load %arg1[%c0_51, %c169] : memref<8x1024xf32, #tpu.memory_space<vmem>>, vector<8x800xf32>
    %c384 = arith.constant 384 : index
    %c0_52 = arith.constant 0 : index
    %52 = vector.load %arg16[%c384, %c0_52] : memref<400x800xf32, #tpu.memory_space<vmem>>, vector<8x800xf32>
    tpu.vector_store %arg16[%c384, %c0_52], %51 {strides = array<i32>} : memref<400x800xf32, #tpu.memory_space<vmem>>, vector<8x800xf32>,
    %c0_53 = arith.constant 0 : index
    %c170 = arith.constant 170 : index
    %53 = vector.load %arg1[%c0_53, %c170] : memref<8x1024xf32, #tpu.memory_space<vmem>>, vector<8x800xf32>
    %c392 = arith.constant 392 : index
    %c0_54 = arith.constant 0 : index
    %54 = vector.load %arg16[%c392, %c0_54] : memref<400x800xf32, #tpu.memory_space<vmem>>, vector<8x800xf32>
    tpu.vector_store %arg16[%c392, %c0_54], %53 {strides = array<i32>} : memref<400x800xf32, #tpu.memory_space<vmem>>, vector<8x800xf32>,
    %c0_55 = arith.constant 0 : index
    %c0_56 = arith.constant 0 : index
    %55 = vector.load %arg4[%c0_55, %c0_56] : memref<8x200xf32, #tpu.memory_space<vmem>>, vector<8x200xf32>
    %c200_57 = arith.constant 200 : index
    %c0_58 = arith.constant 0 : index
    %56 = vector.load %arg16[%c200_57, %c0_58] : memref<400x800xf32, #tpu.memory_space<vmem>>, vector<200x800xf32>
    %cst_59 = arith.constant dense<0.000000e+00> : vector<8x800xf32>
    %57 = tpu.matmul %55, %56, %cst_59 {dimension_numbers = #tpu.dot_dimension_numbers<[1], [0], [0], [1], [0, 0, 1, 1], [], []>} : vector<8x200xf32>, vector<200x800xf32>, vector<8x800xf32> -> vector<8x800xf32>
    %c0_60 = arith.constant 0 : index
    %c0_61 = arith.constant 0 : index
    %58 = vector.load %arg5[%c0_60, %c0_61] : memref<8x1xf32, #tpu.memory_space<vmem>>, vector<8x1xf32>
    %59 = vector.broadcast %58 : vector<8x1xf32> to vector<8x800xf32>
    %60 = arith.addf %57, %59 : vector<8x800xf32>
    %61 = vector.broadcast %0 : vector<1x800xf32> to vector<8x800xf32>
    %62 = arith.mulf %60, %61 : vector<8x800xf32>
    %cst_62 = arith.constant dense<0.000000e+00> : vector<8xf32>
    %63 = vector.multi_reduction <add>, %62, %cst_62 [1] : vector<8x800xf32> to vector<8xf32>
    %64 = vector.shape_cast %63 : vector<8xf32> to vector<8x1xf32>
    %cst_63 = arith.constant 0.001953125 : f32
    %65 = vector.broadcast %cst_63 : f32 to vector<8x1xf32>
    %66 = arith.mulf %64, %65 : vector<8x1xf32>
    %67 = arith.mulf %62, %60 : vector<8x800xf32>
    %cst_64 = arith.constant dense<0.000000e+00> : vector<8xf32>
    %68 = vector.multi_reduction <add>, %67, %cst_64 [1] : vector<8x800xf32> to vector<8xf32>
    %69 = vector.shape_cast %68 : vector<8xf32> to vector<8x1xf32>
    %cst_65 = arith.constant 0.001953125 : f32
    %70 = vector.broadcast %cst_65 : f32 to vector<8x1xf32>
    %71 = arith.mulf %69, %70 : vector<8x1xf32>
    %72 = arith.mulf %66, %66 : vector<8x1xf32>
    %73 = arith.subf %71, %72 : vector<8x1xf32>
    %cst_66 = arith.constant 0.000000e+00 : f32
    %74 = vector.broadcast %cst_66 : f32 to vector<8x1xf32>
    %75 = arith.maximumf %73, %74 : vector<8x1xf32>
    %cst_67 = arith.constant 9.99999974E-6 : f32
    %76 = vector.broadcast %cst_67 : f32 to vector<8x1xf32>
    %77 = arith.addf %75, %76 : vector<8x1xf32>
    %78 = math.rsqrt %77 : vector<8x1xf32>
    %79 = vector.broadcast %66 : vector<8x1xf32> to vector<8x800xf32>
    %80 = arith.subf %60, %79 : vector<8x800xf32>
    %81 = vector.broadcast %78 : vector<8x1xf32> to vector<8x800xf32>
    %82 = arith.mulf %80, %81 : vector<8x800xf32>
    %c0_68 = arith.constant 0 : index
    %c0_69 = arith.constant 0 : index
    %83 = vector.load %arg6[%c0_68, %c0_69] : memref<8x1xf32, #tpu.memory_space<vmem>>, vector<8x1xf32>
    %84 = vector.broadcast %83 : vector<8x1xf32> to vector<8x800xf32>
    %85 = arith.mulf %82, %84 : vector<8x800xf32>
    %c0_70 = arith.constant 0 : index
    %c0_71 = arith.constant 0 : index
    %86 = vector.load %arg7[%c0_70, %c0_71] : memref<8x1xf32, #tpu.memory_space<vmem>>, vector<8x1xf32>
    %87 = vector.broadcast %86 : vector<8x1xf32> to vector<8x800xf32>
    %88 = arith.addf %85, %87 : vector<8x800xf32>
    %cst_72 = arith.constant 0.000000e+00 : f32
    %89 = vector.broadcast %cst_72 : f32 to vector<8x800xf32>
    %90 = arith.maximumf %88, %89 : vector<8x800xf32>
    %91 = vector.broadcast %0 : vector<1x800xf32> to vector<8x800xf32>
    %92 = arith.mulf %91, %90 : vector<8x800xf32>
    %c0_73 = arith.constant 0 : index
    %c128_74 = arith.constant 128 : index
    %93 = vector.load %arg15[%c0_73, %c128_74] : memref<8x1024xf32, #tpu.memory_space<vmem>>, vector<8x800xf32>
    tpu.vector_store %arg15[%c0_73, %c128_74], %92 {strides = array<i32>} : memref<8x1024xf32, #tpu.memory_space<vmem>>, vector<8x800xf32>,
    %c0_75 = arith.constant 0 : index
    %c86_76 = arith.constant 86 : index
    %94 = vector.load %arg15[%c0_75, %c86_76] : memref<8x1024xf32, #tpu.memory_space<vmem>>, vector<8x800xf32>
    %c0_77 = arith.constant 0 : index
    %c0_78 = arith.constant 0 : index
    %95 = vector.load %arg16[%c0_77, %c0_78] : memref<400x800xf32, #tpu.memory_space<vmem>>, vector<8x800xf32>
    tpu.vector_store %arg16[%c0_77, %c0_78], %94 {strides = array<i32>} : memref<400x800xf32, #tpu.memory_space<vmem>>, vector<8x800xf32>,
    %c0_79 = arith.constant 0 : index
    %c87_80 = arith.constant 87 : index
    %96 = vector.load %arg15[%c0_79, %c87_80] : memref<8x1024xf32, #tpu.memory_space<vmem>>, vector<8x800xf32>
    %c8 = arith.constant 8 : index
    %c0_81 = arith.constant 0 : index
    %97 = vector.load %arg16[%c8, %c0_81] : memref<400x800xf32, #tpu.memory_space<vmem>>, vector<8x800xf32>
    tpu.vector_store %arg16[%c8, %c0_81], %96 {strides = array<i32>} : memref<400x800xf32, #tpu.memory_space<vmem>>, vector<8x800xf32>,
    %c0_82 = arith.constant 0 : index
    %c88_83 = arith.constant 88 : index
    %98 = vector.load %arg15[%c0_82, %c88_83] : memref<8x1024xf32, #tpu.memory_space<vmem>>, vector<8x800xf32>
    %c16 = arith.constant 16 : index
    %c0_84 = arith.constant 0 : index
    %99 = vector.load %arg16[%c16, %c0_84] : memref<400x800xf32, #tpu.memory_space<vmem>>, vector<8x800xf32>
    tpu.vector_store %arg16[%c16, %c0_84], %98 {strides = array<i32>} : memref<400x800xf32, #tpu.memory_space<vmem>>, vector<8x800xf32>,
    %c0_85 = arith.constant 0 : index
    %c89_86 = arith.constant 89 : index
    %100 = vector.load %arg15[%c0_85, %c89_86] : memref<8x1024xf32, #tpu.memory_space<vmem>>, vector<8x800xf32>
    %c24 = arith.constant 24 : index
    %c0_87 = arith.constant 0 : index
    %101 = vector.load %arg16[%c24, %c0_87] : memref<400x800xf32, #tpu.memory_space<vmem>>, vector<8x800xf32>
    tpu.vector_store %arg16[%c24, %c0_87], %100 {strides = array<i32>} : memref<400x800xf32, #tpu.memory_space<vmem>>, vector<8x800xf32>,
    %c0_88 = arith.constant 0 : index
    %c90_89 = arith.constant 90 : index
    %102 = vector.load %arg15[%c0_88, %c90_89] : memref<8x1024xf32, #tpu.memory_space<vmem>>, vector<8x800xf32>
    %c32 = arith.constant 32 : index
    %c0_90 = arith.constant 0 : index
    %103 = vector.load %arg16[%c32, %c0_90] : memref<400x800xf32, #tpu.memory_space<vmem>>, vector<8x800xf32>
    tpu.vector_store %arg16[%c32, %c0_90], %102 {strides = array<i32>} : memref<400x800xf32, #tpu.memory_space<vmem>>, vector<8x800xf32>,
    %c0_91 = arith.constant 0 : index
    %c106_92 = arith.constant 106 : index
    %104 = vector.load %arg15[%c0_91, %c106_92] : memref<8x1024xf32, #tpu.memory_space<vmem>>, vector<8x800xf32>
    %c40 = arith.constant 40 : index
    %c0_93 = arith.constant 0 : index
    %105 = vector.load %arg16[%c40, %c0_93] : memref<400x800xf32, #tpu.memory_space<vmem>>, vector<8x800xf32>
    tpu.vector_store %arg16[%c40, %c0_93], %104 {strides = array<i32>} : memref<400x800xf32, #tpu.memory_space<vmem>>, vector<8x800xf32>,
    %c0_94 = arith.constant 0 : index
    %c107_95 = arith.constant 107 : index
    %106 = vector.load %arg15[%c0_94, %c107_95] : memref<8x1024xf32, #tpu.memory_space<vmem>>, vector<8x800xf32>
    %c48 = arith.constant 48 : index
    %c0_96 = arith.constant 0 : index
    %107 = vector.load %arg16[%c48, %c0_96] : memref<400x800xf32, #tpu.memory_space<vmem>>, vector<8x800xf32>
    tpu.vector_store %arg16[%c48, %c0_96], %106 {strides = array<i32>} : memref<400x800xf32, #tpu.memory_space<vmem>>, vector<8x800xf32>,
    %c0_97 = arith.constant 0 : index
    %c108_98 = arith.constant 108 : index
    %108 = vector.load %arg15[%c0_97, %c108_98] : memref<8x1024xf32, #tpu.memory_space<vmem>>, vector<8x800xf32>
    %c56 = arith.constant 56 : index
    %c0_99 = arith.constant 0 : index
    %109 = vector.load %arg16[%c56, %c0_99] : memref<400x800xf32, #tpu.memory_space<vmem>>, vector<8x800xf32>
    tpu.vector_store %arg16[%c56, %c0_99], %108 {strides = array<i32>} : memref<400x800xf32, #tpu.memory_space<vmem>>, vector<8x800xf32>,
    %c0_100 = arith.constant 0 : index
    %c109_101 = arith.constant 109 : index
    %110 = vector.load %arg15[%c0_100, %c109_101] : memref<8x1024xf32, #tpu.memory_space<vmem>>, vector<8x800xf32>
    %c64 = arith.constant 64 : index
    %c0_102 = arith.constant 0 : index
    %111 = vector.load %arg16[%c64, %c0_102] : memref<400x800xf32, #tpu.memory_space<vmem>>, vector<8x800xf32>
    tpu.vector_store %arg16[%c64, %c0_102], %110 {strides = array<i32>} : memref<400x800xf32, #tpu.memory_space<vmem>>, vector<8x800xf32>,
    %c0_103 = arith.constant 0 : index
    %c110_104 = arith.constant 110 : index
    %112 = vector.load %arg15[%c0_103, %c110_104] : memref<8x1024xf32, #tpu.memory_space<vmem>>, vector<8x800xf32>
    %c72 = arith.constant 72 : index
    %c0_105 = arith.constant 0 : index
    %113 = vector.load %arg16[%c72, %c0_105] : memref<400x800xf32, #tpu.memory_space<vmem>>, vector<8x800xf32>
    tpu.vector_store %arg16[%c72, %c0_105], %112 {strides = array<i32>} : memref<400x800xf32, #tpu.memory_space<vmem>>, vector<8x800xf32>,
    %c0_106 = arith.constant 0 : index
    %c126_107 = arith.constant 126 : index
    %114 = vector.load %arg15[%c0_106, %c126_107] : memref<8x1024xf32, #tpu.memory_space<vmem>>, vector<8x800xf32>
    %c80 = arith.constant 80 : index
    %c0_108 = arith.constant 0 : index
    %115 = vector.load %arg16[%c80, %c0_108] : memref<400x800xf32, #tpu.memory_space<vmem>>, vector<8x800xf32>
    tpu.vector_store %arg16[%c80, %c0_108], %114 {strides = array<i32>} : memref<400x800xf32, #tpu.memory_space<vmem>>, vector<8x800xf32>,
    %c0_109 = arith.constant 0 : index
    %c127_110 = arith.constant 127 : index
    %116 = vector.load %arg15[%c0_109, %c127_110] : memref<8x1024xf32, #tpu.memory_space<vmem>>, vector<8x800xf32>
    %c88_111 = arith.constant 88 : index
    %c0_112 = arith.constant 0 : index
    %117 = vector.load %arg16[%c88_111, %c0_112] : memref<400x800xf32, #tpu.memory_space<vmem>>, vector<8x800xf32>
    tpu.vector_store %arg16[%c88_111, %c0_112], %116 {strides = array<i32>} : memref<400x800xf32, #tpu.memory_space<vmem>>, vector<8x800xf32>,
    %c0_113 = arith.constant 0 : index
    %c128_114 = arith.constant 128 : index
    %118 = vector.load %arg15[%c0_113, %c128_114] : memref<8x1024xf32, #tpu.memory_space<vmem>>, vector<8x800xf32>
    %c96 = arith.constant 96 : index
    %c0_115 = arith.constant 0 : index
    %119 = vector.load %arg16[%c96, %c0_115] : memref<400x800xf32, #tpu.memory_space<vmem>>, vector<8x800xf32>
    tpu.vector_store %arg16[%c96, %c0_115], %118 {strides = array<i32>} : memref<400x800xf32, #tpu.memory_space<vmem>>, vector<8x800xf32>,
    %c0_116 = arith.constant 0 : index
    %c129_117 = arith.constant 129 : index
    %120 = vector.load %arg15[%c0_116, %c129_117] : memref<8x1024xf32, #tpu.memory_space<vmem>>, vector<8x800xf32>
    %c104 = arith.constant 104 : index
    %c0_118 = arith.constant 0 : index
    %121 = vector.load %arg16[%c104, %c0_118] : memref<400x800xf32, #tpu.memory_space<vmem>>, vector<8x800xf32>
    tpu.vector_store %arg16[%c104, %c0_118], %120 {strides = array<i32>} : memref<400x800xf32, #tpu.memory_space<vmem>>, vector<8x800xf32>,
    %c0_119 = arith.constant 0 : index
    %c130_120 = arith.constant 130 : index
    %122 = vector.load %arg15[%c0_119, %c130_120] : memref<8x1024xf32, #tpu.memory_space<vmem>>, vector<8x800xf32>
    %c112 = arith.constant 112 : index
    %c0_121 = arith.constant 0 : index
    %123 = vector.load %arg16[%c112, %c0_121] : memref<400x800xf32, #tpu.memory_space<vmem>>, vector<8x800xf32>
    tpu.vector_store %arg16[%c112, %c0_121], %122 {strides = array<i32>} : memref<400x800xf32, #tpu.memory_space<vmem>>, vector<8x800xf32>,
    %c0_122 = arith.constant 0 : index
    %c146_123 = arith.constant 146 : index
    %124 = vector.load %arg15[%c0_122, %c146_123] : memref<8x1024xf32, #tpu.memory_space<vmem>>, vector<8x800xf32>
    %c120 = arith.constant 120 : index
    %c0_124 = arith.constant 0 : index
    %125 = vector.load %arg16[%c120, %c0_124] : memref<400x800xf32, #tpu.memory_space<vmem>>, vector<8x800xf32>
    tpu.vector_store %arg16[%c120, %c0_124], %124 {strides = array<i32>} : memref<400x800xf32, #tpu.memory_space<vmem>>, vector<8x800xf32>,
    %c0_125 = arith.constant 0 : index
    %c147_126 = arith.constant 147 : index
    %126 = vector.load %arg15[%c0_125, %c147_126] : memref<8x1024xf32, #tpu.memory_space<vmem>>, vector<8x800xf32>
    %c128_127 = arith.constant 128 : index
    %c0_128 = arith.constant 0 : index
    %127 = vector.load %arg16[%c128_127, %c0_128] : memref<400x800xf32, #tpu.memory_space<vmem>>, vector<8x800xf32>
    tpu.vector_store %arg16[%c128_127, %c0_128], %126 {strides = array<i32>} : memref<400x800xf32, #tpu.memory_space<vmem>>, vector<8x800xf32>,
    %c0_129 = arith.constant 0 : index
    %c148_130 = arith.constant 148 : index
    %128 = vector.load %arg15[%c0_129, %c148_130] : memref<8x1024xf32, #tpu.memory_space<vmem>>, vector<8x800xf32>
    %c136 = arith.constant 136 : index
    %c0_131 = arith.constant 0 : index
    %129 = vector.load %arg16[%c136, %c0_131] : memref<400x800xf32, #tpu.memory_space<vmem>>, vector<8x800xf32>
    tpu.vector_store %arg16[%c136, %c0_131], %128 {strides = array<i32>} : memref<400x800xf32, #tpu.memory_space<vmem>>, vector<8x800xf32>,
    %c0_132 = arith.constant 0 : index
    %c149_133 = arith.constant 149 : index
    %130 = vector.load %arg15[%c0_132, %c149_133] : memref<8x1024xf32, #tpu.memory_space<vmem>>, vector<8x800xf32>
    %c144 = arith.constant 144 : index
    %c0_134 = arith.constant 0 : index
    %131 = vector.load %arg16[%c144, %c0_134] : memref<400x800xf32, #tpu.memory_space<vmem>>, vector<8x800xf32>
    tpu.vector_store %arg16[%c144, %c0_134], %130 {strides = array<i32>} : memref<400x800xf32, #tpu.memory_space<vmem>>, vector<8x800xf32>,
    %c0_135 = arith.constant 0 : index
    %c150_136 = arith.constant 150 : index
    %132 = vector.load %arg15[%c0_135, %c150_136] : memref<8x1024xf32, #tpu.memory_space<vmem>>, vector<8x800xf32>
    %c152 = arith.constant 152 : index
    %c0_137 = arith.constant 0 : index
    %133 = vector.load %arg16[%c152, %c0_137] : memref<400x800xf32, #tpu.memory_space<vmem>>, vector<8x800xf32>
    tpu.vector_store %arg16[%c152, %c0_137], %132 {strides = array<i32>} : memref<400x800xf32, #tpu.memory_space<vmem>>, vector<8x800xf32>,
    %c0_138 = arith.constant 0 : index
    %c166_139 = arith.constant 166 : index
    %134 = vector.load %arg15[%c0_138, %c166_139] : memref<8x1024xf32, #tpu.memory_space<vmem>>, vector<8x800xf32>
    %c160 = arith.constant 160 : index
    %c0_140 = arith.constant 0 : index
    %135 = vector.load %arg16[%c160, %c0_140] : memref<400x800xf32, #tpu.memory_space<vmem>>, vector<8x800xf32>
    tpu.vector_store %arg16[%c160, %c0_140], %134 {strides = array<i32>} : memref<400x800xf32, #tpu.memory_space<vmem>>, vector<8x800xf32>,
    %c0_141 = arith.constant 0 : index
    %c167_142 = arith.constant 167 : index
    %136 = vector.load %arg15[%c0_141, %c167_142] : memref<8x1024xf32, #tpu.memory_space<vmem>>, vector<8x800xf32>
    %c168_143 = arith.constant 168 : index
    %c0_144 = arith.constant 0 : index
    %137 = vector.load %arg16[%c168_143, %c0_144] : memref<400x800xf32, #tpu.memory_space<vmem>>, vector<8x800xf32>
    tpu.vector_store %arg16[%c168_143, %c0_144], %136 {strides = array<i32>} : memref<400x800xf32, #tpu.memory_space<vmem>>, vector<8x800xf32>,
    %c0_145 = arith.constant 0 : index
    %c168_146 = arith.constant 168 : index
    %138 = vector.load %arg15[%c0_145, %c168_146] : memref<8x1024xf32, #tpu.memory_space<vmem>>, vector<8x800xf32>
    %c176 = arith.constant 176 : index
    %c0_147 = arith.constant 0 : index
    %139 = vector.load %arg16[%c176, %c0_147] : memref<400x800xf32, #tpu.memory_space<vmem>>, vector<8x800xf32>
    tpu.vector_store %arg16[%c176, %c0_147], %138 {strides = array<i32>} : memref<400x800xf32, #tpu.memory_space<vmem>>, vector<8x800xf32>,
    %c0_148 = arith.constant 0 : index
    %c169_149 = arith.constant 169 : index
    %140 = vector.load %arg15[%c0_148, %c169_149] : memref<8x1024xf32, #tpu.memory_space<vmem>>, vector<8x800xf32>
    %c184 = arith.constant 184 : index
    %c0_150 = arith.constant 0 : index
    %141 = vector.load %arg16[%c184, %c0_150] : memref<400x800xf32, #tpu.memory_space<vmem>>, vector<8x800xf32>
    tpu.vector_store %arg16[%c184, %c0_150], %140 {strides = array<i32>} : memref<400x800xf32, #tpu.memory_space<vmem>>, vector<8x800xf32>,
    %c0_151 = arith.constant 0 : index
    %c170_152 = arith.constant 170 : index
    %142 = vector.load %arg15[%c0_151, %c170_152] : memref<8x1024xf32, #tpu.memory_space<vmem>>, vector<8x800xf32>
    %c192 = arith.constant 192 : index
    %c0_153 = arith.constant 0 : index
    %143 = vector.load %arg16[%c192, %c0_153] : memref<400x800xf32, #tpu.memory_space<vmem>>, vector<8x800xf32>
    tpu.vector_store %arg16[%c192, %c0_153], %142 {strides = array<i32>} : memref<400x800xf32, #tpu.memory_space<vmem>>, vector<8x800xf32>,
    %c0_154 = arith.constant 0 : index
    %c0_155 = arith.constant 0 : index
    %144 = vector.load %arg8[%c0_154, %c0_155] : memref<8x200xf32, #tpu.memory_space<vmem>>, vector<8x200xf32>
    %c0_156 = arith.constant 0 : index
    %c0_157 = arith.constant 0 : index
    %145 = vector.load %arg16[%c0_156, %c0_157] : memref<400x800xf32, #tpu.memory_space<vmem>>, vector<200x800xf32>
    %cst_158 = arith.constant dense<0.000000e+00> : vector<8x800xf32>
    %146 = tpu.matmul %144, %145, %cst_158 {dimension_numbers = #tpu.dot_dimension_numbers<[1], [0], [0], [1], [0, 0, 1, 1], [], []>} : vector<8x200xf32>, vector<200x800xf32>, vector<8x800xf32> -> vector<8x800xf32>
    %c0_159 = arith.constant 0 : index
    %c0_160 = arith.constant 0 : index
    %147 = vector.load %arg9[%c0_159, %c0_160] : memref<8x1xf32, #tpu.memory_space<vmem>>, vector<8x1xf32>
    %148 = vector.broadcast %147 : vector<8x1xf32> to vector<8x800xf32>
    %149 = arith.addf %146, %148 : vector<8x800xf32>
    %150 = vector.broadcast %0 : vector<1x800xf32> to vector<8x800xf32>
    %151 = arith.mulf %149, %150 : vector<8x800xf32>
    %cst_161 = arith.constant dense<0.000000e+00> : vector<8xf32>
    %152 = vector.multi_reduction <add>, %151, %cst_161 [1] : vector<8x800xf32> to vector<8xf32>
    %153 = vector.shape_cast %152 : vector<8xf32> to vector<8x1xf32>
    %cst_162 = arith.constant 0.001953125 : f32
    %154 = vector.broadcast %cst_162 : f32 to vector<8x1xf32>
    %155 = arith.mulf %153, %154 : vector<8x1xf32>
    %156 = arith.mulf %151, %149 : vector<8x800xf32>
    %cst_163 = arith.constant dense<0.000000e+00> : vector<8xf32>
    %157 = vector.multi_reduction <add>, %156, %cst_163 [1] : vector<8x800xf32> to vector<8xf32>
    %158 = vector.shape_cast %157 : vector<8xf32> to vector<8x1xf32>
    %cst_164 = arith.constant 0.001953125 : f32
    %159 = vector.broadcast %cst_164 : f32 to vector<8x1xf32>
    %160 = arith.mulf %158, %159 : vector<8x1xf32>
    %161 = arith.mulf %155, %155 : vector<8x1xf32>
    %162 = arith.subf %160, %161 : vector<8x1xf32>
    %cst_165 = arith.constant 0.000000e+00 : f32
    %163 = vector.broadcast %cst_165 : f32 to vector<8x1xf32>
    %164 = arith.maximumf %162, %163 : vector<8x1xf32>
    %cst_166 = arith.constant 9.99999974E-6 : f32
    %165 = vector.broadcast %cst_166 : f32 to vector<8x1xf32>
    %166 = arith.addf %164, %165 : vector<8x1xf32>
    %167 = math.rsqrt %166 : vector<8x1xf32>
    %168 = vector.broadcast %155 : vector<8x1xf32> to vector<8x800xf32>
    %169 = arith.subf %149, %168 : vector<8x800xf32>
    %170 = vector.broadcast %167 : vector<8x1xf32> to vector<8x800xf32>
    %171 = arith.mulf %169, %170 : vector<8x800xf32>
    %c0_167 = arith.constant 0 : index
    %c0_168 = arith.constant 0 : index
    %172 = vector.load %arg10[%c0_167, %c0_168] : memref<8x1xf32, #tpu.memory_space<vmem>>, vector<8x1xf32>
    %173 = vector.broadcast %172 : vector<8x1xf32> to vector<8x800xf32>
    %174 = arith.mulf %171, %173 : vector<8x800xf32>
    %c0_169 = arith.constant 0 : index
    %c0_170 = arith.constant 0 : index
    %175 = vector.load %arg11[%c0_169, %c0_170] : memref<8x1xf32, #tpu.memory_space<vmem>>, vector<8x1xf32>
    %176 = vector.broadcast %175 : vector<8x1xf32> to vector<8x800xf32>
    %177 = arith.addf %174, %176 : vector<8x800xf32>
    %cst_171 = arith.constant 0.000000e+00 : f32
    %178 = vector.broadcast %cst_171 : f32 to vector<8x800xf32>
    %179 = arith.maximumf %177, %178 : vector<8x800xf32>
    %180 = vector.broadcast %0 : vector<1x800xf32> to vector<8x800xf32>
    %181 = arith.mulf %180, %179 : vector<8x800xf32>
    %c0_172 = arith.constant 0 : index
    %c128_173 = arith.constant 128 : index
    %182 = vector.load %arg15[%c0_172, %c128_173] : memref<8x1024xf32, #tpu.memory_space<vmem>>, vector<8x800xf32>
    tpu.vector_store %arg15[%c0_172, %c128_173], %181 {strides = array<i32>} : memref<8x1024xf32, #tpu.memory_space<vmem>>, vector<8x800xf32>,
    %c0_174 = arith.constant 0 : index
    %c86_175 = arith.constant 86 : index
    %183 = vector.load %arg15[%c0_174, %c86_175] : memref<8x1024xf32, #tpu.memory_space<vmem>>, vector<8x800xf32>
    %c0_176 = arith.constant 0 : index
    %c0_177 = arith.constant 0 : index
    %184 = vector.load %arg16[%c0_176, %c0_177] : memref<400x800xf32, #tpu.memory_space<vmem>>, vector<8x800xf32>
    tpu.vector_store %arg16[%c0_176, %c0_177], %183 {strides = array<i32>} : memref<400x800xf32, #tpu.memory_space<vmem>>, vector<8x800xf32>,
    %c0_178 = arith.constant 0 : index
    %c87_179 = arith.constant 87 : index
    %185 = vector.load %arg15[%c0_178, %c87_179] : memref<8x1024xf32, #tpu.memory_space<vmem>>, vector<8x800xf32>
    %c8_180 = arith.constant 8 : index
    %c0_181 = arith.constant 0 : index
    %186 = vector.load %arg16[%c8_180, %c0_181] : memref<400x800xf32, #tpu.memory_space<vmem>>, vector<8x800xf32>
    tpu.vector_store %arg16[%c8_180, %c0_181], %185 {strides = array<i32>} : memref<400x800xf32, #tpu.memory_space<vmem>>, vector<8x800xf32>,
    %c0_182 = arith.constant 0 : index
    %c88_183 = arith.constant 88 : index
    %187 = vector.load %arg15[%c0_182, %c88_183] : memref<8x1024xf32, #tpu.memory_space<vmem>>, vector<8x800xf32>
    %c16_184 = arith.constant 16 : index
    %c0_185 = arith.constant 0 : index
    %188 = vector.load %arg16[%c16_184, %c0_185] : memref<400x800xf32, #tpu.memory_space<vmem>>, vector<8x800xf32>
    tpu.vector_store %arg16[%c16_184, %c0_185], %187 {strides = array<i32>} : memref<400x800xf32, #tpu.memory_space<vmem>>, vector<8x800xf32>,
    %c0_186 = arith.constant 0 : index
    %c89_187 = arith.constant 89 : index
    %189 = vector.load %arg15[%c0_186, %c89_187] : memref<8x1024xf32, #tpu.memory_space<vmem>>, vector<8x800xf32>
    %c24_188 = arith.constant 24 : index
    %c0_189 = arith.constant 0 : index
    %190 = vector.load %arg16[%c24_188, %c0_189] : memref<400x800xf32, #tpu.memory_space<vmem>>, vector<8x800xf32>
    tpu.vector_store %arg16[%c24_188, %c0_189], %189 {strides = array<i32>} : memref<400x800xf32, #tpu.memory_space<vmem>>, vector<8x800xf32>,
    %c0_190 = arith.constant 0 : index
    %c90_191 = arith.constant 90 : index
    %191 = vector.load %arg15[%c0_190, %c90_191] : memref<8x1024xf32, #tpu.memory_space<vmem>>, vector<8x800xf32>
    %c32_192 = arith.constant 32 : index
    %c0_193 = arith.constant 0 : index
    %192 = vector.load %arg16[%c32_192, %c0_193] : memref<400x800xf32, #tpu.memory_space<vmem>>, vector<8x800xf32>
    tpu.vector_store %arg16[%c32_192, %c0_193], %191 {strides = array<i32>} : memref<400x800xf32, #tpu.memory_space<vmem>>, vector<8x800xf32>,
    %c0_194 = arith.constant 0 : index
    %c106_195 = arith.constant 106 : index
    %193 = vector.load %arg15[%c0_194, %c106_195] : memref<8x1024xf32, #tpu.memory_space<vmem>>, vector<8x800xf32>
    %c40_196 = arith.constant 40 : index
    %c0_197 = arith.constant 0 : index
    %194 = vector.load %arg16[%c40_196, %c0_197] : memref<400x800xf32, #tpu.memory_space<vmem>>, vector<8x800xf32>
    tpu.vector_store %arg16[%c40_196, %c0_197], %193 {strides = array<i32>} : memref<400x800xf32, #tpu.memory_space<vmem>>, vector<8x800xf32>,
    %c0_198 = arith.constant 0 : index
    %c107_199 = arith.constant 107 : index
    %195 = vector.load %arg15[%c0_198, %c107_199] : memref<8x1024xf32, #tpu.memory_space<vmem>>, vector<8x800xf32>
    %c48_200 = arith.constant 48 : index
    %c0_201 = arith.constant 0 : index
    %196 = vector.load %arg16[%c48_200, %c0_201] : memref<400x800xf32, #tpu.memory_space<vmem>>, vector<8x800xf32>
    tpu.vector_store %arg16[%c48_200, %c0_201], %195 {strides = array<i32>} : memref<400x800xf32, #tpu.memory_space<vmem>>, vector<8x800xf32>,
    %c0_202 = arith.constant 0 : index
    %c108_203 = arith.constant 108 : index
    %197 = vector.load %arg15[%c0_202, %c108_203] : memref<8x1024xf32, #tpu.memory_space<vmem>>, vector<8x800xf32>
    %c56_204 = arith.constant 56 : index
    %c0_205 = arith.constant 0 : index
    %198 = vector.load %arg16[%c56_204, %c0_205] : memref<400x800xf32, #tpu.memory_space<vmem>>, vector<8x800xf32>
    tpu.vector_store %arg16[%c56_204, %c0_205], %197 {strides = array<i32>} : memref<400x800xf32, #tpu.memory_space<vmem>>, vector<8x800xf32>,
    %c0_206 = arith.constant 0 : index
    %c109_207 = arith.constant 109 : index
    %199 = vector.load %arg15[%c0_206, %c109_207] : memref<8x1024xf32, #tpu.memory_space<vmem>>, vector<8x800xf32>
    %c64_208 = arith.constant 64 : index
    %c0_209 = arith.constant 0 : index
    %200 = vector.load %arg16[%c64_208, %c0_209] : memref<400x800xf32, #tpu.memory_space<vmem>>, vector<8x800xf32>
    tpu.vector_store %arg16[%c64_208, %c0_209], %199 {strides = array<i32>} : memref<400x800xf32, #tpu.memory_space<vmem>>, vector<8x800xf32>,
    %c0_210 = arith.constant 0 : index
    %c110_211 = arith.constant 110 : index
    %201 = vector.load %arg15[%c0_210, %c110_211] : memref<8x1024xf32, #tpu.memory_space<vmem>>, vector<8x800xf32>
    %c72_212 = arith.constant 72 : index
    %c0_213 = arith.constant 0 : index
    %202 = vector.load %arg16[%c72_212, %c0_213] : memref<400x800xf32, #tpu.memory_space<vmem>>, vector<8x800xf32>
    tpu.vector_store %arg16[%c72_212, %c0_213], %201 {strides = array<i32>} : memref<400x800xf32, #tpu.memory_space<vmem>>, vector<8x800xf32>,
    %c0_214 = arith.constant 0 : index
    %c126_215 = arith.constant 126 : index
    %203 = vector.load %arg15[%c0_214, %c126_215] : memref<8x1024xf32, #tpu.memory_space<vmem>>, vector<8x800xf32>
    %c80_216 = arith.constant 80 : index
    %c0_217 = arith.constant 0 : index
    %204 = vector.load %arg16[%c80_216, %c0_217] : memref<400x800xf32, #tpu.memory_space<vmem>>, vector<8x800xf32>
    tpu.vector_store %arg16[%c80_216, %c0_217], %203 {strides = array<i32>} : memref<400x800xf32, #tpu.memory_space<vmem>>, vector<8x800xf32>,
    %c0_218 = arith.constant 0 : index
    %c127_219 = arith.constant 127 : index
    %205 = vector.load %arg15[%c0_218, %c127_219] : memref<8x1024xf32, #tpu.memory_space<vmem>>, vector<8x800xf32>
    %c88_220 = arith.constant 88 : index
    %c0_221 = arith.constant 0 : index
    %206 = vector.load %arg16[%c88_220, %c0_221] : memref<400x800xf32, #tpu.memory_space<vmem>>, vector<8x800xf32>
    tpu.vector_store %arg16[%c88_220, %c0_221], %205 {strides = array<i32>} : memref<400x800xf32, #tpu.memory_space<vmem>>, vector<8x800xf32>,
    %c0_222 = arith.constant 0 : index
    %c128_223 = arith.constant 128 : index
    %207 = vector.load %arg15[%c0_222, %c128_223] : memref<8x1024xf32, #tpu.memory_space<vmem>>, vector<8x800xf32>
    %c96_224 = arith.constant 96 : index
    %c0_225 = arith.constant 0 : index
    %208 = vector.load %arg16[%c96_224, %c0_225] : memref<400x800xf32, #tpu.memory_space<vmem>>, vector<8x800xf32>
    tpu.vector_store %arg16[%c96_224, %c0_225], %207 {strides = array<i32>} : memref<400x800xf32, #tpu.memory_space<vmem>>, vector<8x800xf32>,
    %c0_226 = arith.constant 0 : index
    %c129_227 = arith.constant 129 : index
    %209 = vector.load %arg15[%c0_226, %c129_227] : memref<8x1024xf32, #tpu.memory_space<vmem>>, vector<8x800xf32>
    %c104_228 = arith.constant 104 : index
    %c0_229 = arith.constant 0 : index
    %210 = vector.load %arg16[%c104_228, %c0_229] : memref<400x800xf32, #tpu.memory_space<vmem>>, vector<8x800xf32>
    tpu.vector_store %arg16[%c104_228, %c0_229], %209 {strides = array<i32>} : memref<400x800xf32, #tpu.memory_space<vmem>>, vector<8x800xf32>,
    %c0_230 = arith.constant 0 : index
    %c130_231 = arith.constant 130 : index
    %211 = vector.load %arg15[%c0_230, %c130_231] : memref<8x1024xf32, #tpu.memory_space<vmem>>, vector<8x800xf32>
    %c112_232 = arith.constant 112 : index
    %c0_233 = arith.constant 0 : index
    %212 = vector.load %arg16[%c112_232, %c0_233] : memref<400x800xf32, #tpu.memory_space<vmem>>, vector<8x800xf32>
    tpu.vector_store %arg16[%c112_232, %c0_233], %211 {strides = array<i32>} : memref<400x800xf32, #tpu.memory_space<vmem>>, vector<8x800xf32>,
    %c0_234 = arith.constant 0 : index
    %c146_235 = arith.constant 146 : index
    %213 = vector.load %arg15[%c0_234, %c146_235] : memref<8x1024xf32, #tpu.memory_space<vmem>>, vector<8x800xf32>
    %c120_236 = arith.constant 120 : index
    %c0_237 = arith.constant 0 : index
    %214 = vector.load %arg16[%c120_236, %c0_237] : memref<400x800xf32, #tpu.memory_space<vmem>>, vector<8x800xf32>
    tpu.vector_store %arg16[%c120_236, %c0_237], %213 {strides = array<i32>} : memref<400x800xf32, #tpu.memory_space<vmem>>, vector<8x800xf32>,
    %c0_238 = arith.constant 0 : index
    %c147_239 = arith.constant 147 : index
    %215 = vector.load %arg15[%c0_238, %c147_239] : memref<8x1024xf32, #tpu.memory_space<vmem>>, vector<8x800xf32>
    %c128_240 = arith.constant 128 : index
    %c0_241 = arith.constant 0 : index
    %216 = vector.load %arg16[%c128_240, %c0_241] : memref<400x800xf32, #tpu.memory_space<vmem>>, vector<8x800xf32>
    tpu.vector_store %arg16[%c128_240, %c0_241], %215 {strides = array<i32>} : memref<400x800xf32, #tpu.memory_space<vmem>>, vector<8x800xf32>,
    %c0_242 = arith.constant 0 : index
    %c148_243 = arith.constant 148 : index
    %217 = vector.load %arg15[%c0_242, %c148_243] : memref<8x1024xf32, #tpu.memory_space<vmem>>, vector<8x800xf32>
    %c136_244 = arith.constant 136 : index
    %c0_245 = arith.constant 0 : index
    %218 = vector.load %arg16[%c136_244, %c0_245] : memref<400x800xf32, #tpu.memory_space<vmem>>, vector<8x800xf32>
    tpu.vector_store %arg16[%c136_244, %c0_245], %217 {strides = array<i32>} : memref<400x800xf32, #tpu.memory_space<vmem>>, vector<8x800xf32>,
    %c0_246 = arith.constant 0 : index
    %c149_247 = arith.constant 149 : index
    %219 = vector.load %arg15[%c0_246, %c149_247] : memref<8x1024xf32, #tpu.memory_space<vmem>>, vector<8x800xf32>
    %c144_248 = arith.constant 144 : index
    %c0_249 = arith.constant 0 : index
    %220 = vector.load %arg16[%c144_248, %c0_249] : memref<400x800xf32, #tpu.memory_space<vmem>>, vector<8x800xf32>
    tpu.vector_store %arg16[%c144_248, %c0_249], %219 {strides = array<i32>} : memref<400x800xf32, #tpu.memory_space<vmem>>, vector<8x800xf32>,
    %c0_250 = arith.constant 0 : index
    %c150_251 = arith.constant 150 : index
    %221 = vector.load %arg15[%c0_250, %c150_251] : memref<8x1024xf32, #tpu.memory_space<vmem>>, vector<8x800xf32>
    %c152_252 = arith.constant 152 : index
    %c0_253 = arith.constant 0 : index
    %222 = vector.load %arg16[%c152_252, %c0_253] : memref<400x800xf32, #tpu.memory_space<vmem>>, vector<8x800xf32>
    tpu.vector_store %arg16[%c152_252, %c0_253], %221 {strides = array<i32>} : memref<400x800xf32, #tpu.memory_space<vmem>>, vector<8x800xf32>,
    %c0_254 = arith.constant 0 : index
    %c166_255 = arith.constant 166 : index
    %223 = vector.load %arg15[%c0_254, %c166_255] : memref<8x1024xf32, #tpu.memory_space<vmem>>, vector<8x800xf32>
    %c160_256 = arith.constant 160 : index
    %c0_257 = arith.constant 0 : index
    %224 = vector.load %arg16[%c160_256, %c0_257] : memref<400x800xf32, #tpu.memory_space<vmem>>, vector<8x800xf32>
    tpu.vector_store %arg16[%c160_256, %c0_257], %223 {strides = array<i32>} : memref<400x800xf32, #tpu.memory_space<vmem>>, vector<8x800xf32>,
    %c0_258 = arith.constant 0 : index
    %c167_259 = arith.constant 167 : index
    %225 = vector.load %arg15[%c0_258, %c167_259] : memref<8x1024xf32, #tpu.memory_space<vmem>>, vector<8x800xf32>
    %c168_260 = arith.constant 168 : index
    %c0_261 = arith.constant 0 : index
    %226 = vector.load %arg16[%c168_260, %c0_261] : memref<400x800xf32, #tpu.memory_space<vmem>>, vector<8x800xf32>
    tpu.vector_store %arg16[%c168_260, %c0_261], %225 {strides = array<i32>} : memref<400x800xf32, #tpu.memory_space<vmem>>, vector<8x800xf32>,
    %c0_262 = arith.constant 0 : index
    %c168_263 = arith.constant 168 : index
    %227 = vector.load %arg15[%c0_262, %c168_263] : memref<8x1024xf32, #tpu.memory_space<vmem>>, vector<8x800xf32>
    %c176_264 = arith.constant 176 : index
    %c0_265 = arith.constant 0 : index
    %228 = vector.load %arg16[%c176_264, %c0_265] : memref<400x800xf32, #tpu.memory_space<vmem>>, vector<8x800xf32>
    tpu.vector_store %arg16[%c176_264, %c0_265], %227 {strides = array<i32>} : memref<400x800xf32, #tpu.memory_space<vmem>>, vector<8x800xf32>,
    %c0_266 = arith.constant 0 : index
    %c169_267 = arith.constant 169 : index
    %229 = vector.load %arg15[%c0_266, %c169_267] : memref<8x1024xf32, #tpu.memory_space<vmem>>, vector<8x800xf32>
    %c184_268 = arith.constant 184 : index
    %c0_269 = arith.constant 0 : index
    %230 = vector.load %arg16[%c184_268, %c0_269] : memref<400x800xf32, #tpu.memory_space<vmem>>, vector<8x800xf32>
    tpu.vector_store %arg16[%c184_268, %c0_269], %229 {strides = array<i32>} : memref<400x800xf32, #tpu.memory_space<vmem>>, vector<8x800xf32>,
    %c0_270 = arith.constant 0 : index
    %c170_271 = arith.constant 170 : index
    %231 = vector.load %arg15[%c0_270, %c170_271] : memref<8x1024xf32, #tpu.memory_space<vmem>>, vector<8x800xf32>
    %c192_272 = arith.constant 192 : index
    %c0_273 = arith.constant 0 : index
    %232 = vector.load %arg16[%c192_272, %c0_273] : memref<400x800xf32, #tpu.memory_space<vmem>>, vector<8x800xf32>
    tpu.vector_store %arg16[%c192_272, %c0_273], %231 {strides = array<i32>} : memref<400x800xf32, #tpu.memory_space<vmem>>, vector<8x800xf32>,
    %c0_274 = arith.constant 0 : index
    %c0_275 = arith.constant 0 : index
    %233 = vector.load %arg12[%c0_274, %c0_275] : memref<8x400xf32, #tpu.memory_space<vmem>>, vector<8x400xf32>
    %c0_276 = arith.constant 0 : index
    %c0_277 = arith.constant 0 : index
    %234 = vector.load %arg16[%c0_276, %c0_277] : memref<400x800xf32, #tpu.memory_space<vmem>>, vector<400x800xf32>
    %cst_278 = arith.constant dense<0.000000e+00> : vector<8x800xf32>
    %235 = tpu.matmul %233, %234, %cst_278 {dimension_numbers = #tpu.dot_dimension_numbers<[1], [0], [0], [1], [0, 0, 1, 1], [], []>} : vector<8x400xf32>, vector<400x800xf32>, vector<8x800xf32> -> vector<8x800xf32>
    %c0_279 = arith.constant 0 : index
    %c0_280 = arith.constant 0 : index
    %236 = vector.load %arg3[%c0_279, %c0_280] : memref<800x128xf32, #tpu.memory_space<vmem>>, vector<800x128xf32>
    %cst_281 = arith.constant dense<0.000000e+00> : vector<8x128xf32>
    %237 = tpu.matmul %235, %236, %cst_281 {dimension_numbers = #tpu.dot_dimension_numbers<[1], [0], [0], [1], [0, 0, 1, 1], [], []>} : vector<8x800xf32>, vector<800x128xf32>, vector<8x128xf32> -> vector<8x128xf32>
    %c0_282 = arith.constant 0 : index
    %c0_283 = arith.constant 0 : index
    %238 = vector.load %arg13[%c0_282, %c0_283] : memref<8x1xf32, #tpu.memory_space<vmem>>, vector<8x1xf32>
    %239 = vector.broadcast %238 : vector<8x1xf32> to vector<8x128xf32>
    %240 = arith.addf %237, %239 : vector<8x128xf32>
    %c0_284 = arith.constant 0 : index
    %c0_285 = arith.constant 0 : index
    %241 = vector.load %arg14[%c0_284, %c0_285] : memref<8x128xf32, #tpu.memory_space<vmem>>, vector<8x128xf32>
    tpu.vector_store %arg14[%c0_284, %c0_285], %240 {strides = array<i32>} : memref<8x128xf32, #tpu.memory_space<vmem>>, vector<8x128xf32>,
    return
  }
  func.func @transform_0(%arg0: i32) -> (i32, i32) {
    %c0_i32 = arith.constant 0 : i32
    %c0_i32_0 = arith.constant 0 : i32
    %c0_i32_1 = arith.constant 0 : i32
    return %c0_i32, %c0_i32_0 : i32, i32
  }
  func.func @transform_1(%arg0: i32) -> (i32, i32) {
    %c0_i32 = arith.constant 0 : i32
    %c0_i32_0 = arith.constant 0 : i32
    %c0_i32_1 = arith.constant 0 : i32
    return %c0_i32, %c0_i32_0 : i32, i32
  }
  func.func @transform_2(%arg0: i32) -> (i32, i32) {
    %c0_i32 = arith.constant 0 : i32
    %c0_i32_0 = arith.constant 0 : i32
    %c0_i32_1 = arith.constant 0 : i32
    return %c0_i32, %c0_i32_0 : i32, i32
  }
  func.func @transform_3(%arg0: i32) -> (i32, i32) {
    %c0_i32 = arith.constant 0 : i32
    %c0_i32_0 = arith.constant 0 : i32
    %c0_i32_1 = arith.constant 0 : i32
    return %c0_i32, %c0_i32_0 : i32, i32
  }
  func.func @transform_4(%arg0: i32) -> (i32, i32) {
    %c0_i32 = arith.constant 0 : i32
    %c0_i32_0 = arith.constant 0 : i32
    %c0_i32_1 = arith.constant 0 : i32
    return %c0_i32, %c0_i32_0 : i32, i32
  }
  func.func @transform_5(%arg0: i32) -> (i32, i32) {
    %c0_i32 = arith.constant 0 : i32
    %c0_i32_0 = arith.constant 0 : i32
    %c0_i32_1 = arith.constant 0 : i32
    return %c0_i32, %c0_i32_0 : i32, i32
  }
  func.func @transform_6(%arg0: i32) -> (i32, i32) {
    %c0_i32 = arith.constant 0 : i32
    %c0_i32_0 = arith.constant 0 : i32
    %c0_i32_1 = arith.constant 0 : i32
    return %c0_i32, %c0_i32_0 : i32, i32
  }
  func.func @transform_7(%arg0: i32) -> (i32, i32) {
    %c0_i32 = arith.constant 0 : i32
    %c0_i32_0 = arith.constant 0 : i32
    %c0_i32_1 = arith.constant 0 : i32
    return %c0_i32, %c0_i32_0 : i32, i32
  }
  func.func @transform_8(%arg0: i32) -> (i32, i32) {
    %c0_i32 = arith.constant 0 : i32
    %c0_i32_0 = arith.constant 0 : i32
    %c0_i32_1 = arith.constant 0 : i32
    return %c0_i32, %c0_i32_0 : i32, i32
  }
  func.func @transform_9(%arg0: i32) -> (i32, i32) {
    %c0_i32 = arith.constant 0 : i32
    %c0_i32_0 = arith.constant 0 : i32
    %c0_i32_1 = arith.constant 0 : i32
    return %c0_i32, %c0_i32_0 : i32, i32
  }
  func.func @transform_10(%arg0: i32) -> (i32, i32) {
    %c0_i32 = arith.constant 0 : i32
    %c0_i32_0 = arith.constant 0 : i32
    %c0_i32_1 = arith.constant 0 : i32
    return %c0_i32, %c0_i32_0 : i32, i32
  }
  func.func @transform_11(%arg0: i32) -> (i32, i32) {
    %c0_i32 = arith.constant 0 : i32
    %c0_i32_0 = arith.constant 0 : i32
    %c0_i32_1 = arith.constant 0 : i32
    return %c0_i32, %c0_i32_0 : i32, i32
  }
  func.func @transform_12(%arg0: i32) -> (i32, i32) {
    %c0_i32 = arith.constant 0 : i32
    %c0_i32_0 = arith.constant 0 : i32
    %c0_i32_1 = arith.constant 0 : i32
    return %c0_i32, %c0_i32_0 : i32, i32
  }
  func.func @transform_13(%arg0: i32) -> (i32, i32) {
    %c0_i32 = arith.constant 0 : i32
    %c0_i32_0 = arith.constant 0 : i32
    %c0_i32_1 = arith.constant 0 : i32
    return %c0_i32, %c0_i32_0 : i32, i32
  }
}

</mosaic_0001>

<llo_original>
// kernel: identity_block_forward.1
$region0: #{identity_block_forward.1}
  #allocation0 [shape = 'u32[]', space=smem, size = 0x4, offset = 0x4, fixed_abs, tag = 'smem constant byte address 0x4 - core index']
  #allocation1 [shape = 'u32[144,128]{1,0:T(1,128)}', space=vmem, size = 0x12000, scoped, tag = 'internal scratch']
  #allocation2 [shape = 'f32[8,1024]{1,0:T(8,128)}', space=vmem, size = 0x8000, scoped, tag = 'scratch operand']
  #allocation3 [shape = 'f32[400,800]{1,0:T(8,128)}', space=vmem, size = 0x15e000, scoped, tag = 'scratch operand']
  %s0 = inlined_call_operand.vmem [shape: f32[8,1024], index: 0, kind: input, shape index: {}]
  %s1 = inlined_call_operand.vmem [shape: f32[1,800], index: 1, kind: input, shape index: {}]
  %s2 = inlined_call_operand.vmem [shape: f32[800,128], index: 2, kind: input, shape index: {}]
  %s3 = inlined_call_operand.vmem [shape: f32[8,200], index: 3, kind: input, shape index: {}]
  %s4 = inlined_call_operand.vmem [shape: f32[8,1], index: 4, kind: input, shape index: {}]
  %s5 = inlined_call_operand.vmem [shape: f32[8,1], index: 5, kind: input, shape index: {}]
  %s6 = inlined_call_operand.vmem [shape: f32[8,1], index: 6, kind: input, shape index: {}]
  %s7 = inlined_call_operand.vmem [shape: f32[8,200], index: 7, kind: input, shape index: {}]
  %s8 = inlined_call_operand.vmem [shape: f32[8,1], index: 8, kind: input, shape index: {}]
  %s9 = inlined_call_operand.vmem [shape: f32[8,1], index: 9, kind: input, shape index: {}]
  %s10 = inlined_call_operand.vmem [shape: f32[8,1], index: 10, kind: input, shape index: {}]
  %s11 = inlined_call_operand.vmem [shape: f32[8,400], index: 11, kind: input, shape index: {}]
  %s12 = inlined_call_operand.vmem [shape: f32[8,1], index: 12, kind: input, shape index: {}]
  %s13 = inlined_call_operand.vmem [shape: f32[8,128], index: 13, kind: output, shape index: {}]
  %s14 = sld [smem:[#allocation0]]
  $region62: #{identity_block_forward.1} parent=0
    _
  %s16 = ssub.s32 1, %s14
  %s17 = scalar_select 0, %s16, %s14
  // Predicated region
  $region2: #{identity_block_forward.1} parent=0 // pred_check
    _
  $region3: #{identity_block_forward.1} parent=0 // pred_check_branch
    %19 = sbr.rel (0) target = $region5
  $region4: #{identity_block_forward.1} parent=0 // pred_region
    _
  $region5: #{identity_block_forward.1} parent=0 // pred_fallthru
    _
  // Predicated region
  $region6: #{identity_block_forward.1} parent=0 // pred_check
    _
  $region7: #{identity_block_forward.1} parent=0 // pred_check_branch
    %21 = sbr.rel (0) target = $region9
  $region8: #{identity_block_forward.1} parent=0 // pred_region
    _
  $region9: #{identity_block_forward.1} parent=0 // pred_fallthru
    _
  // Predicated region
  $region10: #{identity_block_forward.1} parent=0 // pred_check
    _
  $region11: #{identity_block_forward.1} parent=0 // pred_check_branch
    %23 = sbr.rel (0) target = $region13
  $region12: #{identity_block_forward.1} parent=0 // pred_region
    _
  $region13: #{identity_block_forward.1} parent=0 // pred_fallthru
    _
  // Predicated region
  $region14: #{identity_block_forward.1} parent=0 // pred_check
    _
  $region15: #{identity_block_forward.1} parent=0 // pred_check_branch
    %25 = sbr.rel (0) target = $region17
  $region16: #{identity_block_forward.1} parent=0 // pred_region
    _
  $region17: #{identity_block_forward.1} parent=0 // pred_fallthru
    _
  // Predicated region
  $region18: #{identity_block_forward.1} parent=0 // pred_check
    _
  $region19: #{identity_block_forward.1} parent=0 // pred_check_branch
    %27 = sbr.rel (0) target = $region21
  $region20: #{identity_block_forward.1} parent=0 // pred_region
    _
  $region21: #{identity_block_forward.1} parent=0 // pred_fallthru
    _
  // Predicated region
  $region22: #{identity_block_forward.1} parent=0 // pred_check
    _
  $region23: #{identity_block_forward.1} parent=0 // pred_check_branch
    %29 = sbr.rel (0) target = $region25
  $region24: #{identity_block_forward.1} parent=0 // pred_region
    _
  $region25: #{identity_block_forward.1} parent=0 // pred_fallthru
    _
  // Predicated region
  $region26: #{identity_block_forward.1} parent=0 // pred_check
    _
  $region27: #{identity_block_forward.1} parent=0 // pred_check_branch
    %31 = sbr.rel (0) target = $region29
  $region28: #{identity_block_forward.1} parent=0 // pred_region
    _
  $region29: #{identity_block_forward.1} parent=0 // pred_fallthru
    _
  // Predicated region
  $region30: #{identity_block_forward.1} parent=0 // pred_check
    _
  $region31: #{identity_block_forward.1} parent=0 // pred_check_branch
    %33 = sbr.rel (0) target = $region33
  $region32: #{identity_block_forward.1} parent=0 // pred_region
    _
  $region33: #{identity_block_forward.1} parent=0 // pred_fallthru
    _
  // Predicated region
  $region34: #{identity_block_forward.1} parent=0 // pred_check
    _
  $region35: #{identity_block_forward.1} parent=0 // pred_check_branch
    %35 = sbr.rel (0) target = $region37
  $region36: #{identity_block_forward.1} parent=0 // pred_region
    _
  $region37: #{identity_block_forward.1} parent=0 // pred_fallthru
    _
  // Predicated region
  $region38: #{identity_block_forward.1} parent=0 // pred_check
    _
  $region39: #{identity_block_forward.1} parent=0 // pred_check_branch
    %37 = sbr.rel (0) target = $region41
  $region40: #{identity_block_forward.1} parent=0 // pred_region
    _
  $region41: #{identity_block_forward.1} parent=0 // pred_fallthru
    _
  // Predicated region
  $region42: #{identity_block_forward.1} parent=0 // pred_check
    _
  $region43: #{identity_block_forward.1} parent=0 // pred_check_branch
    %39 = sbr.rel (0) target = $region45
  $region44: #{identity_block_forward.1} parent=0 // pred_region
    _
  $region45: #{identity_block_forward.1} parent=0 // pred_fallthru
    _
  // Predicated region
  $region46: #{identity_block_forward.1} parent=0 // pred_check
    _
  $region47: #{identity_block_forward.1} parent=0 // pred_check_branch
    %41 = sbr.rel (0) target = $region49
  $region48: #{identity_block_forward.1} parent=0 // pred_region
    _
  $region49: #{identity_block_forward.1} parent=0 // pred_fallthru
    _
  // Predicated region
  $region50: #{identity_block_forward.1} parent=0 // pred_check
    _
  $region51: #{identity_block_forward.1} parent=0 // pred_check_branch
    %43 = sbr.rel (0) target = $region53
  $region52: #{identity_block_forward.1} parent=0 // pred_region
    _
  $region53: #{identity_block_forward.1} parent=0 // pred_fallthru
    _
  %v44 = vld [vmem:[%s1] sm:$0x7f]
  %45 = vst [vmem:[#allocation2] sm:$0xff] 0.0
  %vm46 = vcmask 1047808
  %47 = vst.msk [vmem:[#allocation2 + $0x38] sm:$0xff] %vm46, 0.0
  %v48 = vld [vmem:[%s0] sm:$0xff]
  %v49 = vld [vmem:[%s0 + $0x8] sm:$0xff]
  %v50 = vld [vmem:[%s0 + $0x10] sm:$0xff]
  %v51 = vld [vmem:[%s0 + $0x18] sm:$0xff]
  %v52 = vld [vmem:[%s0 + $0x20] sm:$0xff]
  %v53 = vld [vmem:[%s0 + $0x28] sm:$0xff]
  %v54 = vld [vmem:[%s0 + $0x30] sm:$0xff]
  %62 = vrot.lane.b32.xlu0 %v48, 42
  %v63 = vpop.permute.xlu0 %62
  %64 = vrot.lane.b32.xlu0 %v49, 42
  %v65 = vpop.permute.xlu0 %64
  %66 = vrot.lane.b32.xlu0 %v50, 42
  %v67 = vpop.permute.xlu0 %66
  %68 = vrot.lane.b32.xlu0 %v51, 42
  %v69 = vpop.permute.xlu0 %68
  %70 = vrot.lane.b32.xlu0 %v52, 42
  %v71 = vpop.permute.xlu0 %70
  %72 = vrot.lane.b32.xlu0 %v53, 42
  %v73 = vpop.permute.xlu0 %72
  %74 = vrot.lane.b32.xlu0 %v54, 42
  %v75 = vpop.permute.xlu0 %74
  %vm76 = vcmask 343040
  %v77 = vsel %vm76, %v63, %v65
  %v78 = vsel %vm76, %v65, %v67
  %v79 = vsel %vm76, %v67, %v69
  %v80 = vsel %vm76, %v69, %v71
  %v81 = vsel %vm76, %v71, %v73
  %v82 = vsel %vm76, %v73, %v75
  %90 = vst [vmem:[#allocation3 + $0x578] sm:$0xff] %v77
  %91 = vst [vmem:[#allocation3 + $0x580] sm:$0xff] %v78
  %92 = vst [vmem:[#allocation3 + $0x588] sm:$0xff] %v79
  %93 = vst [vmem:[#allocation3 + $0x590] sm:$0xff] %v80
  %94 = vst [vmem:[#allocation3 + $0x598] sm:$0xff] %v81
  %95 = vst [vmem:[#allocation3 + $0x5a0] sm:$0xff] %v82
  %vm96 = vcmask 261120
  %97 = vst.msk [vmem:[#allocation3 + $0x5a8] sm:$0xff] %vm96, %v75
  %v98 = vld [vmem:[%s0] sm:$0xff]
  %v99 = vld [vmem:[%s0 + $0x8] sm:$0xff]
  %v100 = vld [vmem:[%s0 + $0x10] sm:$0xff]
  %v101 = vld [vmem:[%s0 + $0x18] sm:$0xff]
  %v102 = vld [vmem:[%s0 + $0x20] sm:$0xff]
  %v103 = vld [vmem:[%s0 + $0x28] sm:$0xff]
  %v104 = vld [vmem:[%s0 + $0x30] sm:$0xff]
  %112 = vrot.lane.b32.xlu0 %v98, 41
  %v113 = vpop.permute.xlu0 %112
  %114 = vrot.lane.b32.xlu0 %v99, 41
  %v115 = vpop.permute.xlu0 %114
  %116 = vrot.lane.b32.xlu0 %v100, 41
  %v117 = vpop.permute.xlu0 %116
  %118 = vrot.lane.b32.xlu0 %v101, 41
  %v119 = vpop.permute.xlu0 %118
  %120 = vrot.lane.b32.xlu0 %v102, 41
  %v121 = vpop.permute.xlu0 %120
  %122 = vrot.lane.b32.xlu0 %v103, 41
  %v123 = vpop.permute.xlu0 %122
  %124 = vrot.lane.b32.xlu0 %v104, 41
  %v125 = vpop.permute.xlu0 %124
  %vm126 = vcmask 334848
  %v127 = vsel %vm126, %v113, %v115
  %v128 = vsel %vm126, %v115, %v117
  %v129 = vsel %vm126, %v117, %v119
  %v130 = vsel %vm126, %v119, %v121
  %v131 = vsel %vm126, %v121, %v123
  %v132 = vsel %vm126, %v123, %v125
  %140 = vst [vmem:[#allocation3 + $0x5b0] sm:$0xff] %v127
  %141 = vst [vmem:[#allocation3 + $0x5b8] sm:$0xff] %v128
  %142 = vst [vmem:[#allocation3 + $0x5c0] sm:$0xff] %v129
  %143 = vst [vmem:[#allocation3 + $0x5c8] sm:$0xff] %v130
  %144 = vst [vmem:[#allocation3 + $0x5d0] sm:$0xff] %v131
  %145 = vst [vmem:[#allocation3 + $0x5d8] sm:$0xff] %v132
  %146 = vst.msk [vmem:[#allocation3 + $0x5e0] sm:$0xff] %vm96, %v125
  %v147 = vld [vmem:[%s0] sm:$0xff]
  %v148 = vld [vmem:[%s0 + $0x8] sm:$0xff]
  %v149 = vld [vmem:[%s0 + $0x10] sm:$0xff]
  %v150 = vld [vmem:[%s0 + $0x18] sm:$0xff]
  %v151 = vld [vmem:[%s0 + $0x20] sm:$0xff]
  %v152 = vld [vmem:[%s0 + $0x28] sm:$0xff]
  %v153 = vld [vmem:[%s0 + $0x30] sm:$0xff]
  %161 = vrot.lane.b32.xlu0 %v147, 40
  %v162 = vpop.permute.xlu0 %161
  %163 = vrot.lane.b32.xlu0 %v148, 40
  %v164 = vpop.permute.xlu0 %163
  %165 = vrot.lane.b32.xlu0 %v149, 40
  %v166 = vpop.permute.xlu0 %165
  %167 = vrot.lane.b32.xlu0 %v150, 40
  %v168 = vpop.permute.xlu0 %167
  %169 = vrot.lane.b32.xlu0 %v151, 40
  %v170 = vpop.permute.xlu0 %169
  %171 = vrot.lane.b32.xlu0 %v152, 40
  %v172 = vpop.permute.xlu0 %171
  %173 = vrot.lane.b32.xlu0 %v153, 40
  %v174 = vpop.permute.xlu0 %173
  %vm175 = vcmask 326656
  %v176 = vsel %vm175, %v162, %v164
  %v177 = vsel %vm175, %v164, %v166
  %v178 = vsel %vm175, %v166, %v168
  %v179 = vsel %vm175, %v168, %v170
  %v180 = vsel %vm175, %v170, %v172
  %v181 = vsel %vm175, %v172, %v174
  %189 = vst [vmem:[#allocation3 + $0x5e8] sm:$0xff] %v176
  %190 = vst [vmem:[#allocation3 + $0x5f0] sm:$0xff] %v177
  %191 = vst [vmem:[#allocation3 + $0x5f8] sm:$0xff] %v178
  %192 = vst [vmem:[#allocation3 + $0x600] sm:$0xff] %v179
  %193 = vst [vmem:[#allocation3 + $0x608] sm:$0xff] %v180
  %194 = vst [vmem:[#allocation3 + $0x610] sm:$0xff] %v181
  %195 = vst.msk [vmem:[#allocation3 + $0x618] sm:$0xff] %vm96, %v174
  %v196 = vld [vmem:[%s0] sm:$0xff]
  %v197 = vld [vmem:[%s0 + $0x8] sm:$0xff]
  %v198 = vld [vmem:[%s0 + $0x10] sm:$0xff]
  %v199 = vld [vmem:[%s0 + $0x18] sm:$0xff]
  %v200 = vld [vmem:[%s0 + $0x20] sm:$0xff]
  %v201 = vld [vmem:[%s0 + $0x28] sm:$0xff]
  %v202 = vld [vmem:[%s0 + $0x30] sm:$0xff]
  %210 = vrot.lane.b32.xlu0 %v196, 39
  %v211 = vpop.permute.xlu0 %210
  %212 = vrot.lane.b32.xlu0 %v197, 39
  %v213 = vpop.permute.xlu0 %212
  %214 = vrot.lane.b32.xlu0 %v198, 39
  %v215 = vpop.permute.xlu0 %214
  %216 = vrot.lane.b32.xlu0 %v199, 39
  %v217 = vpop.permute.xlu0 %216
  %218 = vrot.lane.b32.xlu0 %v200, 39
  %v219 = vpop.permute.xlu0 %218
  %220 = vrot.lane.b32.xlu0 %v201, 39
  %v221 = vpop.permute.xlu0 %220
  %222 = vrot.lane.b32.xlu0 %v202, 39
  %v223 = vpop.permute.xlu0 %222
  %vm224 = vcmask 318464
  %v225 = vsel %vm224, %v211, %v213
  %v226 = vsel %vm224, %v213, %v215
  %v227 = vsel %vm224, %v215, %v217
  %v228 = vsel %vm224, %v217, %v219
  %v229 = vsel %vm224, %v219, %v221
  %v230 = vsel %vm224, %v221, %v223
  %238 = vst [vmem:[#allocation3 + $0x620] sm:$0xff] %v225
  %239 = vst [vmem:[#allocation3 + $0x628] sm:$0xff] %v226
  %240 = vst [vmem:[#allocation3 + $0x630] sm:$0xff] %v227
  %241 = vst [vmem:[#allocation3 + $0x638] sm:$0xff] %v228
  %242 = vst [vmem:[#allocation3 + $0x640] sm:$0xff] %v229
  %243 = vst [vmem:[#allocation3 + $0x648] sm:$0xff] %v230
  %244 = vst.msk [vmem:[#allocation3 + $0x650] sm:$0xff] %vm96, %v223
  %v245 = vld [vmem:[%s0] sm:$0xff]
  %v246 = vld [vmem:[%s0 + $0x8] sm:$0xff]
  %v247 = vld [vmem:[%s0 + $0x10] sm:$0xff]
  %v248 = vld [vmem:[%s0 + $0x18] sm:$0xff]
  %v249 = vld [vmem:[%s0 + $0x20] sm:$0xff]
  %v250 = vld [vmem:[%s0 + $0x28] sm:$0xff]
  %v251 = vld [vmem:[%s0 + $0x30] sm:$0xff]
  %259 = vrot.lane.b32.xlu0 %v245, 38
  %v260 = vpop.permute.xlu0 %259
  %261 = vrot.lane.b32.xlu0 %v246, 38
  %v262 = vpop.permute.xlu0 %261
  %263 = vrot.lane.b32.xlu0 %v247, 38
  %v264 = vpop.permute.xlu0 %263
  %265 = vrot.lane.b32.xlu0 %v248, 38
  %v266 = vpop.permute.xlu0 %265
  %267 = vrot.lane.b32.xlu0 %v249, 38
  %v268 = vpop.permute.xlu0 %267
  %269 = vrot.lane.b32.xlu0 %v250, 38
  %v270 = vpop.permute.xlu0 %269
  %271 = vrot.lane.b32.xlu0 %v251, 38
  %v272 = vpop.permute.xlu0 %271
  %vm273 = vcmask 310272
  %v274 = vsel %vm273, %v260, %v262
  %v275 = vsel %vm273, %v262, %v264
  %v276 = vsel %vm273, %v264, %v266
  %v277 = vsel %vm273, %v266, %v268
  %v278 = vsel %vm273, %v268, %v270
  %v279 = vsel %vm273, %v270, %v272
  %287 = vst [vmem:[#allocation3 + $0x658] sm:$0xff] %v274
  %288 = vst [vmem:[#allocation3 + $0x660] sm:$0xff] %v275
  %289 = vst [vmem:[#allocation3 + $0x668] sm:$0xff] %v276
  %290 = vst [vmem:[#allocation3 + $0x670] sm:$0xff] %v277
  %291 = vst [vmem:[#allocation3 + $0x678] sm:$0xff] %v278
  %292 = vst [vmem:[#allocation3 + $0x680] sm:$0xff] %v279
  %293 = vst.msk [vmem:[#allocation3 + $0x688] sm:$0xff] %vm96, %v272
  %v294 = vld [vmem:[%s0] sm:$0xff]
  %v295 = vld [vmem:[%s0 + $0x8] sm:$0xff]
  %v296 = vld [vmem:[%s0 + $0x10] sm:$0xff]
  %v297 = vld [vmem:[%s0 + $0x18] sm:$0xff]
  %v298 = vld [vmem:[%s0 + $0x20] sm:$0xff]
  %v299 = vld [vmem:[%s0 + $0x28] sm:$0xff]
  %v300 = vld [vmem:[%s0 + $0x30] sm:$0xff]
  %v301 = vld [vmem:[%s0 + $0x38] sm:$0xff]
  %310 = vrot.lane.b32.xlu0 %v294, 22
  %v311 = vpop.permute.xlu0 %310
  %312 = vrot.lane.b32.xlu0 %v295, 22
  %v313 = vpop.permute.xlu0 %312
  %314 = vrot.lane.b32.xlu0 %v296, 22
  %v315 = vpop.permute.xlu0 %314
  %316 = vrot.lane.b32.xlu0 %v297, 22
  %v317 = vpop.permute.xlu0 %316
  %318 = vrot.lane.b32.xlu0 %v298, 22
  %v319 = vpop.permute.xlu0 %318
  %320 = vrot.lane.b32.xlu0 %v299, 22
  %v321 = vpop.permute.xlu0 %320
  %322 = vrot.lane.b32.xlu0 %v300, 22
  %v323 = vpop.permute.xlu0 %322
  %324 = vrot.lane.b32.xlu0 %v301, 22
  %v325 = vpop.permute.xlu0 %324
  %vm326 = vcmask 179200
  %v327 = vsel %vm326, %v311, %v313
  %v328 = vsel %vm326, %v313, %v315
  %v329 = vsel %vm326, %v315, %v317
  %v330 = vsel %vm326, %v317, %v319
  %v331 = vsel %vm326, %v319, %v321
  %v332 = vsel %vm326, %v321, %v323
  %v333 = vsel %vm326, %v323, %v325
  %341 = vst [vmem:[#allocation3 + $0x690] sm:$0xff] %v327
  %342 = vst [vmem:[#allocation3 + $0x698] sm:$0xff] %v328
  %343 = vst [vmem:[#allocation3 + $0x6a0] sm:$0xff] %v329
  %344 = vst [vmem:[#allocation3 + $0x6a8] sm:$0xff] %v330
  %345 = vst [vmem:[#allocation3 + $0x6b0] sm:$0xff] %v331
  %346 = vst [vmem:[#allocation3 + $0x6b8] sm:$0xff] %v332
  %347 = vst.msk [vmem:[#allocation3 + $0x6c0] sm:$0xff] %vm96, %v333
  %v348 = vld [vmem:[%s0] sm:$0xff]
  %v349 = vld [vmem:[%s0 + $0x8] sm:$0xff]
  %v350 = vld [vmem:[%s0 + $0x10] sm:$0xff]
  %v351 = vld [vmem:[%s0 + $0x18] sm:$0xff]
  %v352 = vld [vmem:[%s0 + $0x20] sm:$0xff]
  %v353 = vld [vmem:[%s0 + $0x28] sm:$0xff]
  %v354 = vld [vmem:[%s0 + $0x30] sm:$0xff]
  %v355 = vld [vmem:[%s0 + $0x38] sm:$0xff]
  %364 = vrot.lane.b32.xlu0 %v348, 21
  %v365 = vpop.permute.xlu0 %364
  %366 = vrot.lane.b32.xlu0 %v349, 21
  %v367 = vpop.permute.xlu0 %366
  %368 = vrot.lane.b32.xlu0 %v350, 21
  %v369 = vpop.permute.xlu0 %368
  %370 = vrot.lane.b32.xlu0 %v351, 21
  %v371 = vpop.permute.xlu0 %370
  %372 = vrot.lane.b32.xlu0 %v352, 21
  %v373 = vpop.permute.xlu0 %372
  %374 = vrot.lane.b32.xlu0 %v353, 21
  %v375 = vpop.permute.xlu0 %374
  %376 = vrot.lane.b32.xlu0 %v354, 21
  %v377 = vpop.permute.xlu0 %376
  %378 = vrot.lane.b32.xlu0 %v355, 21
  %v379 = vpop.permute.xlu0 %378
  %vm380 = vcmask 171008
  %v381 = vsel %vm380, %v365, %v367
  %v382 = vsel %vm380, %v367, %v369
  %v383 = vsel %vm380, %v369, %v371
  %v384 = vsel %vm380, %v371, %v373
  %v385 = vsel %vm380, %v373, %v375
  %v386 = vsel %vm380, %v375, %v377
  %v387 = vsel %vm380, %v377, %v379
  %395 = vst [vmem:[#allocation3 + $0x6c8] sm:$0xff] %v381
  %396 = vst [vmem:[#allocation3 + $0x6d0] sm:$0xff] %v382
  %397 = vst [vmem:[#allocation3 + $0x6d8] sm:$0xff] %v383
  %398 = vst [vmem:[#allocation3 + $0x6e0] sm:$0xff] %v384
  %399 = vst [vmem:[#allocation3 + $0x6e8] sm:$0xff] %v385
  %400 = vst [vmem:[#allocation3 + $0x6f0] sm:$0xff] %v386
  %401 = vst.msk [vmem:[#allocation3 + $0x6f8] sm:$0xff] %vm96, %v387
  %v402 = vld [vmem:[%s0] sm:$0xff]
  %v403 = vld [vmem:[%s0 + $0x8] sm:$0xff]
  %v404 = vld [vmem:[%s0 + $0x10] sm:$0xff]
  %v405 = vld [vmem:[%s0 + $0x18] sm:$0xff]
  %v406 = vld [vmem:[%s0 + $0x20] sm:$0xff]
  %v407 = vld [vmem:[%s0 + $0x28] sm:$0xff]
  %v408 = vld [vmem:[%s0 + $0x30] sm:$0xff]
  %v409 = vld [vmem:[%s0 + $0x38] sm:$0xff]
  %418 = vrot.lane.b32.xlu0 %v402, 20
  %v419 = vpop.permute.xlu0 %418
  %420 = vrot.lane.b32.xlu0 %v403, 20
  %v421 = vpop.permute.xlu0 %420
  %422 = vrot.lane.b32.xlu0 %v404, 20
  %v423 = vpop.permute.xlu0 %422
  %424 = vrot.lane.b32.xlu0 %v405, 20
  %v425 = vpop.permute.xlu0 %424
  %426 = vrot.lane.b32.xlu0 %v406, 20
  %v427 = vpop.permute.xlu0 %426
  %428 = vrot.lane.b32.xlu0 %v407, 20
  %v429 = vpop.permute.xlu0 %428
  %430 = vrot.lane.b32.xlu0 %v408, 20
  %v431 = vpop.permute.xlu0 %430
  %432 = vrot.lane.b32.xlu0 %v409, 20
  %v433 = vpop.permute.xlu0 %432
  %vm434 = vcmask 162816
  %v435 = vsel %vm434, %v419, %v421
  %v436 = vsel %vm434, %v421, %v423
  %v437 = vsel %vm434, %v423, %v425
  %v438 = vsel %vm434, %v425, %v427
  %v439 = vsel %vm434, %v427, %v429
  %v440 = vsel %vm434, %v429, %v431
  %v441 = vsel %vm434, %v431, %v433
  %449 = vst [vmem:[#allocation3 + $0x700] sm:$0xff] %v435
  %450 = vst [vmem:[#allocation3 + $0x708] sm:$0xff] %v436
  %451 = vst [vmem:[#allocation3 + $0x710] sm:$0xff] %v437
  %452 = vst [vmem:[#allocation3 + $0x718] sm:$0xff] %v438
  %453 = vst [vmem:[#allocation3 + $0x720] sm:$0xff] %v439
  %454 = vst [vmem:[#allocation3 + $0x728] sm:$0xff] %v440
  %455 = vst.msk [vmem:[#allocation3 + $0x730] sm:$0xff] %vm96, %v441
  %v456 = vld [vmem:[%s0] sm:$0xff]
  %v457 = vld [vmem:[%s0 + $0x8] sm:$0xff]
  %v458 = vld [vmem:[%s0 + $0x10] sm:$0xff]
  %v459 = vld [vmem:[%s0 + $0x18] sm:$0xff]
  %v460 = vld [vmem:[%s0 + $0x20] sm:$0xff]
  %v461 = vld [vmem:[%s0 + $0x28] sm:$0xff]
  %v462 = vld [vmem:[%s0 + $0x30] sm:$0xff]
  %v463 = vld [vmem:[%s0 + $0x38] sm:$0xff]
  %472 = vrot.lane.b32.xlu0 %v456, 19
  %v473 = vpop.permute.xlu0 %472
  %474 = vrot.lane.b32.xlu0 %v457, 19
  %v475 = vpop.permute.xlu0 %474
  %476 = vrot.lane.b32.xlu0 %v458, 19
  %v477 = vpop.permute.xlu0 %476
  %478 = vrot.lane.b32.xlu0 %v459, 19
  %v479 = vpop.permute.xlu0 %478
  %480 = vrot.lane.b32.xlu0 %v460, 19
  %v481 = vpop.permute.xlu0 %480
  %482 = vrot.lane.b32.xlu0 %v461, 19
  %v483 = vpop.permute.xlu0 %482
  %484 = vrot.lane.b32.xlu0 %v462, 19
  %v485 = vpop.permute.xlu0 %484
  %486 = vrot.lane.b32.xlu0 %v463, 19
  %v487 = vpop.permute.xlu0 %486
  %vm488 = vcmask 154624
  %v489 = vsel %vm488, %v473, %v475
  %v490 = vsel %vm488, %v475, %v477
  %v491 = vsel %vm488, %v477, %v479
  %v492 = vsel %vm488, %v479, %v481
  %v493 = vsel %vm488, %v481, %v483
  %v494 = vsel %vm488, %v483, %v485
  %v495 = vsel %vm488, %v485, %v487
  %503 = vst [vmem:[#allocation3 + $0x738] sm:$0xff] %v489
  %504 = vst [vmem:[#allocation3 + $0x740] sm:$0xff] %v490
  %505 = vst [vmem:[#allocation3 + $0x748] sm:$0xff] %v491
  %506 = vst [vmem:[#allocation3 + $0x750] sm:$0xff] %v492
  %507 = vst [vmem:[#allocation3 + $0x758] sm:$0xff] %v493
  %508 = vst [vmem:[#allocation3 + $0x760] sm:$0xff] %v494
  %509 = vst.msk [vmem:[#allocation3 + $0x768] sm:$0xff] %vm96, %v495
  %v510 = vld [vmem:[%s0] sm:$0xff]
  %v511 = vld [vmem:[%s0 + $0x8] sm:$0xff]
  %v512 = vld [vmem:[%s0 + $0x10] sm:$0xff]
  %v513 = vld [vmem:[%s0 + $0x18] sm:$0xff]
  %v514 = vld [vmem:[%s0 + $0x20] sm:$0xff]
  %v515 = vld [vmem:[%s0 + $0x28] sm:$0xff]
  %v516 = vld [vmem:[%s0 + $0x30] sm:$0xff]
  %v517 = vld [vmem:[%s0 + $0x38] sm:$0xff]
  %526 = vrot.lane.b32.xlu0 %v510, 18
  %v527 = vpop.permute.xlu0 %526
  %528 = vrot.lane.b32.xlu0 %v511, 18
  %v529 = vpop.permute.xlu0 %528
  %530 = vrot.lane.b32.xlu0 %v512, 18
  %v531 = vpop.permute.xlu0 %530
  %532 = vrot.lane.b32.xlu0 %v513, 18
  %v533 = vpop.permute.xlu0 %532
  %534 = vrot.lane.b32.xlu0 %v514, 18
  %v535 = vpop.permute.xlu0 %534
  %536 = vrot.lane.b32.xlu0 %v515, 18
  %v537 = vpop.permute.xlu0 %536
  %538 = vrot.lane.b32.xlu0 %v516, 18
  %v539 = vpop.permute.xlu0 %538
  %540 = vrot.lane.b32.xlu0 %v517, 18
  %v541 = vpop.permute.xlu0 %540
  %vm542 = vcmask 146432
  %v543 = vsel %vm542, %v527, %v529
  %v544 = vsel %vm542, %v529, %v531
  %v545 = vsel %vm542, %v531, %v533
  %v546 = vsel %vm542, %v533, %v535
  %v547 = vsel %vm542, %v535, %v537
  %v548 = vsel %vm542, %v537, %v539
  %v549 = vsel %vm542, %v539, %v541
  %557 = vst [vmem:[#allocation3 + $0x770] sm:$0xff] %v543
  %558 = vst [vmem:[#allocation3 + $0x778] sm:$0xff] %v544
  %559 = vst [vmem:[#allocation3 + $0x780] sm:$0xff] %v545
  %560 = vst [vmem:[#allocation3 + $0x788] sm:$0xff] %v546
  %561 = vst [vmem:[#allocation3 + $0x790] sm:$0xff] %v547
  %562 = vst [vmem:[#allocation3 + $0x798] sm:$0xff] %v548
  %563 = vst.msk [vmem:[#allocation3 + $0x7a0] sm:$0xff] %vm96, %v549
  %v564 = vld [vmem:[%s0] sm:$0xff]
  %v565 = vld [vmem:[%s0 + $0x8] sm:$0xff]
  %v566 = vld [vmem:[%s0 + $0x10] sm:$0xff]
  %v567 = vld [vmem:[%s0 + $0x18] sm:$0xff]
  %v568 = vld [vmem:[%s0 + $0x20] sm:$0xff]
  %v569 = vld [vmem:[%s0 + $0x28] sm:$0xff]
  %v570 = vld [vmem:[%s0 + $0x30] sm:$0xff]
  %v571 = vld [vmem:[%s0 + $0x38] sm:$0xff]
  %580 = vrot.lane.b32.xlu0 %v564, 2
  %v581 = vpop.permute.xlu0 %580
  %582 = vrot.lane.b32.xlu0 %v565, 2
  %v583 = vpop.permute.xlu0 %582
  %584 = vrot.lane.b32.xlu0 %v566, 2
  %v585 = vpop.permute.xlu0 %584
  %586 = vrot.lane.b32.xlu0 %v567, 2
  %v587 = vpop.permute.xlu0 %586
  %588 = vrot.lane.b32.xlu0 %v568, 2
  %v589 = vpop.permute.xlu0 %588
  %590 = vrot.lane.b32.xlu0 %v569, 2
  %v591 = vpop.permute.xlu0 %590
  %592 = vrot.lane.b32.xlu0 %v570, 2
  %v593 = vpop.permute.xlu0 %592
  %594 = vrot.lane.b32.xlu0 %v571, 2
  %v595 = vpop.permute.xlu0 %594
  %vm596 = vcmask 15360
  %v597 = vsel %vm596, %v581, %v583
  %v598 = vsel %vm596, %v583, %v585
  %v599 = vsel %vm596, %v585, %v587
  %v600 = vsel %vm596, %v587, %v589
  %v601 = vsel %vm596, %v589, %v591
  %v602 = vsel %vm596, %v591, %v593
  %v603 = vsel %vm596, %v593, %v595
  %611 = vst [vmem:[#allocation3 + $0x7a8] sm:$0xff] %v597
  %612 = vst [vmem:[#allocation3 + $0x7b0] sm:$0xff] %v598
  %613 = vst [vmem:[#allocation3 + $0x7b8] sm:$0xff] %v599
  %614 = vst [vmem:[#allocation3 + $0x7c0] sm:$0xff] %v600
  %615 = vst [vmem:[#allocation3 + $0x7c8] sm:$0xff] %v601
  %616 = vst [vmem:[#allocation3 + $0x7d0] sm:$0xff] %v602
  %617 = vst.msk [vmem:[#allocation3 + $0x7d8] sm:$0xff] %vm96, %v603
  %v618 = vld [vmem:[%s0] sm:$0xff]
  %v619 = vld [vmem:[%s0 + $0x8] sm:$0xff]
  %v620 = vld [vmem:[%s0 + $0x10] sm:$0xff]
  %v621 = vld [vmem:[%s0 + $0x18] sm:$0xff]
  %v622 = vld [vmem:[%s0 + $0x20] sm:$0xff]
  %v623 = vld [vmem:[%s0 + $0x28] sm:$0xff]
  %v624 = vld [vmem:[%s0 + $0x30] sm:$0xff]
  %v625 = vld [vmem:[%s0 + $0x38] sm:$0xff]
  %634 = vrot.lane.b32.xlu0 %v618, 1
  %v635 = vpop.permute.xlu0 %634
  %636 = vrot.lane.b32.xlu0 %v619, 1
  %v637 = vpop.permute.xlu0 %636
  %638 = vrot.lane.b32.xlu0 %v620, 1
  %v639 = vpop.permute.xlu0 %638
  %640 = vrot.lane.b32.xlu0 %v621, 1
  %v641 = vpop.permute.xlu0 %640
  %642 = vrot.lane.b32.xlu0 %v622, 1
  %v643 = vpop.permute.xlu0 %642
  %644 = vrot.lane.b32.xlu0 %v623, 1
  %v645 = vpop.permute.xlu0 %644
  %646 = vrot.lane.b32.xlu0 %v624, 1
  %v647 = vpop.permute.xlu0 %646
  %648 = vrot.lane.b32.xlu0 %v625, 1
  %v649 = vpop.permute.xlu0 %648
  %vm650 = vcmask 7168
  %v651 = vsel %vm650, %v635, %v637
  %v652 = vsel %vm650, %v637, %v639
  %v653 = vsel %vm650, %v639, %v641
  %v654 = vsel %vm650, %v641, %v643
  %v655 = vsel %vm650, %v643, %v645
  %v656 = vsel %vm650, %v645, %v647
  %v657 = vsel %vm650, %v647, %v649
  %665 = vst [vmem:[#allocation3 + $0x7e0] sm:$0xff] %v651
  %666 = vst [vmem:[#allocation3 + $0x7e8] sm:$0xff] %v652
  %667 = vst [vmem:[#allocation3 + $0x7f0] sm:$0xff] %v653
  %668 = vst [vmem:[#allocation3 + $0x7f8] sm:$0xff] %v654
  %669 = vst [vmem:[#allocation3 + $0x800] sm:$0xff] %v655
  %670 = vst [vmem:[#allocation3 + $0x808] sm:$0xff] %v656
  %671 = vst.msk [vmem:[#allocation3 + $0x810] sm:$0xff] %vm96, %v657
  %v672 = vld [vmem:[%s0 + $0x8] sm:$0xff]
  %v673 = vld [vmem:[%s0 + $0x10] sm:$0xff]
  %v674 = vld [vmem:[%s0 + $0x18] sm:$0xff]
  %v675 = vld [vmem:[%s0 + $0x20] sm:$0xff]
  %v676 = vld [vmem:[%s0 + $0x28] sm:$0xff]
  %v677 = vld [vmem:[%s0 + $0x30] sm:$0xff]
  %v678 = vld [vmem:[%s0 + $0x38] sm:$0xff]
  %679 = vst [vmem:[#allocation3 + $0x818] sm:$0xff] %v672
  %680 = vst [vmem:[#allocation3 + $0x820] sm:$0xff] %v673
  %681 = vst [vmem:[#allocation3 + $0x828] sm:$0xff] %v674
  %682 = vst [vmem:[#allocation3 + $0x830] sm:$0xff] %v675
  %683 = vst [vmem:[#allocation3 + $0x838] sm:$0xff] %v676
  %684 = vst [vmem:[#allocation3 + $0x840] sm:$0xff] %v677
  %685 = vst.msk [vmem:[#allocation3 + $0x848] sm:$0xff] %vm96, %v678
  %v686 = vld [vmem:[%s0 + $0x8] sm:$0xff]
  %v687 = vld [vmem:[%s0 + $0x10] sm:$0xff]
  %v688 = vld [vmem:[%s0 + $0x18] sm:$0xff]
  %v689 = vld [vmem:[%s0 + $0x20] sm:$0xff]
  %v690 = vld [vmem:[%s0 + $0x28] sm:$0xff]
  %v691 = vld [vmem:[%s0 + $0x30] sm:$0xff]
  %v692 = vld [vmem:[%s0 + $0x38] sm:$0xff]
  %700 = vrot.lane.b32.xlu0 %v686, 127
  %v701 = vpop.permute.xlu0 %700
  %702 = vrot.lane.b32.xlu0 %v687, 127
  %v703 = vpop.permute.xlu0 %702
  %704 = vrot.lane.b32.xlu0 %v688, 127
  %v705 = vpop.permute.xlu0 %704
  %706 = vrot.lane.b32.xlu0 %v689, 127
  %v707 = vpop.permute.xlu0 %706
  %708 = vrot.lane.b32.xlu0 %v690, 127
  %v709 = vpop.permute.xlu0 %708
  %710 = vrot.lane.b32.xlu0 %v691, 127
  %v711 = vpop.permute.xlu0 %710
  %712 = vrot.lane.b32.xlu0 %v692, 127
  %v713 = vpop.permute.xlu0 %712
  %vm714 = vcmask 1039360
  %v715 = vsel %vm714, %v701, %v703
  %v716 = vsel %vm714, %v703, %v705
  %v717 = vsel %vm714, %v705, %v707
  %v718 = vsel %vm714, %v707, %v709
  %v719 = vsel %vm714, %v709, %v711
  %v720 = vsel %vm714, %v711, %v713
  %728 = vst [vmem:[#allocation3 + $0x850] sm:$0xff] %v715
  %729 = vst [vmem:[#allocation3 + $0x858] sm:$0xff] %v716
  %730 = vst [vmem:[#allocation3 + $0x860] sm:$0xff] %v717
  %731 = vst [vmem:[#allocation3 + $0x868] sm:$0xff] %v718
  %732 = vst [vmem:[#allocation3 + $0x870] sm:$0xff] %v719
  %733 = vst [vmem:[#allocation3 + $0x878] sm:$0xff] %v720
  %734 = vst.msk [vmem:[#allocation3 + $0x880] sm:$0xff] %vm96, %v713
  %v735 = vld [vmem:[%s0 + $0x8] sm:$0xff]
  %v736 = vld [vmem:[%s0 + $0x10] sm:$0xff]
  %v737 = vld [vmem:[%s0 + $0x18] sm:$0xff]
  %v738 = vld [vmem:[%s0 + $0x20] sm:$0xff]
  %v739 = vld [vmem:[%s0 + $0x28] sm:$0xff]
  %v740 = vld [vmem:[%s0 + $0x30] sm:$0xff]
  %v741 = vld [vmem:[%s0 + $0x38] sm:$0xff]
  %749 = vrot.lane.b32.xlu0 %v735, 126
  %v750 = vpop.permute.xlu0 %749
  %751 = vrot.lane.b32.xlu0 %v736, 126
  %v752 = vpop.permute.xlu0 %751
  %753 = vrot.lane.b32.xlu0 %v737, 126
  %v754 = vpop.permute.xlu0 %753
  %755 = vrot.lane.b32.xlu0 %v738, 126
  %v756 = vpop.permute.xlu0 %755
  %757 = vrot.lane.b32.xlu0 %v739, 126
  %v758 = vpop.permute.xlu0 %757
  %759 = vrot.lane.b32.xlu0 %v740, 126
  %v760 = vpop.permute.xlu0 %759
  %761 = vrot.lane.b32.xlu0 %v741, 126
  %v762 = vpop.permute.xlu0 %761
  %vm763 = vcmask 1031168
  %v764 = vsel %vm763, %v750, %v752
  %v765 = vsel %vm763, %v752, %v754
  %v766 = vsel %vm763, %v754, %v756
  %v767 = vsel %vm763, %v756, %v758
  %v768 = vsel %vm763, %v758, %v760
  %v769 = vsel %vm763, %v760, %v762
  %777 = vst [vmem:[#allocation3 + $0x888] sm:$0xff] %v764
  %778 = vst [vmem:[#allocation3 + $0x890] sm:$0xff] %v765
  %779 = vst [vmem:[#allocation3 + $0x898] sm:$0xff] %v766
  %780 = vst [vmem:[#allocation3 + $0x8a0] sm:$0xff] %v767
  %781 = vst [vmem:[#allocation3 + $0x8a8] sm:$0xff] %v768
  %782 = vst [vmem:[#allocation3 + $0x8b0] sm:$0xff] %v769
  %783 = vst.msk [vmem:[#allocation3 + $0x8b8] sm:$0xff] %vm96, %v762
  %v784 = vld [vmem:[%s0 + $0x8] sm:$0xff]
  %v785 = vld [vmem:[%s0 + $0x10] sm:$0xff]
  %v786 = vld [vmem:[%s0 + $0x18] sm:$0xff]
  %v787 = vld [vmem:[%s0 + $0x20] sm:$0xff]
  %v788 = vld [vmem:[%s0 + $0x28] sm:$0xff]
  %v789 = vld [vmem:[%s0 + $0x30] sm:$0xff]
  %v790 = vld [vmem:[%s0 + $0x38] sm:$0xff]
  %798 = vrot.lane.b32.xlu0 %v784, 110
  %v799 = vpop.permute.xlu0 %798
  %800 = vrot.lane.b32.xlu0 %v785, 110
  %v801 = vpop.permute.xlu0 %800
  %802 = vrot.lane.b32.xlu0 %v786, 110
  %v803 = vpop.permute.xlu0 %802
  %804 = vrot.lane.b32.xlu0 %v787, 110
  %v805 = vpop.permute.xlu0 %804
  %806 = vrot.lane.b32.xlu0 %v788, 110
  %v807 = vpop.permute.xlu0 %806
  %808 = vrot.lane.b32.xlu0 %v789, 110
  %v809 = vpop.permute.xlu0 %808
  %810 = vrot.lane.b32.xlu0 %v790, 110
  %v811 = vpop.permute.xlu0 %810
  %vm812 = vcmask 900096
  %v813 = vsel %vm812, %v799, %v801
  %v814 = vsel %vm812, %v801, %v803
  %v815 = vsel %vm812, %v803, %v805
  %v816 = vsel %vm812, %v805, %v807
  %v817 = vsel %vm812, %v807, %v809
  %v818 = vsel %vm812, %v809, %v811
  %826 = vst [vmem:[#allocation3 + $0x8c0] sm:$0xff] %v813
  %827 = vst [vmem:[#allocation3 + $0x8c8] sm:$0xff] %v814
  %828 = vst [vmem:[#allocation3 + $0x8d0] sm:$0xff] %v815
  %829 = vst [vmem:[#allocation3 + $0x8d8] sm:$0xff] %v816
  %830 = vst [vmem:[#allocation3 + $0x8e0] sm:$0xff] %v817
  %831 = vst [vmem:[#allocation3 + $0x8e8] sm:$0xff] %v818
  %832 = vst.msk [vmem:[#allocation3 + $0x8f0] sm:$0xff] %vm96, %v811
  %v833 = vld [vmem:[%s0 + $0x8] sm:$0xff]
  %v834 = vld [vmem:[%s0 + $0x10] sm:$0xff]
  %v835 = vld [vmem:[%s0 + $0x18] sm:$0xff]
  %v836 = vld [vmem:[%s0 + $0x20] sm:$0xff]
  %v837 = vld [vmem:[%s0 + $0x28] sm:$0xff]
  %v838 = vld [vmem:[%s0 + $0x30] sm:$0xff]
  %v839 = vld [vmem:[%s0 + $0x38] sm:$0xff]
  %847 = vrot.lane.b32.xlu0 %v833, 109
  %v848 = vpop.permute.xlu0 %847
  %849 = vrot.lane.b32.xlu0 %v834, 109
  %v850 = vpop.permute.xlu0 %849
  %851 = vrot.lane.b32.xlu0 %v835, 109
  %v852 = vpop.permute.xlu0 %851
  %853 = vrot.lane.b32.xlu0 %v836, 109
  %v854 = vpop.permute.xlu0 %853
  %855 = vrot.lane.b32.xlu0 %v837, 109
  %v856 = vpop.permute.xlu0 %855
  %857 = vrot.lane.b32.xlu0 %v838, 109
  %v858 = vpop.permute.xlu0 %857
  %859 = vrot.lane.b32.xlu0 %v839, 109
  %v860 = vpop.permute.xlu0 %859
  %vm861 = vcmask 891904
  %v862 = vsel %vm861, %v848, %v850
  %v863 = vsel %vm861, %v850, %v852
  %v864 = vsel %vm861, %v852, %v854
  %v865 = vsel %vm861, %v854, %v856
  %v866 = vsel %vm861, %v856, %v858
  %v867 = vsel %vm861, %v858, %v860
  %875 = vst [vmem:[#allocation3 + $0x8f8] sm:$0xff] %v862
  %876 = vst [vmem:[#allocation3 + $0x900] sm:$0xff] %v863
  %877 = vst [vmem:[#allocation3 + $0x908] sm:$0xff] %v864
  %878 = vst [vmem:[#allocation3 + $0x910] sm:$0xff] %v865
  %879 = vst [vmem:[#allocation3 + $0x918] sm:$0xff] %v866
  %880 = vst [vmem:[#allocation3 + $0x920] sm:$0xff] %v867
  %881 = vst.msk [vmem:[#allocation3 + $0x928] sm:$0xff] %vm96, %v860
  %v882 = vld [vmem:[%s0 + $0x8] sm:$0xff]
  %v883 = vld [vmem:[%s0 + $0x10] sm:$0xff]
  %v884 = vld [vmem:[%s0 + $0x18] sm:$0xff]
  %v885 = vld [vmem:[%s0 + $0x20] sm:$0xff]
  %v886 = vld [vmem:[%s0 + $0x28] sm:$0xff]
  %v887 = vld [vmem:[%s0 + $0x30] sm:$0xff]
  %v888 = vld [vmem:[%s0 + $0x38] sm:$0xff]
  %896 = vrot.lane.b32.xlu0 %v882, 108
  %v897 = vpop.permute.xlu0 %896
  %898 = vrot.lane.b32.xlu0 %v883, 108
  %v899 = vpop.permute.xlu0 %898
  %900 = vrot.lane.b32.xlu0 %v884, 108
  %v901 = vpop.permute.xlu0 %900
  %902 = vrot.lane.b32.xlu0 %v885, 108
  %v903 = vpop.permute.xlu0 %902
  %904 = vrot.lane.b32.xlu0 %v886, 108
  %v905 = vpop.permute.xlu0 %904
  %906 = vrot.lane.b32.xlu0 %v887, 108
  %v907 = vpop.permute.xlu0 %906
  %908 = vrot.lane.b32.xlu0 %v888, 108
  %v909 = vpop.permute.xlu0 %908
  %vm910 = vcmask 883712
  %v911 = vsel %vm910, %v897, %v899
  %v912 = vsel %vm910, %v899, %v901
  %v913 = vsel %vm910, %v901, %v903
  %v914 = vsel %vm910, %v903, %v905
  %v915 = vsel %vm910, %v905, %v907
  %v916 = vsel %vm910, %v907, %v909
  %924 = vst [vmem:[#allocation3 + $0x930] sm:$0xff] %v911
  %925 = vst [vmem:[#allocation3 + $0x938] sm:$0xff] %v912
  %926 = vst [vmem:[#allocation3 + $0x940] sm:$0xff] %v913
  %927 = vst [vmem:[#allocation3 + $0x948] sm:$0xff] %v914
  %928 = vst [vmem:[#allocation3 + $0x950] sm:$0xff] %v915
  %929 = vst [vmem:[#allocation3 + $0x958] sm:$0xff] %v916
  %930 = vst.msk [vmem:[#allocation3 + $0x960] sm:$0xff] %vm96, %v909
  %v931 = vld [vmem:[%s0 + $0x8] sm:$0xff]
  %v932 = vld [vmem:[%s0 + $0x10] sm:$0xff]
  %v933 = vld [vmem:[%s0 + $0x18] sm:$0xff]
  %v934 = vld [vmem:[%s0 + $0x20] sm:$0xff]
  %v935 = vld [vmem:[%s0 + $0x28] sm:$0xff]
  %v936 = vld [vmem:[%s0 + $0x30] sm:$0xff]
  %v937 = vld [vmem:[%s0 + $0x38] sm:$0xff]
  %945 = vrot.lane.b32.xlu0 %v931, 107
  %v946 = vpop.permute.xlu0 %945
  %947 = vrot.lane.b32.xlu0 %v932, 107
  %v948 = vpop.permute.xlu0 %947
  %949 = vrot.lane.b32.xlu0 %v933, 107
  %v950 = vpop.permute.xlu0 %949
  %951 = vrot.lane.b32.xlu0 %v934, 107
  %v952 = vpop.permute.xlu0 %951
  %953 = vrot.lane.b32.xlu0 %v935, 107
  %v954 = vpop.permute.xlu0 %953
  %955 = vrot.lane.b32.xlu0 %v936, 107
  %v956 = vpop.permute.xlu0 %955
  %957 = vrot.lane.b32.xlu0 %v937, 107
  %v958 = vpop.permute.xlu0 %957
  %vm959 = vcmask 875520
  %v960 = vsel %vm959, %v946, %v948
  %v961 = vsel %vm959, %v948, %v950
  %v962 = vsel %vm959, %v950, %v952
  %v963 = vsel %vm959, %v952, %v954
  %v964 = vsel %vm959, %v954, %v956
  %v965 = vsel %vm959, %v956, %v958
  %973 = vst [vmem:[#allocation3 + $0x968] sm:$0xff] %v960
  %974 = vst [vmem:[#allocation3 + $0x970] sm:$0xff] %v961
  %975 = vst [vmem:[#allocation3 + $0x978] sm:$0xff] %v962
  %976 = vst [vmem:[#allocation3 + $0x980] sm:$0xff] %v963
  %977 = vst [vmem:[#allocation3 + $0x988] sm:$0xff] %v964
  %978 = vst [vmem:[#allocation3 + $0x990] sm:$0xff] %v965
  %979 = vst.msk [vmem:[#allocation3 + $0x998] sm:$0xff] %vm96, %v958
  %v980 = vld [vmem:[%s0 + $0x8] sm:$0xff]
  %v981 = vld [vmem:[%s0 + $0x10] sm:$0xff]
  %v982 = vld [vmem:[%s0 + $0x18] sm:$0xff]
  %v983 = vld [vmem:[%s0 + $0x20] sm:$0xff]
  %v984 = vld [vmem:[%s0 + $0x28] sm:$0xff]
  %v985 = vld [vmem:[%s0 + $0x30] sm:$0xff]
  %v986 = vld [vmem:[%s0 + $0x38] sm:$0xff]
  %994 = vrot.lane.b32.xlu0 %v980, 106
  %v995 = vpop.permute.xlu0 %994
  %996 = vrot.lane.b32.xlu0 %v981, 106
  %v997 = vpop.permute.xlu0 %996
  %998 = vrot.lane.b32.xlu0 %v982, 106
  %v999 = vpop.permute.xlu0 %998
  %1000 = vrot.lane.b32.xlu0 %v983, 106
  %v1001 = vpop.permute.xlu0 %1000
  %1002 = vrot.lane.b32.xlu0 %v984, 106
  %v1003 = vpop.permute.xlu0 %1002
  %1004 = vrot.lane.b32.xlu0 %v985, 106
  %v1005 = vpop.permute.xlu0 %1004
  %1006 = vrot.lane.b32.xlu0 %v986, 106
  %v1007 = vpop.permute.xlu0 %1006
  %vm1008 = vcmask 867328
  %v1009 = vsel %vm1008, %v995, %v997
  %v1010 = vsel %vm1008, %v997, %v999
  %v1011 = vsel %vm1008, %v999, %v1001
  %v1012 = vsel %vm1008, %v1001, %v1003
  %v1013 = vsel %vm1008, %v1003, %v1005
  %v1014 = vsel %vm1008, %v1005, %v1007
  %1022 = vst [vmem:[#allocation3 + $0x9a0] sm:$0xff] %v1009
  %1023 = vst [vmem:[#allocation3 + $0x9a8] sm:$0xff] %v1010
  %1024 = vst [vmem:[#allocation3 + $0x9b0] sm:$0xff] %v1011
  %1025 = vst [vmem:[#allocation3 + $0x9b8] sm:$0xff] %v1012
  %1026 = vst [vmem:[#allocation3 + $0x9c0] sm:$0xff] %v1013
  %1027 = vst [vmem:[#allocation3 + $0x9c8] sm:$0xff] %v1014
  %1028 = vst.msk [vmem:[#allocation3 + $0x9d0] sm:$0xff] %vm96, %v1007
  %v1029 = vld [vmem:[%s0 + $0x8] sm:$0xff]
  %v1030 = vld [vmem:[%s0 + $0x10] sm:$0xff]
  %v1031 = vld [vmem:[%s0 + $0x18] sm:$0xff]
  %v1032 = vld [vmem:[%s0 + $0x20] sm:$0xff]
  %v1033 = vld [vmem:[%s0 + $0x28] sm:$0xff]
  %v1034 = vld [vmem:[%s0 + $0x30] sm:$0xff]
  %v1035 = vld [vmem:[%s0 + $0x38] sm:$0xff]
  %1043 = vrot.lane.b32.xlu0 %v1029, 90
  %v1044 = vpop.permute.xlu0 %1043
  %1045 = vrot.lane.b32.xlu0 %v1030, 90
  %v1046 = vpop.permute.xlu0 %1045
  %1047 = vrot.lane.b32.xlu0 %v1031, 90
  %v1048 = vpop.permute.xlu0 %1047
  %1049 = vrot.lane.b32.xlu0 %v1032, 90
  %v1050 = vpop.permute.xlu0 %1049
  %1051 = vrot.lane.b32.xlu0 %v1033, 90
  %v1052 = vpop.permute.xlu0 %1051
  %1053 = vrot.lane.b32.xlu0 %v1034, 90
  %v1054 = vpop.permute.xlu0 %1053
  %1055 = vrot.lane.b32.xlu0 %v1035, 90
  %v1056 = vpop.permute.xlu0 %1055
  %vm1057 = vcmask 736256
  %v1058 = vsel %vm1057, %v1044, %v1046
  %v1059 = vsel %vm1057, %v1046, %v1048
  %v1060 = vsel %vm1057, %v1048, %v1050
  %v1061 = vsel %vm1057, %v1050, %v1052
  %v1062 = vsel %vm1057, %v1052, %v1054
  %v1063 = vsel %vm1057, %v1054, %v1056
  %1071 = vst [vmem:[#allocation3 + $0x9d8] sm:$0xff] %v1058
  %1072 = vst [vmem:[#allocation3 + $0x9e0] sm:$0xff] %v1059
  %1073 = vst [vmem:[#allocation3 + $0x9e8] sm:$0xff] %v1060
  %1074 = vst [vmem:[#allocation3 + $0x9f0] sm:$0xff] %v1061
  %1075 = vst [vmem:[#allocation3 + $0x9f8] sm:$0xff] %v1062
  %1076 = vst [vmem:[#allocation3 + $0xa00] sm:$0xff] %v1063
  %1077 = vst.msk [vmem:[#allocation3 + $0xa08] sm:$0xff] %vm96, %v1056
  %v1078 = vld [vmem:[%s0 + $0x8] sm:$0xff]
  %v1079 = vld [vmem:[%s0 + $0x10] sm:$0xff]
  %v1080 = vld [vmem:[%s0 + $0x18] sm:$0xff]
  %v1081 = vld [vmem:[%s0 + $0x20] sm:$0xff]
  %v1082 = vld [vmem:[%s0 + $0x28] sm:$0xff]
  %v1083 = vld [vmem:[%s0 + $0x30] sm:$0xff]
  %v1084 = vld [vmem:[%s0 + $0x38] sm:$0xff]
  %1092 = vrot.lane.b32.xlu0 %v1078, 89
  %v1093 = vpop.permute.xlu0 %1092
  %1094 = vrot.lane.b32.xlu0 %v1079, 89
  %v1095 = vpop.permute.xlu0 %1094
  %1096 = vrot.lane.b32.xlu0 %v1080, 89
  %v1097 = vpop.permute.xlu0 %1096
  %1098 = vrot.lane.b32.xlu0 %v1081, 89
  %v1099 = vpop.permute.xlu0 %1098
  %1100 = vrot.lane.b32.xlu0 %v1082, 89
  %v1101 = vpop.permute.xlu0 %1100
  %1102 = vrot.lane.b32.xlu0 %v1083, 89
  %v1103 = vpop.permute.xlu0 %1102
  %1104 = vrot.lane.b32.xlu0 %v1084, 89
  %v1105 = vpop.permute.xlu0 %1104
  %vm1106 = vcmask 728064
  %v1107 = vsel %vm1106, %v1093, %v1095
  %v1108 = vsel %vm1106, %v1095, %v1097
  %v1109 = vsel %vm1106, %v1097, %v1099
  %v1110 = vsel %vm1106, %v1099, %v1101
  %v1111 = vsel %vm1106, %v1101, %v1103
  %v1112 = vsel %vm1106, %v1103, %v1105
  %1120 = vst [vmem:[#allocation3 + $0xa10] sm:$0xff] %v1107
  %1121 = vst [vmem:[#allocation3 + $0xa18] sm:$0xff] %v1108
  %1122 = vst [vmem:[#allocation3 + $0xa20] sm:$0xff] %v1109
  %1123 = vst [vmem:[#allocation3 + $0xa28] sm:$0xff] %v1110
  %1124 = vst [vmem:[#allocation3 + $0xa30] sm:$0xff] %v1111
  %1125 = vst [vmem:[#allocation3 + $0xa38] sm:$0xff] %v1112
  %1126 = vst.msk [vmem:[#allocation3 + $0xa40] sm:$0xff] %vm96, %v1105
  %v1127 = vld [vmem:[%s0 + $0x8] sm:$0xff]
  %v1128 = vld [vmem:[%s0 + $0x10] sm:$0xff]
  %v1129 = vld [vmem:[%s0 + $0x18] sm:$0xff]
  %v1130 = vld [vmem:[%s0 + $0x20] sm:$0xff]
  %v1131 = vld [vmem:[%s0 + $0x28] sm:$0xff]
  %v1132 = vld [vmem:[%s0 + $0x30] sm:$0xff]
  %v1133 = vld [vmem:[%s0 + $0x38] sm:$0xff]
  %1141 = vrot.lane.b32.xlu0 %v1127, 88
  %v1142 = vpop.permute.xlu0 %1141
  %1143 = vrot.lane.b32.xlu0 %v1128, 88
  %v1144 = vpop.permute.xlu0 %1143
  %1145 = vrot.lane.b32.xlu0 %v1129, 88
  %v1146 = vpop.permute.xlu0 %1145
  %1147 = vrot.lane.b32.xlu0 %v1130, 88
  %v1148 = vpop.permute.xlu0 %1147
  %1149 = vrot.lane.b32.xlu0 %v1131, 88
  %v1150 = vpop.permute.xlu0 %1149
  %1151 = vrot.lane.b32.xlu0 %v1132, 88
  %v1152 = vpop.permute.xlu0 %1151
  %1153 = vrot.lane.b32.xlu0 %v1133, 88
  %v1154 = vpop.permute.xlu0 %1153
  %vm1155 = vcmask 719872
  %v1156 = vsel %vm1155, %v1142, %v1144
  %v1157 = vsel %vm1155, %v1144, %v1146
  %v1158 = vsel %vm1155, %v1146, %v1148
  %v1159 = vsel %vm1155, %v1148, %v1150
  %v1160 = vsel %vm1155, %v1150, %v1152
  %v1161 = vsel %vm1155, %v1152, %v1154
  %1169 = vst [vmem:[#allocation3 + $0xa48] sm:$0xff] %v1156
  %1170 = vst [vmem:[#allocation3 + $0xa50] sm:$0xff] %v1157
  %1171 = vst [vmem:[#allocation3 + $0xa58] sm:$0xff] %v1158
  %1172 = vst [vmem:[#allocation3 + $0xa60] sm:$0xff] %v1159
  %1173 = vst [vmem:[#allocation3 + $0xa68] sm:$0xff] %v1160
  %1174 = vst [vmem:[#allocation3 + $0xa70] sm:$0xff] %v1161
  %1175 = vst.msk [vmem:[#allocation3 + $0xa78] sm:$0xff] %vm96, %v1154
  %v1176 = vld [vmem:[%s0 + $0x8] sm:$0xff]
  %v1177 = vld [vmem:[%s0 + $0x10] sm:$0xff]
  %v1178 = vld [vmem:[%s0 + $0x18] sm:$0xff]
  %v1179 = vld [vmem:[%s0 + $0x20] sm:$0xff]
  %v1180 = vld [vmem:[%s0 + $0x28] sm:$0xff]
  %v1181 = vld [vmem:[%s0 + $0x30] sm:$0xff]
  %v1182 = vld [vmem:[%s0 + $0x38] sm:$0xff]
  %1190 = vrot.lane.b32.xlu0 %v1176, 87
  %v1191 = vpop.permute.xlu0 %1190
  %1192 = vrot.lane.b32.xlu0 %v1177, 87
  %v1193 = vpop.permute.xlu0 %1192
  %1194 = vrot.lane.b32.xlu0 %v1178, 87
  %v1195 = vpop.permute.xlu0 %1194
  %1196 = vrot.lane.b32.xlu0 %v1179, 87
  %v1197 = vpop.permute.xlu0 %1196
  %1198 = vrot.lane.b32.xlu0 %v1180, 87
  %v1199 = vpop.permute.xlu0 %1198
  %1200 = vrot.lane.b32.xlu0 %v1181, 87
  %v1201 = vpop.permute.xlu0 %1200
  %1202 = vrot.lane.b32.xlu0 %v1182, 87
  %v1203 = vpop.permute.xlu0 %1202
  %vm1204 = vcmask 711680
  %v1205 = vsel %vm1204, %v1191, %v1193
  %v1206 = vsel %vm1204, %v1193, %v1195
  %v1207 = vsel %vm1204, %v1195, %v1197
  %v1208 = vsel %vm1204, %v1197, %v1199
  %v1209 = vsel %vm1204, %v1199, %v1201
  %v1210 = vsel %vm1204, %v1201, %v1203
  %1218 = vst [vmem:[#allocation3 + $0xa80] sm:$0xff] %v1205
  %1219 = vst [vmem:[#allocation3 + $0xa88] sm:$0xff] %v1206
  %1220 = vst [vmem:[#allocation3 + $0xa90] sm:$0xff] %v1207
  %1221 = vst [vmem:[#allocation3 + $0xa98] sm:$0xff] %v1208
  %1222 = vst [vmem:[#allocation3 + $0xaa0] sm:$0xff] %v1209
  %1223 = vst [vmem:[#allocation3 + $0xaa8] sm:$0xff] %v1210
  %1224 = vst.msk [vmem:[#allocation3 + $0xab0] sm:$0xff] %vm96, %v1203
  %v1225 = vld [vmem:[%s0 + $0x8] sm:$0xff]
  %v1226 = vld [vmem:[%s0 + $0x10] sm:$0xff]
  %v1227 = vld [vmem:[%s0 + $0x18] sm:$0xff]
  %v1228 = vld [vmem:[%s0 + $0x20] sm:$0xff]
  %v1229 = vld [vmem:[%s0 + $0x28] sm:$0xff]
  %v1230 = vld [vmem:[%s0 + $0x30] sm:$0xff]
  %v1231 = vld [vmem:[%s0 + $0x38] sm:$0xff]
  %1239 = vrot.lane.b32.xlu0 %v1225, 86
  %v1240 = vpop.permute.xlu0 %1239
  %1241 = vrot.lane.b32.xlu0 %v1226, 86
  %v1242 = vpop.permute.xlu0 %1241
  %1243 = vrot.lane.b32.xlu0 %v1227, 86
  %v1244 = vpop.permute.xlu0 %1243
  %1245 = vrot.lane.b32.xlu0 %v1228, 86
  %v1246 = vpop.permute.xlu0 %1245
  %1247 = vrot.lane.b32.xlu0 %v1229, 86
  %v1248 = vpop.permute.xlu0 %1247
  %1249 = vrot.lane.b32.xlu0 %v1230, 86
  %v1250 = vpop.permute.xlu0 %1249
  %1251 = vrot.lane.b32.xlu0 %v1231, 86
  %v1252 = vpop.permute.xlu0 %1251
  %vm1253 = vcmask 703488
  %v1254 = vsel %vm1253, %v1240, %v1242
  %v1255 = vsel %vm1253, %v1242, %v1244
  %v1256 = vsel %vm1253, %v1244, %v1246
  %v1257 = vsel %vm1253, %v1246, %v1248
  %v1258 = vsel %vm1253, %v1248, %v1250
  %v1259 = vsel %vm1253, %v1250, %v1252
  %1267 = vst [vmem:[#allocation3 + $0xab8] sm:$0xff] %v1254
  %1268 = vst [vmem:[#allocation3 + $0xac0] sm:$0xff] %v1255
  %1269 = vst [vmem:[#allocation3 + $0xac8] sm:$0xff] %v1256
  %1270 = vst [vmem:[#allocation3 + $0xad0] sm:$0xff] %v1257
  %1271 = vst [vmem:[#allocation3 + $0xad8] sm:$0xff] %v1258
  %1272 = vst [vmem:[#allocation3 + $0xae0] sm:$0xff] %v1259
  %1273 = vst.msk [vmem:[#allocation3 + $0xae8] sm:$0xff] %vm96, %v1252
  %v1274 = vld [vmem:[%s3] sm:$0xff]
  %v1275 = vld [vmem:[%s3 + $0x8] sm:$0xff]
  %v1276 = vld [vmem:[#allocation3 + $0x578] sm:$0xff]
  %v1277 = vld [vmem:[#allocation3 + $0x580] sm:$0xff]
  %v1278 = vld [vmem:[#allocation3 + $0x588] sm:$0xff]
  %v1279 = vld [vmem:[#allocation3 + $0x590] sm:$0xff]
  %v1280 = vld [vmem:[#allocation3 + $0x598] sm:$0xff]
  %v1281 = vld [vmem:[#allocation3 + $0x5a0] sm:$0xff]
  %v1282 = vld [vmem:[#allocation3 + $0x5a8] sm:$0xff]
  %v1283 = vld [vmem:[#allocation3 + $0x5b0] sm:$0xff]
  %v1284 = vld [vmem:[#allocation3 + $0x5b8] sm:$0xff]
  %v1285 = vld [vmem:[#allocation3 + $0x5c0] sm:$0xff]
  %v1286 = vld [vmem:[#allocation3 + $0x5c8] sm:$0xff]
  %v1287 = vld [vmem:[#allocation3 + $0x5d0] sm:$0xff]
  %v1288 = vld [vmem:[#allocation3 + $0x5d8] sm:$0xff]
  %v1289 = vld [vmem:[#allocation3 + $0x5e0] sm:$0xff]
  %v1290 = vld [vmem:[#allocation3 + $0x5e8] sm:$0xff]
  %v1291 = vld [vmem:[#allocation3 + $0x5f0] sm:$0xff]
  %v1292 = vld [vmem:[#allocation3 + $0x5f8] sm:$0xff]
  %v1293 = vld [vmem:[#allocation3 + $0x600] sm:$0xff]
  %v1294 = vld [vmem:[#allocation3 + $0x608] sm:$0xff]
  %v1295 = vld [vmem:[#allocation3 + $0x610] sm:$0xff]
  %v1296 = vld [vmem:[#allocation3 + $0x618] sm:$0xff]
  %v1297 = vld [vmem:[#allocation3 + $0x620] sm:$0xff]
  %v1298 = vld [vmem:[#allocation3 + $0x628] sm:$0xff]
  %v1299 = vld [vmem:[#allocation3 + $0x630] sm:$0xff]
  %v1300 = vld [vmem:[#allocation3 + $0x638] sm:$0xff]
  %v1301 = vld [vmem:[#allocation3 + $0x640] sm:$0xff]
  %v1302 = vld [vmem:[#allocation3 + $0x648] sm:$0xff]
  %v1303 = vld [vmem:[#allocation3 + $0x650] sm:$0xff]
  %v1304 = vld [vmem:[#allocation3 + $0x658] sm:$0xff]
  %v1305 = vld [vmem:[#allocation3 + $0x660] sm:$0xff]
  %v1306 = vld [vmem:[#allocation3 + $0x668] sm:$0xff]
  %v1307 = vld [vmem:[#allocation3 + $0x670] sm:$0xff]
  %v1308 = vld [vmem:[#allocation3 + $0x678] sm:$0xff]
  %v1309 = vld [vmem:[#allocation3 + $0x680] sm:$0xff]
  %v1310 = vld [vmem:[#allocation3 + $0x688] sm:$0xff]
  %v1311 = vld [vmem:[#allocation3 + $0x690] sm:$0xff]
  %v1312 = vld [vmem:[#allocation3 + $0x698] sm:$0xff]
  %v1313 = vld [vmem:[#allocation3 + $0x6a0] sm:$0xff]
  %v1314 = vld [vmem:[#allocation3 + $0x6a8] sm:$0xff]
  %v1315 = vld [vmem:[#allocation3 + $0x6b0] sm:$0xff]
  %v1316 = vld [vmem:[#allocation3 + $0x6b8] sm:$0xff]
  %v1317 = vld [vmem:[#allocation3 + $0x6c0] sm:$0xff]
  %v1318 = vld [vmem:[#allocation3 + $0x6c8] sm:$0xff]
  %v1319 = vld [vmem:[#allocation3 + $0x6d0] sm:$0xff]
  %v1320 = vld [vmem:[#allocation3 + $0x6d8] sm:$0xff]
  %v1321 = vld [vmem:[#allocation3 + $0x6e0] sm:$0xff]
  %v1322 = vld [vmem:[#allocation3 + $0x6e8] sm:$0xff]
  %v1323 = vld [vmem:[#allocation3 + $0x6f0] sm:$0xff]
  %v1324 = vld [vmem:[#allocation3 + $0x6f8] sm:$0xff]
  %v1325 = vld [vmem:[#allocation3 + $0x700] sm:$0xff]
  %v1326 = vld [vmem:[#allocation3 + $0x708] sm:$0xff]
  %v1327 = vld [vmem:[#allocation3 + $0x710] sm:$0xff]
  %v1328 = vld [vmem:[#allocation3 + $0x718] sm:$0xff]
  %v1329 = vld [vmem:[#allocation3 + $0x720] sm:$0xff]
  %v1330 = vld [vmem:[#allocation3 + $0x728] sm:$0xff]
  %v1331 = vld [vmem:[#allocation3 + $0x730] sm:$0xff]
  %v1332 = vld [vmem:[#allocation3 + $0x738] sm:$0xff]
  %v1333 = vld [vmem:[#allocation3 + $0x740] sm:$0xff]
  %v1334 = vld [vmem:[#allocation3 + $0x748] sm:$0xff]
  %v1335 = vld [vmem:[#allocation3 + $0x750] sm:$0xff]
  %v1336 = vld [vmem:[#allocation3 + $0x758] sm:$0xff]
  %v1337 = vld [vmem:[#allocation3 + $0x760] sm:$0xff]
  %v1338 = vld [vmem:[#allocation3 + $0x768] sm:$0xff]
  %v1339 = vld [vmem:[#allocation3 + $0x770] sm:$0xff]
  %v1340 = vld [vmem:[#allocation3 + $0x778] sm:$0xff]
  %v1341 = vld [vmem:[#allocation3 + $0x780] sm:$0xff]
  %v1342 = vld [vmem:[#allocation3 + $0x788] sm:$0xff]
  %v1343 = vld [vmem:[#allocation3 + $0x790] sm:$0xff]
  %v1344 = vld [vmem:[#allocation3 + $0x798] sm:$0xff]
  %v1345 = vld [vmem:[#allocation3 + $0x7a0] sm:$0xff]
  %v1346 = vld [vmem:[#allocation3 + $0x7a8] sm:$0xff]
  %v1347 = vld [vmem:[#allocation3 + $0x7b0] sm:$0xff]
  %v1348 = vld [vmem:[#allocation3 + $0x7b8] sm:$0xff]
  %v1349 = vld [vmem:[#allocation3 + $0x7c0] sm:$0xff]
  %v1350 = vld [vmem:[#allocation3 + $0x7c8] sm:$0xff]
  %v1351 = vld [vmem:[#allocation3 + $0x7d0] sm:$0xff]
  %v1352 = vld [vmem:[#allocation3 + $0x7d8] sm:$0xff]
  %v1353 = vld [vmem:[#allocation3 + $0x7e0] sm:$0xff]
  %v1354 = vld [vmem:[#allocation3 + $0x7e8] sm:$0xff]
  %v1355 = vld [vmem:[#allocation3 + $0x7f0] sm:$0xff]
  %v1356 = vld [vmem:[#allocation3 + $0x7f8] sm:$0xff]
  %v1357 = vld [vmem:[#allocation3 + $0x800] sm:$0xff]
  %v1358 = vld [vmem:[#allocation3 + $0x808] sm:$0xff]
  %v1359 = vld [vmem:[#allocation3 + $0x810] sm:$0xff]
  %v1360 = vld [vmem:[#allocation3 + $0x818] sm:$0xff]
  %v1361 = vld [vmem:[#allocation3 + $0x820] sm:$0xff]
  %v1362 = vld [vmem:[#allocation3 + $0x828] sm:$0xff]
  %v1363 = vld [vmem:[#allocation3 + $0x830] sm:$0xff]
  %v1364 = vld [vmem:[#allocation3 + $0x838] sm:$0xff]
  %v1365 = vld [vmem:[#allocation3 + $0x840] sm:$0xff]
  %v1366 = vld [vmem:[#allocation3 + $0x848] sm:$0xff]
  %v1367 = vld [vmem:[#allocation3 + $0x850] sm:$0xff]
  %v1368 = vld [vmem:[#allocation3 + $0x858] sm:$0xff]
  %v1369 = vld [vmem:[#allocation3 + $0x860] sm:$0xff]
  %v1370 = vld [vmem:[#allocation3 + $0x868] sm:$0xff]
  %v1371 = vld [vmem:[#allocation3 + $0x870] sm:$0xff]
  %v1372 = vld [vmem:[#allocation3 + $0x878] sm:$0xff]
  %v1373 = vld [vmem:[#allocation3 + $0x880] sm:$0xff]
  %v1374 = vld [vmem:[#allocation3 + $0x888] sm:$0xff]
  %v1375 = vld [vmem:[#allocation3 + $0x890] sm:$0xff]
  %v1376 = vld [vmem:[#allocation3 + $0x898] sm:$0xff]
  %v1377 = vld [vmem:[#allocation3 + $0x8a0] sm:$0xff]
  %v1378 = vld [vmem:[#allocation3 + $0x8a8] sm:$0xff]
  %v1379 = vld [vmem:[#allocation3 + $0x8b0] sm:$0xff]
  %v1380 = vld [vmem:[#allocation3 + $0x8b8] sm:$0xff]
  %v1381 = vld [vmem:[#allocation3 + $0x8c0] sm:$0xff]
  %v1382 = vld [vmem:[#allocation3 + $0x8c8] sm:$0xff]
  %v1383 = vld [vmem:[#allocation3 + $0x8d0] sm:$0xff]
  %v1384 = vld [vmem:[#allocation3 + $0x8d8] sm:$0xff]
  %v1385 = vld [vmem:[#allocation3 + $0x8e0] sm:$0xff]
  %v1386 = vld [vmem:[#allocation3 + $0x8e8] sm:$0xff]
  %v1387 = vld [vmem:[#allocation3 + $0x8f0] sm:$0xff]
  %v1388 = vld [vmem:[#allocation3 + $0x8f8] sm:$0xff]
  %v1389 = vld [vmem:[#allocation3 + $0x900] sm:$0xff]
  %v1390 = vld [vmem:[#allocation3 + $0x908] sm:$0xff]
  %v1391 = vld [vmem:[#allocation3 + $0x910] sm:$0xff]
  %v1392 = vld [vmem:[#allocation3 + $0x918] sm:$0xff]
  %v1393 = vld [vmem:[#allocation3 + $0x920] sm:$0xff]
  %v1394 = vld [vmem:[#allocation3 + $0x928] sm:$0xff]
  %v1395 = vld [vmem:[#allocation3 + $0x930] sm:$0xff]
  %v1396 = vld [vmem:[#allocation3 + $0x938] sm:$0xff]
  %v1397 = vld [vmem:[#allocation3 + $0x940] sm:$0xff]
  %v1398 = vld [vmem:[#allocation3 + $0x948] sm:$0xff]
  %v1399 = vld [vmem:[#allocation3 + $0x950] sm:$0xff]
  %v1400 = vld [vmem:[#allocation3 + $0x958] sm:$0xff]
  %v1401 = vld [vmem:[#allocation3 + $0x960] sm:$0xff]
  %v1402 = vld [vmem:[#allocation3 + $0x968] sm:$0xff]
  %v1403 = vld [vmem:[#allocation3 + $0x970] sm:$0xff]
  %v1404 = vld [vmem:[#allocation3 + $0x978] sm:$0xff]
  %v1405 = vld [vmem:[#allocation3 + $0x980] sm:$0xff]
  %v1406 = vld [vmem:[#allocation3 + $0x988] sm:$0xff]
  %v1407 = vld [vmem:[#allocation3 + $0x990] sm:$0xff]
  %v1408 = vld [vmem:[#allocation3 + $0x998] sm:$0xff]
  %v1409 = vld [vmem:[#allocation3 + $0x9a0] sm:$0xff]
  %v1410 = vld [vmem:[#allocation3 + $0x9a8] sm:$0xff]
  %v1411 = vld [vmem:[#allocation3 + $0x9b0] sm:$0xff]
  %v1412 = vld [vmem:[#allocation3 + $0x9b8] sm:$0xff]
  %v1413 = vld [vmem:[#allocation3 + $0x9c0] sm:$0xff]
  %v1414 = vld [vmem:[#allocation3 + $0x9c8] sm:$0xff]
  %v1415 = vld [vmem:[#allocation3 + $0x9d0] sm:$0xff]
  %v1416 = vld [vmem:[#allocation3 + $0x9d8] sm:$0xff]
  %v1417 = vld [vmem:[#allocation3 + $0x9e0] sm:$0xff]
  %v1418 = vld [vmem:[#allocation3 + $0x9e8] sm:$0xff]
  %v1419 = vld [vmem:[#allocation3 + $0x9f0] sm:$0xff]
  %v1420 = vld [vmem:[#allocation3 + $0x9f8] sm:$0xff]
  %v1421 = vld [vmem:[#allocation3 + $0xa00] sm:$0xff]
  %v1422 = vld [vmem:[#allocation3 + $0xa08] sm:$0xff]
  %v1423 = vld [vmem:[#allocation3 + $0xa10] sm:$0xff]
  %v1424 = vld [vmem:[#allocation3 + $0xa18] sm:$0xff]
  %v1425 = vld [vmem:[#allocation3 + $0xa20] sm:$0xff]
  %v1426 = vld [vmem:[#allocation3 + $0xa28] sm:$0xff]
  %v1427 = vld [vmem:[#allocation3 + $0xa30] sm:$0xff]
  %v1428 = vld [vmem:[#allocation3 + $0xa38] sm:$0xff]
  %v1429 = vld [vmem:[#allocation3 + $0xa40] sm:$0xff]
  %v1430 = vld [vmem:[#allocation3 + $0xa48] sm:$0xff]
  %v1431 = vld [vmem:[#allocation3 + $0xa50] sm:$0xff]
  %v1432 = vld [vmem:[#allocation3 + $0xa58] sm:$0xff]
  %v1433 = vld [vmem:[#allocation3 + $0xa60] sm:$0xff]
  %v1434 = vld [vmem:[#allocation3 + $0xa68] sm:$0xff]
  %v1435 = vld [vmem:[#allocation3 + $0xa70] sm:$0xff]
  %v1436 = vld [vmem:[#allocation3 + $0xa78] sm:$0xff]
  %v1437 = vld [vmem:[#allocation3 + $0xa80] sm:$0xff]
  %v1438 = vld [vmem:[#allocation3 + $0xa88] sm:$0xff]
  %v1439 = vld [vmem:[#allocation3 + $0xa90] sm:$0xff]
  %v1440 = vld [vmem:[#allocation3 + $0xa98] sm:$0xff]
  %v1441 = vld [vmem:[#allocation3 + $0xaa0] sm:$0xff]
  %v1442 = vld [vmem:[#allocation3 + $0xaa8] sm:$0xff]
  %v1443 = vld [vmem:[#allocation3 + $0xab0] sm:$0xff]
  %v1444 = vld [vmem:[#allocation3 + $0xab8] sm:$0xff]
  %v1445 = vld [vmem:[#allocation3 + $0xac0] sm:$0xff]
  %v1446 = vld [vmem:[#allocation3 + $0xac8] sm:$0xff]
  %v1447 = vld [vmem:[#allocation3 + $0xad0] sm:$0xff]
  %v1448 = vld [vmem:[#allocation3 + $0xad8] sm:$0xff]
  %v1449 = vld [vmem:[#allocation3 + $0xae0] sm:$0xff]
  %v1450 = vld [vmem:[#allocation3 + $0xae8] sm:$0xff]
  %v1451 = vld [vmem:[%s4] sm:$0xff]
  %1453 = vset.pattern.permute.xlu0 0
  %1454 = vperm.xlu0 %1453, %v1451
  %v1455 = vpop.permute.xlu0 %1454
  %vm1457 = vcmask 588800
  %v1459 = vsel %vm1457, %v1275, 0
  %1461 = vmatprep.subr.mxu0 %v1277
  %1462 = vmatpush1.msra.mxu0 %v1276
  %1463 = vmatprep.subr.mxu0 %v1284
  %1464 = vmatpush1.msra.mxu0 %v1283
  %1465 = vmatprep.subr.mxu0 %v1291
  %1466 = vmatpush1.msra.mxu0 %v1290
  %1467 = vmatprep.subr.mxu0 %v1298
  %1468 = vmatpush1.msra.mxu0 %v1297
  %1469 = vmatprep.subr.mxu0 %v1305
  %1470 = vmatpush1.msra.mxu0 %v1304
  %1471 = vmatprep.subr.mxu0 %v1312
  %1472 = vmatpush1.msra.mxu0 %v1311
  %1473 = vmatprep.subr.mxu0 %v1319
  %1474 = vmatpush1.msra.mxu0 %v1318
  %1475 = vmatprep.subr.mxu0 %v1326
  %1476 = vmatpush1.msra.mxu0 %v1325
  %1477 = vmatprep.subr.mxu0 %v1333
  %1478 = vmatpush1.msra.mxu0 %v1332
  %1479 = vmatprep.subr.mxu0 %v1340
  %1480 = vmatpush1.msra.mxu0 %v1339
  %1481 = vmatprep.subr.mxu0 %v1347
  %1482 = vmatpush1.msra.mxu0 %v1346
  %1483 = vmatprep.subr.mxu0 %v1354
  %1484 = vmatpush1.msra.mxu0 %v1353
  %1485 = vmatprep.subr.mxu0 %v1361
  %1486 = vmatpush1.msra.mxu0 %v1360
  %1487 = vmatprep.subr.mxu0 %v1368
  %1488 = vmatpush1.msra.mxu0 %v1367
  %1489 = vmatprep.subr.mxu0 %v1375
  %1490 = vmatpush1.msra.mxu0 %v1374
  %1491 = vmatprep.subr.mxu0 %v1382
  %1492 = vmatpush1.msra.mxu0 %v1381
  %1493 = vmatprep.subr.mxu0 %v1389
  %1494 = vmatpush1.msra.mxu0 %v1388
  %1495 = vmatprep.subr.mxu0 %v1396
  %1496 = vmatpush1.msra.mxu0 %v1395
  %1497 = vmatprep.subr.mxu0 %v1403
  %1498 = vmatpush1.msra.mxu0 %v1402
  %1499 = vmatprep.subr.mxu0 %v1410
  %1500 = vmatpush1.msra.mxu0 %v1409
  %1501 = vmatprep.subr.mxu0 %v1417
  %1502 = vmatpush1.msra.mxu0 %v1416
  %1503 = vmatprep.subr.mxu0 %v1424
  %1504 = vmatpush1.msra.mxu0 %v1423
  %1505 = vmatprep.subr.mxu0 %v1431
  %1506 = vmatpush1.msra.mxu0 %v1430
  %1507 = vmatprep.subr.mxu0 %v1438
  %1508 = vmatpush1.msra.mxu0 %v1437
  %1509 = vmatprep.subr.mxu0 %v1445
  %1510 = vmatpush1.msra.mxu0 %v1444
  %1511 = vmatprep.subr.mxu0 0.0
  %1512 = vmatpush1.msra.mxu0 0.0
  %1513 = vmatprep.subr.mxu0 0.0
  %1514 = vmatpush1.msra.mxu0 0.0
  %1515 = vmatprep.subr.mxu0 0.0
  %1516 = vmatpush1.msra.mxu0 0.0
  %1517 = vmatprep.subr.mxu0 0.0
  %1518 = vmatpush1.msra.mxu0 0.0
  %1519 = vmatprep.subr.mxu0 0.0
  %1520 = vmatpush1.msra.mxu0 0.0
  %1521 = vmatprep.subr.mxu0 0.0
  %1522 = vmatpush1.msra.mxu0 0.0
  %1523 = vmatprep.subr.mxu0 0.0
  %1524 = vmatpush1.msra.mxu0 0.0
  %1525 = vmatprep.mubr.f32.mxu0 %v1459
  %1526 = vmatmul.mubr.f32.gmra.mrb[0].mxu0 %v1274
  %v1527 = vpop.f32.mrb[0].mxu0
  %v1528 = vadd.f32 %v1455, %v1527
  %v1529 = vpop.f32.mrb[0].mxu0
  %v1530 = vadd.f32 %v1455, %v1529
  %1531 = vdwg.mxu0
  %1532 = vmatprep.subr.mxu0 %v1279
  %1533 = vmatpush1.msra.mxu0 %v1278
  %1534 = vmatprep.subr.mxu0 %v1286
  %1535 = vmatpush1.msra.mxu0 %v1285
  %1536 = vmatprep.subr.mxu0 %v1293
  %1537 = vmatpush1.msra.mxu0 %v1292
  %1538 = vmatprep.subr.mxu0 %v1300
  %1539 = vmatpush1.msra.mxu0 %v1299
  %1540 = vmatprep.subr.mxu0 %v1307
  %1541 = vmatpush1.msra.mxu0 %v1306
  %1542 = vmatprep.subr.mxu0 %v1314
  %1543 = vmatpush1.msra.mxu0 %v1313
  %1544 = vmatprep.subr.mxu0 %v1321
  %1545 = vmatpush1.msra.mxu0 %v1320
  %1546 = vmatprep.subr.mxu0 %v1328
  %1547 = vmatpush1.msra.mxu0 %v1327
  %1548 = vmatprep.subr.mxu0 %v1335
  %1549 = vmatpush1.msra.mxu0 %v1334
  %1550 = vmatprep.subr.mxu0 %v1342
  %1551 = vmatpush1.msra.mxu0 %v1341
  %1552 = vmatprep.subr.mxu0 %v1349
  %1553 = vmatpush1.msra.mxu0 %v1348
  %1554 = vmatprep.subr.mxu0 %v1356
  %1555 = vmatpush1.msra.mxu0 %v1355
  %1556 = vmatprep.subr.mxu0 %v1363
  %1557 = vmatpush1.msra.mxu0 %v1362
  %1558 = vmatprep.subr.mxu0 %v1370
  %1559 = vmatpush1.msra.mxu0 %v1369
  %1560 = vmatprep.subr.mxu0 %v1377
  %1561 = vmatpush1.msra.mxu0 %v1376
  %1562 = vmatprep.subr.mxu0 %v1384
  %1563 = vmatpush1.msra.mxu0 %v1383
  %1564 = vmatprep.subr.mxu0 %v1391
  %1565 = vmatpush1.msra.mxu0 %v1390
  %1566 = vmatprep.subr.mxu0 %v1398
  %1567 = vmatpush1.msra.mxu0 %v1397
  %1568 = vmatprep.subr.mxu0 %v1405
  %1569 = vmatpush1.msra.mxu0 %v1404
  %1570 = vmatprep.subr.mxu0 %v1412
  %1571 = vmatpush1.msra.mxu0 %v1411
  %1572 = vmatprep.subr.mxu0 %v1419
  %1573 = vmatpush1.msra.mxu0 %v1418
  %1574 = vmatprep.subr.mxu0 %v1426
  %1575 = vmatpush1.msra.mxu0 %v1425
  %1576 = vmatprep.subr.mxu0 %v1433
  %1577 = vmatpush1.msra.mxu0 %v1432
  %1578 = vmatprep.subr.mxu0 %v1440
  %1579 = vmatpush1.msra.mxu0 %v1439
  %1580 = vmatprep.subr.mxu0 %v1447
  %1581 = vmatpush1.msra.mxu0 %v1446
  %1582 = vmatprep.subr.mxu0 0.0
  %1583 = vmatpush1.msra.mxu0 0.0
  %1584 = vmatprep.subr.mxu0 0.0
  %1585 = vmatpush1.msra.mxu0 0.0
  %1586 = vmatprep.subr.mxu0 0.0
  %1587 = vmatpush1.msra.mxu0 0.0
  %1588 = vmatprep.subr.mxu0 0.0
  %1589 = vmatpush1.msra.mxu0 0.0
  %1590 = vmatprep.subr.mxu0 0.0
  %1591 = vmatpush1.msra.mxu0 0.0
  %1592 = vmatprep.subr.mxu0 0.0
  %1593 = vmatpush1.msra.mxu0 0.0
  %1594 = vmatprep.subr.mxu0 0.0
  %1595 = vmatpush1.msra.mxu0 0.0
  %1596 = vmatprep.mubr.f32.mxu0 %v1459
  %1597 = vmatmul.mubr.f32.gmra.mrb[0].mxu0 %v1274
  %v1598 = vpop.f32.mrb[0].mxu0
  %v1599 = vadd.f32 %v1455, %v1598
  %v1600 = vpop.f32.mrb[0].mxu0
  %v1601 = vadd.f32 %v1455, %v1600
  %1602 = vdwg.mxu0
  %1603 = vmatprep.subr.mxu0 %v1281
  %1604 = vmatpush1.msra.mxu0 %v1280
  %1605 = vmatprep.subr.mxu0 %v1288
  %1606 = vmatpush1.msra.mxu0 %v1287
  %1607 = vmatprep.subr.mxu0 %v1295
  %1608 = vmatpush1.msra.mxu0 %v1294
  %1609 = vmatprep.subr.mxu0 %v1302
  %1610 = vmatpush1.msra.mxu0 %v1301
  %1611 = vmatprep.subr.mxu0 %v1309
  %1612 = vmatpush1.msra.mxu0 %v1308
  %1613 = vmatprep.subr.mxu0 %v1316
  %1614 = vmatpush1.msra.mxu0 %v1315
  %1615 = vmatprep.subr.mxu0 %v1323
  %1616 = vmatpush1.msra.mxu0 %v1322
  %1617 = vmatprep.subr.mxu0 %v1330
  %1618 = vmatpush1.msra.mxu0 %v1329
  %1619 = vmatprep.subr.mxu0 %v1337
  %1620 = vmatpush1.msra.mxu0 %v1336
  %1621 = vmatprep.subr.mxu0 %v1344
  %1622 = vmatpush1.msra.mxu0 %v1343
  %1623 = vmatprep.subr.mxu0 %v1351
  %1624 = vmatpush1.msra.mxu0 %v1350
  %1625 = vmatprep.subr.mxu0 %v1358
  %1626 = vmatpush1.msra.mxu0 %v1357
  %1627 = vmatprep.subr.mxu0 %v1365
  %1628 = vmatpush1.msra.mxu0 %v1364
  %1629 = vmatprep.subr.mxu0 %v1372
  %1630 = vmatpush1.msra.mxu0 %v1371
  %1631 = vmatprep.subr.mxu0 %v1379
  %1632 = vmatpush1.msra.mxu0 %v1378
  %1633 = vmatprep.subr.mxu0 %v1386
  %1634 = vmatpush1.msra.mxu0 %v1385
  %1635 = vmatprep.subr.mxu0 %v1393
  %1636 = vmatpush1.msra.mxu0 %v1392
  %1637 = vmatprep.subr.mxu0 %v1400
  %1638 = vmatpush1.msra.mxu0 %v1399
  %1639 = vmatprep.subr.mxu0 %v1407
  %1640 = vmatpush1.msra.mxu0 %v1406
  %1641 = vmatprep.subr.mxu0 %v1414
  %1642 = vmatpush1.msra.mxu0 %v1413
  %1643 = vmatprep.subr.mxu0 %v1421
  %1644 = vmatpush1.msra.mxu0 %v1420
  %1645 = vmatprep.subr.mxu0 %v1428
  %1646 = vmatpush1.msra.mxu0 %v1427
  %1647 = vmatprep.subr.mxu0 %v1435
  %1648 = vmatpush1.msra.mxu0 %v1434
  %1649 = vmatprep.subr.mxu0 %v1442
  %1650 = vmatpush1.msra.mxu0 %v1441
  %1651 = vmatprep.subr.mxu0 %v1449
  %1652 = vmatpush1.msra.mxu0 %v1448
  %1653 = vmatprep.subr.mxu0 0.0
  %1654 = vmatpush1.msra.mxu0 0.0
  %1655 = vmatprep.subr.mxu0 0.0
  %1656 = vmatpush1.msra.mxu0 0.0
  %1657 = vmatprep.subr.mxu0 0.0
  %1658 = vmatpush1.msra.mxu0 0.0
  %1659 = vmatprep.subr.mxu0 0.0
  %1660 = vmatpush1.msra.mxu0 0.0
  %1661 = vmatprep.subr.mxu0 0.0
  %1662 = vmatpush1.msra.mxu0 0.0
  %1663 = vmatprep.subr.mxu0 0.0
  %1664 = vmatpush1.msra.mxu0 0.0
  %1665 = vmatprep.subr.mxu0 0.0
  %1666 = vmatpush1.msra.mxu0 0.0
  %1667 = vmatprep.mubr.f32.mxu0 %v1459
  %1668 = vmatmul.mubr.f32.gmra.mrb[0].mxu0 %v1274
  %v1669 = vpop.f32.mrb[0].mxu0
  %v1670 = vadd.f32 %v1455, %v1669
  %v1671 = vpop.f32.mrb[0].mxu0
  %v1672 = vadd.f32 %v1455, %v1671
  %1673 = vdwg.mxu0
  %1674 = vmatprep.subr.mxu0 0.0
  %1675 = vmatpush1.msra.mxu0 %v1282
  %1676 = vmatprep.subr.mxu0 0.0
  %1677 = vmatpush1.msra.mxu0 %v1289
  %1678 = vmatprep.subr.mxu0 0.0
  %1679 = vmatpush1.msra.mxu0 %v1296
  %1680 = vmatprep.subr.mxu0 0.0
  %1681 = vmatpush1.msra.mxu0 %v1303
  %1682 = vmatprep.subr.mxu0 0.0
  %1683 = vmatpush1.msra.mxu0 %v1310
  %1684 = vmatprep.subr.mxu0 0.0
  %1685 = vmatpush1.msra.mxu0 %v1317
  %1686 = vmatprep.subr.mxu0 0.0
  %1687 = vmatpush1.msra.mxu0 %v1324
  %1688 = vmatprep.subr.mxu0 0.0
  %1689 = vmatpush1.msra.mxu0 %v1331
  %1690 = vmatprep.subr.mxu0 0.0
  %1691 = vmatpush1.msra.mxu0 %v1338
  %1692 = vmatprep.subr.mxu0 0.0
  %1693 = vmatpush1.msra.mxu0 %v1345
  %1694 = vmatprep.subr.mxu0 0.0
  %1695 = vmatpush1.msra.mxu0 %v1352
  %1696 = vmatprep.subr.mxu0 0.0
  %1697 = vmatpush1.msra.mxu0 %v1359
  %1698 = vmatprep.subr.mxu0 0.0
  %1699 = vmatpush1.msra.mxu0 %v1366
  %1700 = vmatprep.subr.mxu0 0.0
  %1701 = vmatpush1.msra.mxu0 %v1373
  %1702 = vmatprep.subr.mxu0 0.0
  %1703 = vmatpush1.msra.mxu0 %v1380
  %1704 = vmatprep.subr.mxu0 0.0
  %1705 = vmatpush1.msra.mxu0 %v1387
  %1706 = vmatprep.subr.mxu0 0.0
  %1707 = vmatpush1.msra.mxu0 %v1394
  %1708 = vmatprep.subr.mxu0 0.0
  %1709 = vmatpush1.msra.mxu0 %v1401
  %1710 = vmatprep.subr.mxu0 0.0
  %1711 = vmatpush1.msra.mxu0 %v1408
  %1712 = vmatprep.subr.mxu0 0.0
  %1713 = vmatpush1.msra.mxu0 %v1415
  %1714 = vmatprep.subr.mxu0 0.0
  %1715 = vmatpush1.msra.mxu0 %v1422
  %1716 = vmatprep.subr.mxu0 0.0
  %1717 = vmatpush1.msra.mxu0 %v1429
  %1718 = vmatprep.subr.mxu0 0.0
  %1719 = vmatpush1.msra.mxu0 %v1436
  %1720 = vmatprep.subr.mxu0 0.0
  %1721 = vmatpush1.msra.mxu0 %v1443
  %1722 = vmatprep.subr.mxu0 0.0
  %1723 = vmatpush1.msra.mxu0 %v1450
  %1724 = vmatprep.subr.mxu0 0.0
  %1725 = vmatpush1.msra.mxu0 0.0
  %1726 = vmatprep.subr.mxu0 0.0
  %1727 = vmatpush1.msra.mxu0 0.0
  %1728 = vmatprep.subr.mxu0 0.0
  %1729 = vmatpush1.msra.mxu0 0.0
  %1730 = vmatprep.subr.mxu0 0.0
  %1731 = vmatpush1.msra.mxu0 0.0
  %1732 = vmatprep.subr.mxu0 0.0
  %1733 = vmatpush1.msra.mxu0 0.0
  %1734 = vmatprep.subr.mxu0 0.0
  %1735 = vmatpush1.msra.mxu0 0.0
  %1736 = vmatprep.subr.mxu0 0.0
  %1737 = vmatpush1.msra.mxu0 0.0
  %1738 = vmatprep.mubr.f32.mxu0 %v1459
  %1739 = vmatmul.mubr.f32.gmra.mrb[0].mxu0 %v1274
  %v1740 = vpop.f32.mrb[0].mxu0
  %v1741 = vadd.f32 %v1455, %v1740
  %v1742 = vpop.f32.mrb[0].mxu0
  %1743 = vdwg.mxu0
  %v1745 = vlaneseq
  %v1746 = vshrl.u32 %v1745, 7
  %v1747 = vsub.s32 0, %v1746
  %v1748 = vrot.slane %v44, %v1747
  %v1749 = vlaneseq
  %v1750 = vshrl.u32 %v1749, 7
  %v1751 = vsub.s32 1, %v1750
  %v1752 = vrot.slane %v44, %v1751
  %v1753 = vlaneseq
  %v1754 = vshrl.u32 %v1753, 7
  %v1755 = vsub.s32 2, %v1754
  %v1756 = vrot.slane %v44, %v1755
  %v1757 = vlaneseq
  %v1758 = vshrl.u32 %v1757, 7
  %v1759 = vsub.s32 3, %v1758
  %v1760 = vrot.slane %v44, %v1759
  %v1761 = vlaneseq
  %v1762 = vshrl.u32 %v1761, 7
  %v1763 = vsub.s32 4, %v1762
  %v1764 = vrot.slane %v44, %v1763
  %v1765 = vlaneseq
  %v1766 = vshrl.u32 %v1765, 7
  %v1767 = vsub.s32 5, %v1766
  %v1768 = vrot.slane %v44, %v1767
  %v1769 = vlaneseq
  %v1770 = vshrl.u32 %v1769, 7
  %v1771 = vsub.s32 6, %v1770
  %v1772 = vrot.slane %v44, %v1771
  %v1780 = vmul.f32 %v1528, %v1748
  %v1781 = vmul.f32 %v1530, %v1752
  %v1782 = vmul.f32 %v1599, %v1756
  %v1783 = vmul.f32 %v1601, %v1760
  %v1784 = vmul.f32 %v1670, %v1764
  %v1785 = vmul.f32 %v1672, %v1768
  %v1786 = vmul.f32 %v1741, %v1772
  %v1787 = vadd.f32 %v1780, %v1781
  %v1788 = vadd.f32 %v1787, %v1782
  %v1789 = vadd.f32 %v1788, %v1783
  %v1790 = vadd.f32 %v1789, %v1784
  %v1791 = vadd.f32 %v1790, %v1785
  %v1792 = vsel %vm96, %v1786, 0.0
  %v1793 = vadd.f32 %v1791, %v1792
  %1794 = vadd.xlane.f32.xlu0 %v1793
  %v1795 = vpop.xlane.xlu0 %1794
  %v1796 = vmul.f32 %v1795, 0.001953125
  %v1797 = vmul.f32 %v1780, %v1528
  %v1798 = vmul.f32 %v1781, %v1530
  %v1799 = vmul.f32 %v1782, %v1599
  %v1800 = vmul.f32 %v1783, %v1601
  %v1801 = vmul.f32 %v1784, %v1670
  %v1802 = vmul.f32 %v1785, %v1672
  %v1803 = vmul.f32 %v1786, %v1741
  %v1804 = vadd.f32 %v1797, %v1798
  %v1805 = vadd.f32 %v1804, %v1799
  %v1806 = vadd.f32 %v1805, %v1800
  %v1807 = vadd.f32 %v1806, %v1801
  %v1808 = vadd.f32 %v1807, %v1802
  %v1809 = vsel %vm96, %v1803, 0.0
  %v1810 = vadd.f32 %v1808, %v1809
  %1811 = vadd.xlane.f32.xlu0 %v1810
  %v1812 = vpop.xlane.xlu0 %1811
  %v1813 = vmul.f32 %v1812, 0.001953125
  %v1814 = vmul.f32 %v1796, %v1796
  %v1815 = vsub.f32 %v1813, %v1814
  %v1816 = vmax.f32 %v1815, 0.0
  %v1817 = vadd.f32 %v1816, 1e-05
  %v1818 = vrsqrt.pop %v1817
  %v1819 = vsub.f32 %v1528, %v1796
  %v1820 = vsub.f32 %v1530, %v1796
  %v1821 = vsub.f32 %v1599, %v1796
  %v1822 = vsub.f32 %v1601, %v1796
  %v1823 = vsub.f32 %v1670, %v1796
  %v1824 = vsub.f32 %v1672, %v1796
  %v1825 = vsub.f32 %v1741, %v1796
  %v1826 = vmul.f32 %v1819, %v1818
  %v1827 = vmul.f32 %v1820, %v1818
  %v1828 = vmul.f32 %v1821, %v1818
  %v1829 = vmul.f32 %v1822, %v1818
  %v1830 = vmul.f32 %v1823, %v1818
  %v1831 = vmul.f32 %v1824, %v1818
  %v1832 = vmul.f32 %v1825, %v1818
  %v1833 = vld [vmem:[%s5] sm:$0xff]
  %1835 = vset.pattern.permute.xlu0 0
  %1836 = vperm.xlu0 %1835, %v1833
  %v1837 = vpop.permute.xlu0 %1836
  %v1839 = vmul.f32 %v1826, %v1837
  %v1840 = vmul.f32 %v1827, %v1837
  %v1841 = vmul.f32 %v1828, %v1837
  %v1842 = vmul.f32 %v1829, %v1837
  %v1843 = vmul.f32 %v1830, %v1837
  %v1844 = vmul.f32 %v1831, %v1837
  %v1845 = vmul.f32 %v1832, %v1837
  %v1846 = vld [vmem:[%s6] sm:$0xff]
  %1848 = vset.pattern.permute.xlu0 0
  %1849 = vperm.xlu0 %1848, %v1846
  %v1850 = vpop.permute.xlu0 %1849
  %v1852 = vadd.f32 %v1839, %v1850
  %v1853 = vadd.f32 %v1840, %v1850
  %v1854 = vadd.f32 %v1841, %v1850
  %v1855 = vadd.f32 %v1842, %v1850
  %v1856 = vadd.f32 %v1843, %v1850
  %v1857 = vadd.f32 %v1844, %v1850
  %v1858 = vadd.f32 %v1845, %v1850
  %v1859 = vmax.f32 %v1852, 0.0
  %v1860 = vmax.f32 %v1853, 0.0
  %v1861 = vmax.f32 %v1854, 0.0
  %v1862 = vmax.f32 %v1855, 0.0
  %v1863 = vmax.f32 %v1856, 0.0
  %v1864 = vmax.f32 %v1857, 0.0
  %v1865 = vmax.f32 %v1858, 0.0
  %v1866 = vmul.f32 %v1748, %v1859
  %v1867 = vmul.f32 %v1752, %v1860
  %v1868 = vmul.f32 %v1756, %v1861
  %v1869 = vmul.f32 %v1760, %v1862
  %v1870 = vmul.f32 %v1764, %v1863
  %v1871 = vmul.f32 %v1768, %v1864
  %v1872 = vmul.f32 %v1772, %v1865
  %1873 = vst [vmem:[#allocation2 + $0x8] sm:$0xff] %v1866
  %1874 = vst [vmem:[#allocation2 + $0x10] sm:$0xff] %v1867
  %1875 = vst [vmem:[#allocation2 + $0x18] sm:$0xff] %v1868
  %1876 = vst [vmem:[#allocation2 + $0x20] sm:$0xff] %v1869
  %1877 = vst [vmem:[#allocation2 + $0x28] sm:$0xff] %v1870
  %1878 = vst [vmem:[#allocation2 + $0x30] sm:$0xff] %v1871
  %1879 = vst.msk [vmem:[#allocation2 + $0x38] sm:$0xff] %vm96, %v1872
  %v1880 = vld [vmem:[#allocation2] sm:$0xff]
  %v1881 = vld [vmem:[#allocation2 + $0x8] sm:$0xff]
  %v1882 = vld [vmem:[#allocation2 + $0x10] sm:$0xff]
  %v1883 = vld [vmem:[#allocation2 + $0x18] sm:$0xff]
  %v1884 = vld [vmem:[#allocation2 + $0x20] sm:$0xff]
  %v1885 = vld [vmem:[#allocation2 + $0x28] sm:$0xff]
  %v1886 = vld [vmem:[#allocation2 + $0x30] sm:$0xff]
  %1894 = vrot.lane.b32.xlu0 %v1880, 42
  %v1895 = vpop.permute.xlu0 %1894
  %1896 = vrot.lane.b32.xlu0 %v1881, 42
  %v1897 = vpop.permute.xlu0 %1896
  %1898 = vrot.lane.b32.xlu0 %v1882, 42
  %v1899 = vpop.permute.xlu0 %1898
  %1900 = vrot.lane.b32.xlu0 %v1883, 42
  %v1901 = vpop.permute.xlu0 %1900
  %1902 = vrot.lane.b32.xlu0 %v1884, 42
  %v1903 = vpop.permute.xlu0 %1902
  %1904 = vrot.lane.b32.xlu0 %v1885, 42
  %v1905 = vpop.permute.xlu0 %1904
  %1906 = vrot.lane.b32.xlu0 %v1886, 42
  %v1907 = vpop.permute.xlu0 %1906
  %v1908 = vsel %vm76, %v1895, %v1897
  %v1909 = vsel %vm76, %v1897, %v1899
  %v1910 = vsel %vm76, %v1899, %v1901
  %v1911 = vsel %vm76, %v1901, %v1903
  %v1912 = vsel %vm76, %v1903, %v1905
  %v1913 = vsel %vm76, %v1905, %v1907
  %1921 = vst [vmem:[#allocation3] sm:$0xff] %v1908
  %1922 = vst [vmem:[#allocation3 + $0x8] sm:$0xff] %v1909
  %1923 = vst [vmem:[#allocation3 + $0x10] sm:$0xff] %v1910
  %1924 = vst [vmem:[#allocation3 + $0x18] sm:$0xff] %v1911
  %1925 = vst [vmem:[#allocation3 + $0x20] sm:$0xff] %v1912
  %1926 = vst [vmem:[#allocation3 + $0x28] sm:$0xff] %v1913
  %1927 = vst.msk [vmem:[#allocation3 + $0x30] sm:$0xff] %vm96, %v1907
  %v1928 = vld [vmem:[#allocation2] sm:$0xff]
  %v1929 = vld [vmem:[#allocation2 + $0x8] sm:$0xff]
  %v1930 = vld [vmem:[#allocation2 + $0x10] sm:$0xff]
  %v1931 = vld [vmem:[#allocation2 + $0x18] sm:$0xff]
  %v1932 = vld [vmem:[#allocation2 + $0x20] sm:$0xff]
  %v1933 = vld [vmem:[#allocation2 + $0x28] sm:$0xff]
  %v1934 = vld [vmem:[#allocation2 + $0x30] sm:$0xff]
  %1942 = vrot.lane.b32.xlu0 %v1928, 41
  %v1943 = vpop.permute.xlu0 %1942
  %1944 = vrot.lane.b32.xlu0 %v1929, 41
  %v1945 = vpop.permute.xlu0 %1944
  %1946 = vrot.lane.b32.xlu0 %v1930, 41
  %v1947 = vpop.permute.xlu0 %1946
  %1948 = vrot.lane.b32.xlu0 %v1931, 41
  %v1949 = vpop.permute.xlu0 %1948
  %1950 = vrot.lane.b32.xlu0 %v1932, 41
  %v1951 = vpop.permute.xlu0 %1950
  %1952 = vrot.lane.b32.xlu0 %v1933, 41
  %v1953 = vpop.permute.xlu0 %1952
  %1954 = vrot.lane.b32.xlu0 %v1934, 41
  %v1955 = vpop.permute.xlu0 %1954
  %v1956 = vsel %vm126, %v1943, %v1945
  %v1957 = vsel %vm126, %v1945, %v1947
  %v1958 = vsel %vm126, %v1947, %v1949
  %v1959 = vsel %vm126, %v1949, %v1951
  %v1960 = vsel %vm126, %v1951, %v1953
  %v1961 = vsel %vm126, %v1953, %v1955
  %1969 = vst [vmem:[#allocation3 + $0x38] sm:$0xff] %v1956
  %1970 = vst [vmem:[#allocation3 + $0x40] sm:$0xff] %v1957
  %1971 = vst [vmem:[#allocation3 + $0x48] sm:$0xff] %v1958
  %1972 = vst [vmem:[#allocation3 + $0x50] sm:$0xff] %v1959
  %1973 = vst [vmem:[#allocation3 + $0x58] sm:$0xff] %v1960
  %1974 = vst [vmem:[#allocation3 + $0x60] sm:$0xff] %v1961
  %1975 = vst.msk [vmem:[#allocation3 + $0x68] sm:$0xff] %vm96, %v1955
  %v1976 = vld [vmem:[#allocation2] sm:$0xff]
  %v1977 = vld [vmem:[#allocation2 + $0x8] sm:$0xff]
  %v1978 = vld [vmem:[#allocation2 + $0x10] sm:$0xff]
  %v1979 = vld [vmem:[#allocation2 + $0x18] sm:$0xff]
  %v1980 = vld [vmem:[#allocation2 + $0x20] sm:$0xff]
  %v1981 = vld [vmem:[#allocation2 + $0x28] sm:$0xff]
  %v1982 = vld [vmem:[#allocation2 + $0x30] sm:$0xff]
  %1990 = vrot.lane.b32.xlu0 %v1976, 40
  %v1991 = vpop.permute.xlu0 %1990
  %1992 = vrot.lane.b32.xlu0 %v1977, 40
  %v1993 = vpop.permute.xlu0 %1992
  %1994 = vrot.lane.b32.xlu0 %v1978, 40
  %v1995 = vpop.permute.xlu0 %1994
  %1996 = vrot.lane.b32.xlu0 %v1979, 40
  %v1997 = vpop.permute.xlu0 %1996
  %1998 = vrot.lane.b32.xlu0 %v1980, 40
  %v1999 = vpop.permute.xlu0 %1998
  %2000 = vrot.lane.b32.xlu0 %v1981, 40
  %v2001 = vpop.permute.xlu0 %2000
  %2002 = vrot.lane.b32.xlu0 %v1982, 40
  %v2003 = vpop.permute.xlu0 %2002
  %v2004 = vsel %vm175, %v1991, %v1993
  %v2005 = vsel %vm175, %v1993, %v1995
  %v2006 = vsel %vm175, %v1995, %v1997
  %v2007 = vsel %vm175, %v1997, %v1999
  %v2008 = vsel %vm175, %v1999, %v2001
  %v2009 = vsel %vm175, %v2001, %v2003
  %2017 = vst [vmem:[#allocation3 + $0x70] sm:$0xff] %v2004
  %2018 = vst [vmem:[#allocation3 + $0x78] sm:$0xff] %v2005
  %2019 = vst [vmem:[#allocation3 + $0x80] sm:$0xff] %v2006
  %2020 = vst [vmem:[#allocation3 + $0x88] sm:$0xff] %v2007
  %2021 = vst [vmem:[#allocation3 + $0x90] sm:$0xff] %v2008
  %2022 = vst [vmem:[#allocation3 + $0x98] sm:$0xff] %v2009
  %2023 = vst.msk [vmem:[#allocation3 + $0xa0] sm:$0xff] %vm96, %v2003
  %v2024 = vld [vmem:[#allocation2] sm:$0xff]
  %v2025 = vld [vmem:[#allocation2 + $0x8] sm:$0xff]
  %v2026 = vld [vmem:[#allocation2 + $0x10] sm:$0xff]
  %v2027 = vld [vmem:[#allocation2 + $0x18] sm:$0xff]
  %v2028 = vld [vmem:[#allocation2 + $0x20] sm:$0xff]
  %v2029 = vld [vmem:[#allocation2 + $0x28] sm:$0xff]
  %v2030 = vld [vmem:[#allocation2 + $0x30] sm:$0xff]
  %2038 = vrot.lane.b32.xlu0 %v2024, 39
  %v2039 = vpop.permute.xlu0 %2038
  %2040 = vrot.lane.b32.xlu0 %v2025, 39
  %v2041 = vpop.permute.xlu0 %2040
  %2042 = vrot.lane.b32.xlu0 %v2026, 39
  %v2043 = vpop.permute.xlu0 %2042
  %2044 = vrot.lane.b32.xlu0 %v2027, 39
  %v2045 = vpop.permute.xlu0 %2044
  %2046 = vrot.lane.b32.xlu0 %v2028, 39
  %v2047 = vpop.permute.xlu0 %2046
  %2048 = vrot.lane.b32.xlu0 %v2029, 39
  %v2049 = vpop.permute.xlu0 %2048
  %2050 = vrot.lane.b32.xlu0 %v2030, 39
  %v2051 = vpop.permute.xlu0 %2050
  %v2052 = vsel %vm224, %v2039, %v2041
  %v2053 = vsel %vm224, %v2041, %v2043
  %v2054 = vsel %vm224, %v2043, %v2045
  %v2055 = vsel %vm224, %v2045, %v2047
  %v2056 = vsel %vm224, %v2047, %v2049
  %v2057 = vsel %vm224, %v2049, %v2051
  %2065 = vst [vmem:[#allocation3 + $0xa8] sm:$0xff] %v2052
  %2066 = vst [vmem:[#allocation3 + $0xb0] sm:$0xff] %v2053
  %2067 = vst [vmem:[#allocation3 + $0xb8] sm:$0xff] %v2054
  %2068 = vst [vmem:[#allocation3 + $0xc0] sm:$0xff] %v2055
  %2069 = vst [vmem:[#allocation3 + $0xc8] sm:$0xff] %v2056
  %2070 = vst [vmem:[#allocation3 + $0xd0] sm:$0xff] %v2057
  %2071 = vst.msk [vmem:[#allocation3 + $0xd8] sm:$0xff] %vm96, %v2051
  %v2072 = vld [vmem:[#allocation2] sm:$0xff]
  %v2073 = vld [vmem:[#allocation2 + $0x8] sm:$0xff]
  %v2074 = vld [vmem:[#allocation2 + $0x10] sm:$0xff]
  %v2075 = vld [vmem:[#allocation2 + $0x18] sm:$0xff]
  %v2076 = vld [vmem:[#allocation2 + $0x20] sm:$0xff]
  %v2077 = vld [vmem:[#allocation2 + $0x28] sm:$0xff]
  %v2078 = vld [vmem:[#allocation2 + $0x30] sm:$0xff]
  %2086 = vrot.lane.b32.xlu0 %v2072, 38
  %v2087 = vpop.permute.xlu0 %2086
  %2088 = vrot.lane.b32.xlu0 %v2073, 38
  %v2089 = vpop.permute.xlu0 %2088
  %2090 = vrot.lane.b32.xlu0 %v2074, 38
  %v2091 = vpop.permute.xlu0 %2090
  %2092 = vrot.lane.b32.xlu0 %v2075, 38
  %v2093 = vpop.permute.xlu0 %2092
  %2094 = vrot.lane.b32.xlu0 %v2076, 38
  %v2095 = vpop.permute.xlu0 %2094
  %2096 = vrot.lane.b32.xlu0 %v2077, 38
  %v2097 = vpop.permute.xlu0 %2096
  %2098 = vrot.lane.b32.xlu0 %v2078, 38
  %v2099 = vpop.permute.xlu0 %2098
  %v2100 = vsel %vm273, %v2087, %v2089
  %v2101 = vsel %vm273, %v2089, %v2091
  %v2102 = vsel %vm273, %v2091, %v2093
  %v2103 = vsel %vm273, %v2093, %v2095
  %v2104 = vsel %vm273, %v2095, %v2097
  %v2105 = vsel %vm273, %v2097, %v2099
  %2113 = vst [vmem:[#allocation3 + $0xe0] sm:$0xff] %v2100
  %2114 = vst [vmem:[#allocation3 + $0xe8] sm:$0xff] %v2101
  %2115 = vst [vmem:[#allocation3 + $0xf0] sm:$0xff] %v2102
  %2116 = vst [vmem:[#allocation3 + $0xf8] sm:$0xff] %v2103
  %2117 = vst [vmem:[#allocation3 + $0x100] sm:$0xff] %v2104
  %2118 = vst [vmem:[#allocation3 + $0x108] sm:$0xff] %v2105
  %2119 = vst.msk [vmem:[#allocation3 + $0x110] sm:$0xff] %vm96, %v2099
  %v2120 = vld [vmem:[#allocation2] sm:$0xff]
  %v2121 = vld [vmem:[#allocation2 + $0x8] sm:$0xff]
  %v2122 = vld [vmem:[#allocation2 + $0x10] sm:$0xff]
  %v2123 = vld [vmem:[#allocation2 + $0x18] sm:$0xff]
  %v2124 = vld [vmem:[#allocation2 + $0x20] sm:$0xff]
  %v2125 = vld [vmem:[#allocation2 + $0x28] sm:$0xff]
  %v2126 = vld [vmem:[#allocation2 + $0x30] sm:$0xff]
  %v2127 = vld [vmem:[#allocation2 + $0x38] sm:$0xff]
  %2136 = vrot.lane.b32.xlu0 %v2120, 22
  %v2137 = vpop.permute.xlu0 %2136
  %2138 = vrot.lane.b32.xlu0 %v2121, 22
  %v2139 = vpop.permute.xlu0 %2138
  %2140 = vrot.lane.b32.xlu0 %v2122, 22
  %v2141 = vpop.permute.xlu0 %2140
  %2142 = vrot.lane.b32.xlu0 %v2123, 22
  %v2143 = vpop.permute.xlu0 %2142
  %2144 = vrot.lane.b32.xlu0 %v2124, 22
  %v2145 = vpop.permute.xlu0 %2144
  %2146 = vrot.lane.b32.xlu0 %v2125, 22
  %v2147 = vpop.permute.xlu0 %2146
  %2148 = vrot.lane.b32.xlu0 %v2126, 22
  %v2149 = vpop.permute.xlu0 %2148
  %2150 = vrot.lane.b32.xlu0 %v2127, 22
  %v2151 = vpop.permute.xlu0 %2150
  %v2152 = vsel %vm326, %v2137, %v2139
  %v2153 = vsel %vm326, %v2139, %v2141
  %v2154 = vsel %vm326, %v2141, %v2143
  %v2155 = vsel %vm326, %v2143, %v2145
  %v2156 = vsel %vm326, %v2145, %v2147
  %v2157 = vsel %vm326, %v2147, %v2149
  %v2158 = vsel %vm326, %v2149, %v2151
  %2166 = vst [vmem:[#allocation3 + $0x118] sm:$0xff] %v2152
  %2167 = vst [vmem:[#allocation3 + $0x120] sm:$0xff] %v2153
  %2168 = vst [vmem:[#allocation3 + $0x128] sm:$0xff] %v2154
  %2169 = vst [vmem:[#allocation3 + $0x130] sm:$0xff] %v2155
  %2170 = vst [vmem:[#allocation3 + $0x138] sm:$0xff] %v2156
  %2171 = vst [vmem:[#allocation3 + $0x140] sm:$0xff] %v2157
  %2172 = vst.msk [vmem:[#allocation3 + $0x148] sm:$0xff] %vm96, %v2158
  %v2173 = vld [vmem:[#allocation2] sm:$0xff]
  %v2174 = vld [vmem:[#allocation2 + $0x8] sm:$0xff]
  %v2175 = vld [vmem:[#allocation2 + $0x10] sm:$0xff]
  %v2176 = vld [vmem:[#allocation2 + $0x18] sm:$0xff]
  %v2177 = vld [vmem:[#allocation2 + $0x20] sm:$0xff]
  %v2178 = vld [vmem:[#allocation2 + $0x28] sm:$0xff]
  %v2179 = vld [vmem:[#allocation2 + $0x30] sm:$0xff]
  %v2180 = vld [vmem:[#allocation2 + $0x38] sm:$0xff]
  %2189 = vrot.lane.b32.xlu0 %v2173, 21
  %v2190 = vpop.permute.xlu0 %2189
  %2191 = vrot.lane.b32.xlu0 %v2174, 21
  %v2192 = vpop.permute.xlu0 %2191
  %2193 = vrot.lane.b32.xlu0 %v2175, 21
  %v2194 = vpop.permute.xlu0 %2193
  %2195 = vrot.lane.b32.xlu0 %v2176, 21
  %v2196 = vpop.permute.xlu0 %2195
  %2197 = vrot.lane.b32.xlu0 %v2177, 21
  %v2198 = vpop.permute.xlu0 %2197
  %2199 = vrot.lane.b32.xlu0 %v2178, 21
  %v2200 = vpop.permute.xlu0 %2199
  %2201 = vrot.lane.b32.xlu0 %v2179, 21
  %v2202 = vpop.permute.xlu0 %2201
  %2203 = vrot.lane.b32.xlu0 %v2180, 21
  %v2204 = vpop.permute.xlu0 %2203
  %v2205 = vsel %vm380, %v2190, %v2192
  %v2206 = vsel %vm380, %v2192, %v2194
  %v2207 = vsel %vm380, %v2194, %v2196
  %v2208 = vsel %vm380, %v2196, %v2198
  %v2209 = vsel %vm380, %v2198, %v2200
  %v2210 = vsel %vm380, %v2200, %v2202
  %v2211 = vsel %vm380, %v2202, %v2204
  %2219 = vst [vmem:[#allocation3 + $0x150] sm:$0xff] %v2205
  %2220 = vst [vmem:[#allocation3 + $0x158] sm:$0xff] %v2206
  %2221 = vst [vmem:[#allocation3 + $0x160] sm:$0xff] %v2207
  %2222 = vst [vmem:[#allocation3 + $0x168] sm:$0xff] %v2208
  %2223 = vst [vmem:[#allocation3 + $0x170] sm:$0xff] %v2209
  %2224 = vst [vmem:[#allocation3 + $0x178] sm:$0xff] %v2210
  %2225 = vst.msk [vmem:[#allocation3 + $0x180] sm:$0xff] %vm96, %v2211
  %v2226 = vld [vmem:[#allocation2] sm:$0xff]
  %v2227 = vld [vmem:[#allocation2 + $0x8] sm:$0xff]
  %v2228 = vld [vmem:[#allocation2 + $0x10] sm:$0xff]
  %v2229 = vld [vmem:[#allocation2 + $0x18] sm:$0xff]
  %v2230 = vld [vmem:[#allocation2 + $0x20] sm:$0xff]
  %v2231 = vld [vmem:[#allocation2 + $0x28] sm:$0xff]
  %v2232 = vld [vmem:[#allocation2 + $0x30] sm:$0xff]
  %v2233 = vld [vmem:[#allocation2 + $0x38] sm:$0xff]
  %2242 = vrot.lane.b32.xlu0 %v2226, 20
  %v2243 = vpop.permute.xlu0 %2242
  %2244 = vrot.lane.b32.xlu0 %v2227, 20
  %v2245 = vpop.permute.xlu0 %2244
  %2246 = vrot.lane.b32.xlu0 %v2228, 20
  %v2247 = vpop.permute.xlu0 %2246
  %2248 = vrot.lane.b32.xlu0 %v2229, 20
  %v2249 = vpop.permute.xlu0 %2248
  %2250 = vrot.lane.b32.xlu0 %v2230, 20
  %v2251 = vpop.permute.xlu0 %2250
  %2252 = vrot.lane.b32.xlu0 %v2231, 20
  %v2253 = vpop.permute.xlu0 %2252
  %2254 = vrot.lane.b32.xlu0 %v2232, 20
  %v2255 = vpop.permute.xlu0 %2254
  %2256 = vrot.lane.b32.xlu0 %v2233, 20
  %v2257 = vpop.permute.xlu0 %2256
  %v2258 = vsel %vm434, %v2243, %v2245
  %v2259 = vsel %vm434, %v2245, %v2247
  %v2260 = vsel %vm434, %v2247, %v2249
  %v2261 = vsel %vm434, %v2249, %v2251
  %v2262 = vsel %vm434, %v2251, %v2253
  %v2263 = vsel %vm434, %v2253, %v2255
  %v2264 = vsel %vm434, %v2255, %v2257
  %2272 = vst [vmem:[#allocation3 + $0x188] sm:$0xff] %v2258
  %2273 = vst [vmem:[#allocation3 + $0x190] sm:$0xff] %v2259
  %2274 = vst [vmem:[#allocation3 + $0x198] sm:$0xff] %v2260
  %2275 = vst [vmem:[#allocation3 + $0x1a0] sm:$0xff] %v2261
  %2276 = vst [vmem:[#allocation3 + $0x1a8] sm:$0xff] %v2262
  %2277 = vst [vmem:[#allocation3 + $0x1b0] sm:$0xff] %v2263
  %2278 = vst.msk [vmem:[#allocation3 + $0x1b8] sm:$0xff] %vm96, %v2264
  %v2279 = vld [vmem:[#allocation2] sm:$0xff]
  %v2280 = vld [vmem:[#allocation2 + $0x8] sm:$0xff]
  %v2281 = vld [vmem:[#allocation2 + $0x10] sm:$0xff]
  %v2282 = vld [vmem:[#allocation2 + $0x18] sm:$0xff]
  %v2283 = vld [vmem:[#allocation2 + $0x20] sm:$0xff]
  %v2284 = vld [vmem:[#allocation2 + $0x28] sm:$0xff]
  %v2285 = vld [vmem:[#allocation2 + $0x30] sm:$0xff]
  %v2286 = vld [vmem:[#allocation2 + $0x38] sm:$0xff]
  %2295 = vrot.lane.b32.xlu0 %v2279, 19
  %v2296 = vpop.permute.xlu0 %2295
  %2297 = vrot.lane.b32.xlu0 %v2280, 19
  %v2298 = vpop.permute.xlu0 %2297
  %2299 = vrot.lane.b32.xlu0 %v2281, 19
  %v2300 = vpop.permute.xlu0 %2299
  %2301 = vrot.lane.b32.xlu0 %v2282, 19
  %v2302 = vpop.permute.xlu0 %2301
  %2303 = vrot.lane.b32.xlu0 %v2283, 19
  %v2304 = vpop.permute.xlu0 %2303
  %2305 = vrot.lane.b32.xlu0 %v2284, 19
  %v2306 = vpop.permute.xlu0 %2305
  %2307 = vrot.lane.b32.xlu0 %v2285, 19
  %v2308 = vpop.permute.xlu0 %2307
  %2309 = vrot.lane.b32.xlu0 %v2286, 19
  %v2310 = vpop.permute.xlu0 %2309
  %v2311 = vsel %vm488, %v2296, %v2298
  %v2312 = vsel %vm488, %v2298, %v2300
  %v2313 = vsel %vm488, %v2300, %v2302
  %v2314 = vsel %vm488, %v2302, %v2304
  %v2315 = vsel %vm488, %v2304, %v2306
  %v2316 = vsel %vm488, %v2306, %v2308
  %v2317 = vsel %vm488, %v2308, %v2310
  %2325 = vst [vmem:[#allocation3 + $0x1c0] sm:$0xff] %v2311
  %2326 = vst [vmem:[#allocation3 + $0x1c8] sm:$0xff] %v2312
  %2327 = vst [vmem:[#allocation3 + $0x1d0] sm:$0xff] %v2313
  %2328 = vst [vmem:[#allocation3 + $0x1d8] sm:$0xff] %v2314
  %2329 = vst [vmem:[#allocation3 + $0x1e0] sm:$0xff] %v2315
  %2330 = vst [vmem:[#allocation3 + $0x1e8] sm:$0xff] %v2316
  %2331 = vst.msk [vmem:[#allocation3 + $0x1f0] sm:$0xff] %vm96, %v2317
  %v2332 = vld [vmem:[#allocation2] sm:$0xff]
  %v2333 = vld [vmem:[#allocation2 + $0x8] sm:$0xff]
  %v2334 = vld [vmem:[#allocation2 + $0x10] sm:$0xff]
  %v2335 = vld [vmem:[#allocation2 + $0x18] sm:$0xff]
  %v2336 = vld [vmem:[#allocation2 + $0x20] sm:$0xff]
  %v2337 = vld [vmem:[#allocation2 + $0x28] sm:$0xff]
  %v2338 = vld [vmem:[#allocation2 + $0x30] sm:$0xff]
  %v2339 = vld [vmem:[#allocation2 + $0x38] sm:$0xff]
  %2348 = vrot.lane.b32.xlu0 %v2332, 18
  %v2349 = vpop.permute.xlu0 %2348
  %2350 = vrot.lane.b32.xlu0 %v2333, 18
  %v2351 = vpop.permute.xlu0 %2350
  %2352 = vrot.lane.b32.xlu0 %v2334, 18
  %v2353 = vpop.permute.xlu0 %2352
  %2354 = vrot.lane.b32.xlu0 %v2335, 18
  %v2355 = vpop.permute.xlu0 %2354
  %2356 = vrot.lane.b32.xlu0 %v2336, 18
  %v2357 = vpop.permute.xlu0 %2356
  %2358 = vrot.lane.b32.xlu0 %v2337, 18
  %v2359 = vpop.permute.xlu0 %2358
  %2360 = vrot.lane.b32.xlu0 %v2338, 18
  %v2361 = vpop.permute.xlu0 %2360
  %2362 = vrot.lane.b32.xlu0 %v2339, 18
  %v2363 = vpop.permute.xlu0 %2362
  %v2364 = vsel %vm542, %v2349, %v2351
  %v2365 = vsel %vm542, %v2351, %v2353
  %v2366 = vsel %vm542, %v2353, %v2355
  %v2367 = vsel %vm542, %v2355, %v2357
  %v2368 = vsel %vm542, %v2357, %v2359
  %v2369 = vsel %vm542, %v2359, %v2361
  %v2370 = vsel %vm542, %v2361, %v2363
  %2378 = vst [vmem:[#allocation3 + $0x1f8] sm:$0xff] %v2364
  %2379 = vst [vmem:[#allocation3 + $0x200] sm:$0xff] %v2365
  %2380 = vst [vmem:[#allocation3 + $0x208] sm:$0xff] %v2366
  %2381 = vst [vmem:[#allocation3 + $0x210] sm:$0xff] %v2367
  %2382 = vst [vmem:[#allocation3 + $0x218] sm:$0xff] %v2368
  %2383 = vst [vmem:[#allocation3 + $0x220] sm:$0xff] %v2369
  %2384 = vst.msk [vmem:[#allocation3 + $0x228] sm:$0xff] %vm96, %v2370
  %v2385 = vld [vmem:[#allocation2] sm:$0xff]
  %v2386 = vld [vmem:[#allocation2 + $0x8] sm:$0xff]
  %v2387 = vld [vmem:[#allocation2 + $0x10] sm:$0xff]
  %v2388 = vld [vmem:[#allocation2 + $0x18] sm:$0xff]
  %v2389 = vld [vmem:[#allocation2 + $0x20] sm:$0xff]
  %v2390 = vld [vmem:[#allocation2 + $0x28] sm:$0xff]
  %v2391 = vld [vmem:[#allocation2 + $0x30] sm:$0xff]
  %v2392 = vld [vmem:[#allocation2 + $0x38] sm:$0xff]
  %2401 = vrot.lane.b32.xlu0 %v2385, 2
  %v2402 = vpop.permute.xlu0 %2401
  %2403 = vrot.lane.b32.xlu0 %v2386, 2
  %v2404 = vpop.permute.xlu0 %2403
  %2405 = vrot.lane.b32.xlu0 %v2387, 2
  %v2406 = vpop.permute.xlu0 %2405
  %2407 = vrot.lane.b32.xlu0 %v2388, 2
  %v2408 = vpop.permute.xlu0 %2407
  %2409 = vrot.lane.b32.xlu0 %v2389, 2
  %v2410 = vpop.permute.xlu0 %2409
  %2411 = vrot.lane.b32.xlu0 %v2390, 2
  %v2412 = vpop.permute.xlu0 %2411
  %2413 = vrot.lane.b32.xlu0 %v2391, 2
  %v2414 = vpop.permute.xlu0 %2413
  %2415 = vrot.lane.b32.xlu0 %v2392, 2
  %v2416 = vpop.permute.xlu0 %2415
  %v2417 = vsel %vm596, %v2402, %v2404
  %v2418 = vsel %vm596, %v2404, %v2406
  %v2419 = vsel %vm596, %v2406, %v2408
  %v2420 = vsel %vm596, %v2408, %v2410
  %v2421 = vsel %vm596, %v2410, %v2412
  %v2422 = vsel %vm596, %v2412, %v2414
  %v2423 = vsel %vm596, %v2414, %v2416
  %2431 = vst [vmem:[#allocation3 + $0x230] sm:$0xff] %v2417
  %2432 = vst [vmem:[#allocation3 + $0x238] sm:$0xff] %v2418
  %2433 = vst [vmem:[#allocation3 + $0x240] sm:$0xff] %v2419
  %2434 = vst [vmem:[#allocation3 + $0x248] sm:$0xff] %v2420
  %2435 = vst [vmem:[#allocation3 + $0x250] sm:$0xff] %v2421
  %2436 = vst [vmem:[#allocation3 + $0x258] sm:$0xff] %v2422
  %2437 = vst.msk [vmem:[#allocation3 + $0x260] sm:$0xff] %vm96, %v2423
  %v2438 = vld [vmem:[#allocation2] sm:$0xff]
  %v2439 = vld [vmem:[#allocation2 + $0x8] sm:$0xff]
  %v2440 = vld [vmem:[#allocation2 + $0x10] sm:$0xff]
  %v2441 = vld [vmem:[#allocation2 + $0x18] sm:$0xff]
  %v2442 = vld [vmem:[#allocation2 + $0x20] sm:$0xff]
  %v2443 = vld [vmem:[#allocation2 + $0x28] sm:$0xff]
  %v2444 = vld [vmem:[#allocation2 + $0x30] sm:$0xff]
  %v2445 = vld [vmem:[#allocation2 + $0x38] sm:$0xff]
  %2454 = vrot.lane.b32.xlu0 %v2438, 1
  %v2455 = vpop.permute.xlu0 %2454
  %2456 = vrot.lane.b32.xlu0 %v2439, 1
  %v2457 = vpop.permute.xlu0 %2456
  %2458 = vrot.lane.b32.xlu0 %v2440, 1
  %v2459 = vpop.permute.xlu0 %2458
  %2460 = vrot.lane.b32.xlu0 %v2441, 1
  %v2461 = vpop.permute.xlu0 %2460
  %2462 = vrot.lane.b32.xlu0 %v2442, 1
  %v2463 = vpop.permute.xlu0 %2462
  %2464 = vrot.lane.b32.xlu0 %v2443, 1
  %v2465 = vpop.permute.xlu0 %2464
  %2466 = vrot.lane.b32.xlu0 %v2444, 1
  %v2467 = vpop.permute.xlu0 %2466
  %2468 = vrot.lane.b32.xlu0 %v2445, 1
  %v2469 = vpop.permute.xlu0 %2468
  %v2470 = vsel %vm650, %v2455, %v2457
  %v2471 = vsel %vm650, %v2457, %v2459
  %v2472 = vsel %vm650, %v2459, %v2461
  %v2473 = vsel %vm650, %v2461, %v2463
  %v2474 = vsel %vm650, %v2463, %v2465
  %v2475 = vsel %vm650, %v2465, %v2467
  %v2476 = vsel %vm650, %v2467, %v2469
  %2484 = vst [vmem:[#allocation3 + $0x268] sm:$0xff] %v2470
  %2485 = vst [vmem:[#allocation3 + $0x270] sm:$0xff] %v2471
  %2486 = vst [vmem:[#allocation3 + $0x278] sm:$0xff] %v2472
  %2487 = vst [vmem:[#allocation3 + $0x280] sm:$0xff] %v2473
  %2488 = vst [vmem:[#allocation3 + $0x288] sm:$0xff] %v2474
  %2489 = vst [vmem:[#allocation3 + $0x290] sm:$0xff] %v2475
  %2490 = vst.msk [vmem:[#allocation3 + $0x298] sm:$0xff] %vm96, %v2476
  %v2491 = vld [vmem:[#allocation2 + $0x8] sm:$0xff]
  %v2492 = vld [vmem:[#allocation2 + $0x10] sm:$0xff]
  %v2493 = vld [vmem:[#allocation2 + $0x18] sm:$0xff]
  %v2494 = vld [vmem:[#allocation2 + $0x20] sm:$0xff]
  %v2495 = vld [vmem:[#allocation2 + $0x28] sm:$0xff]
  %v2496 = vld [vmem:[#allocation2 + $0x30] sm:$0xff]
  %v2497 = vld [vmem:[#allocation2 + $0x38] sm:$0xff]
  %2498 = vst [vmem:[#allocation3 + $0x2a0] sm:$0xff] %v2491
  %2499 = vst [vmem:[#allocation3 + $0x2a8] sm:$0xff] %v2492
  %2500 = vst [vmem:[#allocation3 + $0x2b0] sm:$0xff] %v2493
  %2501 = vst [vmem:[#allocation3 + $0x2b8] sm:$0xff] %v2494
  %2502 = vst [vmem:[#allocation3 + $0x2c0] sm:$0xff] %v2495
  %2503 = vst [vmem:[#allocation3 + $0x2c8] sm:$0xff] %v2496
  %2504 = vst.msk [vmem:[#allocation3 + $0x2d0] sm:$0xff] %vm96, %v2497
  %v2505 = vld [vmem:[#allocation2 + $0x8] sm:$0xff]
  %v2506 = vld [vmem:[#allocation2 + $0x10] sm:$0xff]
  %v2507 = vld [vmem:[#allocation2 + $0x18] sm:$0xff]
  %v2508 = vld [vmem:[#allocation2 + $0x20] sm:$0xff]
  %v2509 = vld [vmem:[#allocation2 + $0x28] sm:$0xff]
  %v2510 = vld [vmem:[#allocation2 + $0x30] sm:$0xff]
  %v2511 = vld [vmem:[#allocation2 + $0x38] sm:$0xff]
  %2519 = vrot.lane.b32.xlu0 %v2505, 127
  %v2520 = vpop.permute.xlu0 %2519
  %2521 = vrot.lane.b32.xlu0 %v2506, 127
  %v2522 = vpop.permute.xlu0 %2521
  %2523 = vrot.lane.b32.xlu0 %v2507, 127
  %v2524 = vpop.permute.xlu0 %2523
  %2525 = vrot.lane.b32.xlu0 %v2508, 127
  %v2526 = vpop.permute.xlu0 %2525
  %2527 = vrot.lane.b32.xlu0 %v2509, 127
  %v2528 = vpop.permute.xlu0 %2527
  %2529 = vrot.lane.b32.xlu0 %v2510, 127
  %v2530 = vpop.permute.xlu0 %2529
  %2531 = vrot.lane.b32.xlu0 %v2511, 127
  %v2532 = vpop.permute.xlu0 %2531
  %v2533 = vsel %vm714, %v2520, %v2522
  %v2534 = vsel %vm714, %v2522, %v2524
  %v2535 = vsel %vm714, %v2524, %v2526
  %v2536 = vsel %vm714, %v2526, %v2528
  %v2537 = vsel %vm714, %v2528, %v2530
  %v2538 = vsel %vm714, %v2530, %v2532
  %2546 = vst [vmem:[#allocation3 + $0x2d8] sm:$0xff] %v2533
  %2547 = vst [vmem:[#allocation3 + $0x2e0] sm:$0xff] %v2534
  %2548 = vst [vmem:[#allocation3 + $0x2e8] sm:$0xff] %v2535
  %2549 = vst [vmem:[#allocation3 + $0x2f0] sm:$0xff] %v2536
  %2550 = vst [vmem:[#allocation3 + $0x2f8] sm:$0xff] %v2537
  %2551 = vst [vmem:[#allocation3 + $0x300] sm:$0xff] %v2538
  %2552 = vst.msk [vmem:[#allocation3 + $0x308] sm:$0xff] %vm96, %v2532
  %v2553 = vld [vmem:[#allocation2 + $0x8] sm:$0xff]
  %v2554 = vld [vmem:[#allocation2 + $0x10] sm:$0xff]
  %v2555 = vld [vmem:[#allocation2 + $0x18] sm:$0xff]
  %v2556 = vld [vmem:[#allocation2 + $0x20] sm:$0xff]
  %v2557 = vld [vmem:[#allocation2 + $0x28] sm:$0xff]
  %v2558 = vld [vmem:[#allocation2 + $0x30] sm:$0xff]
  %v2559 = vld [vmem:[#allocation2 + $0x38] sm:$0xff]
  %2567 = vrot.lane.b32.xlu0 %v2553, 126
  %v2568 = vpop.permute.xlu0 %2567
  %2569 = vrot.lane.b32.xlu0 %v2554, 126
  %v2570 = vpop.permute.xlu0 %2569
  %2571 = vrot.lane.b32.xlu0 %v2555, 126
  %v2572 = vpop.permute.xlu0 %2571
  %2573 = vrot.lane.b32.xlu0 %v2556, 126
  %v2574 = vpop.permute.xlu0 %2573
  %2575 = vrot.lane.b32.xlu0 %v2557, 126
  %v2576 = vpop.permute.xlu0 %2575
  %2577 = vrot.lane.b32.xlu0 %v2558, 126
  %v2578 = vpop.permute.xlu0 %2577
  %2579 = vrot.lane.b32.xlu0 %v2559, 126
  %v2580 = vpop.permute.xlu0 %2579
  %v2581 = vsel %vm763, %v2568, %v2570
  %v2582 = vsel %vm763, %v2570, %v2572
  %v2583 = vsel %vm763, %v2572, %v2574
  %v2584 = vsel %vm763, %v2574, %v2576
  %v2585 = vsel %vm763, %v2576, %v2578
  %v2586 = vsel %vm763, %v2578, %v2580
  %2594 = vst [vmem:[#allocation3 + $0x310] sm:$0xff] %v2581
  %2595 = vst [vmem:[#allocation3 + $0x318] sm:$0xff] %v2582
  %2596 = vst [vmem:[#allocation3 + $0x320] sm:$0xff] %v2583
  %2597 = vst [vmem:[#allocation3 + $0x328] sm:$0xff] %v2584
  %2598 = vst [vmem:[#allocation3 + $0x330] sm:$0xff] %v2585
  %2599 = vst [vmem:[#allocation3 + $0x338] sm:$0xff] %v2586
  %2600 = vst.msk [vmem:[#allocation3 + $0x340] sm:$0xff] %vm96, %v2580
  %v2601 = vld [vmem:[#allocation2 + $0x8] sm:$0xff]
  %v2602 = vld [vmem:[#allocation2 + $0x10] sm:$0xff]
  %v2603 = vld [vmem:[#allocation2 + $0x18] sm:$0xff]
  %v2604 = vld [vmem:[#allocation2 + $0x20] sm:$0xff]
  %v2605 = vld [vmem:[#allocation2 + $0x28] sm:$0xff]
  %v2606 = vld [vmem:[#allocation2 + $0x30] sm:$0xff]
  %v2607 = vld [vmem:[#allocation2 + $0x38] sm:$0xff]
  %2615 = vrot.lane.b32.xlu0 %v2601, 110
  %v2616 = vpop.permute.xlu0 %2615
  %2617 = vrot.lane.b32.xlu0 %v2602, 110
  %v2618 = vpop.permute.xlu0 %2617
  %2619 = vrot.lane.b32.xlu0 %v2603, 110
  %v2620 = vpop.permute.xlu0 %2619
  %2621 = vrot.lane.b32.xlu0 %v2604, 110
  %v2622 = vpop.permute.xlu0 %2621
  %2623 = vrot.lane.b32.xlu0 %v2605, 110
  %v2624 = vpop.permute.xlu0 %2623
  %2625 = vrot.lane.b32.xlu0 %v2606, 110
  %v2626 = vpop.permute.xlu0 %2625
  %2627 = vrot.lane.b32.xlu0 %v2607, 110
  %v2628 = vpop.permute.xlu0 %2627
  %v2629 = vsel %vm812, %v2616, %v2618
  %v2630 = vsel %vm812, %v2618, %v2620
  %v2631 = vsel %vm812, %v2620, %v2622
  %v2632 = vsel %vm812, %v2622, %v2624
  %v2633 = vsel %vm812, %v2624, %v2626
  %v2634 = vsel %vm812, %v2626, %v2628
  %2642 = vst [vmem:[#allocation3 + $0x348] sm:$0xff] %v2629
  %2643 = vst [vmem:[#allocation3 + $0x350] sm:$0xff] %v2630
  %2644 = vst [vmem:[#allocation3 + $0x358] sm:$0xff] %v2631
  %2645 = vst [vmem:[#allocation3 + $0x360] sm:$0xff] %v2632
  %2646 = vst [vmem:[#allocation3 + $0x368] sm:$0xff] %v2633
  %2647 = vst [vmem:[#allocation3 + $0x370] sm:$0xff] %v2634
  %2648 = vst.msk [vmem:[#allocation3 + $0x378] sm:$0xff] %vm96, %v2628
  %v2649 = vld [vmem:[#allocation2 + $0x8] sm:$0xff]
  %v2650 = vld [vmem:[#allocation2 + $0x10] sm:$0xff]
  %v2651 = vld [vmem:[#allocation2 + $0x18] sm:$0xff]
  %v2652 = vld [vmem:[#allocation2 + $0x20] sm:$0xff]
  %v2653 = vld [vmem:[#allocation2 + $0x28] sm:$0xff]
  %v2654 = vld [vmem:[#allocation2 + $0x30] sm:$0xff]
  %v2655 = vld [vmem:[#allocation2 + $0x38] sm:$0xff]
  %2663 = vrot.lane.b32.xlu0 %v2649, 109
  %v2664 = vpop.permute.xlu0 %2663
  %2665 = vrot.lane.b32.xlu0 %v2650, 109
  %v2666 = vpop.permute.xlu0 %2665
  %2667 = vrot.lane.b32.xlu0 %v2651, 109
  %v2668 = vpop.permute.xlu0 %2667
  %2669 = vrot.lane.b32.xlu0 %v2652, 109
  %v2670 = vpop.permute.xlu0 %2669
  %2671 = vrot.lane.b32.xlu0 %v2653, 109
  %v2672 = vpop.permute.xlu0 %2671
  %2673 = vrot.lane.b32.xlu0 %v2654, 109
  %v2674 = vpop.permute.xlu0 %2673
  %2675 = vrot.lane.b32.xlu0 %v2655, 109
  %v2676 = vpop.permute.xlu0 %2675
  %v2677 = vsel %vm861, %v2664, %v2666
  %v2678 = vsel %vm861, %v2666, %v2668
  %v2679 = vsel %vm861, %v2668, %v2670
  %v2680 = vsel %vm861, %v2670, %v2672
  %v2681 = vsel %vm861, %v2672, %v2674
  %v2682 = vsel %vm861, %v2674, %v2676
  %2690 = vst [vmem:[#allocation3 + $0x380] sm:$0xff] %v2677
  %2691 = vst [vmem:[#allocation3 + $0x388] sm:$0xff] %v2678
  %2692 = vst [vmem:[#allocation3 + $0x390] sm:$0xff] %v2679
  %2693 = vst [vmem:[#allocation3 + $0x398] sm:$0xff] %v2680
  %2694 = vst [vmem:[#allocation3 + $0x3a0] sm:$0xff] %v2681
  %2695 = vst [vmem:[#allocation3 + $0x3a8] sm:$0xff] %v2682
  %2696 = vst.msk [vmem:[#allocation3 + $0x3b0] sm:$0xff] %vm96, %v2676
  %v2697 = vld [vmem:[#allocation2 + $0x8] sm:$0xff]
  %v2698 = vld [vmem:[#allocation2 + $0x10] sm:$0xff]
  %v2699 = vld [vmem:[#allocation2 + $0x18] sm:$0xff]
  %v2700 = vld [vmem:[#allocation2 + $0x20] sm:$0xff]
  %v2701 = vld [vmem:[#allocation2 + $0x28] sm:$0xff]
  %v2702 = vld [vmem:[#allocation2 + $0x30] sm:$0xff]
  %v2703 = vld [vmem:[#allocation2 + $0x38] sm:$0xff]
  %2711 = vrot.lane.b32.xlu0 %v2697, 108
  %v2712 = vpop.permute.xlu0 %2711
  %2713 = vrot.lane.b32.xlu0 %v2698, 108
  %v2714 = vpop.permute.xlu0 %2713
  %2715 = vrot.lane.b32.xlu0 %v2699, 108
  %v2716 = vpop.permute.xlu0 %2715
  %2717 = vrot.lane.b32.xlu0 %v2700, 108
  %v2718 = vpop.permute.xlu0 %2717
  %2719 = vrot.lane.b32.xlu0 %v2701, 108
  %v2720 = vpop.permute.xlu0 %2719
  %2721 = vrot.lane.b32.xlu0 %v2702, 108
  %v2722 = vpop.permute.xlu0 %2721
  %2723 = vrot.lane.b32.xlu0 %v2703, 108
  %v2724 = vpop.permute.xlu0 %2723
  %v2725 = vsel %vm910, %v2712, %v2714
  %v2726 = vsel %vm910, %v2714, %v2716
  %v2727 = vsel %vm910, %v2716, %v2718
  %v2728 = vsel %vm910, %v2718, %v2720
  %v2729 = vsel %vm910, %v2720, %v2722
  %v2730 = vsel %vm910, %v2722, %v2724
  %2738 = vst [vmem:[#allocation3 + $0x3b8] sm:$0xff] %v2725
  %2739 = vst [vmem:[#allocation3 + $0x3c0] sm:$0xff] %v2726
  %2740 = vst [vmem:[#allocation3 + $0x3c8] sm:$0xff] %v2727
  %2741 = vst [vmem:[#allocation3 + $0x3d0] sm:$0xff] %v2728
  %2742 = vst [vmem:[#allocation3 + $0x3d8] sm:$0xff] %v2729
  %2743 = vst [vmem:[#allocation3 + $0x3e0] sm:$0xff] %v2730
  %2744 = vst.msk [vmem:[#allocation3 + $0x3e8] sm:$0xff] %vm96, %v2724
  %v2745 = vld [vmem:[#allocation2 + $0x8] sm:$0xff]
  %v2746 = vld [vmem:[#allocation2 + $0x10] sm:$0xff]
  %v2747 = vld [vmem:[#allocation2 + $0x18] sm:$0xff]
  %v2748 = vld [vmem:[#allocation2 + $0x20] sm:$0xff]
  %v2749 = vld [vmem:[#allocation2 + $0x28] sm:$0xff]
  %v2750 = vld [vmem:[#allocation2 + $0x30] sm:$0xff]
  %v2751 = vld [vmem:[#allocation2 + $0x38] sm:$0xff]
  %2759 = vrot.lane.b32.xlu0 %v2745, 107
  %v2760 = vpop.permute.xlu0 %2759
  %2761 = vrot.lane.b32.xlu0 %v2746, 107
  %v2762 = vpop.permute.xlu0 %2761
  %2763 = vrot.lane.b32.xlu0 %v2747, 107
  %v2764 = vpop.permute.xlu0 %2763
  %2765 = vrot.lane.b32.xlu0 %v2748, 107
  %v2766 = vpop.permute.xlu0 %2765
  %2767 = vrot.lane.b32.xlu0 %v2749, 107
  %v2768 = vpop.permute.xlu0 %2767
  %2769 = vrot.lane.b32.xlu0 %v2750, 107
  %v2770 = vpop.permute.xlu0 %2769
  %2771 = vrot.lane.b32.xlu0 %v2751, 107
  %v2772 = vpop.permute.xlu0 %2771
  %v2773 = vsel %vm959, %v2760, %v2762
  %v2774 = vsel %vm959, %v2762, %v2764
  %v2775 = vsel %vm959, %v2764, %v2766
  %v2776 = vsel %vm959, %v2766, %v2768
  %v2777 = vsel %vm959, %v2768, %v2770
  %v2778 = vsel %vm959, %v2770, %v2772
  %2786 = vst [vmem:[#allocation3 + $0x3f0] sm:$0xff] %v2773
  %2787 = vst [vmem:[#allocation3 + $0x3f8] sm:$0xff] %v2774
  %2788 = vst [vmem:[#allocation3 + $0x400] sm:$0xff] %v2775
  %2789 = vst [vmem:[#allocation3 + $0x408] sm:$0xff] %v2776
  %2790 = vst [vmem:[#allocation3 + $0x410] sm:$0xff] %v2777
  %2791 = vst [vmem:[#allocation3 + $0x418] sm:$0xff] %v2778
  %2792 = vst.msk [vmem:[#allocation3 + $0x420] sm:$0xff] %vm96, %v2772
  %v2793 = vld [vmem:[#allocation2 + $0x8] sm:$0xff]
  %v2794 = vld [vmem:[#allocation2 + $0x10] sm:$0xff]
  %v2795 = vld [vmem:[#allocation2 + $0x18] sm:$0xff]
  %v2796 = vld [vmem:[#allocation2 + $0x20] sm:$0xff]
  %v2797 = vld [vmem:[#allocation2 + $0x28] sm:$0xff]
  %v2798 = vld [vmem:[#allocation2 + $0x30] sm:$0xff]
  %v2799 = vld [vmem:[#allocation2 + $0x38] sm:$0xff]
  %2807 = vrot.lane.b32.xlu0 %v2793, 106
  %v2808 = vpop.permute.xlu0 %2807
  %2809 = vrot.lane.b32.xlu0 %v2794, 106
  %v2810 = vpop.permute.xlu0 %2809
  %2811 = vrot.lane.b32.xlu0 %v2795, 106
  %v2812 = vpop.permute.xlu0 %2811
  %2813 = vrot.lane.b32.xlu0 %v2796, 106
  %v2814 = vpop.permute.xlu0 %2813
  %2815 = vrot.lane.b32.xlu0 %v2797, 106
  %v2816 = vpop.permute.xlu0 %2815
  %2817 = vrot.lane.b32.xlu0 %v2798, 106
  %v2818 = vpop.permute.xlu0 %2817
  %2819 = vrot.lane.b32.xlu0 %v2799, 106
  %v2820 = vpop.permute.xlu0 %2819
  %v2821 = vsel %vm1008, %v2808, %v2810
  %v2822 = vsel %vm1008, %v2810, %v2812
  %v2823 = vsel %vm1008, %v2812, %v2814
  %v2824 = vsel %vm1008, %v2814, %v2816
  %v2825 = vsel %vm1008, %v2816, %v2818
  %v2826 = vsel %vm1008, %v2818, %v2820
  %2834 = vst [vmem:[#allocation3 + $0x428] sm:$0xff] %v2821
  %2835 = vst [vmem:[#allocation3 + $0x430] sm:$0xff] %v2822
  %2836 = vst [vmem:[#allocation3 + $0x438] sm:$0xff] %v2823
  %2837 = vst [vmem:[#allocation3 + $0x440] sm:$0xff] %v2824
  %2838 = vst [vmem:[#allocation3 + $0x448] sm:$0xff] %v2825
  %2839 = vst [vmem:[#allocation3 + $0x450] sm:$0xff] %v2826
  %2840 = vst.msk [vmem:[#allocation3 + $0x458] sm:$0xff] %vm96, %v2820
  %v2841 = vld [vmem:[#allocation2 + $0x8] sm:$0xff]
  %v2842 = vld [vmem:[#allocation2 + $0x10] sm:$0xff]
  %v2843 = vld [vmem:[#allocation2 + $0x18] sm:$0xff]
  %v2844 = vld [vmem:[#allocation2 + $0x20] sm:$0xff]
  %v2845 = vld [vmem:[#allocation2 + $0x28] sm:$0xff]
  %v2846 = vld [vmem:[#allocation2 + $0x30] sm:$0xff]
  %v2847 = vld [vmem:[#allocation2 + $0x38] sm:$0xff]
  %2855 = vrot.lane.b32.xlu0 %v2841, 90
  %v2856 = vpop.permute.xlu0 %2855
  %2857 = vrot.lane.b32.xlu0 %v2842, 90
  %v2858 = vpop.permute.xlu0 %2857
  %2859 = vrot.lane.b32.xlu0 %v2843, 90
  %v2860 = vpop.permute.xlu0 %2859
  %2861 = vrot.lane.b32.xlu0 %v2844, 90
  %v2862 = vpop.permute.xlu0 %2861
  %2863 = vrot.lane.b32.xlu0 %v2845, 90
  %v2864 = vpop.permute.xlu0 %2863
  %2865 = vrot.lane.b32.xlu0 %v2846, 90
  %v2866 = vpop.permute.xlu0 %2865
  %2867 = vrot.lane.b32.xlu0 %v2847, 90
  %v2868 = vpop.permute.xlu0 %2867
  %v2869 = vsel %vm1057, %v2856, %v2858
  %v2870 = vsel %vm1057, %v2858, %v2860
  %v2871 = vsel %vm1057, %v2860, %v2862
  %v2872 = vsel %vm1057, %v2862, %v2864
  %v2873 = vsel %vm1057, %v2864, %v2866
  %v2874 = vsel %vm1057, %v2866, %v2868
  %2882 = vst [vmem:[#allocation3 + $0x460] sm:$0xff] %v2869
  %2883 = vst [vmem:[#allocation3 + $0x468] sm:$0xff] %v2870
  %2884 = vst [vmem:[#allocation3 + $0x470] sm:$0xff] %v2871
  %2885 = vst [vmem:[#allocation3 + $0x478] sm:$0xff] %v2872
  %2886 = vst [vmem:[#allocation3 + $0x480] sm:$0xff] %v2873
  %2887 = vst [vmem:[#allocation3 + $0x488] sm:$0xff] %v2874
  %2888 = vst.msk [vmem:[#allocation3 + $0x490] sm:$0xff] %vm96, %v2868
  %v2889 = vld [vmem:[#allocation2 + $0x8] sm:$0xff]
  %v2890 = vld [vmem:[#allocation2 + $0x10] sm:$0xff]
  %v2891 = vld [vmem:[#allocation2 + $0x18] sm:$0xff]
  %v2892 = vld [vmem:[#allocation2 + $0x20] sm:$0xff]
  %v2893 = vld [vmem:[#allocation2 + $0x28] sm:$0xff]
  %v2894 = vld [vmem:[#allocation2 + $0x30] sm:$0xff]
  %v2895 = vld [vmem:[#allocation2 + $0x38] sm:$0xff]
  %2903 = vrot.lane.b32.xlu0 %v2889, 89
  %v2904 = vpop.permute.xlu0 %2903
  %2905 = vrot.lane.b32.xlu0 %v2890, 89
  %v2906 = vpop.permute.xlu0 %2905
  %2907 = vrot.lane.b32.xlu0 %v2891, 89
  %v2908 = vpop.permute.xlu0 %2907
  %2909 = vrot.lane.b32.xlu0 %v2892, 89
  %v2910 = vpop.permute.xlu0 %2909
  %2911 = vrot.lane.b32.xlu0 %v2893, 89
  %v2912 = vpop.permute.xlu0 %2911
  %2913 = vrot.lane.b32.xlu0 %v2894, 89
  %v2914 = vpop.permute.xlu0 %2913
  %2915 = vrot.lane.b32.xlu0 %v2895, 89
  %v2916 = vpop.permute.xlu0 %2915
  %v2917 = vsel %vm1106, %v2904, %v2906
  %v2918 = vsel %vm1106, %v2906, %v2908
  %v2919 = vsel %vm1106, %v2908, %v2910
  %v2920 = vsel %vm1106, %v2910, %v2912
  %v2921 = vsel %vm1106, %v2912, %v2914
  %v2922 = vsel %vm1106, %v2914, %v2916
  %2930 = vst [vmem:[#allocation3 + $0x498] sm:$0xff] %v2917
  %2931 = vst [vmem:[#allocation3 + $0x4a0] sm:$0xff] %v2918
  %2932 = vst [vmem:[#allocation3 + $0x4a8] sm:$0xff] %v2919
  %2933 = vst [vmem:[#allocation3 + $0x4b0] sm:$0xff] %v2920
  %2934 = vst [vmem:[#allocation3 + $0x4b8] sm:$0xff] %v2921
  %2935 = vst [vmem:[#allocation3 + $0x4c0] sm:$0xff] %v2922
  %2936 = vst.msk [vmem:[#allocation3 + $0x4c8] sm:$0xff] %vm96, %v2916
  %v2937 = vld [vmem:[#allocation2 + $0x8] sm:$0xff]
  %v2938 = vld [vmem:[#allocation2 + $0x10] sm:$0xff]
  %v2939 = vld [vmem:[#allocation2 + $0x18] sm:$0xff]
  %v2940 = vld [vmem:[#allocation2 + $0x20] sm:$0xff]
  %v2941 = vld [vmem:[#allocation2 + $0x28] sm:$0xff]
  %v2942 = vld [vmem:[#allocation2 + $0x30] sm:$0xff]
  %v2943 = vld [vmem:[#allocation2 + $0x38] sm:$0xff]
  %2951 = vrot.lane.b32.xlu0 %v2937, 88
  %v2952 = vpop.permute.xlu0 %2951
  %2953 = vrot.lane.b32.xlu0 %v2938, 88
  %v2954 = vpop.permute.xlu0 %2953
  %2955 = vrot.lane.b32.xlu0 %v2939, 88
  %v2956 = vpop.permute.xlu0 %2955
  %2957 = vrot.lane.b32.xlu0 %v2940, 88
  %v2958 = vpop.permute.xlu0 %2957
  %2959 = vrot.lane.b32.xlu0 %v2941, 88
  %v2960 = vpop.permute.xlu0 %2959
  %2961 = vrot.lane.b32.xlu0 %v2942, 88
  %v2962 = vpop.permute.xlu0 %2961
  %2963 = vrot.lane.b32.xlu0 %v2943, 88
  %v2964 = vpop.permute.xlu0 %2963
  %v2965 = vsel %vm1155, %v2952, %v2954
  %v2966 = vsel %vm1155, %v2954, %v2956
  %v2967 = vsel %vm1155, %v2956, %v2958
  %v2968 = vsel %vm1155, %v2958, %v2960
  %v2969 = vsel %vm1155, %v2960, %v2962
  %v2970 = vsel %vm1155, %v2962, %v2964
  %2978 = vst [vmem:[#allocation3 + $0x4d0] sm:$0xff] %v2965
  %2979 = vst [vmem:[#allocation3 + $0x4d8] sm:$0xff] %v2966
  %2980 = vst [vmem:[#allocation3 + $0x4e0] sm:$0xff] %v2967
  %2981 = vst [vmem:[#allocation3 + $0x4e8] sm:$0xff] %v2968
  %2982 = vst [vmem:[#allocation3 + $0x4f0] sm:$0xff] %v2969
  %2983 = vst [vmem:[#allocation3 + $0x4f8] sm:$0xff] %v2970
  %2984 = vst.msk [vmem:[#allocation3 + $0x500] sm:$0xff] %vm96, %v2964
  %v2985 = vld [vmem:[#allocation2 + $0x8] sm:$0xff]
  %v2986 = vld [vmem:[#allocation2 + $0x10] sm:$0xff]
  %v2987 = vld [vmem:[#allocation2 + $0x18] sm:$0xff]
  %v2988 = vld [vmem:[#allocation2 + $0x20] sm:$0xff]
  %v2989 = vld [vmem:[#allocation2 + $0x28] sm:$0xff]
  %v2990 = vld [vmem:[#allocation2 + $0x30] sm:$0xff]
  %v2991 = vld [vmem:[#allocation2 + $0x38] sm:$0xff]
  %2999 = vrot.lane.b32.xlu0 %v2985, 87
  %v3000 = vpop.permute.xlu0 %2999
  %3001 = vrot.lane.b32.xlu0 %v2986, 87
  %v3002 = vpop.permute.xlu0 %3001
  %3003 = vrot.lane.b32.xlu0 %v2987, 87
  %v3004 = vpop.permute.xlu0 %3003
  %3005 = vrot.lane.b32.xlu0 %v2988, 87
  %v3006 = vpop.permute.xlu0 %3005
  %3007 = vrot.lane.b32.xlu0 %v2989, 87
  %v3008 = vpop.permute.xlu0 %3007
  %3009 = vrot.lane.b32.xlu0 %v2990, 87
  %v3010 = vpop.permute.xlu0 %3009
  %3011 = vrot.lane.b32.xlu0 %v2991, 87
  %v3012 = vpop.permute.xlu0 %3011
  %v3013 = vsel %vm1204, %v3000, %v3002
  %v3014 = vsel %vm1204, %v3002, %v3004
  %v3015 = vsel %vm1204, %v3004, %v3006
  %v3016 = vsel %vm1204, %v3006, %v3008
  %v3017 = vsel %vm1204, %v3008, %v3010
  %v3018 = vsel %vm1204, %v3010, %v3012
  %3026 = vst [vmem:[#allocation3 + $0x508] sm:$0xff] %v3013
  %3027 = vst [vmem:[#allocation3 + $0x510] sm:$0xff] %v3014
  %3028 = vst [vmem:[#allocation3 + $0x518] sm:$0xff] %v3015
  %3029 = vst [vmem:[#allocation3 + $0x520] sm:$0xff] %v3016
  %3030 = vst [vmem:[#allocation3 + $0x528] sm:$0xff] %v3017
  %3031 = vst [vmem:[#allocation3 + $0x530] sm:$0xff] %v3018
  %3032 = vst.msk [vmem:[#allocation3 + $0x538] sm:$0xff] %vm96, %v3012
  %v3033 = vld [vmem:[#allocation2 + $0x8] sm:$0xff]
  %v3034 = vld [vmem:[#allocation2 + $0x10] sm:$0xff]
  %v3035 = vld [vmem:[#allocation2 + $0x18] sm:$0xff]
  %v3036 = vld [vmem:[#allocation2 + $0x20] sm:$0xff]
  %v3037 = vld [vmem:[#allocation2 + $0x28] sm:$0xff]
  %v3038 = vld [vmem:[#allocation2 + $0x30] sm:$0xff]
  %v3039 = vld [vmem:[#allocation2 + $0x38] sm:$0xff]
  %3047 = vrot.lane.b32.xlu0 %v3033, 86
  %v3048 = vpop.permute.xlu0 %3047
  %3049 = vrot.lane.b32.xlu0 %v3034, 86
  %v3050 = vpop.permute.xlu0 %3049
  %3051 = vrot.lane.b32.xlu0 %v3035, 86
  %v3052 = vpop.permute.xlu0 %3051
  %3053 = vrot.lane.b32.xlu0 %v3036, 86
  %v3054 = vpop.permute.xlu0 %3053
  %3055 = vrot.lane.b32.xlu0 %v3037, 86
  %v3056 = vpop.permute.xlu0 %3055
  %3057 = vrot.lane.b32.xlu0 %v3038, 86
  %v3058 = vpop.permute.xlu0 %3057
  %3059 = vrot.lane.b32.xlu0 %v3039, 86
  %v3060 = vpop.permute.xlu0 %3059
  %v3061 = vsel %vm1253, %v3048, %v3050
  %v3062 = vsel %vm1253, %v3050, %v3052
  %v3063 = vsel %vm1253, %v3052, %v3054
  %v3064 = vsel %vm1253, %v3054, %v3056
  %v3065 = vsel %vm1253, %v3056, %v3058
  %v3066 = vsel %vm1253, %v3058, %v3060
  %3074 = vst [vmem:[#allocation3 + $0x540] sm:$0xff] %v3061
  %3075 = vst [vmem:[#allocation3 + $0x548] sm:$0xff] %v3062
  %3076 = vst [vmem:[#allocation3 + $0x550] sm:$0xff] %v3063
  %3077 = vst [vmem:[#allocation3 + $0x558] sm:$0xff] %v3064
  %3078 = vst [vmem:[#allocation3 + $0x560] sm:$0xff] %v3065
  %3079 = vst [vmem:[#allocation3 + $0x568] sm:$0xff] %v3066
  %3080 = vst.msk [vmem:[#allocation3 + $0x570] sm:$0xff] %vm96, %v3060
  %v3081 = vld [vmem:[%s7] sm:$0xff]
  %v3082 = vld [vmem:[%s7 + $0x8] sm:$0xff]
  %v3083 = vld [vmem:[#allocation3] sm:$0xff]
  %v3084 = vld [vmem:[#allocation3 + $0x8] sm:$0xff]
  %v3085 = vld [vmem:[#allocation3 + $0x10] sm:$0xff]
  %v3086 = vld [vmem:[#allocation3 + $0x18] sm:$0xff]
  %v3087 = vld [vmem:[#allocation3 + $0x20] sm:$0xff]
  %v3088 = vld [vmem:[#allocation3 + $0x28] sm:$0xff]
  %v3089 = vld [vmem:[#allocation3 + $0x30] sm:$0xff]
  %v3090 = vld [vmem:[#allocation3 + $0x38] sm:$0xff]
  %v3091 = vld [vmem:[#allocation3 + $0x40] sm:$0xff]
  %v3092 = vld [vmem:[#allocation3 + $0x48] sm:$0xff]
  %v3093 = vld [vmem:[#allocation3 + $0x50] sm:$0xff]
  %v3094 = vld [vmem:[#allocation3 + $0x58] sm:$0xff]
  %v3095 = vld [vmem:[#allocation3 + $0x60] sm:$0xff]
  %v3096 = vld [vmem:[#allocation3 + $0x68] sm:$0xff]
  %v3097 = vld [vmem:[#allocation3 + $0x70] sm:$0xff]
  %v3098 = vld [vmem:[#allocation3 + $0x78] sm:$0xff]
  %v3099 = vld [vmem:[#allocation3 + $0x80] sm:$0xff]
  %v3100 = vld [vmem:[#allocation3 + $0x88] sm:$0xff]
  %v3101 = vld [vmem:[#allocation3 + $0x90] sm:$0xff]
  %v3102 = vld [vmem:[#allocation3 + $0x98] sm:$0xff]
  %v3103 = vld [vmem:[#allocation3 + $0xa0] sm:$0xff]
  %v3104 = vld [vmem:[#allocation3 + $0xa8] sm:$0xff]
  %v3105 = vld [vmem:[#allocation3 + $0xb0] sm:$0xff]
  %v3106 = vld [vmem:[#allocation3 + $0xb8] sm:$0xff]
  %v3107 = vld [vmem:[#allocation3 + $0xc0] sm:$0xff]
  %v3108 = vld [vmem:[#allocation3 + $0xc8] sm:$0xff]
  %v3109 = vld [vmem:[#allocation3 + $0xd0] sm:$0xff]
  %v3110 = vld [vmem:[#allocation3 + $0xd8] sm:$0xff]
  %v3111 = vld [vmem:[#allocation3 + $0xe0] sm:$0xff]
  %v3112 = vld [vmem:[#allocation3 + $0xe8] sm:$0xff]
  %v3113 = vld [vmem:[#allocation3 + $0xf0] sm:$0xff]
  %v3114 = vld [vmem:[#allocation3 + $0xf8] sm:$0xff]
  %v3115 = vld [vmem:[#allocation3 + $0x100] sm:$0xff]
  %v3116 = vld [vmem:[#allocation3 + $0x108] sm:$0xff]
  %v3117 = vld [vmem:[#allocation3 + $0x110] sm:$0xff]
  %v3118 = vld [vmem:[#allocation3 + $0x118] sm:$0xff]
  %v3119 = vld [vmem:[#allocation3 + $0x120] sm:$0xff]
  %v3120 = vld [vmem:[#allocation3 + $0x128] sm:$0xff]
  %v3121 = vld [vmem:[#allocation3 + $0x130] sm:$0xff]
  %v3122 = vld [vmem:[#allocation3 + $0x138] sm:$0xff]
  %v3123 = vld [vmem:[#allocation3 + $0x140] sm:$0xff]
  %v3124 = vld [vmem:[#allocation3 + $0x148] sm:$0xff]
  %v3125 = vld [vmem:[#allocation3 + $0x150] sm:$0xff]
  %v3126 = vld [vmem:[#allocation3 + $0x158] sm:$0xff]
  %v3127 = vld [vmem:[#allocation3 + $0x160] sm:$0xff]
  %v3128 = vld [vmem:[#allocation3 + $0x168] sm:$0xff]
  %v3129 = vld [vmem:[#allocation3 + $0x170] sm:$0xff]
  %v3130 = vld [vmem:[#allocation3 + $0x178] sm:$0xff]
  %v3131 = vld [vmem:[#allocation3 + $0x180] sm:$0xff]
  %v3132 = vld [vmem:[#allocation3 + $0x188] sm:$0xff]
  %v3133 = vld [vmem:[#allocation3 + $0x190] sm:$0xff]
  %v3134 = vld [vmem:[#allocation3 + $0x198] sm:$0xff]
  %v3135 = vld [vmem:[#allocation3 + $0x1a0] sm:$0xff]
  %v3136 = vld [vmem:[#allocation3 + $0x1a8] sm:$0xff]
  %v3137 = vld [vmem:[#allocation3 + $0x1b0] sm:$0xff]
  %v3138 = vld [vmem:[#allocation3 + $0x1b8] sm:$0xff]
  %v3139 = vld [vmem:[#allocation3 + $0x1c0] sm:$0xff]
  %v3140 = vld [vmem:[#allocation3 + $0x1c8] sm:$0xff]
  %v3141 = vld [vmem:[#allocation3 + $0x1d0] sm:$0xff]
  %v3142 = vld [vmem:[#allocation3 + $0x1d8] sm:$0xff]
  %v3143 = vld [vmem:[#allocation3 + $0x1e0] sm:$0xff]
  %v3144 = vld [vmem:[#allocation3 + $0x1e8] sm:$0xff]
  %v3145 = vld [vmem:[#allocation3 + $0x1f0] sm:$0xff]
  %v3146 = vld [vmem:[#allocation3 + $0x1f8] sm:$0xff]
  %v3147 = vld [vmem:[#allocation3 + $0x200] sm:$0xff]
  %v3148 = vld [vmem:[#allocation3 + $0x208] sm:$0xff]
  %v3149 = vld [vmem:[#allocation3 + $0x210] sm:$0xff]
  %v3150 = vld [vmem:[#allocation3 + $0x218] sm:$0xff]
  %v3151 = vld [vmem:[#allocation3 + $0x220] sm:$0xff]
  %v3152 = vld [vmem:[#allocation3 + $0x228] sm:$0xff]
  %v3153 = vld [vmem:[#allocation3 + $0x230] sm:$0xff]
  %v3154 = vld [vmem:[#allocation3 + $0x238] sm:$0xff]
  %v3155 = vld [vmem:[#allocation3 + $0x240] sm:$0xff]
  %v3156 = vld [vmem:[#allocation3 + $0x248] sm:$0xff]
  %v3157 = vld [vmem:[#allocation3 + $0x250] sm:$0xff]
  %v3158 = vld [vmem:[#allocation3 + $0x258] sm:$0xff]
  %v3159 = vld [vmem:[#allocation3 + $0x260] sm:$0xff]
  %v3160 = vld [vmem:[#allocation3 + $0x268] sm:$0xff]
  %v3161 = vld [vmem:[#allocation3 + $0x270] sm:$0xff]
  %v3162 = vld [vmem:[#allocation3 + $0x278] sm:$0xff]
  %v3163 = vld [vmem:[#allocation3 + $0x280] sm:$0xff]
  %v3164 = vld [vmem:[#allocation3 + $0x288] sm:$0xff]
  %v3165 = vld [vmem:[#allocation3 + $0x290] sm:$0xff]
  %v3166 = vld [vmem:[#allocation3 + $0x298] sm:$0xff]
  %v3167 = vld [vmem:[#allocation3 + $0x2a0] sm:$0xff]
  %v3168 = vld [vmem:[#allocation3 + $0x2a8] sm:$0xff]
  %v3169 = vld [vmem:[#allocation3 + $0x2b0] sm:$0xff]
  %v3170 = vld [vmem:[#allocation3 + $0x2b8] sm:$0xff]
  %v3171 = vld [vmem:[#allocation3 + $0x2c0] sm:$0xff]
  %v3172 = vld [vmem:[#allocation3 + $0x2c8] sm:$0xff]
  %v3173 = vld [vmem:[#allocation3 + $0x2d0] sm:$0xff]
  %v3174 = vld [vmem:[#allocation3 + $0x2d8] sm:$0xff]
  %v3175 = vld [vmem:[#allocation3 + $0x2e0] sm:$0xff]
  %v3176 = vld [vmem:[#allocation3 + $0x2e8] sm:$0xff]
  %v3177 = vld [vmem:[#allocation3 + $0x2f0] sm:$0xff]
  %v3178 = vld [vmem:[#allocation3 + $0x2f8] sm:$0xff]
  %v3179 = vld [vmem:[#allocation3 + $0x300] sm:$0xff]
  %v3180 = vld [vmem:[#allocation3 + $0x308] sm:$0xff]
  %v3181 = vld [vmem:[#allocation3 + $0x310] sm:$0xff]
  %v3182 = vld [vmem:[#allocation3 + $0x318] sm:$0xff]
  %v3183 = vld [vmem:[#allocation3 + $0x320] sm:$0xff]
  %v3184 = vld [vmem:[#allocation3 + $0x328] sm:$0xff]
  %v3185 = vld [vmem:[#allocation3 + $0x330] sm:$0xff]
  %v3186 = vld [vmem:[#allocation3 + $0x338] sm:$0xff]
  %v3187 = vld [vmem:[#allocation3 + $0x340] sm:$0xff]
  %v3188 = vld [vmem:[#allocation3 + $0x348] sm:$0xff]
  %v3189 = vld [vmem:[#allocation3 + $0x350] sm:$0xff]
  %v3190 = vld [vmem:[#allocation3 + $0x358] sm:$0xff]
  %v3191 = vld [vmem:[#allocation3 + $0x360] sm:$0xff]
  %v3192 = vld [vmem:[#allocation3 + $0x368] sm:$0xff]
  %v3193 = vld [vmem:[#allocation3 + $0x370] sm:$0xff]
  %v3194 = vld [vmem:[#allocation3 + $0x378] sm:$0xff]
  %v3195 = vld [vmem:[#allocation3 + $0x380] sm:$0xff]
  %v3196 = vld [vmem:[#allocation3 + $0x388] sm:$0xff]
  %v3197 = vld [vmem:[#allocation3 + $0x390] sm:$0xff]
  %v3198 = vld [vmem:[#allocation3 + $0x398] sm:$0xff]
  %v3199 = vld [vmem:[#allocation3 + $0x3a0] sm:$0xff]
  %v3200 = vld [vmem:[#allocation3 + $0x3a8] sm:$0xff]
  %v3201 = vld [vmem:[#allocation3 + $0x3b0] sm:$0xff]
  %v3202 = vld [vmem:[#allocation3 + $0x3b8] sm:$0xff]
  %v3203 = vld [vmem:[#allocation3 + $0x3c0] sm:$0xff]
  %v3204 = vld [vmem:[#allocation3 + $0x3c8] sm:$0xff]
  %v3205 = vld [vmem:[#allocation3 + $0x3d0] sm:$0xff]
  %v3206 = vld [vmem:[#allocation3 + $0x3d8] sm:$0xff]
  %v3207 = vld [vmem:[#allocation3 + $0x3e0] sm:$0xff]
  %v3208 = vld [vmem:[#allocation3 + $0x3e8] sm:$0xff]
  %v3209 = vld [vmem:[#allocation3 + $0x3f0] sm:$0xff]
  %v3210 = vld [vmem:[#allocation3 + $0x3f8] sm:$0xff]
  %v3211 = vld [vmem:[#allocation3 + $0x400] sm:$0xff]
  %v3212 = vld [vmem:[#allocation3 + $0x408] sm:$0xff]
  %v3213 = vld [vmem:[#allocation3 + $0x410] sm:$0xff]
  %v3214 = vld [vmem:[#allocation3 + $0x418] sm:$0xff]
  %v3215 = vld [vmem:[#allocation3 + $0x420] sm:$0xff]
  %v3216 = vld [vmem:[#allocation3 + $0x428] sm:$0xff]
  %v3217 = vld [vmem:[#allocation3 + $0x430] sm:$0xff]
  %v3218 = vld [vmem:[#allocation3 + $0x438] sm:$0xff]
  %v3219 = vld [vmem:[#allocation3 + $0x440] sm:$0xff]
  %v3220 = vld [vmem:[#allocation3 + $0x448] sm:$0xff]
  %v3221 = vld [vmem:[#allocation3 + $0x450] sm:$0xff]
  %v3222 = vld [vmem:[#allocation3 + $0x458] sm:$0xff]
  %v3223 = vld [vmem:[#allocation3 + $0x460] sm:$0xff]
  %v3224 = vld [vmem:[#allocation3 + $0x468] sm:$0xff]
  %v3225 = vld [vmem:[#allocation3 + $0x470] sm:$0xff]
  %v3226 = vld [vmem:[#allocation3 + $0x478] sm:$0xff]
  %v3227 = vld [vmem:[#allocation3 + $0x480] sm:$0xff]
  %v3228 = vld [vmem:[#allocation3 + $0x488] sm:$0xff]
  %v3229 = vld [vmem:[#allocation3 + $0x490] sm:$0xff]
  %v3230 = vld [vmem:[#allocation3 + $0x498] sm:$0xff]
  %v3231 = vld [vmem:[#allocation3 + $0x4a0] sm:$0xff]
  %v3232 = vld [vmem:[#allocation3 + $0x4a8] sm:$0xff]
  %v3233 = vld [vmem:[#allocation3 + $0x4b0] sm:$0xff]
  %v3234 = vld [vmem:[#allocation3 + $0x4b8] sm:$0xff]
  %v3235 = vld [vmem:[#allocation3 + $0x4c0] sm:$0xff]
  %v3236 = vld [vmem:[#allocation3 + $0x4c8] sm:$0xff]
  %v3237 = vld [vmem:[#allocation3 + $0x4d0] sm:$0xff]
  %v3238 = vld [vmem:[#allocation3 + $0x4d8] sm:$0xff]
  %v3239 = vld [vmem:[#allocation3 + $0x4e0] sm:$0xff]
  %v3240 = vld [vmem:[#allocation3 + $0x4e8] sm:$0xff]
  %v3241 = vld [vmem:[#allocation3 + $0x4f0] sm:$0xff]
  %v3242 = vld [vmem:[#allocation3 + $0x4f8] sm:$0xff]
  %v3243 = vld [vmem:[#allocation3 + $0x500] sm:$0xff]
  %v3244 = vld [vmem:[#allocation3 + $0x508] sm:$0xff]
  %v3245 = vld [vmem:[#allocation3 + $0x510] sm:$0xff]
  %v3246 = vld [vmem:[#allocation3 + $0x518] sm:$0xff]
  %v3247 = vld [vmem:[#allocation3 + $0x520] sm:$0xff]
  %v3248 = vld [vmem:[#allocation3 + $0x528] sm:$0xff]
  %v3249 = vld [vmem:[#allocation3 + $0x530] sm:$0xff]
  %v3250 = vld [vmem:[#allocation3 + $0x538] sm:$0xff]
  %v3251 = vld [vmem:[#allocation3 + $0x540] sm:$0xff]
  %v3252 = vld [vmem:[#allocation3 + $0x548] sm:$0xff]
  %v3253 = vld [vmem:[#allocation3 + $0x550] sm:$0xff]
  %v3254 = vld [vmem:[#allocation3 + $0x558] sm:$0xff]
  %v3255 = vld [vmem:[#allocation3 + $0x560] sm:$0xff]
  %v3256 = vld [vmem:[#allocation3 + $0x568] sm:$0xff]
  %v3257 = vld [vmem:[#allocation3 + $0x570] sm:$0xff]
  %v3258 = vld [vmem:[%s8] sm:$0xff]
  %3260 = vset.pattern.permute.xlu0 0
  %3261 = vperm.xlu0 %3260, %v3258
  %v3262 = vpop.permute.xlu0 %3261
  %v3265 = vsel %vm1457, %v3082, 0
  %3267 = vmatprep.subr.mxu0 %v3084
  %3268 = vmatpush1.msra.mxu0 %v3083
  %3269 = vmatprep.subr.mxu0 %v3091
  %3270 = vmatpush1.msra.mxu0 %v3090
  %3271 = vmatprep.subr.mxu0 %v3098
  %3272 = vmatpush1.msra.mxu0 %v3097
  %3273 = vmatprep.subr.mxu0 %v3105
  %3274 = vmatpush1.msra.mxu0 %v3104
  %3275 = vmatprep.subr.mxu0 %v3112
  %3276 = vmatpush1.msra.mxu0 %v3111
  %3277 = vmatprep.subr.mxu0 %v3119
  %3278 = vmatpush1.msra.mxu0 %v3118
  %3279 = vmatprep.subr.mxu0 %v3126
  %3280 = vmatpush1.msra.mxu0 %v3125
  %3281 = vmatprep.subr.mxu0 %v3133
  %3282 = vmatpush1.msra.mxu0 %v3132
  %3283 = vmatprep.subr.mxu0 %v3140
  %3284 = vmatpush1.msra.mxu0 %v3139
  %3285 = vmatprep.subr.mxu0 %v3147
  %3286 = vmatpush1.msra.mxu0 %v3146
  %3287 = vmatprep.subr.mxu0 %v3154
  %3288 = vmatpush1.msra.mxu0 %v3153
  %3289 = vmatprep.subr.mxu0 %v3161
  %3290 = vmatpush1.msra.mxu0 %v3160
  %3291 = vmatprep.subr.mxu0 %v3168
  %3292 = vmatpush1.msra.mxu0 %v3167
  %3293 = vmatprep.subr.mxu0 %v3175
  %3294 = vmatpush1.msra.mxu0 %v3174
  %3295 = vmatprep.subr.mxu0 %v3182
  %3296 = vmatpush1.msra.mxu0 %v3181
  %3297 = vmatprep.subr.mxu0 %v3189
  %3298 = vmatpush1.msra.mxu0 %v3188
  %3299 = vmatprep.subr.mxu0 %v3196
  %3300 = vmatpush1.msra.mxu0 %v3195
  %3301 = vmatprep.subr.mxu0 %v3203
  %3302 = vmatpush1.msra.mxu0 %v3202
  %3303 = vmatprep.subr.mxu0 %v3210
  %3304 = vmatpush1.msra.mxu0 %v3209
  %3305 = vmatprep.subr.mxu0 %v3217
  %3306 = vmatpush1.msra.mxu0 %v3216
  %3307 = vmatprep.subr.mxu0 %v3224
  %3308 = vmatpush1.msra.mxu0 %v3223
  %3309 = vmatprep.subr.mxu0 %v3231
  %3310 = vmatpush1.msra.mxu0 %v3230
  %3311 = vmatprep.subr.mxu0 %v3238
  %3312 = vmatpush1.msra.mxu0 %v3237
  %3313 = vmatprep.subr.mxu0 %v3245
  %3314 = vmatpush1.msra.mxu0 %v3244
  %3315 = vmatprep.subr.mxu0 %v3252
  %3316 = vmatpush1.msra.mxu0 %v3251
  %3317 = vmatprep.subr.mxu0 0.0
  %3318 = vmatpush1.msra.mxu0 0.0
  %3319 = vmatprep.subr.mxu0 0.0
  %3320 = vmatpush1.msra.mxu0 0.0
  %3321 = vmatprep.subr.mxu0 0.0
  %3322 = vmatpush1.msra.mxu0 0.0
  %3323 = vmatprep.subr.mxu0 0.0
  %3324 = vmatpush1.msra.mxu0 0.0
  %3325 = vmatprep.subr.mxu0 0.0
  %3326 = vmatpush1.msra.mxu0 0.0
  %3327 = vmatprep.subr.mxu0 0.0
  %3328 = vmatpush1.msra.mxu0 0.0
  %3329 = vmatprep.subr.mxu0 0.0
  %3330 = vmatpush1.msra.mxu0 0.0
  %3331 = vmatprep.mubr.f32.mxu0 %v3265
  %3332 = vmatmul.mubr.f32.gmra.mrb[0].mxu0 %v3081
  %v3333 = vpop.f32.mrb[0].mxu0
  %v3334 = vadd.f32 %v3262, %v3333
  %v3335 = vpop.f32.mrb[0].mxu0
  %v3336 = vadd.f32 %v3262, %v3335
  %3337 = vdwg.mxu0
  %3338 = vmatprep.subr.mxu0 %v3086
  %3339 = vmatpush1.msra.mxu0 %v3085
  %3340 = vmatprep.subr.mxu0 %v3093
  %3341 = vmatpush1.msra.mxu0 %v3092
  %3342 = vmatprep.subr.mxu0 %v3100
  %3343 = vmatpush1.msra.mxu0 %v3099
  %3344 = vmatprep.subr.mxu0 %v3107
  %3345 = vmatpush1.msra.mxu0 %v3106
  %3346 = vmatprep.subr.mxu0 %v3114
  %3347 = vmatpush1.msra.mxu0 %v3113
  %3348 = vmatprep.subr.mxu0 %v3121
  %3349 = vmatpush1.msra.mxu0 %v3120
  %3350 = vmatprep.subr.mxu0 %v3128
  %3351 = vmatpush1.msra.mxu0 %v3127
  %3352 = vmatprep.subr.mxu0 %v3135
  %3353 = vmatpush1.msra.mxu0 %v3134
  %3354 = vmatprep.subr.mxu0 %v3142
  %3355 = vmatpush1.msra.mxu0 %v3141
  %3356 = vmatprep.subr.mxu0 %v3149
  %3357 = vmatpush1.msra.mxu0 %v3148
  %3358 = vmatprep.subr.mxu0 %v3156
  %3359 = vmatpush1.msra.mxu0 %v3155
  %3360 = vmatprep.subr.mxu0 %v3163
  %3361 = vmatpush1.msra.mxu0 %v3162
  %3362 = vmatprep.subr.mxu0 %v3170
  %3363 = vmatpush1.msra.mxu0 %v3169
  %3364 = vmatprep.subr.mxu0 %v3177
  %3365 = vmatpush1.msra.mxu0 %v3176
  %3366 = vmatprep.subr.mxu0 %v3184
  %3367 = vmatpush1.msra.mxu0 %v3183
  %3368 = vmatprep.subr.mxu0 %v3191
  %3369 = vmatpush1.msra.mxu0 %v3190
  %3370 = vmatprep.subr.mxu0 %v3198
  %3371 = vmatpush1.msra.mxu0 %v3197
  %3372 = vmatprep.subr.mxu0 %v3205
  %3373 = vmatpush1.msra.mxu0 %v3204
  %3374 = vmatprep.subr.mxu0 %v3212
  %3375 = vmatpush1.msra.mxu0 %v3211
  %3376 = vmatprep.subr.mxu0 %v3219
  %3377 = vmatpush1.msra.mxu0 %v3218
  %3378 = vmatprep.subr.mxu0 %v3226
  %3379 = vmatpush1.msra.mxu0 %v3225
  %3380 = vmatprep.subr.mxu0 %v3233
  %3381 = vmatpush1.msra.mxu0 %v3232
  %3382 = vmatprep.subr.mxu0 %v3240
  %3383 = vmatpush1.msra.mxu0 %v3239
  %3384 = vmatprep.subr.mxu0 %v3247
  %3385 = vmatpush1.msra.mxu0 %v3246
  %3386 = vmatprep.subr.mxu0 %v3254
  %3387 = vmatpush1.msra.mxu0 %v3253
  %3388 = vmatprep.subr.mxu0 0.0
  %3389 = vmatpush1.msra.mxu0 0.0
  %3390 = vmatprep.subr.mxu0 0.0
  %3391 = vmatpush1.msra.mxu0 0.0
  %3392 = vmatprep.subr.mxu0 0.0
  %3393 = vmatpush1.msra.mxu0 0.0
  %3394 = vmatprep.subr.mxu0 0.0
  %3395 = vmatpush1.msra.mxu0 0.0
  %3396 = vmatprep.subr.mxu0 0.0
  %3397 = vmatpush1.msra.mxu0 0.0
  %3398 = vmatprep.subr.mxu0 0.0
  %3399 = vmatpush1.msra.mxu0 0.0
  %3400 = vmatprep.subr.mxu0 0.0
  %3401 = vmatpush1.msra.mxu0 0.0
  %3402 = vmatprep.mubr.f32.mxu0 %v3265
  %3403 = vmatmul.mubr.f32.gmra.mrb[0].mxu0 %v3081
  %v3404 = vpop.f32.mrb[0].mxu0
  %v3405 = vadd.f32 %v3262, %v3404
  %v3406 = vpop.f32.mrb[0].mxu0
  %v3407 = vadd.f32 %v3262, %v3406
  %3408 = vdwg.mxu0
  %3409 = vmatprep.subr.mxu0 %v3088
  %3410 = vmatpush1.msra.mxu0 %v3087
  %3411 = vmatprep.subr.mxu0 %v3095
  %3412 = vmatpush1.msra.mxu0 %v3094
  %3413 = vmatprep.subr.mxu0 %v3102
  %3414 = vmatpush1.msra.mxu0 %v3101
  %3415 = vmatprep.subr.mxu0 %v3109
  %3416 = vmatpush1.msra.mxu0 %v3108
  %3417 = vmatprep.subr.mxu0 %v3116
  %3418 = vmatpush1.msra.mxu0 %v3115
  %3419 = vmatprep.subr.mxu0 %v3123
  %3420 = vmatpush1.msra.mxu0 %v3122
  %3421 = vmatprep.subr.mxu0 %v3130
  %3422 = vmatpush1.msra.mxu0 %v3129
  %3423 = vmatprep.subr.mxu0 %v3137
  %3424 = vmatpush1.msra.mxu0 %v3136
  %3425 = vmatprep.subr.mxu0 %v3144
  %3426 = vmatpush1.msra.mxu0 %v3143
  %3427 = vmatprep.subr.mxu0 %v3151
  %3428 = vmatpush1.msra.mxu0 %v3150
  %3429 = vmatprep.subr.mxu0 %v3158
  %3430 = vmatpush1.msra.mxu0 %v3157
  %3431 = vmatprep.subr.mxu0 %v3165
  %3432 = vmatpush1.msra.mxu0 %v3164
  %3433 = vmatprep.subr.mxu0 %v3172
  %3434 = vmatpush1.msra.mxu0 %v3171
  %3435 = vmatprep.subr.mxu0 %v3179
  %3436 = vmatpush1.msra.mxu0 %v3178
  %3437 = vmatprep.subr.mxu0 %v3186
  %3438 = vmatpush1.msra.mxu0 %v3185
  %3439 = vmatprep.subr.mxu0 %v3193
  %3440 = vmatpush1.msra.mxu0 %v3192
  %3441 = vmatprep.subr.mxu0 %v3200
  %3442 = vmatpush1.msra.mxu0 %v3199
  %3443 = vmatprep.subr.mxu0 %v3207
  %3444 = vmatpush1.msra.mxu0 %v3206
  %3445 = vmatprep.subr.mxu0 %v3214
  %3446 = vmatpush1.msra.mxu0 %v3213
  %3447 = vmatprep.subr.mxu0 %v3221
  %3448 = vmatpush1.msra.mxu0 %v3220
  %3449 = vmatprep.subr.mxu0 %v3228
  %3450 = vmatpush1.msra.mxu0 %v3227
  %3451 = vmatprep.subr.mxu0 %v3235
  %3452 = vmatpush1.msra.mxu0 %v3234
  %3453 = vmatprep.subr.mxu0 %v3242
  %3454 = vmatpush1.msra.mxu0 %v3241
  %3455 = vmatprep.subr.mxu0 %v3249
  %3456 = vmatpush1.msra.mxu0 %v3248
  %3457 = vmatprep.subr.mxu0 %v3256
  %3458 = vmatpush1.msra.mxu0 %v3255
  %3459 = vmatprep.subr.mxu0 0.0
  %3460 = vmatpush1.msra.mxu0 0.0
  %3461 = vmatprep.subr.mxu0 0.0
  %3462 = vmatpush1.msra.mxu0 0.0
  %3463 = vmatprep.subr.mxu0 0.0
  %3464 = vmatpush1.msra.mxu0 0.0
  %3465 = vmatprep.subr.mxu0 0.0
  %3466 = vmatpush1.msra.mxu0 0.0
  %3467 = vmatprep.subr.mxu0 0.0
  %3468 = vmatpush1.msra.mxu0 0.0
  %3469 = vmatprep.subr.mxu0 0.0
  %3470 = vmatpush1.msra.mxu0 0.0
  %3471 = vmatprep.subr.mxu0 0.0
  %3472 = vmatpush1.msra.mxu0 0.0
  %3473 = vmatprep.mubr.f32.mxu0 %v3265
  %3474 = vmatmul.mubr.f32.gmra.mrb[0].mxu0 %v3081
  %v3475 = vpop.f32.mrb[0].mxu0
  %v3476 = vadd.f32 %v3262, %v3475
  %v3477 = vpop.f32.mrb[0].mxu0
  %v3478 = vadd.f32 %v3262, %v3477
  %3479 = vdwg.mxu0
  %3480 = vmatprep.subr.mxu0 0.0
  %3481 = vmatpush1.msra.mxu0 %v3089
  %3482 = vmatprep.subr.mxu0 0.0
  %3483 = vmatpush1.msra.mxu0 %v3096
  %3484 = vmatprep.subr.mxu0 0.0
  %3485 = vmatpush1.msra.mxu0 %v3103
  %3486 = vmatprep.subr.mxu0 0.0
  %3487 = vmatpush1.msra.mxu0 %v3110
  %3488 = vmatprep.subr.mxu0 0.0
  %3489 = vmatpush1.msra.mxu0 %v3117
  %3490 = vmatprep.subr.mxu0 0.0
  %3491 = vmatpush1.msra.mxu0 %v3124
  %3492 = vmatprep.subr.mxu0 0.0
  %3493 = vmatpush1.msra.mxu0 %v3131
  %3494 = vmatprep.subr.mxu0 0.0
  %3495 = vmatpush1.msra.mxu0 %v3138
  %3496 = vmatprep.subr.mxu0 0.0
  %3497 = vmatpush1.msra.mxu0 %v3145
  %3498 = vmatprep.subr.mxu0 0.0
  %3499 = vmatpush1.msra.mxu0 %v3152
  %3500 = vmatprep.subr.mxu0 0.0
  %3501 = vmatpush1.msra.mxu0 %v3159
  %3502 = vmatprep.subr.mxu0 0.0
  %3503 = vmatpush1.msra.mxu0 %v3166
  %3504 = vmatprep.subr.mxu0 0.0
  %3505 = vmatpush1.msra.mxu0 %v3173
  %3506 = vmatprep.subr.mxu0 0.0
  %3507 = vmatpush1.msra.mxu0 %v3180
  %3508 = vmatprep.subr.mxu0 0.0
  %3509 = vmatpush1.msra.mxu0 %v3187
  %3510 = vmatprep.subr.mxu0 0.0
  %3511 = vmatpush1.msra.mxu0 %v3194
  %3512 = vmatprep.subr.mxu0 0.0
  %3513 = vmatpush1.msra.mxu0 %v3201
  %3514 = vmatprep.subr.mxu0 0.0
  %3515 = vmatpush1.msra.mxu0 %v3208
  %3516 = vmatprep.subr.mxu0 0.0
  %3517 = vmatpush1.msra.mxu0 %v3215
  %3518 = vmatprep.subr.mxu0 0.0
  %3519 = vmatpush1.msra.mxu0 %v3222
  %3520 = vmatprep.subr.mxu0 0.0
  %3521 = vmatpush1.msra.mxu0 %v3229
  %3522 = vmatprep.subr.mxu0 0.0
  %3523 = vmatpush1.msra.mxu0 %v3236
  %3524 = vmatprep.subr.mxu0 0.0
  %3525 = vmatpush1.msra.mxu0 %v3243
  %3526 = vmatprep.subr.mxu0 0.0
  %3527 = vmatpush1.msra.mxu0 %v3250
  %3528 = vmatprep.subr.mxu0 0.0
  %3529 = vmatpush1.msra.mxu0 %v3257
  %3530 = vmatprep.subr.mxu0 0.0
  %3531 = vmatpush1.msra.mxu0 0.0
  %3532 = vmatprep.subr.mxu0 0.0
  %3533 = vmatpush1.msra.mxu0 0.0
  %3534 = vmatprep.subr.mxu0 0.0
  %3535 = vmatpush1.msra.mxu0 0.0
  %3536 = vmatprep.subr.mxu0 0.0
  %3537 = vmatpush1.msra.mxu0 0.0
  %3538 = vmatprep.subr.mxu0 0.0
  %3539 = vmatpush1.msra.mxu0 0.0
  %3540 = vmatprep.subr.mxu0 0.0
  %3541 = vmatpush1.msra.mxu0 0.0
  %3542 = vmatprep.subr.mxu0 0.0
  %3543 = vmatpush1.msra.mxu0 0.0
  %3544 = vmatprep.mubr.f32.mxu0 %v3265
  %3545 = vmatmul.mubr.f32.gmra.mrb[0].mxu0 %v3081
  %v3546 = vpop.f32.mrb[0].mxu0
  %v3547 = vadd.f32 %v3262, %v3546
  %v3548 = vpop.f32.mrb[0].mxu0
  %3549 = vdwg.mxu0
  %v3550 = vmul.f32 %v3334, %v1748
  %v3551 = vmul.f32 %v3336, %v1752
  %v3552 = vmul.f32 %v3405, %v1756
  %v3553 = vmul.f32 %v3407, %v1760
  %v3554 = vmul.f32 %v3476, %v1764
  %v3555 = vmul.f32 %v3478, %v1768
  %v3556 = vmul.f32 %v3547, %v1772
  %v3557 = vadd.f32 %v3550, %v3551
  %v3558 = vadd.f32 %v3557, %v3552
  %v3559 = vadd.f32 %v3558, %v3553
  %v3560 = vadd.f32 %v3559, %v3554
  %v3561 = vadd.f32 %v3560, %v3555
  %v3562 = vsel %vm96, %v3556, 0.0
  %v3563 = vadd.f32 %v3561, %v3562
  %3564 = vadd.xlane.f32.xlu0 %v3563
  %v3565 = vpop.xlane.xlu0 %3564
  %v3566 = vmul.f32 %v3565, 0.001953125
  %v3567 = vmul.f32 %v3550, %v3334
  %v3568 = vmul.f32 %v3551, %v3336
  %v3569 = vmul.f32 %v3552, %v3405
  %v3570 = vmul.f32 %v3553, %v3407
  %v3571 = vmul.f32 %v3554, %v3476
  %v3572 = vmul.f32 %v3555, %v3478
  %v3573 = vmul.f32 %v3556, %v3547
  %v3574 = vadd.f32 %v3567, %v3568
  %v3575 = vadd.f32 %v3574, %v3569
  %v3576 = vadd.f32 %v3575, %v3570
  %v3577 = vadd.f32 %v3576, %v3571
  %v3578 = vadd.f32 %v3577, %v3572
  %v3579 = vsel %vm96, %v3573, 0.0
  %v3580 = vadd.f32 %v3578, %v3579
  %3581 = vadd.xlane.f32.xlu0 %v3580
  %v3582 = vpop.xlane.xlu0 %3581
  %v3583 = vmul.f32 %v3582, 0.001953125
  %v3584 = vmul.f32 %v3566, %v3566
  %v3585 = vsub.f32 %v3583, %v3584
  %v3586 = vmax.f32 %v3585, 0.0
  %v3587 = vadd.f32 %v3586, 1e-05
  %v3588 = vrsqrt.pop %v3587
  %v3589 = vsub.f32 %v3334, %v3566
  %v3590 = vsub.f32 %v3336, %v3566
  %v3591 = vsub.f32 %v3405, %v3566
  %v3592 = vsub.f32 %v3407, %v3566
  %v3593 = vsub.f32 %v3476, %v3566
  %v3594 = vsub.f32 %v3478, %v3566
  %v3595 = vsub.f32 %v3547, %v3566
  %v3596 = vmul.f32 %v3589, %v3588
  %v3597 = vmul.f32 %v3590, %v3588
  %v3598 = vmul.f32 %v3591, %v3588
  %v3599 = vmul.f32 %v3592, %v3588
  %v3600 = vmul.f32 %v3593, %v3588
  %v3601 = vmul.f32 %v3594, %v3588
  %v3602 = vmul.f32 %v3595, %v3588
  %v3603 = vld [vmem:[%s9] sm:$0xff]
  %3605 = vset.pattern.permute.xlu0 0
  %3606 = vperm.xlu0 %3605, %v3603
  %v3607 = vpop.permute.xlu0 %3606
  %v3609 = vmul.f32 %v3596, %v3607
  %v3610 = vmul.f32 %v3597, %v3607
  %v3611 = vmul.f32 %v3598, %v3607
  %v3612 = vmul.f32 %v3599, %v3607
  %v3613 = vmul.f32 %v3600, %v3607
  %v3614 = vmul.f32 %v3601, %v3607
  %v3615 = vmul.f32 %v3602, %v3607
  %v3616 = vld [vmem:[%s10] sm:$0xff]
  %3618 = vset.pattern.permute.xlu0 0
  %3619 = vperm.xlu0 %3618, %v3616
  %v3620 = vpop.permute.xlu0 %3619
  %v3622 = vadd.f32 %v3609, %v3620
  %v3623 = vadd.f32 %v3610, %v3620
  %v3624 = vadd.f32 %v3611, %v3620
  %v3625 = vadd.f32 %v3612, %v3620
  %v3626 = vadd.f32 %v3613, %v3620
  %v3627 = vadd.f32 %v3614, %v3620
  %v3628 = vadd.f32 %v3615, %v3620
  %v3629 = vmax.f32 %v3622, 0.0
  %v3630 = vmax.f32 %v3623, 0.0
  %v3631 = vmax.f32 %v3624, 0.0
  %v3632 = vmax.f32 %v3625, 0.0
  %v3633 = vmax.f32 %v3626, 0.0
  %v3634 = vmax.f32 %v3627, 0.0
  %v3635 = vmax.f32 %v3628, 0.0
  %v3636 = vmul.f32 %v1748, %v3629
  %v3637 = vmul.f32 %v1752, %v3630
  %v3638 = vmul.f32 %v1756, %v3631
  %v3639 = vmul.f32 %v1760, %v3632
  %v3640 = vmul.f32 %v1764, %v3633
  %v3641 = vmul.f32 %v1768, %v3634
  %v3642 = vmul.f32 %v1772, %v3635
  %3643 = vst [vmem:[#allocation2 + $0x8] sm:$0xff] %v3636
  %3644 = vst [vmem:[#allocation2 + $0x10] sm:$0xff] %v3637
  %3645 = vst [vmem:[#allocation2 + $0x18] sm:$0xff] %v3638
  %3646 = vst [vmem:[#allocation2 + $0x20] sm:$0xff] %v3639
  %3647 = vst [vmem:[#allocation2 + $0x28] sm:$0xff] %v3640
  %3648 = vst [vmem:[#allocation2 + $0x30] sm:$0xff] %v3641
  %3649 = vst.msk [vmem:[#allocation2 + $0x38] sm:$0xff] %vm96, %v3642
  %v3650 = vld [vmem:[#allocation2] sm:$0xff]
  %v3651 = vld [vmem:[#allocation2 + $0x8] sm:$0xff]
  %v3652 = vld [vmem:[#allocation2 + $0x10] sm:$0xff]
  %v3653 = vld [vmem:[#allocation2 + $0x18] sm:$0xff]
  %v3654 = vld [vmem:[#allocation2 + $0x20] sm:$0xff]
  %v3655 = vld [vmem:[#allocation2 + $0x28] sm:$0xff]
  %v3656 = vld [vmem:[#allocation2 + $0x30] sm:$0xff]
  %3664 = vrot.lane.b32.xlu0 %v3650, 42
  %v3665 = vpop.permute.xlu0 %3664
  %3666 = vrot.lane.b32.xlu0 %v3651, 42
  %v3667 = vpop.permute.xlu0 %3666
  %3668 = vrot.lane.b32.xlu0 %v3652, 42
  %v3669 = vpop.permute.xlu0 %3668
  %3670 = vrot.lane.b32.xlu0 %v3653, 42
  %v3671 = vpop.permute.xlu0 %3670
  %3672 = vrot.lane.b32.xlu0 %v3654, 42
  %v3673 = vpop.permute.xlu0 %3672
  %3674 = vrot.lane.b32.xlu0 %v3655, 42
  %v3675 = vpop.permute.xlu0 %3674
  %3676 = vrot.lane.b32.xlu0 %v3656, 42
  %v3677 = vpop.permute.xlu0 %3676
  %v3678 = vsel %vm76, %v3665, %v3667
  %v3679 = vsel %vm76, %v3667, %v3669
  %v3680 = vsel %vm76, %v3669, %v3671
  %v3681 = vsel %vm76, %v3671, %v3673
  %v3682 = vsel %vm76, %v3673, %v3675
  %v3683 = vsel %vm76, %v3675, %v3677
  %3691 = vst [vmem:[#allocation3] sm:$0xff] %v3678
  %3692 = vst [vmem:[#allocation3 + $0x8] sm:$0xff] %v3679
  %3693 = vst [vmem:[#allocation3 + $0x10] sm:$0xff] %v3680
  %3694 = vst [vmem:[#allocation3 + $0x18] sm:$0xff] %v3681
  %3695 = vst [vmem:[#allocation3 + $0x20] sm:$0xff] %v3682
  %3696 = vst [vmem:[#allocation3 + $0x28] sm:$0xff] %v3683
  %3697 = vst.msk [vmem:[#allocation3 + $0x30] sm:$0xff] %vm96, %v3677
  %v3698 = vld [vmem:[#allocation2] sm:$0xff]
  %v3699 = vld [vmem:[#allocation2 + $0x8] sm:$0xff]
  %v3700 = vld [vmem:[#allocation2 + $0x10] sm:$0xff]
  %v3701 = vld [vmem:[#allocation2 + $0x18] sm:$0xff]
  %v3702 = vld [vmem:[#allocation2 + $0x20] sm:$0xff]
  %v3703 = vld [vmem:[#allocation2 + $0x28] sm:$0xff]
  %v3704 = vld [vmem:[#allocation2 + $0x30] sm:$0xff]
  %3712 = vrot.lane.b32.xlu0 %v3698, 41
  %v3713 = vpop.permute.xlu0 %3712
  %3714 = vrot.lane.b32.xlu0 %v3699, 41
  %v3715 = vpop.permute.xlu0 %3714
  %3716 = vrot.lane.b32.xlu0 %v3700, 41
  %v3717 = vpop.permute.xlu0 %3716
  %3718 = vrot.lane.b32.xlu0 %v3701, 41
  %v3719 = vpop.permute.xlu0 %3718
  %3720 = vrot.lane.b32.xlu0 %v3702, 41
  %v3721 = vpop.permute.xlu0 %3720
  %3722 = vrot.lane.b32.xlu0 %v3703, 41
  %v3723 = vpop.permute.xlu0 %3722
  %3724 = vrot.lane.b32.xlu0 %v3704, 41
  %v3725 = vpop.permute.xlu0 %3724
  %v3726 = vsel %vm126, %v3713, %v3715
  %v3727 = vsel %vm126, %v3715, %v3717
  %v3728 = vsel %vm126, %v3717, %v3719
  %v3729 = vsel %vm126, %v3719, %v3721
  %v3730 = vsel %vm126, %v3721, %v3723
  %v3731 = vsel %vm126, %v3723, %v3725
  %3739 = vst [vmem:[#allocation3 + $0x38] sm:$0xff] %v3726
  %3740 = vst [vmem:[#allocation3 + $0x40] sm:$0xff] %v3727
  %3741 = vst [vmem:[#allocation3 + $0x48] sm:$0xff] %v3728
  %3742 = vst [vmem:[#allocation3 + $0x50] sm:$0xff] %v3729
  %3743 = vst [vmem:[#allocation3 + $0x58] sm:$0xff] %v3730
  %3744 = vst [vmem:[#allocation3 + $0x60] sm:$0xff] %v3731
  %3745 = vst.msk [vmem:[#allocation3 + $0x68] sm:$0xff] %vm96, %v3725
  %v3746 = vld [vmem:[#allocation2] sm:$0xff]
  %v3747 = vld [vmem:[#allocation2 + $0x8] sm:$0xff]
  %v3748 = vld [vmem:[#allocation2 + $0x10] sm:$0xff]
  %v3749 = vld [vmem:[#allocation2 + $0x18] sm:$0xff]
  %v3750 = vld [vmem:[#allocation2 + $0x20] sm:$0xff]
  %v3751 = vld [vmem:[#allocation2 + $0x28] sm:$0xff]
  %v3752 = vld [vmem:[#allocation2 + $0x30] sm:$0xff]
  %3760 = vrot.lane.b32.xlu0 %v3746, 40
  %v3761 = vpop.permute.xlu0 %3760
  %3762 = vrot.lane.b32.xlu0 %v3747, 40
  %v3763 = vpop.permute.xlu0 %3762
  %3764 = vrot.lane.b32.xlu0 %v3748, 40
  %v3765 = vpop.permute.xlu0 %3764
  %3766 = vrot.lane.b32.xlu0 %v3749, 40
  %v3767 = vpop.permute.xlu0 %3766
  %3768 = vrot.lane.b32.xlu0 %v3750, 40
  %v3769 = vpop.permute.xlu0 %3768
  %3770 = vrot.lane.b32.xlu0 %v3751, 40
  %v3771 = vpop.permute.xlu0 %3770
  %3772 = vrot.lane.b32.xlu0 %v3752, 40
  %v3773 = vpop.permute.xlu0 %3772
  %v3774 = vsel %vm175, %v3761, %v3763
  %v3775 = vsel %vm175, %v3763, %v3765
  %v3776 = vsel %vm175, %v3765, %v3767
  %v3777 = vsel %vm175, %v3767, %v3769
  %v3778 = vsel %vm175, %v3769, %v3771
  %v3779 = vsel %vm175, %v3771, %v3773
  %3787 = vst [vmem:[#allocation3 + $0x70] sm:$0xff] %v3774
  %3788 = vst [vmem:[#allocation3 + $0x78] sm:$0xff] %v3775
  %3789 = vst [vmem:[#allocation3 + $0x80] sm:$0xff] %v3776
  %3790 = vst [vmem:[#allocation3 + $0x88] sm:$0xff] %v3777
  %3791 = vst [vmem:[#allocation3 + $0x90] sm:$0xff] %v3778
  %3792 = vst [vmem:[#allocation3 + $0x98] sm:$0xff] %v3779
  %3793 = vst.msk [vmem:[#allocation3 + $0xa0] sm:$0xff] %vm96, %v3773
  %v3794 = vld [vmem:[#allocation2] sm:$0xff]
  %v3795 = vld [vmem:[#allocation2 + $0x8] sm:$0xff]
  %v3796 = vld [vmem:[#allocation2 + $0x10] sm:$0xff]
  %v3797 = vld [vmem:[#allocation2 + $0x18] sm:$0xff]
  %v3798 = vld [vmem:[#allocation2 + $0x20] sm:$0xff]
  %v3799 = vld [vmem:[#allocation2 + $0x28] sm:$0xff]
  %v3800 = vld [vmem:[#allocation2 + $0x30] sm:$0xff]
  %3808 = vrot.lane.b32.xlu0 %v3794, 39
  %v3809 = vpop.permute.xlu0 %3808
  %3810 = vrot.lane.b32.xlu0 %v3795, 39
  %v3811 = vpop.permute.xlu0 %3810
  %3812 = vrot.lane.b32.xlu0 %v3796, 39
  %v3813 = vpop.permute.xlu0 %3812
  %3814 = vrot.lane.b32.xlu0 %v3797, 39
  %v3815 = vpop.permute.xlu0 %3814
  %3816 = vrot.lane.b32.xlu0 %v3798, 39
  %v3817 = vpop.permute.xlu0 %3816
  %3818 = vrot.lane.b32.xlu0 %v3799, 39
  %v3819 = vpop.permute.xlu0 %3818
  %3820 = vrot.lane.b32.xlu0 %v3800, 39
  %v3821 = vpop.permute.xlu0 %3820
  %v3822 = vsel %vm224, %v3809, %v3811
  %v3823 = vsel %vm224, %v3811, %v3813
  %v3824 = vsel %vm224, %v3813, %v3815
  %v3825 = vsel %vm224, %v3815, %v3817
  %v3826 = vsel %vm224, %v3817, %v3819
  %v3827 = vsel %vm224, %v3819, %v3821
  %3835 = vst [vmem:[#allocation3 + $0xa8] sm:$0xff] %v3822
  %3836 = vst [vmem:[#allocation3 + $0xb0] sm:$0xff] %v3823
  %3837 = vst [vmem:[#allocation3 + $0xb8] sm:$0xff] %v3824
  %3838 = vst [vmem:[#allocation3 + $0xc0] sm:$0xff] %v3825
  %3839 = vst [vmem:[#allocation3 + $0xc8] sm:$0xff] %v3826
  %3840 = vst [vmem:[#allocation3 + $0xd0] sm:$0xff] %v3827
  %3841 = vst.msk [vmem:[#allocation3 + $0xd8] sm:$0xff] %vm96, %v3821
  %v3842 = vld [vmem:[#allocation2] sm:$0xff]
  %v3843 = vld [vmem:[#allocation2 + $0x8] sm:$0xff]
  %v3844 = vld [vmem:[#allocation2 + $0x10] sm:$0xff]
  %v3845 = vld [vmem:[#allocation2 + $0x18] sm:$0xff]
  %v3846 = vld [vmem:[#allocation2 + $0x20] sm:$0xff]
  %v3847 = vld [vmem:[#allocation2 + $0x28] sm:$0xff]
  %v3848 = vld [vmem:[#allocation2 + $0x30] sm:$0xff]
  %3856 = vrot.lane.b32.xlu0 %v3842, 38
  %v3857 = vpop.permute.xlu0 %3856
  %3858 = vrot.lane.b32.xlu0 %v3843, 38
  %v3859 = vpop.permute.xlu0 %3858
  %3860 = vrot.lane.b32.xlu0 %v3844, 38
  %v3861 = vpop.permute.xlu0 %3860
  %3862 = vrot.lane.b32.xlu0 %v3845, 38
  %v3863 = vpop.permute.xlu0 %3862
  %3864 = vrot.lane.b32.xlu0 %v3846, 38
  %v3865 = vpop.permute.xlu0 %3864
  %3866 = vrot.lane.b32.xlu0 %v3847, 38
  %v3867 = vpop.permute.xlu0 %3866
  %3868 = vrot.lane.b32.xlu0 %v3848, 38
  %v3869 = vpop.permute.xlu0 %3868
  %v3870 = vsel %vm273, %v3857, %v3859
  %v3871 = vsel %vm273, %v3859, %v3861
  %v3872 = vsel %vm273, %v3861, %v3863
  %v3873 = vsel %vm273, %v3863, %v3865
  %v3874 = vsel %vm273, %v3865, %v3867
  %v3875 = vsel %vm273, %v3867, %v3869
  %3883 = vst [vmem:[#allocation3 + $0xe0] sm:$0xff] %v3870
  %3884 = vst [vmem:[#allocation3 + $0xe8] sm:$0xff] %v3871
  %3885 = vst [vmem:[#allocation3 + $0xf0] sm:$0xff] %v3872
  %3886 = vst [vmem:[#allocation3 + $0xf8] sm:$0xff] %v3873
  %3887 = vst [vmem:[#allocation3 + $0x100] sm:$0xff] %v3874
  %3888 = vst [vmem:[#allocation3 + $0x108] sm:$0xff] %v3875
  %3889 = vst.msk [vmem:[#allocation3 + $0x110] sm:$0xff] %vm96, %v3869
  %v3890 = vld [vmem:[#allocation2] sm:$0xff]
  %v3891 = vld [vmem:[#allocation2 + $0x8] sm:$0xff]
  %v3892 = vld [vmem:[#allocation2 + $0x10] sm:$0xff]
  %v3893 = vld [vmem:[#allocation2 + $0x18] sm:$0xff]
  %v3894 = vld [vmem:[#allocation2 + $0x20] sm:$0xff]
  %v3895 = vld [vmem:[#allocation2 + $0x28] sm:$0xff]
  %v3896 = vld [vmem:[#allocation2 + $0x30] sm:$0xff]
  %v3897 = vld [vmem:[#allocation2 + $0x38] sm:$0xff]
  %3906 = vrot.lane.b32.xlu0 %v3890, 22
  %v3907 = vpop.permute.xlu0 %3906
  %3908 = vrot.lane.b32.xlu0 %v3891, 22
  %v3909 = vpop.permute.xlu0 %3908
  %3910 = vrot.lane.b32.xlu0 %v3892, 22
  %v3911 = vpop.permute.xlu0 %3910
  %3912 = vrot.lane.b32.xlu0 %v3893, 22
  %v3913 = vpop.permute.xlu0 %3912
  %3914 = vrot.lane.b32.xlu0 %v3894, 22
  %v3915 = vpop.permute.xlu0 %3914
  %3916 = vrot.lane.b32.xlu0 %v3895, 22
  %v3917 = vpop.permute.xlu0 %3916
  %3918 = vrot.lane.b32.xlu0 %v3896, 22
  %v3919 = vpop.permute.xlu0 %3918
  %3920 = vrot.lane.b32.xlu0 %v3897, 22
  %v3921 = vpop.permute.xlu0 %3920
  %v3922 = vsel %vm326, %v3907, %v3909
  %v3923 = vsel %vm326, %v3909, %v3911
  %v3924 = vsel %vm326, %v3911, %v3913
  %v3925 = vsel %vm326, %v3913, %v3915
  %v3926 = vsel %vm326, %v3915, %v3917
  %v3927 = vsel %vm326, %v3917, %v3919
  %v3928 = vsel %vm326, %v3919, %v3921
  %3936 = vst [vmem:[#allocation3 + $0x118] sm:$0xff] %v3922
  %3937 = vst [vmem:[#allocation3 + $0x120] sm:$0xff] %v3923
  %3938 = vst [vmem:[#allocation3 + $0x128] sm:$0xff] %v3924
  %3939 = vst [vmem:[#allocation3 + $0x130] sm:$0xff] %v3925
  %3940 = vst [vmem:[#allocation3 + $0x138] sm:$0xff] %v3926
  %3941 = vst [vmem:[#allocation3 + $0x140] sm:$0xff] %v3927
  %3942 = vst.msk [vmem:[#allocation3 + $0x148] sm:$0xff] %vm96, %v3928
  %v3943 = vld [vmem:[#allocation2] sm:$0xff]
  %v3944 = vld [vmem:[#allocation2 + $0x8] sm:$0xff]
  %v3945 = vld [vmem:[#allocation2 + $0x10] sm:$0xff]
  %v3946 = vld [vmem:[#allocation2 + $0x18] sm:$0xff]
  %v3947 = vld [vmem:[#allocation2 + $0x20] sm:$0xff]
  %v3948 = vld [vmem:[#allocation2 + $0x28] sm:$0xff]
  %v3949 = vld [vmem:[#allocation2 + $0x30] sm:$0xff]
  %v3950 = vld [vmem:[#allocation2 + $0x38] sm:$0xff]
  %3959 = vrot.lane.b32.xlu0 %v3943, 21
  %v3960 = vpop.permute.xlu0 %3959
  %3961 = vrot.lane.b32.xlu0 %v3944, 21
  %v3962 = vpop.permute.xlu0 %3961
  %3963 = vrot.lane.b32.xlu0 %v3945, 21
  %v3964 = vpop.permute.xlu0 %3963
  %3965 = vrot.lane.b32.xlu0 %v3946, 21
  %v3966 = vpop.permute.xlu0 %3965
  %3967 = vrot.lane.b32.xlu0 %v3947, 21
  %v3968 = vpop.permute.xlu0 %3967
  %3969 = vrot.lane.b32.xlu0 %v3948, 21
  %v3970 = vpop.permute.xlu0 %3969
  %3971 = vrot.lane.b32.xlu0 %v3949, 21
  %v3972 = vpop.permute.xlu0 %3971
  %3973 = vrot.lane.b32.xlu0 %v3950, 21
  %v3974 = vpop.permute.xlu0 %3973
  %v3975 = vsel %vm380, %v3960, %v3962
  %v3976 = vsel %vm380, %v3962, %v3964
  %v3977 = vsel %vm380, %v3964, %v3966
  %v3978 = vsel %vm380, %v3966, %v3968
  %v3979 = vsel %vm380, %v3968, %v3970
  %v3980 = vsel %vm380, %v3970, %v3972
  %v3981 = vsel %vm380, %v3972, %v3974
  %3989 = vst [vmem:[#allocation3 + $0x150] sm:$0xff] %v3975
  %3990 = vst [vmem:[#allocation3 + $0x158] sm:$0xff] %v3976
  %3991 = vst [vmem:[#allocation3 + $0x160] sm:$0xff] %v3977
  %3992 = vst [vmem:[#allocation3 + $0x168] sm:$0xff] %v3978
  %3993 = vst [vmem:[#allocation3 + $0x170] sm:$0xff] %v3979
  %3994 = vst [vmem:[#allocation3 + $0x178] sm:$0xff] %v3980
  %3995 = vst.msk [vmem:[#allocation3 + $0x180] sm:$0xff] %vm96, %v3981
  %v3996 = vld [vmem:[#allocation2] sm:$0xff]
  %v3997 = vld [vmem:[#allocation2 + $0x8] sm:$0xff]
  %v3998 = vld [vmem:[#allocation2 + $0x10] sm:$0xff]
  %v3999 = vld [vmem:[#allocation2 + $0x18] sm:$0xff]
  %v4000 = vld [vmem:[#allocation2 + $0x20] sm:$0xff]
  %v4001 = vld [vmem:[#allocation2 + $0x28] sm:$0xff]
  %v4002 = vld [vmem:[#allocation2 + $0x30] sm:$0xff]
  %v4003 = vld [vmem:[#allocation2 + $0x38] sm:$0xff]
  %4012 = vrot.lane.b32.xlu0 %v3996, 20
  %v4013 = vpop.permute.xlu0 %4012
  %4014 = vrot.lane.b32.xlu0 %v3997, 20
  %v4015 = vpop.permute.xlu0 %4014
  %4016 = vrot.lane.b32.xlu0 %v3998, 20
  %v4017 = vpop.permute.xlu0 %4016
  %4018 = vrot.lane.b32.xlu0 %v3999, 20
  %v4019 = vpop.permute.xlu0 %4018
  %4020 = vrot.lane.b32.xlu0 %v4000, 20
  %v4021 = vpop.permute.xlu0 %4020
  %4022 = vrot.lane.b32.xlu0 %v4001, 20
  %v4023 = vpop.permute.xlu0 %4022
  %4024 = vrot.lane.b32.xlu0 %v4002, 20
  %v4025 = vpop.permute.xlu0 %4024
  %4026 = vrot.lane.b32.xlu0 %v4003, 20
  %v4027 = vpop.permute.xlu0 %4026
  %v4028 = vsel %vm434, %v4013, %v4015
  %v4029 = vsel %vm434, %v4015, %v4017
  %v4030 = vsel %vm434, %v4017, %v4019
  %v4031 = vsel %vm434, %v4019, %v4021
  %v4032 = vsel %vm434, %v4021, %v4023
  %v4033 = vsel %vm434, %v4023, %v4025
  %v4034 = vsel %vm434, %v4025, %v4027
  %4042 = vst [vmem:[#allocation3 + $0x188] sm:$0xff] %v4028
  %4043 = vst [vmem:[#allocation3 + $0x190] sm:$0xff] %v4029
  %4044 = vst [vmem:[#allocation3 + $0x198] sm:$0xff] %v4030
  %4045 = vst [vmem:[#allocation3 + $0x1a0] sm:$0xff] %v4031
  %4046 = vst [vmem:[#allocation3 + $0x1a8] sm:$0xff] %v4032
  %4047 = vst [vmem:[#allocation3 + $0x1b0] sm:$0xff] %v4033
  %4048 = vst.msk [vmem:[#allocation3 + $0x1b8] sm:$0xff] %vm96, %v4034
  %v4049 = vld [vmem:[#allocation2] sm:$0xff]
  %v4050 = vld [vmem:[#allocation2 + $0x8] sm:$0xff]
  %v4051 = vld [vmem:[#allocation2 + $0x10] sm:$0xff]
  %v4052 = vld [vmem:[#allocation2 + $0x18] sm:$0xff]
  %v4053 = vld [vmem:[#allocation2 + $0x20] sm:$0xff]
  %v4054 = vld [vmem:[#allocation2 + $0x28] sm:$0xff]
  %v4055 = vld [vmem:[#allocation2 + $0x30] sm:$0xff]
  %v4056 = vld [vmem:[#allocation2 + $0x38] sm:$0xff]
  %4065 = vrot.lane.b32.xlu0 %v4049, 19
  %v4066 = vpop.permute.xlu0 %4065
  %4067 = vrot.lane.b32.xlu0 %v4050, 19
  %v4068 = vpop.permute.xlu0 %4067
  %4069 = vrot.lane.b32.xlu0 %v4051, 19
  %v4070 = vpop.permute.xlu0 %4069
  %4071 = vrot.lane.b32.xlu0 %v4052, 19
  %v4072 = vpop.permute.xlu0 %4071
  %4073 = vrot.lane.b32.xlu0 %v4053, 19
  %v4074 = vpop.permute.xlu0 %4073
  %4075 = vrot.lane.b32.xlu0 %v4054, 19
  %v4076 = vpop.permute.xlu0 %4075
  %4077 = vrot.lane.b32.xlu0 %v4055, 19
  %v4078 = vpop.permute.xlu0 %4077
  %4079 = vrot.lane.b32.xlu0 %v4056, 19
  %v4080 = vpop.permute.xlu0 %4079
  %v4081 = vsel %vm488, %v4066, %v4068
  %v4082 = vsel %vm488, %v4068, %v4070
  %v4083 = vsel %vm488, %v4070, %v4072
  %v4084 = vsel %vm488, %v4072, %v4074
  %v4085 = vsel %vm488, %v4074, %v4076
  %v4086 = vsel %vm488, %v4076, %v4078
  %v4087 = vsel %vm488, %v4078, %v4080
  %4095 = vst [vmem:[#allocation3 + $0x1c0] sm:$0xff] %v4081
  %4096 = vst [vmem:[#allocation3 + $0x1c8] sm:$0xff] %v4082
  %4097 = vst [vmem:[#allocation3 + $0x1d0] sm:$0xff] %v4083
  %4098 = vst [vmem:[#allocation3 + $0x1d8] sm:$0xff] %v4084
  %4099 = vst [vmem:[#allocation3 + $0x1e0] sm:$0xff] %v4085
  %4100 = vst [vmem:[#allocation3 + $0x1e8] sm:$0xff] %v4086
  %4101 = vst.msk [vmem:[#allocation3 + $0x1f0] sm:$0xff] %vm96, %v4087
  %v4102 = vld [vmem:[#allocation2] sm:$0xff]
  %v4103 = vld [vmem:[#allocation2 + $0x8] sm:$0xff]
  %v4104 = vld [vmem:[#allocation2 + $0x10] sm:$0xff]
  %v4105 = vld [vmem:[#allocation2 + $0x18] sm:$0xff]
  %v4106 = vld [vmem:[#allocation2 + $0x20] sm:$0xff]
  %v4107 = vld [vmem:[#allocation2 + $0x28] sm:$0xff]
  %v4108 = vld [vmem:[#allocation2 + $0x30] sm:$0xff]
  %v4109 = vld [vmem:[#allocation2 + $0x38] sm:$0xff]
  %4118 = vrot.lane.b32.xlu0 %v4102, 18
  %v4119 = vpop.permute.xlu0 %4118
  %4120 = vrot.lane.b32.xlu0 %v4103, 18
  %v4121 = vpop.permute.xlu0 %4120
  %4122 = vrot.lane.b32.xlu0 %v4104, 18
  %v4123 = vpop.permute.xlu0 %4122
  %4124 = vrot.lane.b32.xlu0 %v4105, 18
  %v4125 = vpop.permute.xlu0 %4124
  %4126 = vrot.lane.b32.xlu0 %v4106, 18
  %v4127 = vpop.permute.xlu0 %4126
  %4128 = vrot.lane.b32.xlu0 %v4107, 18
  %v4129 = vpop.permute.xlu0 %4128
  %4130 = vrot.lane.b32.xlu0 %v4108, 18
  %v4131 = vpop.permute.xlu0 %4130
  %4132 = vrot.lane.b32.xlu0 %v4109, 18
  %v4133 = vpop.permute.xlu0 %4132
  %v4134 = vsel %vm542, %v4119, %v4121
  %v4135 = vsel %vm542, %v4121, %v4123
  %v4136 = vsel %vm542, %v4123, %v4125
  %v4137 = vsel %vm542, %v4125, %v4127
  %v4138 = vsel %vm542, %v4127, %v4129
  %v4139 = vsel %vm542, %v4129, %v4131
  %v4140 = vsel %vm542, %v4131, %v4133
  %4148 = vst [vmem:[#allocation3 + $0x1f8] sm:$0xff] %v4134
  %4149 = vst [vmem:[#allocation3 + $0x200] sm:$0xff] %v4135
  %4150 = vst [vmem:[#allocation3 + $0x208] sm:$0xff] %v4136
  %4151 = vst [vmem:[#allocation3 + $0x210] sm:$0xff] %v4137
  %4152 = vst [vmem:[#allocation3 + $0x218] sm:$0xff] %v4138
  %4153 = vst [vmem:[#allocation3 + $0x220] sm:$0xff] %v4139
  %4154 = vst.msk [vmem:[#allocation3 + $0x228] sm:$0xff] %vm96, %v4140
  %v4155 = vld [vmem:[#allocation2] sm:$0xff]
  %v4156 = vld [vmem:[#allocation2 + $0x8] sm:$0xff]
  %v4157 = vld [vmem:[#allocation2 + $0x10] sm:$0xff]
  %v4158 = vld [vmem:[#allocation2 + $0x18] sm:$0xff]
  %v4159 = vld [vmem:[#allocation2 + $0x20] sm:$0xff]
  %v4160 = vld [vmem:[#allocation2 + $0x28] sm:$0xff]
  %v4161 = vld [vmem:[#allocation2 + $0x30] sm:$0xff]
  %v4162 = vld [vmem:[#allocation2 + $0x38] sm:$0xff]
  %4171 = vrot.lane.b32.xlu0 %v4155, 2
  %v4172 = vpop.permute.xlu0 %4171
  %4173 = vrot.lane.b32.xlu0 %v4156, 2
  %v4174 = vpop.permute.xlu0 %4173
  %4175 = vrot.lane.b32.xlu0 %v4157, 2
  %v4176 = vpop.permute.xlu0 %4175
  %4177 = vrot.lane.b32.xlu0 %v4158, 2
  %v4178 = vpop.permute.xlu0 %4177
  %4179 = vrot.lane.b32.xlu0 %v4159, 2
  %v4180 = vpop.permute.xlu0 %4179
  %4181 = vrot.lane.b32.xlu0 %v4160, 2
  %v4182 = vpop.permute.xlu0 %4181
  %4183 = vrot.lane.b32.xlu0 %v4161, 2
  %v4184 = vpop.permute.xlu0 %4183
  %4185 = vrot.lane.b32.xlu0 %v4162, 2
  %v4186 = vpop.permute.xlu0 %4185
  %v4187 = vsel %vm596, %v4172, %v4174
  %v4188 = vsel %vm596, %v4174, %v4176
  %v4189 = vsel %vm596, %v4176, %v4178
  %v4190 = vsel %vm596, %v4178, %v4180
  %v4191 = vsel %vm596, %v4180, %v4182
  %v4192 = vsel %vm596, %v4182, %v4184
  %v4193 = vsel %vm596, %v4184, %v4186
  %4201 = vst [vmem:[#allocation3 + $0x230] sm:$0xff] %v4187
  %4202 = vst [vmem:[#allocation3 + $0x238] sm:$0xff] %v4188
  %4203 = vst [vmem:[#allocation3 + $0x240] sm:$0xff] %v4189
  %4204 = vst [vmem:[#allocation3 + $0x248] sm:$0xff] %v4190
  %4205 = vst [vmem:[#allocation3 + $0x250] sm:$0xff] %v4191
  %4206 = vst [vmem:[#allocation3 + $0x258] sm:$0xff] %v4192
  %4207 = vst.msk [vmem:[#allocation3 + $0x260] sm:$0xff] %vm96, %v4193
  %v4208 = vld [vmem:[#allocation2] sm:$0xff]
  %v4209 = vld [vmem:[#allocation2 + $0x8] sm:$0xff]
  %v4210 = vld [vmem:[#allocation2 + $0x10] sm:$0xff]
  %v4211 = vld [vmem:[#allocation2 + $0x18] sm:$0xff]
  %v4212 = vld [vmem:[#allocation2 + $0x20] sm:$0xff]
  %v4213 = vld [vmem:[#allocation2 + $0x28] sm:$0xff]
  %v4214 = vld [vmem:[#allocation2 + $0x30] sm:$0xff]
  %v4215 = vld [vmem:[#allocation2 + $0x38] sm:$0xff]
  %4224 = vrot.lane.b32.xlu0 %v4208, 1
  %v4225 = vpop.permute.xlu0 %4224
  %4226 = vrot.lane.b32.xlu0 %v4209, 1
  %v4227 = vpop.permute.xlu0 %4226
  %4228 = vrot.lane.b32.xlu0 %v4210, 1
  %v4229 = vpop.permute.xlu0 %4228
  %4230 = vrot.lane.b32.xlu0 %v4211, 1
  %v4231 = vpop.permute.xlu0 %4230
  %4232 = vrot.lane.b32.xlu0 %v4212, 1
  %v4233 = vpop.permute.xlu0 %4232
  %4234 = vrot.lane.b32.xlu0 %v4213, 1
  %v4235 = vpop.permute.xlu0 %4234
  %4236 = vrot.lane.b32.xlu0 %v4214, 1
  %v4237 = vpop.permute.xlu0 %4236
  %4238 = vrot.lane.b32.xlu0 %v4215, 1
  %v4239 = vpop.permute.xlu0 %4238
  %v4240 = vsel %vm650, %v4225, %v4227
  %v4241 = vsel %vm650, %v4227, %v4229
  %v4242 = vsel %vm650, %v4229, %v4231
  %v4243 = vsel %vm650, %v4231, %v4233
  %v4244 = vsel %vm650, %v4233, %v4235
  %v4245 = vsel %vm650, %v4235, %v4237
  %v4246 = vsel %vm650, %v4237, %v4239
  %4254 = vst [vmem:[#allocation3 + $0x268] sm:$0xff] %v4240
  %4255 = vst [vmem:[#allocation3 + $0x270] sm:$0xff] %v4241
  %4256 = vst [vmem:[#allocation3 + $0x278] sm:$0xff] %v4242
  %4257 = vst [vmem:[#allocation3 + $0x280] sm:$0xff] %v4243
  %4258 = vst [vmem:[#allocation3 + $0x288] sm:$0xff] %v4244
  %4259 = vst [vmem:[#allocation3 + $0x290] sm:$0xff] %v4245
  %4260 = vst.msk [vmem:[#allocation3 + $0x298] sm:$0xff] %vm96, %v4246
  %v4261 = vld [vmem:[#allocation2 + $0x8] sm:$0xff]
  %v4262 = vld [vmem:[#allocation2 + $0x10] sm:$0xff]
  %v4263 = vld [vmem:[#allocation2 + $0x18] sm:$0xff]
  %v4264 = vld [vmem:[#allocation2 + $0x20] sm:$0xff]
  %v4265 = vld [vmem:[#allocation2 + $0x28] sm:$0xff]
  %v4266 = vld [vmem:[#allocation2 + $0x30] sm:$0xff]
  %v4267 = vld [vmem:[#allocation2 + $0x38] sm:$0xff]
  %4268 = vst [vmem:[#allocation3 + $0x2a0] sm:$0xff] %v4261
  %4269 = vst [vmem:[#allocation3 + $0x2a8] sm:$0xff] %v4262
  %4270 = vst [vmem:[#allocation3 + $0x2b0] sm:$0xff] %v4263
  %4271 = vst [vmem:[#allocation3 + $0x2b8] sm:$0xff] %v4264
  %4272 = vst [vmem:[#allocation3 + $0x2c0] sm:$0xff] %v4265
  %4273 = vst [vmem:[#allocation3 + $0x2c8] sm:$0xff] %v4266
  %4274 = vst.msk [vmem:[#allocation3 + $0x2d0] sm:$0xff] %vm96, %v4267
  %v4275 = vld [vmem:[#allocation2 + $0x8] sm:$0xff]
  %v4276 = vld [vmem:[#allocation2 + $0x10] sm:$0xff]
  %v4277 = vld [vmem:[#allocation2 + $0x18] sm:$0xff]
  %v4278 = vld [vmem:[#allocation2 + $0x20] sm:$0xff]
  %v4279 = vld [vmem:[#allocation2 + $0x28] sm:$0xff]
  %v4280 = vld [vmem:[#allocation2 + $0x30] sm:$0xff]
  %v4281 = vld [vmem:[#allocation2 + $0x38] sm:$0xff]
  %4289 = vrot.lane.b32.xlu0 %v4275, 127
  %v4290 = vpop.permute.xlu0 %4289
  %4291 = vrot.lane.b32.xlu0 %v4276, 127
  %v4292 = vpop.permute.xlu0 %4291
  %4293 = vrot.lane.b32.xlu0 %v4277, 127
  %v4294 = vpop.permute.xlu0 %4293
  %4295 = vrot.lane.b32.xlu0 %v4278, 127
  %v4296 = vpop.permute.xlu0 %4295
  %4297 = vrot.lane.b32.xlu0 %v4279, 127
  %v4298 = vpop.permute.xlu0 %4297
  %4299 = vrot.lane.b32.xlu0 %v4280, 127
  %v4300 = vpop.permute.xlu0 %4299
  %4301 = vrot.lane.b32.xlu0 %v4281, 127
  %v4302 = vpop.permute.xlu0 %4301
  %v4303 = vsel %vm714, %v4290, %v4292
  %v4304 = vsel %vm714, %v4292, %v4294
  %v4305 = vsel %vm714, %v4294, %v4296
  %v4306 = vsel %vm714, %v4296, %v4298
  %v4307 = vsel %vm714, %v4298, %v4300
  %v4308 = vsel %vm714, %v4300, %v4302
  %4316 = vst [vmem:[#allocation3 + $0x2d8] sm:$0xff] %v4303
  %4317 = vst [vmem:[#allocation3 + $0x2e0] sm:$0xff] %v4304
  %4318 = vst [vmem:[#allocation3 + $0x2e8] sm:$0xff] %v4305
  %4319 = vst [vmem:[#allocation3 + $0x2f0] sm:$0xff] %v4306
  %4320 = vst [vmem:[#allocation3 + $0x2f8] sm:$0xff] %v4307
  %4321 = vst [vmem:[#allocation3 + $0x300] sm:$0xff] %v4308
  %4322 = vst.msk [vmem:[#allocation3 + $0x308] sm:$0xff] %vm96, %v4302
  %v4323 = vld [vmem:[#allocation2 + $0x8] sm:$0xff]
  %v4324 = vld [vmem:[#allocation2 + $0x10] sm:$0xff]
  %v4325 = vld [vmem:[#allocation2 + $0x18] sm:$0xff]
  %v4326 = vld [vmem:[#allocation2 + $0x20] sm:$0xff]
  %v4327 = vld [vmem:[#allocation2 + $0x28] sm:$0xff]
  %v4328 = vld [vmem:[#allocation2 + $0x30] sm:$0xff]
  %v4329 = vld [vmem:[#allocation2 + $0x38] sm:$0xff]
  %4337 = vrot.lane.b32.xlu0 %v4323, 126
  %v4338 = vpop.permute.xlu0 %4337
  %4339 = vrot.lane.b32.xlu0 %v4324, 126
  %v4340 = vpop.permute.xlu0 %4339
  %4341 = vrot.lane.b32.xlu0 %v4325, 126
  %v4342 = vpop.permute.xlu0 %4341
  %4343 = vrot.lane.b32.xlu0 %v4326, 126
  %v4344 = vpop.permute.xlu0 %4343
  %4345 = vrot.lane.b32.xlu0 %v4327, 126
  %v4346 = vpop.permute.xlu0 %4345
  %4347 = vrot.lane.b32.xlu0 %v4328, 126
  %v4348 = vpop.permute.xlu0 %4347
  %4349 = vrot.lane.b32.xlu0 %v4329, 126
  %v4350 = vpop.permute.xlu0 %4349
  %v4351 = vsel %vm763, %v4338, %v4340
  %v4352 = vsel %vm763, %v4340, %v4342
  %v4353 = vsel %vm763, %v4342, %v4344
  %v4354 = vsel %vm763, %v4344, %v4346
  %v4355 = vsel %vm763, %v4346, %v4348
  %v4356 = vsel %vm763, %v4348, %v4350
  %4364 = vst [vmem:[#allocation3 + $0x310] sm:$0xff] %v4351
  %4365 = vst [vmem:[#allocation3 + $0x318] sm:$0xff] %v4352
  %4366 = vst [vmem:[#allocation3 + $0x320] sm:$0xff] %v4353
  %4367 = vst [vmem:[#allocation3 + $0x328] sm:$0xff] %v4354
  %4368 = vst [vmem:[#allocation3 + $0x330] sm:$0xff] %v4355
  %4369 = vst [vmem:[#allocation3 + $0x338] sm:$0xff] %v4356
  %4370 = vst.msk [vmem:[#allocation3 + $0x340] sm:$0xff] %vm96, %v4350
  %v4371 = vld [vmem:[#allocation2 + $0x8] sm:$0xff]
  %v4372 = vld [vmem:[#allocation2 + $0x10] sm:$0xff]
  %v4373 = vld [vmem:[#allocation2 + $0x18] sm:$0xff]
  %v4374 = vld [vmem:[#allocation2 + $0x20] sm:$0xff]
  %v4375 = vld [vmem:[#allocation2 + $0x28] sm:$0xff]
  %v4376 = vld [vmem:[#allocation2 + $0x30] sm:$0xff]
  %v4377 = vld [vmem:[#allocation2 + $0x38] sm:$0xff]
  %4385 = vrot.lane.b32.xlu0 %v4371, 110
  %v4386 = vpop.permute.xlu0 %4385
  %4387 = vrot.lane.b32.xlu0 %v4372, 110
  %v4388 = vpop.permute.xlu0 %4387
  %4389 = vrot.lane.b32.xlu0 %v4373, 110
  %v4390 = vpop.permute.xlu0 %4389
  %4391 = vrot.lane.b32.xlu0 %v4374, 110
  %v4392 = vpop.permute.xlu0 %4391
  %4393 = vrot.lane.b32.xlu0 %v4375, 110
  %v4394 = vpop.permute.xlu0 %4393
  %4395 = vrot.lane.b32.xlu0 %v4376, 110
  %v4396 = vpop.permute.xlu0 %4395
  %4397 = vrot.lane.b32.xlu0 %v4377, 110
  %v4398 = vpop.permute.xlu0 %4397
  %v4399 = vsel %vm812, %v4386, %v4388
  %v4400 = vsel %vm812, %v4388, %v4390
  %v4401 = vsel %vm812, %v4390, %v4392
  %v4402 = vsel %vm812, %v4392, %v4394
  %v4403 = vsel %vm812, %v4394, %v4396
  %v4404 = vsel %vm812, %v4396, %v4398
  %4412 = vst [vmem:[#allocation3 + $0x348] sm:$0xff] %v4399
  %4413 = vst [vmem:[#allocation3 + $0x350] sm:$0xff] %v4400
  %4414 = vst [vmem:[#allocation3 + $0x358] sm:$0xff] %v4401
  %4415 = vst [vmem:[#allocation3 + $0x360] sm:$0xff] %v4402
  %4416 = vst [vmem:[#allocation3 + $0x368] sm:$0xff] %v4403
  %4417 = vst [vmem:[#allocation3 + $0x370] sm:$0xff] %v4404
  %4418 = vst.msk [vmem:[#allocation3 + $0x378] sm:$0xff] %vm96, %v4398
  %v4419 = vld [vmem:[#allocation2 + $0x8] sm:$0xff]
  %v4420 = vld [vmem:[#allocation2 + $0x10] sm:$0xff]
  %v4421 = vld [vmem:[#allocation2 + $0x18] sm:$0xff]
  %v4422 = vld [vmem:[#allocation2 + $0x20] sm:$0xff]
  %v4423 = vld [vmem:[#allocation2 + $0x28] sm:$0xff]
  %v4424 = vld [vmem:[#allocation2 + $0x30] sm:$0xff]
  %v4425 = vld [vmem:[#allocation2 + $0x38] sm:$0xff]
  %4433 = vrot.lane.b32.xlu0 %v4419, 109
  %v4434 = vpop.permute.xlu0 %4433
  %4435 = vrot.lane.b32.xlu0 %v4420, 109
  %v4436 = vpop.permute.xlu0 %4435
  %4437 = vrot.lane.b32.xlu0 %v4421, 109
  %v4438 = vpop.permute.xlu0 %4437
  %4439 = vrot.lane.b32.xlu0 %v4422, 109
  %v4440 = vpop.permute.xlu0 %4439
  %4441 = vrot.lane.b32.xlu0 %v4423, 109
  %v4442 = vpop.permute.xlu0 %4441
  %4443 = vrot.lane.b32.xlu0 %v4424, 109
  %v4444 = vpop.permute.xlu0 %4443
  %4445 = vrot.lane.b32.xlu0 %v4425, 109
  %v4446 = vpop.permute.xlu0 %4445
  %v4447 = vsel %vm861, %v4434, %v4436
  %v4448 = vsel %vm861, %v4436, %v4438
  %v4449 = vsel %vm861, %v4438, %v4440
  %v4450 = vsel %vm861, %v4440, %v4442
  %v4451 = vsel %vm861, %v4442, %v4444
  %v4452 = vsel %vm861, %v4444, %v4446
  %4460 = vst [vmem:[#allocation3 + $0x380] sm:$0xff] %v4447
  %4461 = vst [vmem:[#allocation3 + $0x388] sm:$0xff] %v4448
  %4462 = vst [vmem:[#allocation3 + $0x390] sm:$0xff] %v4449
  %4463 = vst [vmem:[#allocation3 + $0x398] sm:$0xff] %v4450
  %4464 = vst [vmem:[#allocation3 + $0x3a0] sm:$0xff] %v4451
  %4465 = vst [vmem:[#allocation3 + $0x3a8] sm:$0xff] %v4452
  %4466 = vst.msk [vmem:[#allocation3 + $0x3b0] sm:$0xff] %vm96, %v4446
  %v4467 = vld [vmem:[#allocation2 + $0x8] sm:$0xff]
  %v4468 = vld [vmem:[#allocation2 + $0x10] sm:$0xff]
  %v4469 = vld [vmem:[#allocation2 + $0x18] sm:$0xff]
  %v4470 = vld [vmem:[#allocation2 + $0x20] sm:$0xff]
  %v4471 = vld [vmem:[#allocation2 + $0x28] sm:$0xff]
  %v4472 = vld [vmem:[#allocation2 + $0x30] sm:$0xff]
  %v4473 = vld [vmem:[#allocation2 + $0x38] sm:$0xff]
  %4481 = vrot.lane.b32.xlu0 %v4467, 108
  %v4482 = vpop.permute.xlu0 %4481
  %4483 = vrot.lane.b32.xlu0 %v4468, 108
  %v4484 = vpop.permute.xlu0 %4483
  %4485 = vrot.lane.b32.xlu0 %v4469, 108
  %v4486 = vpop.permute.xlu0 %4485
  %4487 = vrot.lane.b32.xlu0 %v4470, 108
  %v4488 = vpop.permute.xlu0 %4487
  %4489 = vrot.lane.b32.xlu0 %v4471, 108
  %v4490 = vpop.permute.xlu0 %4489
  %4491 = vrot.lane.b32.xlu0 %v4472, 108
  %v4492 = vpop.permute.xlu0 %4491
  %4493 = vrot.lane.b32.xlu0 %v4473, 108
  %v4494 = vpop.permute.xlu0 %4493
  %v4495 = vsel %vm910, %v4482, %v4484
  %v4496 = vsel %vm910, %v4484, %v4486
  %v4497 = vsel %vm910, %v4486, %v4488
  %v4498 = vsel %vm910, %v4488, %v4490
  %v4499 = vsel %vm910, %v4490, %v4492
  %v4500 = vsel %vm910, %v4492, %v4494
  %4508 = vst [vmem:[#allocation3 + $0x3b8] sm:$0xff] %v4495
  %4509 = vst [vmem:[#allocation3 + $0x3c0] sm:$0xff] %v4496
  %4510 = vst [vmem:[#allocation3 + $0x3c8] sm:$0xff] %v4497
  %4511 = vst [vmem:[#allocation3 + $0x3d0] sm:$0xff] %v4498
  %4512 = vst [vmem:[#allocation3 + $0x3d8] sm:$0xff] %v4499
  %4513 = vst [vmem:[#allocation3 + $0x3e0] sm:$0xff] %v4500
  %4514 = vst.msk [vmem:[#allocation3 + $0x3e8] sm:$0xff] %vm96, %v4494
  %v4515 = vld [vmem:[#allocation2 + $0x8] sm:$0xff]
  %v4516 = vld [vmem:[#allocation2 + $0x10] sm:$0xff]
  %v4517 = vld [vmem:[#allocation2 + $0x18] sm:$0xff]
  %v4518 = vld [vmem:[#allocation2 + $0x20] sm:$0xff]
  %v4519 = vld [vmem:[#allocation2 + $0x28] sm:$0xff]
  %v4520 = vld [vmem:[#allocation2 + $0x30] sm:$0xff]
  %v4521 = vld [vmem:[#allocation2 + $0x38] sm:$0xff]
  %4529 = vrot.lane.b32.xlu0 %v4515, 107
  %v4530 = vpop.permute.xlu0 %4529
  %4531 = vrot.lane.b32.xlu0 %v4516, 107
  %v4532 = vpop.permute.xlu0 %4531
  %4533 = vrot.lane.b32.xlu0 %v4517, 107
  %v4534 = vpop.permute.xlu0 %4533
  %4535 = vrot.lane.b32.xlu0 %v4518, 107
  %v4536 = vpop.permute.xlu0 %4535
  %4537 = vrot.lane.b32.xlu0 %v4519, 107
  %v4538 = vpop.permute.xlu0 %4537
  %4539 = vrot.lane.b32.xlu0 %v4520, 107
  %v4540 = vpop.permute.xlu0 %4539
  %4541 = vrot.lane.b32.xlu0 %v4521, 107
  %v4542 = vpop.permute.xlu0 %4541
  %v4543 = vsel %vm959, %v4530, %v4532
  %v4544 = vsel %vm959, %v4532, %v4534
  %v4545 = vsel %vm959, %v4534, %v4536
  %v4546 = vsel %vm959, %v4536, %v4538
  %v4547 = vsel %vm959, %v4538, %v4540
  %v4548 = vsel %vm959, %v4540, %v4542
  %4556 = vst [vmem:[#allocation3 + $0x3f0] sm:$0xff] %v4543
  %4557 = vst [vmem:[#allocation3 + $0x3f8] sm:$0xff] %v4544
  %4558 = vst [vmem:[#allocation3 + $0x400] sm:$0xff] %v4545
  %4559 = vst [vmem:[#allocation3 + $0x408] sm:$0xff] %v4546
  %4560 = vst [vmem:[#allocation3 + $0x410] sm:$0xff] %v4547
  %4561 = vst [vmem:[#allocation3 + $0x418] sm:$0xff] %v4548
  %4562 = vst.msk [vmem:[#allocation3 + $0x420] sm:$0xff] %vm96, %v4542
  %v4563 = vld [vmem:[#allocation2 + $0x8] sm:$0xff]
  %v4564 = vld [vmem:[#allocation2 + $0x10] sm:$0xff]
  %v4565 = vld [vmem:[#allocation2 + $0x18] sm:$0xff]
  %v4566 = vld [vmem:[#allocation2 + $0x20] sm:$0xff]
  %v4567 = vld [vmem:[#allocation2 + $0x28] sm:$0xff]
  %v4568 = vld [vmem:[#allocation2 + $0x30] sm:$0xff]
  %v4569 = vld [vmem:[#allocation2 + $0x38] sm:$0xff]
  %4577 = vrot.lane.b32.xlu0 %v4563, 106
  %v4578 = vpop.permute.xlu0 %4577
  %4579 = vrot.lane.b32.xlu0 %v4564, 106
  %v4580 = vpop.permute.xlu0 %4579
  %4581 = vrot.lane.b32.xlu0 %v4565, 106
  %v4582 = vpop.permute.xlu0 %4581
  %4583 = vrot.lane.b32.xlu0 %v4566, 106
  %v4584 = vpop.permute.xlu0 %4583
  %4585 = vrot.lane.b32.xlu0 %v4567, 106
  %v4586 = vpop.permute.xlu0 %4585
  %4587 = vrot.lane.b32.xlu0 %v4568, 106
  %v4588 = vpop.permute.xlu0 %4587
  %4589 = vrot.lane.b32.xlu0 %v4569, 106
  %v4590 = vpop.permute.xlu0 %4589
  %v4591 = vsel %vm1008, %v4578, %v4580
  %v4592 = vsel %vm1008, %v4580, %v4582
  %v4593 = vsel %vm1008, %v4582, %v4584
  %v4594 = vsel %vm1008, %v4584, %v4586
  %v4595 = vsel %vm1008, %v4586, %v4588
  %v4596 = vsel %vm1008, %v4588, %v4590
  %4604 = vst [vmem:[#allocation3 + $0x428] sm:$0xff] %v4591
  %4605 = vst [vmem:[#allocation3 + $0x430] sm:$0xff] %v4592
  %4606 = vst [vmem:[#allocation3 + $0x438] sm:$0xff] %v4593
  %4607 = vst [vmem:[#allocation3 + $0x440] sm:$0xff] %v4594
  %4608 = vst [vmem:[#allocation3 + $0x448] sm:$0xff] %v4595
  %4609 = vst [vmem:[#allocation3 + $0x450] sm:$0xff] %v4596
  %4610 = vst.msk [vmem:[#allocation3 + $0x458] sm:$0xff] %vm96, %v4590
  %v4611 = vld [vmem:[#allocation2 + $0x8] sm:$0xff]
  %v4612 = vld [vmem:[#allocation2 + $0x10] sm:$0xff]
  %v4613 = vld [vmem:[#allocation2 + $0x18] sm:$0xff]
  %v4614 = vld [vmem:[#allocation2 + $0x20] sm:$0xff]
  %v4615 = vld [vmem:[#allocation2 + $0x28] sm:$0xff]
  %v4616 = vld [vmem:[#allocation2 + $0x30] sm:$0xff]
  %v4617 = vld [vmem:[#allocation2 + $0x38] sm:$0xff]
  %4625 = vrot.lane.b32.xlu0 %v4611, 90
  %v4626 = vpop.permute.xlu0 %4625
  %4627 = vrot.lane.b32.xlu0 %v4612, 90
  %v4628 = vpop.permute.xlu0 %4627
  %4629 = vrot.lane.b32.xlu0 %v4613, 90
  %v4630 = vpop.permute.xlu0 %4629
  %4631 = vrot.lane.b32.xlu0 %v4614, 90
  %v4632 = vpop.permute.xlu0 %4631
  %4633 = vrot.lane.b32.xlu0 %v4615, 90
  %v4634 = vpop.permute.xlu0 %4633
  %4635 = vrot.lane.b32.xlu0 %v4616, 90
  %v4636 = vpop.permute.xlu0 %4635
  %4637 = vrot.lane.b32.xlu0 %v4617, 90
  %v4638 = vpop.permute.xlu0 %4637
  %v4639 = vsel %vm1057, %v4626, %v4628
  %v4640 = vsel %vm1057, %v4628, %v4630
  %v4641 = vsel %vm1057, %v4630, %v4632
  %v4642 = vsel %vm1057, %v4632, %v4634
  %v4643 = vsel %vm1057, %v4634, %v4636
  %v4644 = vsel %vm1057, %v4636, %v4638
  %4652 = vst [vmem:[#allocation3 + $0x460] sm:$0xff] %v4639
  %4653 = vst [vmem:[#allocation3 + $0x468] sm:$0xff] %v4640
  %4654 = vst [vmem:[#allocation3 + $0x470] sm:$0xff] %v4641
  %4655 = vst [vmem:[#allocation3 + $0x478] sm:$0xff] %v4642
  %4656 = vst [vmem:[#allocation3 + $0x480] sm:$0xff] %v4643
  %4657 = vst [vmem:[#allocation3 + $0x488] sm:$0xff] %v4644
  %4658 = vst.msk [vmem:[#allocation3 + $0x490] sm:$0xff] %vm96, %v4638
  %v4659 = vld [vmem:[#allocation2 + $0x8] sm:$0xff]
  %v4660 = vld [vmem:[#allocation2 + $0x10] sm:$0xff]
  %v4661 = vld [vmem:[#allocation2 + $0x18] sm:$0xff]
  %v4662 = vld [vmem:[#allocation2 + $0x20] sm:$0xff]
  %v4663 = vld [vmem:[#allocation2 + $0x28] sm:$0xff]
  %v4664 = vld [vmem:[#allocation2 + $0x30] sm:$0xff]
  %v4665 = vld [vmem:[#allocation2 + $0x38] sm:$0xff]
  %4673 = vrot.lane.b32.xlu0 %v4659, 89
  %v4674 = vpop.permute.xlu0 %4673
  %4675 = vrot.lane.b32.xlu0 %v4660, 89
  %v4676 = vpop.permute.xlu0 %4675
  %4677 = vrot.lane.b32.xlu0 %v4661, 89
  %v4678 = vpop.permute.xlu0 %4677
  %4679 = vrot.lane.b32.xlu0 %v4662, 89
  %v4680 = vpop.permute.xlu0 %4679
  %4681 = vrot.lane.b32.xlu0 %v4663, 89
  %v4682 = vpop.permute.xlu0 %4681
  %4683 = vrot.lane.b32.xlu0 %v4664, 89
  %v4684 = vpop.permute.xlu0 %4683
  %4685 = vrot.lane.b32.xlu0 %v4665, 89
  %v4686 = vpop.permute.xlu0 %4685
  %v4687 = vsel %vm1106, %v4674, %v4676
  %v4688 = vsel %vm1106, %v4676, %v4678
  %v4689 = vsel %vm1106, %v4678, %v4680
  %v4690 = vsel %vm1106, %v4680, %v4682
  %v4691 = vsel %vm1106, %v4682, %v4684
  %v4692 = vsel %vm1106, %v4684, %v4686
  %4700 = vst [vmem:[#allocation3 + $0x498] sm:$0xff] %v4687
  %4701 = vst [vmem:[#allocation3 + $0x4a0] sm:$0xff] %v4688
  %4702 = vst [vmem:[#allocation3 + $0x4a8] sm:$0xff] %v4689
  %4703 = vst [vmem:[#allocation3 + $0x4b0] sm:$0xff] %v4690
  %4704 = vst [vmem:[#allocation3 + $0x4b8] sm:$0xff] %v4691
  %4705 = vst [vmem:[#allocation3 + $0x4c0] sm:$0xff] %v4692
  %4706 = vst.msk [vmem:[#allocation3 + $0x4c8] sm:$0xff] %vm96, %v4686
  %v4707 = vld [vmem:[#allocation2 + $0x8] sm:$0xff]
  %v4708 = vld [vmem:[#allocation2 + $0x10] sm:$0xff]
  %v4709 = vld [vmem:[#allocation2 + $0x18] sm:$0xff]
  %v4710 = vld [vmem:[#allocation2 + $0x20] sm:$0xff]
  %v4711 = vld [vmem:[#allocation2 + $0x28] sm:$0xff]
  %v4712 = vld [vmem:[#allocation2 + $0x30] sm:$0xff]
  %v4713 = vld [vmem:[#allocation2 + $0x38] sm:$0xff]
  %4721 = vrot.lane.b32.xlu0 %v4707, 88
  %v4722 = vpop.permute.xlu0 %4721
  %4723 = vrot.lane.b32.xlu0 %v4708, 88
  %v4724 = vpop.permute.xlu0 %4723
  %4725 = vrot.lane.b32.xlu0 %v4709, 88
  %v4726 = vpop.permute.xlu0 %4725
  %4727 = vrot.lane.b32.xlu0 %v4710, 88
  %v4728 = vpop.permute.xlu0 %4727
  %4729 = vrot.lane.b32.xlu0 %v4711, 88
  %v4730 = vpop.permute.xlu0 %4729
  %4731 = vrot.lane.b32.xlu0 %v4712, 88
  %v4732 = vpop.permute.xlu0 %4731
  %4733 = vrot.lane.b32.xlu0 %v4713, 88
  %v4734 = vpop.permute.xlu0 %4733
  %v4735 = vsel %vm1155, %v4722, %v4724
  %v4736 = vsel %vm1155, %v4724, %v4726
  %v4737 = vsel %vm1155, %v4726, %v4728
  %v4738 = vsel %vm1155, %v4728, %v4730
  %v4739 = vsel %vm1155, %v4730, %v4732
  %v4740 = vsel %vm1155, %v4732, %v4734
  %4748 = vst [vmem:[#allocation3 + $0x4d0] sm:$0xff] %v4735
  %4749 = vst [vmem:[#allocation3 + $0x4d8] sm:$0xff] %v4736
  %4750 = vst [vmem:[#allocation3 + $0x4e0] sm:$0xff] %v4737
  %4751 = vst [vmem:[#allocation3 + $0x4e8] sm:$0xff] %v4738
  %4752 = vst [vmem:[#allocation3 + $0x4f0] sm:$0xff] %v4739
  %4753 = vst [vmem:[#allocation3 + $0x4f8] sm:$0xff] %v4740
  %4754 = vst.msk [vmem:[#allocation3 + $0x500] sm:$0xff] %vm96, %v4734
  %v4755 = vld [vmem:[#allocation2 + $0x8] sm:$0xff]
  %v4756 = vld [vmem:[#allocation2 + $0x10] sm:$0xff]
  %v4757 = vld [vmem:[#allocation2 + $0x18] sm:$0xff]
  %v4758 = vld [vmem:[#allocation2 + $0x20] sm:$0xff]
  %v4759 = vld [vmem:[#allocation2 + $0x28] sm:$0xff]
  %v4760 = vld [vmem:[#allocation2 + $0x30] sm:$0xff]
  %v4761 = vld [vmem:[#allocation2 + $0x38] sm:$0xff]
  %4769 = vrot.lane.b32.xlu0 %v4755, 87
  %v4770 = vpop.permute.xlu0 %4769
  %4771 = vrot.lane.b32.xlu0 %v4756, 87
  %v4772 = vpop.permute.xlu0 %4771
  %4773 = vrot.lane.b32.xlu0 %v4757, 87
  %v4774 = vpop.permute.xlu0 %4773
  %4775 = vrot.lane.b32.xlu0 %v4758, 87
  %v4776 = vpop.permute.xlu0 %4775
  %4777 = vrot.lane.b32.xlu0 %v4759, 87
  %v4778 = vpop.permute.xlu0 %4777
  %4779 = vrot.lane.b32.xlu0 %v4760, 87
  %v4780 = vpop.permute.xlu0 %4779
  %4781 = vrot.lane.b32.xlu0 %v4761, 87
  %v4782 = vpop.permute.xlu0 %4781
  %v4783 = vsel %vm1204, %v4770, %v4772
  %v4784 = vsel %vm1204, %v4772, %v4774
  %v4785 = vsel %vm1204, %v4774, %v4776
  %v4786 = vsel %vm1204, %v4776, %v4778
  %v4787 = vsel %vm1204, %v4778, %v4780
  %v4788 = vsel %vm1204, %v4780, %v4782
  %4796 = vst [vmem:[#allocation3 + $0x508] sm:$0xff] %v4783
  %4797 = vst [vmem:[#allocation3 + $0x510] sm:$0xff] %v4784
  %4798 = vst [vmem:[#allocation3 + $0x518] sm:$0xff] %v4785
  %4799 = vst [vmem:[#allocation3 + $0x520] sm:$0xff] %v4786
  %4800 = vst [vmem:[#allocation3 + $0x528] sm:$0xff] %v4787
  %4801 = vst [vmem:[#allocation3 + $0x530] sm:$0xff] %v4788
  %4802 = vst.msk [vmem:[#allocation3 + $0x538] sm:$0xff] %vm96, %v4782
  %v4803 = vld [vmem:[#allocation2 + $0x8] sm:$0xff]
  %v4804 = vld [vmem:[#allocation2 + $0x10] sm:$0xff]
  %v4805 = vld [vmem:[#allocation2 + $0x18] sm:$0xff]
  %v4806 = vld [vmem:[#allocation2 + $0x20] sm:$0xff]
  %v4807 = vld [vmem:[#allocation2 + $0x28] sm:$0xff]
  %v4808 = vld [vmem:[#allocation2 + $0x30] sm:$0xff]
  %v4809 = vld [vmem:[#allocation2 + $0x38] sm:$0xff]
  %4817 = vrot.lane.b32.xlu0 %v4803, 86
  %v4818 = vpop.permute.xlu0 %4817
  %4819 = vrot.lane.b32.xlu0 %v4804, 86
  %v4820 = vpop.permute.xlu0 %4819
  %4821 = vrot.lane.b32.xlu0 %v4805, 86
  %v4822 = vpop.permute.xlu0 %4821
  %4823 = vrot.lane.b32.xlu0 %v4806, 86
  %v4824 = vpop.permute.xlu0 %4823
  %4825 = vrot.lane.b32.xlu0 %v4807, 86
  %v4826 = vpop.permute.xlu0 %4825
  %4827 = vrot.lane.b32.xlu0 %v4808, 86
  %v4828 = vpop.permute.xlu0 %4827
  %4829 = vrot.lane.b32.xlu0 %v4809, 86
  %v4830 = vpop.permute.xlu0 %4829
  %v4831 = vsel %vm1253, %v4818, %v4820
  %v4832 = vsel %vm1253, %v4820, %v4822
  %v4833 = vsel %vm1253, %v4822, %v4824
  %v4834 = vsel %vm1253, %v4824, %v4826
  %v4835 = vsel %vm1253, %v4826, %v4828
  %v4836 = vsel %vm1253, %v4828, %v4830
  %4844 = vst [vmem:[#allocation3 + $0x540] sm:$0xff] %v4831
  %4845 = vst [vmem:[#allocation3 + $0x548] sm:$0xff] %v4832
  %4846 = vst [vmem:[#allocation3 + $0x550] sm:$0xff] %v4833
  %4847 = vst [vmem:[#allocation3 + $0x558] sm:$0xff] %v4834
  %4848 = vst [vmem:[#allocation3 + $0x560] sm:$0xff] %v4835
  %4849 = vst [vmem:[#allocation3 + $0x568] sm:$0xff] %v4836
  %4850 = vst.msk [vmem:[#allocation3 + $0x570] sm:$0xff] %vm96, %v4830
  %v4851 = vld [vmem:[%s11] sm:$0xff]
  %v4852 = vld [vmem:[%s11 + $0x8] sm:$0xff]
  %v4853 = vld [vmem:[%s11 + $0x10] sm:$0xff]
  %v4854 = vld [vmem:[%s11 + $0x18] sm:$0xff]
  %v4855 = vld [vmem:[#allocation3] sm:$0xff]
  %v4856 = vld [vmem:[#allocation3 + $0x8] sm:$0xff]
  %v4857 = vld [vmem:[#allocation3 + $0x10] sm:$0xff]
  %v4858 = vld [vmem:[#allocation3 + $0x18] sm:$0xff]
  %v4859 = vld [vmem:[#allocation3 + $0x20] sm:$0xff]
  %v4860 = vld [vmem:[#allocation3 + $0x28] sm:$0xff]
  %v4861 = vld [vmem:[#allocation3 + $0x30] sm:$0xff]
  %v4862 = vld [vmem:[#allocation3 + $0x38] sm:$0xff]
  %v4863 = vld [vmem:[#allocation3 + $0x40] sm:$0xff]
  %v4864 = vld [vmem:[#allocation3 + $0x48] sm:$0xff]
  %v4865 = vld [vmem:[#allocation3 + $0x50] sm:$0xff]
  %v4866 = vld [vmem:[#allocation3 + $0x58] sm:$0xff]
  %v4867 = vld [vmem:[#allocation3 + $0x60] sm:$0xff]
  %v4868 = vld [vmem:[#allocation3 + $0x68] sm:$0xff]
  %v4869 = vld [vmem:[#allocation3 + $0x70] sm:$0xff]
  %v4870 = vld [vmem:[#allocation3 + $0x78] sm:$0xff]
  %v4871 = vld [vmem:[#allocation3 + $0x80] sm:$0xff]
  %v4872 = vld [vmem:[#allocation3 + $0x88] sm:$0xff]
  %v4873 = vld [vmem:[#allocation3 + $0x90] sm:$0xff]
  %v4874 = vld [vmem:[#allocation3 + $0x98] sm:$0xff]
  %v4875 = vld [vmem:[#allocation3 + $0xa0] sm:$0xff]
  %v4876 = vld [vmem:[#allocation3 + $0xa8] sm:$0xff]
  %v4877 = vld [vmem:[#allocation3 + $0xb0] sm:$0xff]
  %v4878 = vld [vmem:[#allocation3 + $0xb8] sm:$0xff]
  %v4879 = vld [vmem:[#allocation3 + $0xc0] sm:$0xff]
  %v4880 = vld [vmem:[#allocation3 + $0xc8] sm:$0xff]
  %v4881 = vld [vmem:[#allocation3 + $0xd0] sm:$0xff]
  %v4882 = vld [vmem:[#allocation3 + $0xd8] sm:$0xff]
  %v4883 = vld [vmem:[#allocation3 + $0xe0] sm:$0xff]
  %v4884 = vld [vmem:[#allocation3 + $0xe8] sm:$0xff]
  %v4885 = vld [vmem:[#allocation3 + $0xf0] sm:$0xff]
  %v4886 = vld [vmem:[#allocation3 + $0xf8] sm:$0xff]
  %v4887 = vld [vmem:[#allocation3 + $0x100] sm:$0xff]
  %v4888 = vld [vmem:[#allocation3 + $0x108] sm:$0xff]
  %v4889 = vld [vmem:[#allocation3 + $0x110] sm:$0xff]
  %v4890 = vld [vmem:[#allocation3 + $0x118] sm:$0xff]
  %v4891 = vld [vmem:[#allocation3 + $0x120] sm:$0xff]
  %v4892 = vld [vmem:[#allocation3 + $0x128] sm:$0xff]
  %v4893 = vld [vmem:[#allocation3 + $0x130] sm:$0xff]
  %v4894 = vld [vmem:[#allocation3 + $0x138] sm:$0xff]
  %v4895 = vld [vmem:[#allocation3 + $0x140] sm:$0xff]
  %v4896 = vld [vmem:[#allocation3 + $0x148] sm:$0xff]
  %v4897 = vld [vmem:[#allocation3 + $0x150] sm:$0xff]
  %v4898 = vld [vmem:[#allocation3 + $0x158] sm:$0xff]
  %v4899 = vld [vmem:[#allocation3 + $0x160] sm:$0xff]
  %v4900 = vld [vmem:[#allocation3 + $0x168] sm:$0xff]
  %v4901 = vld [vmem:[#allocation3 + $0x170] sm:$0xff]
  %v4902 = vld [vmem:[#allocation3 + $0x178] sm:$0xff]
  %v4903 = vld [vmem:[#allocation3 + $0x180] sm:$0xff]
  %v4904 = vld [vmem:[#allocation3 + $0x188] sm:$0xff]
  %v4905 = vld [vmem:[#allocation3 + $0x190] sm:$0xff]
  %v4906 = vld [vmem:[#allocation3 + $0x198] sm:$0xff]
  %v4907 = vld [vmem:[#allocation3 + $0x1a0] sm:$0xff]
  %v4908 = vld [vmem:[#allocation3 + $0x1a8] sm:$0xff]
  %v4909 = vld [vmem:[#allocation3 + $0x1b0] sm:$0xff]
  %v4910 = vld [vmem:[#allocation3 + $0x1b8] sm:$0xff]
  %v4911 = vld [vmem:[#allocation3 + $0x1c0] sm:$0xff]
  %v4912 = vld [vmem:[#allocation3 + $0x1c8] sm:$0xff]
  %v4913 = vld [vmem:[#allocation3 + $0x1d0] sm:$0xff]
  %v4914 = vld [vmem:[#allocation3 + $0x1d8] sm:$0xff]
  %v4915 = vld [vmem:[#allocation3 + $0x1e0] sm:$0xff]
  %v4916 = vld [vmem:[#allocation3 + $0x1e8] sm:$0xff]
  %v4917 = vld [vmem:[#allocation3 + $0x1f0] sm:$0xff]
  %v4918 = vld [vmem:[#allocation3 + $0x1f8] sm:$0xff]
  %v4919 = vld [vmem:[#allocation3 + $0x200] sm:$0xff]
  %v4920 = vld [vmem:[#allocation3 + $0x208] sm:$0xff]
  %v4921 = vld [vmem:[#allocation3 + $0x210] sm:$0xff]
  %v4922 = vld [vmem:[#allocation3 + $0x218] sm:$0xff]
  %v4923 = vld [vmem:[#allocation3 + $0x220] sm:$0xff]
  %v4924 = vld [vmem:[#allocation3 + $0x228] sm:$0xff]
  %v4925 = vld [vmem:[#allocation3 + $0x230] sm:$0xff]
  %v4926 = vld [vmem:[#allocation3 + $0x238] sm:$0xff]
  %v4927 = vld [vmem:[#allocation3 + $0x240] sm:$0xff]
  %v4928 = vld [vmem:[#allocation3 + $0x248] sm:$0xff]
  %v4929 = vld [vmem:[#allocation3 + $0x250] sm:$0xff]
  %v4930 = vld [vmem:[#allocation3 + $0x258] sm:$0xff]
  %v4931 = vld [vmem:[#allocation3 + $0x260] sm:$0xff]
  %v4932 = vld [vmem:[#allocation3 + $0x268] sm:$0xff]
  %v4933 = vld [vmem:[#allocation3 + $0x270] sm:$0xff]
  %v4934 = vld [vmem:[#allocation3 + $0x278] sm:$0xff]
  %v4935 = vld [vmem:[#allocation3 + $0x280] sm:$0xff]
  %v4936 = vld [vmem:[#allocation3 + $0x288] sm:$0xff]
  %v4937 = vld [vmem:[#allocation3 + $0x290] sm:$0xff]
  %v4938 = vld [vmem:[#allocation3 + $0x298] sm:$0xff]
  %v4939 = vld [vmem:[#allocation3 + $0x2a0] sm:$0xff]
  %v4940 = vld [vmem:[#allocation3 + $0x2a8] sm:$0xff]
  %v4941 = vld [vmem:[#allocation3 + $0x2b0] sm:$0xff]
  %v4942 = vld [vmem:[#allocation3 + $0x2b8] sm:$0xff]
  %v4943 = vld [vmem:[#allocation3 + $0x2c0] sm:$0xff]
  %v4944 = vld [vmem:[#allocation3 + $0x2c8] sm:$0xff]
  %v4945 = vld [vmem:[#allocation3 + $0x2d0] sm:$0xff]
  %v4946 = vld [vmem:[#allocation3 + $0x2d8] sm:$0xff]
  %v4947 = vld [vmem:[#allocation3 + $0x2e0] sm:$0xff]
  %v4948 = vld [vmem:[#allocation3 + $0x2e8] sm:$0xff]
  %v4949 = vld [vmem:[#allocation3 + $0x2f0] sm:$0xff]
  %v4950 = vld [vmem:[#allocation3 + $0x2f8] sm:$0xff]
  %v4951 = vld [vmem:[#allocation3 + $0x300] sm:$0xff]
  %v4952 = vld [vmem:[#allocation3 + $0x308] sm:$0xff]
  %v4953 = vld [vmem:[#allocation3 + $0x310] sm:$0xff]
  %v4954 = vld [vmem:[#allocation3 + $0x318] sm:$0xff]
  %v4955 = vld [vmem:[#allocation3 + $0x320] sm:$0xff]
  %v4956 = vld [vmem:[#allocation3 + $0x328] sm:$0xff]
  %v4957 = vld [vmem:[#allocation3 + $0x330] sm:$0xff]
  %v4958 = vld [vmem:[#allocation3 + $0x338] sm:$0xff]
  %v4959 = vld [vmem:[#allocation3 + $0x340] sm:$0xff]
  %v4960 = vld [vmem:[#allocation3 + $0x348] sm:$0xff]
  %v4961 = vld [vmem:[#allocation3 + $0x350] sm:$0xff]
  %v4962 = vld [vmem:[#allocation3 + $0x358] sm:$0xff]
  %v4963 = vld [vmem:[#allocation3 + $0x360] sm:$0xff]
  %v4964 = vld [vmem:[#allocation3 + $0x368] sm:$0xff]
  %v4965 = vld [vmem:[#allocation3 + $0x370] sm:$0xff]
  %v4966 = vld [vmem:[#allocation3 + $0x378] sm:$0xff]
  %v4967 = vld [vmem:[#allocation3 + $0x380] sm:$0xff]
  %v4968 = vld [vmem:[#allocation3 + $0x388] sm:$0xff]
  %v4969 = vld [vmem:[#allocation3 + $0x390] sm:$0xff]
  %v4970 = vld [vmem:[#allocation3 + $0x398] sm:$0xff]
  %v4971 = vld [vmem:[#allocation3 + $0x3a0] sm:$0xff]
  %v4972 = vld [vmem:[#allocation3 + $0x3a8] sm:$0xff]
  %v4973 = vld [vmem:[#allocation3 + $0x3b0] sm:$0xff]
  %v4974 = vld [vmem:[#allocation3 + $0x3b8] sm:$0xff]
  %v4975 = vld [vmem:[#allocation3 + $0x3c0] sm:$0xff]
  %v4976 = vld [vmem:[#allocation3 + $0x3c8] sm:$0xff]
  %v4977 = vld [vmem:[#allocation3 + $0x3d0] sm:$0xff]
  %v4978 = vld [vmem:[#allocation3 + $0x3d8] sm:$0xff]
  %v4979 = vld [vmem:[#allocation3 + $0x3e0] sm:$0xff]
  %v4980 = vld [vmem:[#allocation3 + $0x3e8] sm:$0xff]
  %v4981 = vld [vmem:[#allocation3 + $0x3f0] sm:$0xff]
  %v4982 = vld [vmem:[#allocation3 + $0x3f8] sm:$0xff]
  %v4983 = vld [vmem:[#allocation3 + $0x400] sm:$0xff]
  %v4984 = vld [vmem:[#allocation3 + $0x408] sm:$0xff]
  %v4985 = vld [vmem:[#allocation3 + $0x410] sm:$0xff]
  %v4986 = vld [vmem:[#allocation3 + $0x418] sm:$0xff]
  %v4987 = vld [vmem:[#allocation3 + $0x420] sm:$0xff]
  %v4988 = vld [vmem:[#allocation3 + $0x428] sm:$0xff]
  %v4989 = vld [vmem:[#allocation3 + $0x430] sm:$0xff]
  %v4990 = vld [vmem:[#allocation3 + $0x438] sm:$0xff]
  %v4991 = vld [vmem:[#allocation3 + $0x440] sm:$0xff]
  %v4992 = vld [vmem:[#allocation3 + $0x448] sm:$0xff]
  %v4993 = vld [vmem:[#allocation3 + $0x450] sm:$0xff]
  %v4994 = vld [vmem:[#allocation3 + $0x458] sm:$0xff]
  %v4995 = vld [vmem:[#allocation3 + $0x460] sm:$0xff]
  %v4996 = vld [vmem:[#allocation3 + $0x468] sm:$0xff]
  %v4997 = vld [vmem:[#allocation3 + $0x470] sm:$0xff]
  %v4998 = vld [vmem:[#allocation3 + $0x478] sm:$0xff]
  %v4999 = vld [vmem:[#allocation3 + $0x480] sm:$0xff]
  %v5000 = vld [vmem:[#allocation3 + $0x488] sm:$0xff]
  %v5001 = vld [vmem:[#allocation3 + $0x490] sm:$0xff]
  %v5002 = vld [vmem:[#allocation3 + $0x498] sm:$0xff]
  %v5003 = vld [vmem:[#allocation3 + $0x4a0] sm:$0xff]
  %v5004 = vld [vmem:[#allocation3 + $0x4a8] sm:$0xff]
  %v5005 = vld [vmem:[#allocation3 + $0x4b0] sm:$0xff]
  %v5006 = vld [vmem:[#allocation3 + $0x4b8] sm:$0xff]
  %v5007 = vld [vmem:[#allocation3 + $0x4c0] sm:$0xff]
  %v5008 = vld [vmem:[#allocation3 + $0x4c8] sm:$0xff]
  %v5009 = vld [vmem:[#allocation3 + $0x4d0] sm:$0xff]
  %v5010 = vld [vmem:[#allocation3 + $0x4d8] sm:$0xff]
  %v5011 = vld [vmem:[#allocation3 + $0x4e0] sm:$0xff]
  %v5012 = vld [vmem:[#allocation3 + $0x4e8] sm:$0xff]
  %v5013 = vld [vmem:[#allocation3 + $0x4f0] sm:$0xff]
  %v5014 = vld [vmem:[#allocation3 + $0x4f8] sm:$0xff]
  %v5015 = vld [vmem:[#allocation3 + $0x500] sm:$0xff]
  %v5016 = vld [vmem:[#allocation3 + $0x508] sm:$0xff]
  %v5017 = vld [vmem:[#allocation3 + $0x510] sm:$0xff]
  %v5018 = vld [vmem:[#allocation3 + $0x518] sm:$0xff]
  %v5019 = vld [vmem:[#allocation3 + $0x520] sm:$0xff]
  %v5020 = vld [vmem:[#allocation3 + $0x528] sm:$0xff]
  %v5021 = vld [vmem:[#allocation3 + $0x530] sm:$0xff]
  %v5022 = vld [vmem:[#allocation3 + $0x538] sm:$0xff]
  %v5023 = vld [vmem:[#allocation3 + $0x540] sm:$0xff]
  %v5024 = vld [vmem:[#allocation3 + $0x548] sm:$0xff]
  %v5025 = vld [vmem:[#allocation3 + $0x550] sm:$0xff]
  %v5026 = vld [vmem:[#allocation3 + $0x558] sm:$0xff]
  %v5027 = vld [vmem:[#allocation3 + $0x560] sm:$0xff]
  %v5028 = vld [vmem:[#allocation3 + $0x568] sm:$0xff]
  %v5029 = vld [vmem:[#allocation3 + $0x570] sm:$0xff]
  %v5030 = vld [vmem:[#allocation3 + $0x578] sm:$0xff]
  %v5031 = vld [vmem:[#allocation3 + $0x580] sm:$0xff]
  %v5032 = vld [vmem:[#allocation3 + $0x588] sm:$0xff]
  %v5033 = vld [vmem:[#allocation3 + $0x590] sm:$0xff]
  %v5034 = vld [vmem:[#allocation3 + $0x598] sm:$0xff]
  %v5035 = vld [vmem:[#allocation3 + $0x5a0] sm:$0xff]
  %v5036 = vld [vmem:[#allocation3 + $0x5a8] sm:$0xff]
  %v5037 = vld [vmem:[#allocation3 + $0x5b0] sm:$0xff]
  %v5038 = vld [vmem:[#allocation3 + $0x5b8] sm:$0xff]
  %v5039 = vld [vmem:[#allocation3 + $0x5c0] sm:$0xff]
  %v5040 = vld [vmem:[#allocation3 + $0x5c8] sm:$0xff]
  %v5041 = vld [vmem:[#allocation3 + $0x5d0] sm:$0xff]
  %v5042 = vld [vmem:[#allocation3 + $0x5d8] sm:$0xff]
  %v5043 = vld [vmem:[#allocation3 + $0x5e0] sm:$0xff]
  %v5044 = vld [vmem:[#allocation3 + $0x5e8] sm:$0xff]
  %v5045 = vld [vmem:[#allocation3 + $0x5f0] sm:$0xff]
  %v5046 = vld [vmem:[#allocation3 + $0x5f8] sm:$0xff]
  %v5047 = vld [vmem:[#allocation3 + $0x600] sm:$0xff]
  %v5048 = vld [vmem:[#allocation3 + $0x608] sm:$0xff]
  %v5049 = vld [vmem:[#allocation3 + $0x610] sm:$0xff]
  %v5050 = vld [vmem:[#allocation3 + $0x618] sm:$0xff]
  %v5051 = vld [vmem:[#allocation3 + $0x620] sm:$0xff]
  %v5052 = vld [vmem:[#allocation3 + $0x628] sm:$0xff]
  %v5053 = vld [vmem:[#allocation3 + $0x630] sm:$0xff]
  %v5054 = vld [vmem:[#allocation3 + $0x638] sm:$0xff]
  %v5055 = vld [vmem:[#allocation3 + $0x640] sm:$0xff]
  %v5056 = vld [vmem:[#allocation3 + $0x648] sm:$0xff]
  %v5057 = vld [vmem:[#allocation3 + $0x650] sm:$0xff]
  %v5058 = vld [vmem:[#allocation3 + $0x658] sm:$0xff]
  %v5059 = vld [vmem:[#allocation3 + $0x660] sm:$0xff]
  %v5060 = vld [vmem:[#allocation3 + $0x668] sm:$0xff]
  %v5061 = vld [vmem:[#allocation3 + $0x670] sm:$0xff]
  %v5062 = vld [vmem:[#allocation3 + $0x678] sm:$0xff]
  %v5063 = vld [vmem:[#allocation3 + $0x680] sm:$0xff]
  %v5064 = vld [vmem:[#allocation3 + $0x688] sm:$0xff]
  %v5065 = vld [vmem:[#allocation3 + $0x690] sm:$0xff]
  %v5066 = vld [vmem:[#allocation3 + $0x698] sm:$0xff]
  %v5067 = vld [vmem:[#allocation3 + $0x6a0] sm:$0xff]
  %v5068 = vld [vmem:[#allocation3 + $0x6a8] sm:$0xff]
  %v5069 = vld [vmem:[#allocation3 + $0x6b0] sm:$0xff]
  %v5070 = vld [vmem:[#allocation3 + $0x6b8] sm:$0xff]
  %v5071 = vld [vmem:[#allocation3 + $0x6c0] sm:$0xff]
  %v5072 = vld [vmem:[#allocation3 + $0x6c8] sm:$0xff]
  %v5073 = vld [vmem:[#allocation3 + $0x6d0] sm:$0xff]
  %v5074 = vld [vmem:[#allocation3 + $0x6d8] sm:$0xff]
  %v5075 = vld [vmem:[#allocation3 + $0x6e0] sm:$0xff]
  %v5076 = vld [vmem:[#allocation3 + $0x6e8] sm:$0xff]
  %v5077 = vld [vmem:[#allocation3 + $0x6f0] sm:$0xff]
  %v5078 = vld [vmem:[#allocation3 + $0x6f8] sm:$0xff]
  %v5079 = vld [vmem:[#allocation3 + $0x700] sm:$0xff]
  %v5080 = vld [vmem:[#allocation3 + $0x708] sm:$0xff]
  %v5081 = vld [vmem:[#allocation3 + $0x710] sm:$0xff]
  %v5082 = vld [vmem:[#allocation3 + $0x718] sm:$0xff]
  %v5083 = vld [vmem:[#allocation3 + $0x720] sm:$0xff]
  %v5084 = vld [vmem:[#allocation3 + $0x728] sm:$0xff]
  %v5085 = vld [vmem:[#allocation3 + $0x730] sm:$0xff]
  %v5086 = vld [vmem:[#allocation3 + $0x738] sm:$0xff]
  %v5087 = vld [vmem:[#allocation3 + $0x740] sm:$0xff]
  %v5088 = vld [vmem:[#allocation3 + $0x748] sm:$0xff]
  %v5089 = vld [vmem:[#allocation3 + $0x750] sm:$0xff]
  %v5090 = vld [vmem:[#allocation3 + $0x758] sm:$0xff]
  %v5091 = vld [vmem:[#allocation3 + $0x760] sm:$0xff]
  %v5092 = vld [vmem:[#allocation3 + $0x768] sm:$0xff]
  %v5093 = vld [vmem:[#allocation3 + $0x770] sm:$0xff]
  %v5094 = vld [vmem:[#allocation3 + $0x778] sm:$0xff]
  %v5095 = vld [vmem:[#allocation3 + $0x780] sm:$0xff]
  %v5096 = vld [vmem:[#allocation3 + $0x788] sm:$0xff]
  %v5097 = vld [vmem:[#allocation3 + $0x790] sm:$0xff]
  %v5098 = vld [vmem:[#allocation3 + $0x798] sm:$0xff]
  %v5099 = vld [vmem:[#allocation3 + $0x7a0] sm:$0xff]
  %v5100 = vld [vmem:[#allocation3 + $0x7a8] sm:$0xff]
  %v5101 = vld [vmem:[#allocation3 + $0x7b0] sm:$0xff]
  %v5102 = vld [vmem:[#allocation3 + $0x7b8] sm:$0xff]
  %v5103 = vld [vmem:[#allocation3 + $0x7c0] sm:$0xff]
  %v5104 = vld [vmem:[#allocation3 + $0x7c8] sm:$0xff]
  %v5105 = vld [vmem:[#allocation3 + $0x7d0] sm:$0xff]
  %v5106 = vld [vmem:[#allocation3 + $0x7d8] sm:$0xff]
  %v5107 = vld [vmem:[#allocation3 + $0x7e0] sm:$0xff]
  %v5108 = vld [vmem:[#allocation3 + $0x7e8] sm:$0xff]
  %v5109 = vld [vmem:[#allocation3 + $0x7f0] sm:$0xff]
  %v5110 = vld [vmem:[#allocation3 + $0x7f8] sm:$0xff]
  %v5111 = vld [vmem:[#allocation3 + $0x800] sm:$0xff]
  %v5112 = vld [vmem:[#allocation3 + $0x808] sm:$0xff]
  %v5113 = vld [vmem:[#allocation3 + $0x810] sm:$0xff]
  %v5114 = vld [vmem:[#allocation3 + $0x818] sm:$0xff]
  %v5115 = vld [vmem:[#allocation3 + $0x820] sm:$0xff]
  %v5116 = vld [vmem:[#allocation3 + $0x828] sm:$0xff]
  %v5117 = vld [vmem:[#allocation3 + $0x830] sm:$0xff]
  %v5118 = vld [vmem:[#allocation3 + $0x838] sm:$0xff]
  %v5119 = vld [vmem:[#allocation3 + $0x840] sm:$0xff]
  %v5120 = vld [vmem:[#allocation3 + $0x848] sm:$0xff]
  %v5121 = vld [vmem:[#allocation3 + $0x850] sm:$0xff]
  %v5122 = vld [vmem:[#allocation3 + $0x858] sm:$0xff]
  %v5123 = vld [vmem:[#allocation3 + $0x860] sm:$0xff]
  %v5124 = vld [vmem:[#allocation3 + $0x868] sm:$0xff]
  %v5125 = vld [vmem:[#allocation3 + $0x870] sm:$0xff]
  %v5126 = vld [vmem:[#allocation3 + $0x878] sm:$0xff]
  %v5127 = vld [vmem:[#allocation3 + $0x880] sm:$0xff]
  %v5128 = vld [vmem:[#allocation3 + $0x888] sm:$0xff]
  %v5129 = vld [vmem:[#allocation3 + $0x890] sm:$0xff]
  %v5130 = vld [vmem:[#allocation3 + $0x898] sm:$0xff]
  %v5131 = vld [vmem:[#allocation3 + $0x8a0] sm:$0xff]
  %v5132 = vld [vmem:[#allocation3 + $0x8a8] sm:$0xff]
  %v5133 = vld [vmem:[#allocation3 + $0x8b0] sm:$0xff]
  %v5134 = vld [vmem:[#allocation3 + $0x8b8] sm:$0xff]
  %v5135 = vld [vmem:[#allocation3 + $0x8c0] sm:$0xff]
  %v5136 = vld [vmem:[#allocation3 + $0x8c8] sm:$0xff]
  %v5137 = vld [vmem:[#allocation3 + $0x8d0] sm:$0xff]
  %v5138 = vld [vmem:[#allocation3 + $0x8d8] sm:$0xff]
  %v5139 = vld [vmem:[#allocation3 + $0x8e0] sm:$0xff]
  %v5140 = vld [vmem:[#allocation3 + $0x8e8] sm:$0xff]
  %v5141 = vld [vmem:[#allocation3 + $0x8f0] sm:$0xff]
  %v5142 = vld [vmem:[#allocation3 + $0x8f8] sm:$0xff]
  %v5143 = vld [vmem:[#allocation3 + $0x900] sm:$0xff]
  %v5144 = vld [vmem:[#allocation3 + $0x908] sm:$0xff]
  %v5145 = vld [vmem:[#allocation3 + $0x910] sm:$0xff]
  %v5146 = vld [vmem:[#allocation3 + $0x918] sm:$0xff]
  %v5147 = vld [vmem:[#allocation3 + $0x920] sm:$0xff]
  %v5148 = vld [vmem:[#allocation3 + $0x928] sm:$0xff]
  %v5149 = vld [vmem:[#allocation3 + $0x930] sm:$0xff]
  %v5150 = vld [vmem:[#allocation3 + $0x938] sm:$0xff]
  %v5151 = vld [vmem:[#allocation3 + $0x940] sm:$0xff]
  %v5152 = vld [vmem:[#allocation3 + $0x948] sm:$0xff]
  %v5153 = vld [vmem:[#allocation3 + $0x950] sm:$0xff]
  %v5154 = vld [vmem:[#allocation3 + $0x958] sm:$0xff]
  %v5155 = vld [vmem:[#allocation3 + $0x960] sm:$0xff]
  %v5156 = vld [vmem:[#allocation3 + $0x968] sm:$0xff]
  %v5157 = vld [vmem:[#allocation3 + $0x970] sm:$0xff]
  %v5158 = vld [vmem:[#allocation3 + $0x978] sm:$0xff]
  %v5159 = vld [vmem:[#allocation3 + $0x980] sm:$0xff]
  %v5160 = vld [vmem:[#allocation3 + $0x988] sm:$0xff]
  %v5161 = vld [vmem:[#allocation3 + $0x990] sm:$0xff]
  %v5162 = vld [vmem:[#allocation3 + $0x998] sm:$0xff]
  %v5163 = vld [vmem:[#allocation3 + $0x9a0] sm:$0xff]
  %v5164 = vld [vmem:[#allocation3 + $0x9a8] sm:$0xff]
  %v5165 = vld [vmem:[#allocation3 + $0x9b0] sm:$0xff]
  %v5166 = vld [vmem:[#allocation3 + $0x9b8] sm:$0xff]
  %v5167 = vld [vmem:[#allocation3 + $0x9c0] sm:$0xff]
  %v5168 = vld [vmem:[#allocation3 + $0x9c8] sm:$0xff]
  %v5169 = vld [vmem:[#allocation3 + $0x9d0] sm:$0xff]
  %v5170 = vld [vmem:[#allocation3 + $0x9d8] sm:$0xff]
  %v5171 = vld [vmem:[#allocation3 + $0x9e0] sm:$0xff]
  %v5172 = vld [vmem:[#allocation3 + $0x9e8] sm:$0xff]
  %v5173 = vld [vmem:[#allocation3 + $0x9f0] sm:$0xff]
  %v5174 = vld [vmem:[#allocation3 + $0x9f8] sm:$0xff]
  %v5175 = vld [vmem:[#allocation3 + $0xa00] sm:$0xff]
  %v5176 = vld [vmem:[#allocation3 + $0xa08] sm:$0xff]
  %v5177 = vld [vmem:[#allocation3 + $0xa10] sm:$0xff]
  %v5178 = vld [vmem:[#allocation3 + $0xa18] sm:$0xff]
  %v5179 = vld [vmem:[#allocation3 + $0xa20] sm:$0xff]
  %v5180 = vld [vmem:[#allocation3 + $0xa28] sm:$0xff]
  %v5181 = vld [vmem:[#allocation3 + $0xa30] sm:$0xff]
  %v5182 = vld [vmem:[#allocation3 + $0xa38] sm:$0xff]
  %v5183 = vld [vmem:[#allocation3 + $0xa40] sm:$0xff]
  %v5184 = vld [vmem:[#allocation3 + $0xa48] sm:$0xff]
  %v5185 = vld [vmem:[#allocation3 + $0xa50] sm:$0xff]
  %v5186 = vld [vmem:[#allocation3 + $0xa58] sm:$0xff]
  %v5187 = vld [vmem:[#allocation3 + $0xa60] sm:$0xff]
  %v5188 = vld [vmem:[#allocation3 + $0xa68] sm:$0xff]
  %v5189 = vld [vmem:[#allocation3 + $0xa70] sm:$0xff]
  %v5190 = vld [vmem:[#allocation3 + $0xa78] sm:$0xff]
  %v5191 = vld [vmem:[#allocation3 + $0xa80] sm:$0xff]
  %v5192 = vld [vmem:[#allocation3 + $0xa88] sm:$0xff]
  %v5193 = vld [vmem:[#allocation3 + $0xa90] sm:$0xff]
  %v5194 = vld [vmem:[#allocation3 + $0xa98] sm:$0xff]
  %v5195 = vld [vmem:[#allocation3 + $0xaa0] sm:$0xff]
  %v5196 = vld [vmem:[#allocation3 + $0xaa8] sm:$0xff]
  %v5197 = vld [vmem:[#allocation3 + $0xab0] sm:$0xff]
  %v5198 = vld [vmem:[#allocation3 + $0xab8] sm:$0xff]
  %v5199 = vld [vmem:[#allocation3 + $0xac0] sm:$0xff]
  %v5200 = vld [vmem:[#allocation3 + $0xac8] sm:$0xff]
  %v5201 = vld [vmem:[#allocation3 + $0xad0] sm:$0xff]
  %v5202 = vld [vmem:[#allocation3 + $0xad8] sm:$0xff]
  %v5203 = vld [vmem:[#allocation3 + $0xae0] sm:$0xff]
  %v5204 = vld [vmem:[#allocation3 + $0xae8] sm:$0xff]
  %vm5205 = vcmask 130048
  %v5207 = vsel %vm5205, %v4854, 0
  %5209 = vmatprep.subr.mxu0 %v4856
  %5210 = vmatpush1.msra.mxu0 %v4855
  %5211 = vmatprep.subr.mxu0 %v4863
  %5212 = vmatpush1.msra.mxu0 %v4862
  %5213 = vmatprep.subr.mxu0 %v4870
  %5214 = vmatpush1.msra.mxu0 %v4869
  %5215 = vmatprep.subr.mxu0 %v4877
  %5216 = vmatpush1.msra.mxu0 %v4876
  %5217 = vmatprep.subr.mxu0 %v4884
  %5218 = vmatpush1.msra.mxu0 %v4883
  %5219 = vmatprep.subr.mxu0 %v4891
  %5220 = vmatpush1.msra.mxu0 %v4890
  %5221 = vmatprep.subr.mxu0 %v4898
  %5222 = vmatpush1.msra.mxu0 %v4897
  %5223 = vmatprep.subr.mxu0 %v4905
  %5224 = vmatpush1.msra.mxu0 %v4904
  %5225 = vmatprep.subr.mxu0 %v4912
  %5226 = vmatpush1.msra.mxu0 %v4911
  %5227 = vmatprep.subr.mxu0 %v4919
  %5228 = vmatpush1.msra.mxu0 %v4918
  %5229 = vmatprep.subr.mxu0 %v4926
  %5230 = vmatpush1.msra.mxu0 %v4925
  %5231 = vmatprep.subr.mxu0 %v4933
  %5232 = vmatpush1.msra.mxu0 %v4932
  %5233 = vmatprep.subr.mxu0 %v4940
  %5234 = vmatpush1.msra.mxu0 %v4939
  %5235 = vmatprep.subr.mxu0 %v4947
  %5236 = vmatpush1.msra.mxu0 %v4946
  %5237 = vmatprep.subr.mxu0 %v4954
  %5238 = vmatpush1.msra.mxu0 %v4953
  %5239 = vmatprep.subr.mxu0 %v4961
  %5240 = vmatpush1.msra.mxu0 %v4960
  %5241 = vmatprep.subr.mxu0 %v4968
  %5242 = vmatpush1.msra.mxu0 %v4967
  %5243 = vmatprep.subr.mxu0 %v4975
  %5244 = vmatpush1.msra.mxu0 %v4974
  %5245 = vmatprep.subr.mxu0 %v4982
  %5246 = vmatpush1.msra.mxu0 %v4981
  %5247 = vmatprep.subr.mxu0 %v4989
  %5248 = vmatpush1.msra.mxu0 %v4988
  %5249 = vmatprep.subr.mxu0 %v4996
  %5250 = vmatpush1.msra.mxu0 %v4995
  %5251 = vmatprep.subr.mxu0 %v5003
  %5252 = vmatpush1.msra.mxu0 %v5002
  %5253 = vmatprep.subr.mxu0 %v5010
  %5254 = vmatpush1.msra.mxu0 %v5009
  %5255 = vmatprep.subr.mxu0 %v5017
  %5256 = vmatpush1.msra.mxu0 %v5016
  %5257 = vmatprep.subr.mxu0 %v5024
  %5258 = vmatpush1.msra.mxu0 %v5023
  %5259 = vmatprep.subr.mxu0 %v5031
  %5260 = vmatpush1.msra.mxu0 %v5030
  %5261 = vmatprep.subr.mxu0 %v5038
  %5262 = vmatpush1.msra.mxu0 %v5037
  %5263 = vmatprep.subr.mxu0 %v5045
  %5264 = vmatpush1.msra.mxu0 %v5044
  %5265 = vmatprep.subr.mxu0 %v5052
  %5266 = vmatpush1.msra.mxu0 %v5051
  %5267 = vmatprep.subr.mxu0 %v5059
  %5268 = vmatpush1.msra.mxu0 %v5058
  %5269 = vmatprep.subr.mxu0 %v5066
  %5270 = vmatpush1.msra.mxu0 %v5065
  %5271 = vmatprep.subr.mxu0 %v5073
  %5272 = vmatpush1.msra.mxu0 %v5072
  %5273 = vmatprep.mubr.f32.mxu0 %v4852
  %5274 = vmatmul.mubr.f32.gmra.mrb[0].mxu0 %v4851
  %v5275 = vpop.f32.mrb[0].mxu0
  %v5276 = vadd.f32 0.0, %v5275
  %v5277 = vpop.f32.mrb[0].mxu0
  %v5278 = vadd.f32 0.0, %v5277
  %5279 = vdwg.mxu0
  %5280 = vmatprep.subr.mxu0 %v5080
  %5281 = vmatpush1.msra.mxu0 %v5079
  %5282 = vmatprep.subr.mxu0 %v5087
  %5283 = vmatpush1.msra.mxu0 %v5086
  %5284 = vmatprep.subr.mxu0 %v5094
  %5285 = vmatpush1.msra.mxu0 %v5093
  %5286 = vmatprep.subr.mxu0 %v5101
  %5287 = vmatpush1.msra.mxu0 %v5100
  %5288 = vmatprep.subr.mxu0 %v5108
  %5289 = vmatpush1.msra.mxu0 %v5107
  %5290 = vmatprep.subr.mxu0 %v5115
  %5291 = vmatpush1.msra.mxu0 %v5114
  %5292 = vmatprep.subr.mxu0 %v5122
  %5293 = vmatpush1.msra.mxu0 %v5121
  %5294 = vmatprep.subr.mxu0 %v5129
  %5295 = vmatpush1.msra.mxu0 %v5128
  %5296 = vmatprep.subr.mxu0 %v5136
  %5297 = vmatpush1.msra.mxu0 %v5135
  %5298 = vmatprep.subr.mxu0 %v5143
  %5299 = vmatpush1.msra.mxu0 %v5142
  %5300 = vmatprep.subr.mxu0 %v5150
  %5301 = vmatpush1.msra.mxu0 %v5149
  %5302 = vmatprep.subr.mxu0 %v5157
  %5303 = vmatpush1.msra.mxu0 %v5156
  %5304 = vmatprep.subr.mxu0 %v5164
  %5305 = vmatpush1.msra.mxu0 %v5163
  %5306 = vmatprep.subr.mxu0 %v5171
  %5307 = vmatpush1.msra.mxu0 %v5170
  %5308 = vmatprep.subr.mxu0 %v5178
  %5309 = vmatpush1.msra.mxu0 %v5177
  %5310 = vmatprep.subr.mxu0 %v5185
  %5311 = vmatpush1.msra.mxu0 %v5184
  %5312 = vmatprep.subr.mxu0 %v5192
  %5313 = vmatpush1.msra.mxu0 %v5191
  %5314 = vmatprep.subr.mxu0 %v5199
  %5315 = vmatpush1.msra.mxu0 %v5198
  %5316 = vmatprep.subr.mxu0 0.0
  %5317 = vmatpush1.msra.mxu0 0.0
  %5318 = vmatprep.subr.mxu0 0.0
  %5319 = vmatpush1.msra.mxu0 0.0
  %5320 = vmatprep.subr.mxu0 0.0
  %5321 = vmatpush1.msra.mxu0 0.0
  %5322 = vmatprep.subr.mxu0 0.0
  %5323 = vmatpush1.msra.mxu0 0.0
  %5324 = vmatprep.subr.mxu0 0.0
  %5325 = vmatpush1.msra.mxu0 0.0
  %5326 = vmatprep.subr.mxu0 0.0
  %5327 = vmatpush1.msra.mxu0 0.0
  %5328 = vmatprep.subr.mxu0 0.0
  %5329 = vmatpush1.msra.mxu0 0.0
  %5330 = vmatprep.subr.mxu0 0.0
  %5331 = vmatpush1.msra.mxu0 0.0
  %5332 = vmatprep.subr.mxu0 0.0
  %5333 = vmatpush1.msra.mxu0 0.0
  %5334 = vmatprep.subr.mxu0 0.0
  %5335 = vmatpush1.msra.mxu0 0.0
  %5336 = vmatprep.subr.mxu0 0.0
  %5337 = vmatpush1.msra.mxu0 0.0
  %5338 = vmatprep.subr.mxu0 0.0
  %5339 = vmatpush1.msra.mxu0 0.0
  %5340 = vmatprep.subr.mxu0 0.0
  %5341 = vmatpush1.msra.mxu0 0.0
  %5342 = vmatprep.subr.mxu0 0.0
  %5343 = vmatpush1.msra.mxu0 0.0
  %5344 = vmatprep.mubr.f32.mxu0 %v5207
  %5345 = vmatmul.mubr.f32.gmra.mrb[0].mxu0 %v4853
  %v5346 = vpop.f32.mrb[0].mxu0
  %v5347 = vadd.f32 %v5276, %v5346
  %v5348 = vpop.f32.mrb[0].mxu0
  %v5349 = vadd.f32 %v5278, %v5348
  %5350 = vdwg.mxu0
  %5351 = vmatprep.subr.mxu0 %v4858
  %5352 = vmatpush1.msra.mxu0 %v4857
  %5353 = vmatprep.subr.mxu0 %v4865
  %5354 = vmatpush1.msra.mxu0 %v4864
  %5355 = vmatprep.subr.mxu0 %v4872
  %5356 = vmatpush1.msra.mxu0 %v4871
  %5357 = vmatprep.subr.mxu0 %v4879
  %5358 = vmatpush1.msra.mxu0 %v4878
  %5359 = vmatprep.subr.mxu0 %v4886
  %5360 = vmatpush1.msra.mxu0 %v4885
  %5361 = vmatprep.subr.mxu0 %v4893
  %5362 = vmatpush1.msra.mxu0 %v4892
  %5363 = vmatprep.subr.mxu0 %v4900
  %5364 = vmatpush1.msra.mxu0 %v4899
  %5365 = vmatprep.subr.mxu0 %v4907
  %5366 = vmatpush1.msra.mxu0 %v4906
  %5367 = vmatprep.subr.mxu0 %v4914
  %5368 = vmatpush1.msra.mxu0 %v4913
  %5369 = vmatprep.subr.mxu0 %v4921
  %5370 = vmatpush1.msra.mxu0 %v4920
  %5371 = vmatprep.subr.mxu0 %v4928
  %5372 = vmatpush1.msra.mxu0 %v4927
  %5373 = vmatprep.subr.mxu0 %v4935
  %5374 = vmatpush1.msra.mxu0 %v4934
  %5375 = vmatprep.subr.mxu0 %v4942
  %5376 = vmatpush1.msra.mxu0 %v4941
  %5377 = vmatprep.subr.mxu0 %v4949
  %5378 = vmatpush1.msra.mxu0 %v4948
  %5379 = vmatprep.subr.mxu0 %v4956
  %5380 = vmatpush1.msra.mxu0 %v4955
  %5381 = vmatprep.subr.mxu0 %v4963
  %5382 = vmatpush1.msra.mxu0 %v4962
  %5383 = vmatprep.subr.mxu0 %v4970
  %5384 = vmatpush1.msra.mxu0 %v4969
  %5385 = vmatprep.subr.mxu0 %v4977
  %5386 = vmatpush1.msra.mxu0 %v4976
  %5387 = vmatprep.subr.mxu0 %v4984
  %5388 = vmatpush1.msra.mxu0 %v4983
  %5389 = vmatprep.subr.mxu0 %v4991
  %5390 = vmatpush1.msra.mxu0 %v4990
  %5391 = vmatprep.subr.mxu0 %v4998
  %5392 = vmatpush1.msra.mxu0 %v4997
  %5393 = vmatprep.subr.mxu0 %v5005
  %5394 = vmatpush1.msra.mxu0 %v5004
  %5395 = vmatprep.subr.mxu0 %v5012
  %5396 = vmatpush1.msra.mxu0 %v5011
  %5397 = vmatprep.subr.mxu0 %v5019
  %5398 = vmatpush1.msra.mxu0 %v5018
  %5399 = vmatprep.subr.mxu0 %v5026
  %5400 = vmatpush1.msra.mxu0 %v5025
  %5401 = vmatprep.subr.mxu0 %v5033
  %5402 = vmatpush1.msra.mxu0 %v5032
  %5403 = vmatprep.subr.mxu0 %v5040
  %5404 = vmatpush1.msra.mxu0 %v5039
  %5405 = vmatprep.subr.mxu0 %v5047
  %5406 = vmatpush1.msra.mxu0 %v5046
  %5407 = vmatprep.subr.mxu0 %v5054
  %5408 = vmatpush1.msra.mxu0 %v5053
  %5409 = vmatprep.subr.mxu0 %v5061
  %5410 = vmatpush1.msra.mxu0 %v5060
  %5411 = vmatprep.subr.mxu0 %v5068
  %5412 = vmatpush1.msra.mxu0 %v5067
  %5413 = vmatprep.subr.mxu0 %v5075
  %5414 = vmatpush1.msra.mxu0 %v5074
  %5415 = vmatprep.mubr.f32.mxu0 %v4852
  %5416 = vmatmul.mubr.f32.gmra.mrb[0].mxu0 %v4851
  %v5417 = vpop.f32.mrb[0].mxu0
  %v5418 = vadd.f32 0.0, %v5417
  %v5419 = vpop.f32.mrb[0].mxu0
  %v5420 = vadd.f32 0.0, %v5419
  %5421 = vdwg.mxu0
  %5422 = vmatprep.subr.mxu0 %v5082
  %5423 = vmatpush1.msra.mxu0 %v5081
  %5424 = vmatprep.subr.mxu0 %v5089
  %5425 = vmatpush1.msra.mxu0 %v5088
  %5426 = vmatprep.subr.mxu0 %v5096
  %5427 = vmatpush1.msra.mxu0 %v5095
  %5428 = vmatprep.subr.mxu0 %v5103
  %5429 = vmatpush1.msra.mxu0 %v5102
  %5430 = vmatprep.subr.mxu0 %v5110
  %5431 = vmatpush1.msra.mxu0 %v5109
  %5432 = vmatprep.subr.mxu0 %v5117
  %5433 = vmatpush1.msra.mxu0 %v5116
  %5434 = vmatprep.subr.mxu0 %v5124
  %5435 = vmatpush1.msra.mxu0 %v5123
  %5436 = vmatprep.subr.mxu0 %v5131
  %5437 = vmatpush1.msra.mxu0 %v5130
  %5438 = vmatprep.subr.mxu0 %v5138
  %5439 = vmatpush1.msra.mxu0 %v5137
  %5440 = vmatprep.subr.mxu0 %v5145
  %5441 = vmatpush1.msra.mxu0 %v5144
  %5442 = vmatprep.subr.mxu0 %v5152
  %5443 = vmatpush1.msra.mxu0 %v5151
  %5444 = vmatprep.subr.mxu0 %v5159
  %5445 = vmatpush1.msra.mxu0 %v5158
  %5446 = vmatprep.subr.mxu0 %v5166
  %5447 = vmatpush1.msra.mxu0 %v5165
  %5448 = vmatprep.subr.mxu0 %v5173
  %5449 = vmatpush1.msra.mxu0 %v5172
  %5450 = vmatprep.subr.mxu0 %v5180
  %5451 = vmatpush1.msra.mxu0 %v5179
  %5452 = vmatprep.subr.mxu0 %v5187
  %5453 = vmatpush1.msra.mxu0 %v5186
  %5454 = vmatprep.subr.mxu0 %v5194
  %5455 = vmatpush1.msra.mxu0 %v5193
  %5456 = vmatprep.subr.mxu0 %v5201
  %5457 = vmatpush1.msra.mxu0 %v5200
  %5458 = vmatprep.subr.mxu0 0.0
  %5459 = vmatpush1.msra.mxu0 0.0
  %5460 = vmatprep.subr.mxu0 0.0
  %5461 = vmatpush1.msra.mxu0 0.0
  %5462 = vmatprep.subr.mxu0 0.0
  %5463 = vmatpush1.msra.mxu0 0.0
  %5464 = vmatprep.subr.mxu0 0.0
  %5465 = vmatpush1.msra.mxu0 0.0
  %5466 = vmatprep.subr.mxu0 0.0
  %5467 = vmatpush1.msra.mxu0 0.0
  %5468 = vmatprep.subr.mxu0 0.0
  %5469 = vmatpush1.msra.mxu0 0.0
  %5470 = vmatprep.subr.mxu0 0.0
  %5471 = vmatpush1.msra.mxu0 0.0
  %5472 = vmatprep.subr.mxu0 0.0
  %5473 = vmatpush1.msra.mxu0 0.0
  %5474 = vmatprep.subr.mxu0 0.0
  %5475 = vmatpush1.msra.mxu0 0.0
  %5476 = vmatprep.subr.mxu0 0.0
  %5477 = vmatpush1.msra.mxu0 0.0
  %5478 = vmatprep.subr.mxu0 0.0
  %5479 = vmatpush1.msra.mxu0 0.0
  %5480 = vmatprep.subr.mxu0 0.0
  %5481 = vmatpush1.msra.mxu0 0.0
  %5482 = vmatprep.subr.mxu0 0.0
  %5483 = vmatpush1.msra.mxu0 0.0
  %5484 = vmatprep.subr.mxu0 0.0
  %5485 = vmatpush1.msra.mxu0 0.0
  %5486 = vmatprep.mubr.f32.mxu0 %v5207
  %5487 = vmatmul.mubr.f32.gmra.mrb[0].mxu0 %v4853
  %v5488 = vpop.f32.mrb[0].mxu0
  %v5489 = vadd.f32 %v5418, %v5488
  %v5490 = vpop.f32.mrb[0].mxu0
  %v5491 = vadd.f32 %v5420, %v5490
  %5492 = vdwg.mxu0
  %5493 = vmatprep.subr.mxu0 %v4860
  %5494 = vmatpush1.msra.mxu0 %v4859
  %5495 = vmatprep.subr.mxu0 %v4867
  %5496 = vmatpush1.msra.mxu0 %v4866
  %5497 = vmatprep.subr.mxu0 %v4874
  %5498 = vmatpush1.msra.mxu0 %v4873
  %5499 = vmatprep.subr.mxu0 %v4881
  %5500 = vmatpush1.msra.mxu0 %v4880
  %5501 = vmatprep.subr.mxu0 %v4888
  %5502 = vmatpush1.msra.mxu0 %v4887
  %5503 = vmatprep.subr.mxu0 %v4895
  %5504 = vmatpush1.msra.mxu0 %v4894
  %5505 = vmatprep.subr.mxu0 %v4902
  %5506 = vmatpush1.msra.mxu0 %v4901
  %5507 = vmatprep.subr.mxu0 %v4909
  %5508 = vmatpush1.msra.mxu0 %v4908
  %5509 = vmatprep.subr.mxu0 %v4916
  %5510 = vmatpush1.msra.mxu0 %v4915
  %5511 = vmatprep.subr.mxu0 %v4923
  %5512 = vmatpush1.msra.mxu0 %v4922
  %5513 = vmatprep.subr.mxu0 %v4930
  %5514 = vmatpush1.msra.mxu0 %v4929
  %5515 = vmatprep.subr.mxu0 %v4937
  %5516 = vmatpush1.msra.mxu0 %v4936
  %5517 = vmatprep.subr.mxu0 %v4944
  %5518 = vmatpush1.msra.mxu0 %v4943
  %5519 = vmatprep.subr.mxu0 %v4951
  %5520 = vmatpush1.msra.mxu0 %v4950
  %5521 = vmatprep.subr.mxu0 %v4958
  %5522 = vmatpush1.msra.mxu0 %v4957
  %5523 = vmatprep.subr.mxu0 %v4965
  %5524 = vmatpush1.msra.mxu0 %v4964
  %5525 = vmatprep.subr.mxu0 %v4972
  %5526 = vmatpush1.msra.mxu0 %v4971
  %5527 = vmatprep.subr.mxu0 %v4979
  %5528 = vmatpush1.msra.mxu0 %v4978
  %5529 = vmatprep.subr.mxu0 %v4986
  %5530 = vmatpush1.msra.mxu0 %v4985
  %5531 = vmatprep.subr.mxu0 %v4993
  %5532 = vmatpush1.msra.mxu0 %v4992
  %5533 = vmatprep.subr.mxu0 %v5000
  %5534 = vmatpush1.msra.mxu0 %v4999
  %5535 = vmatprep.subr.mxu0 %v5007
  %5536 = vmatpush1.msra.mxu0 %v5006
  %5537 = vmatprep.subr.mxu0 %v5014
  %5538 = vmatpush1.msra.mxu0 %v5013
  %5539 = vmatprep.subr.mxu0 %v5021
  %5540 = vmatpush1.msra.mxu0 %v5020
  %5541 = vmatprep.subr.mxu0 %v5028
  %5542 = vmatpush1.msra.mxu0 %v5027
  %5543 = vmatprep.subr.mxu0 %v5035
  %5544 = vmatpush1.msra.mxu0 %v5034
  %5545 = vmatprep.subr.mxu0 %v5042
  %5546 = vmatpush1.msra.mxu0 %v5041
  %5547 = vmatprep.subr.mxu0 %v5049
  %5548 = vmatpush1.msra.mxu0 %v5048
  %5549 = vmatprep.subr.mxu0 %v5056
  %5550 = vmatpush1.msra.mxu0 %v5055
  %5551 = vmatprep.subr.mxu0 %v5063
  %5552 = vmatpush1.msra.mxu0 %v5062
  %5553 = vmatprep.subr.mxu0 %v5070
  %5554 = vmatpush1.msra.mxu0 %v5069
  %5555 = vmatprep.subr.mxu0 %v5077
  %5556 = vmatpush1.msra.mxu0 %v5076
  %5557 = vmatprep.mubr.f32.mxu0 %v4852
  %5558 = vmatmul.mubr.f32.gmra.mrb[0].mxu0 %v4851
  %v5559 = vpop.f32.mrb[0].mxu0
  %v5560 = vadd.f32 0.0, %v5559
  %v5561 = vpop.f32.mrb[0].mxu0
  %v5562 = vadd.f32 0.0, %v5561
  %5563 = vdwg.mxu0
  %5564 = vmatprep.subr.mxu0 %v5084
  %5565 = vmatpush1.msra.mxu0 %v5083
  %5566 = vmatprep.subr.mxu0 %v5091
  %5567 = vmatpush1.msra.mxu0 %v5090
  %5568 = vmatprep.subr.mxu0 %v5098
  %5569 = vmatpush1.msra.mxu0 %v5097
  %5570 = vmatprep.subr.mxu0 %v5105
  %5571 = vmatpush1.msra.mxu0 %v5104
  %5572 = vmatprep.subr.mxu0 %v5112
  %5573 = vmatpush1.msra.mxu0 %v5111
  %5574 = vmatprep.subr.mxu0 %v5119
  %5575 = vmatpush1.msra.mxu0 %v5118
  %5576 = vmatprep.subr.mxu0 %v5126
  %5577 = vmatpush1.msra.mxu0 %v5125
  %5578 = vmatprep.subr.mxu0 %v5133
  %5579 = vmatpush1.msra.mxu0 %v5132
  %5580 = vmatprep.subr.mxu0 %v5140
  %5581 = vmatpush1.msra.mxu0 %v5139
  %5582 = vmatprep.subr.mxu0 %v5147
  %5583 = vmatpush1.msra.mxu0 %v5146
  %5584 = vmatprep.subr.mxu0 %v5154
  %5585 = vmatpush1.msra.mxu0 %v5153
  %5586 = vmatprep.subr.mxu0 %v5161
  %5587 = vmatpush1.msra.mxu0 %v5160
  %5588 = vmatprep.subr.mxu0 %v5168
  %5589 = vmatpush1.msra.mxu0 %v5167
  %5590 = vmatprep.subr.mxu0 %v5175
  %5591 = vmatpush1.msra.mxu0 %v5174
  %5592 = vmatprep.subr.mxu0 %v5182
  %5593 = vmatpush1.msra.mxu0 %v5181
  %5594 = vmatprep.subr.mxu0 %v5189
  %5595 = vmatpush1.msra.mxu0 %v5188
  %5596 = vmatprep.subr.mxu0 %v5196
  %5597 = vmatpush1.msra.mxu0 %v5195
  %5598 = vmatprep.subr.mxu0 %v5203
  %5599 = vmatpush1.msra.mxu0 %v5202
  %5600 = vmatprep.subr.mxu0 0.0
  %5601 = vmatpush1.msra.mxu0 0.0
  %5602 = vmatprep.subr.mxu0 0.0
  %5603 = vmatpush1.msra.mxu0 0.0
  %5604 = vmatprep.subr.mxu0 0.0
  %5605 = vmatpush1.msra.mxu0 0.0
  %5606 = vmatprep.subr.mxu0 0.0
  %5607 = vmatpush1.msra.mxu0 0.0
  %5608 = vmatprep.subr.mxu0 0.0
  %5609 = vmatpush1.msra.mxu0 0.0
  %5610 = vmatprep.subr.mxu0 0.0
  %5611 = vmatpush1.msra.mxu0 0.0
  %5612 = vmatprep.subr.mxu0 0.0
  %5613 = vmatpush1.msra.mxu0 0.0
  %5614 = vmatprep.subr.mxu0 0.0
  %5615 = vmatpush1.msra.mxu0 0.0
  %5616 = vmatprep.subr.mxu0 0.0
  %5617 = vmatpush1.msra.mxu0 0.0
  %5618 = vmatprep.subr.mxu0 0.0
  %5619 = vmatpush1.msra.mxu0 0.0
  %5620 = vmatprep.subr.mxu0 0.0
  %5621 = vmatpush1.msra.mxu0 0.0
  %5622 = vmatprep.subr.mxu0 0.0
  %5623 = vmatpush1.msra.mxu0 0.0
  %5624 = vmatprep.subr.mxu0 0.0
  %5625 = vmatpush1.msra.mxu0 0.0
  %5626 = vmatprep.subr.mxu0 0.0
  %5627 = vmatpush1.msra.mxu0 0.0
  %5628 = vmatprep.mubr.f32.mxu0 %v5207
  %5629 = vmatmul.mubr.f32.gmra.mrb[0].mxu0 %v4853
  %v5630 = vpop.f32.mrb[0].mxu0
  %v5631 = vadd.f32 %v5560, %v5630
  %v5632 = vpop.f32.mrb[0].mxu0
  %v5633 = vadd.f32 %v5562, %v5632
  %5634 = vdwg.mxu0
  %5635 = vmatprep.subr.mxu0 0.0
  %5636 = vmatpush1.msra.mxu0 %v4861
  %5637 = vmatprep.subr.mxu0 0.0
  %5638 = vmatpush1.msra.mxu0 %v4868
  %5639 = vmatprep.subr.mxu0 0.0
  %5640 = vmatpush1.msra.mxu0 %v4875
  %5641 = vmatprep.subr.mxu0 0.0
  %5642 = vmatpush1.msra.mxu0 %v4882
  %5643 = vmatprep.subr.mxu0 0.0
  %5644 = vmatpush1.msra.mxu0 %v4889
  %5645 = vmatprep.subr.mxu0 0.0
  %5646 = vmatpush1.msra.mxu0 %v4896
  %5647 = vmatprep.subr.mxu0 0.0
  %5648 = vmatpush1.msra.mxu0 %v4903
  %5649 = vmatprep.subr.mxu0 0.0
  %5650 = vmatpush1.msra.mxu0 %v4910
  %5651 = vmatprep.subr.mxu0 0.0
  %5652 = vmatpush1.msra.mxu0 %v4917
  %5653 = vmatprep.subr.mxu0 0.0
  %5654 = vmatpush1.msra.mxu0 %v4924
  %5655 = vmatprep.subr.mxu0 0.0
  %5656 = vmatpush1.msra.mxu0 %v4931
  %5657 = vmatprep.subr.mxu0 0.0
  %5658 = vmatpush1.msra.mxu0 %v4938
  %5659 = vmatprep.subr.mxu0 0.0
  %5660 = vmatpush1.msra.mxu0 %v4945
  %5661 = vmatprep.subr.mxu0 0.0
  %5662 = vmatpush1.msra.mxu0 %v4952
  %5663 = vmatprep.subr.mxu0 0.0
  %5664 = vmatpush1.msra.mxu0 %v4959
  %5665 = vmatprep.subr.mxu0 0.0
  %5666 = vmatpush1.msra.mxu0 %v4966
  %5667 = vmatprep.subr.mxu0 0.0
  %5668 = vmatpush1.msra.mxu0 %v4973
  %5669 = vmatprep.subr.mxu0 0.0
  %5670 = vmatpush1.msra.mxu0 %v4980
  %5671 = vmatprep.subr.mxu0 0.0
  %5672 = vmatpush1.msra.mxu0 %v4987
  %5673 = vmatprep.subr.mxu0 0.0
  %5674 = vmatpush1.msra.mxu0 %v4994
  %5675 = vmatprep.subr.mxu0 0.0
  %5676 = vmatpush1.msra.mxu0 %v5001
  %5677 = vmatprep.subr.mxu0 0.0
  %5678 = vmatpush1.msra.mxu0 %v5008
  %5679 = vmatprep.subr.mxu0 0.0
  %5680 = vmatpush1.msra.mxu0 %v5015
  %5681 = vmatprep.subr.mxu0 0.0
  %5682 = vmatpush1.msra.mxu0 %v5022
  %5683 = vmatprep.subr.mxu0 0.0
  %5684 = vmatpush1.msra.mxu0 %v5029
  %5685 = vmatprep.subr.mxu0 0.0
  %5686 = vmatpush1.msra.mxu0 %v5036
  %5687 = vmatprep.subr.mxu0 0.0
  %5688 = vmatpush1.msra.mxu0 %v5043
  %5689 = vmatprep.subr.mxu0 0.0
  %5690 = vmatpush1.msra.mxu0 %v5050
  %5691 = vmatprep.subr.mxu0 0.0
  %5692 = vmatpush1.msra.mxu0 %v5057
  %5693 = vmatprep.subr.mxu0 0.0
  %5694 = vmatpush1.msra.mxu0 %v5064
  %5695 = vmatprep.subr.mxu0 0.0
  %5696 = vmatpush1.msra.mxu0 %v5071
  %5697 = vmatprep.subr.mxu0 0.0
  %5698 = vmatpush1.msra.mxu0 %v5078
  %5699 = vmatprep.mubr.f32.mxu0 %v4852
  %5700 = vmatmul.mubr.f32.gmra.mrb[0].mxu0 %v4851
  %v5701 = vpop.f32.mrb[0].mxu0
  %v5702 = vadd.f32 0.0, %v5701
  %v5703 = vpop.f32.mrb[0].mxu0
  %5704 = vdwg.mxu0
  %5705 = vmatprep.subr.mxu0 0.0
  %5706 = vmatpush1.msra.mxu0 %v5085
  %5707 = vmatprep.subr.mxu0 0.0
  %5708 = vmatpush1.msra.mxu0 %v5092
  %5709 = vmatprep.subr.mxu0 0.0
  %5710 = vmatpush1.msra.mxu0 %v5099
  %5711 = vmatprep.subr.mxu0 0.0
  %5712 = vmatpush1.msra.mxu0 %v5106
  %5713 = vmatprep.subr.mxu0 0.0
  %5714 = vmatpush1.msra.mxu0 %v5113
  %5715 = vmatprep.subr.mxu0 0.0
  %5716 = vmatpush1.msra.mxu0 %v5120
  %5717 = vmatprep.subr.mxu0 0.0
  %5718 = vmatpush1.msra.mxu0 %v5127
  %5719 = vmatprep.subr.mxu0 0.0
  %5720 = vmatpush1.msra.mxu0 %v5134
  %5721 = vmatprep.subr.mxu0 0.0
  %5722 = vmatpush1.msra.mxu0 %v5141
  %5723 = vmatprep.subr.mxu0 0.0
  %5724 = vmatpush1.msra.mxu0 %v5148
  %5725 = vmatprep.subr.mxu0 0.0
  %5726 = vmatpush1.msra.mxu0 %v5155
  %5727 = vmatprep.subr.mxu0 0.0
  %5728 = vmatpush1.msra.mxu0 %v5162
  %5729 = vmatprep.subr.mxu0 0.0
  %5730 = vmatpush1.msra.mxu0 %v5169
  %5731 = vmatprep.subr.mxu0 0.0
  %5732 = vmatpush1.msra.mxu0 %v5176
  %5733 = vmatprep.subr.mxu0 0.0
  %5734 = vmatpush1.msra.mxu0 %v5183
  %5735 = vmatprep.subr.mxu0 0.0
  %5736 = vmatpush1.msra.mxu0 %v5190
  %5737 = vmatprep.subr.mxu0 0.0
  %5738 = vmatpush1.msra.mxu0 %v5197
  %5739 = vmatprep.subr.mxu0 0.0
  %5740 = vmatpush1.msra.mxu0 %v5204
  %5741 = vmatprep.subr.mxu0 0.0
  %5742 = vmatpush1.msra.mxu0 0.0
  %5743 = vmatprep.subr.mxu0 0.0
  %5744 = vmatpush1.msra.mxu0 0.0
  %5745 = vmatprep.subr.mxu0 0.0
  %5746 = vmatpush1.msra.mxu0 0.0
  %5747 = vmatprep.subr.mxu0 0.0
  %5748 = vmatpush1.msra.mxu0 0.0
  %5749 = vmatprep.subr.mxu0 0.0
  %5750 = vmatpush1.msra.mxu0 0.0
  %5751 = vmatprep.subr.mxu0 0.0
  %5752 = vmatpush1.msra.mxu0 0.0
  %5753 = vmatprep.subr.mxu0 0.0
  %5754 = vmatpush1.msra.mxu0 0.0
  %5755 = vmatprep.subr.mxu0 0.0
  %5756 = vmatpush1.msra.mxu0 0.0
  %5757 = vmatprep.subr.mxu0 0.0
  %5758 = vmatpush1.msra.mxu0 0.0
  %5759 = vmatprep.subr.mxu0 0.0
  %5760 = vmatpush1.msra.mxu0 0.0
  %5761 = vmatprep.subr.mxu0 0.0
  %5762 = vmatpush1.msra.mxu0 0.0
  %5763 = vmatprep.subr.mxu0 0.0
  %5764 = vmatpush1.msra.mxu0 0.0
  %5765 = vmatprep.subr.mxu0 0.0
  %5766 = vmatpush1.msra.mxu0 0.0
  %5767 = vmatprep.subr.mxu0 0.0
  %5768 = vmatpush1.msra.mxu0 0.0
  %5769 = vmatprep.mubr.f32.mxu0 %v5207
  %5770 = vmatmul.mubr.f32.gmra.mrb[0].mxu0 %v4853
  %v5771 = vpop.f32.mrb[0].mxu0
  %v5772 = vadd.f32 %v5702, %v5771
  %v5773 = vpop.f32.mrb[0].mxu0
  %5774 = vdwg.mxu0
  %v5775 = vld [vmem:[%s2] sm:$0xff]
  %v5776 = vld [vmem:[%s2 + $0x8] sm:$0xff]
  %v5777 = vld [vmem:[%s2 + $0x10] sm:$0xff]
  %v5778 = vld [vmem:[%s2 + $0x18] sm:$0xff]
  %v5779 = vld [vmem:[%s2 + $0x20] sm:$0xff]
  %v5780 = vld [vmem:[%s2 + $0x28] sm:$0xff]
  %v5781 = vld [vmem:[%s2 + $0x30] sm:$0xff]
  %v5782 = vld [vmem:[%s2 + $0x38] sm:$0xff]
  %v5783 = vld [vmem:[%s2 + $0x40] sm:$0xff]
  %v5784 = vld [vmem:[%s2 + $0x48] sm:$0xff]
  %v5785 = vld [vmem:[%s2 + $0x50] sm:$0xff]
  %v5786 = vld [vmem:[%s2 + $0x58] sm:$0xff]
  %v5787 = vld [vmem:[%s2 + $0x60] sm:$0xff]
  %v5788 = vld [vmem:[%s2 + $0x68] sm:$0xff]
  %v5789 = vld [vmem:[%s2 + $0x70] sm:$0xff]
  %v5790 = vld [vmem:[%s2 + $0x78] sm:$0xff]
  %v5791 = vld [vmem:[%s2 + $0x80] sm:$0xff]
  %v5792 = vld [vmem:[%s2 + $0x88] sm:$0xff]
  %v5793 = vld [vmem:[%s2 + $0x90] sm:$0xff]
  %v5794 = vld [vmem:[%s2 + $0x98] sm:$0xff]
  %v5795 = vld [vmem:[%s2 + $0xa0] sm:$0xff]
  %v5796 = vld [vmem:[%s2 + $0xa8] sm:$0xff]
  %v5797 = vld [vmem:[%s2 + $0xb0] sm:$0xff]
  %v5798 = vld [vmem:[%s2 + $0xb8] sm:$0xff]
  %v5799 = vld [vmem:[%s2 + $0xc0] sm:$0xff]
  %v5800 = vld [vmem:[%s2 + $0xc8] sm:$0xff]
  %v5801 = vld [vmem:[%s2 + $0xd0] sm:$0xff]
  %v5802 = vld [vmem:[%s2 + $0xd8] sm:$0xff]
  %v5803 = vld [vmem:[%s2 + $0xe0] sm:$0xff]
  %v5804 = vld [vmem:[%s2 + $0xe8] sm:$0xff]
  %v5805 = vld [vmem:[%s2 + $0xf0] sm:$0xff]
  %v5806 = vld [vmem:[%s2 + $0xf8] sm:$0xff]
  %v5807 = vld [vmem:[%s2 + $0x100] sm:$0xff]
  %v5808 = vld [vmem:[%s2 + $0x108] sm:$0xff]
  %v5809 = vld [vmem:[%s2 + $0x110] sm:$0xff]
  %v5810 = vld [vmem:[%s2 + $0x118] sm:$0xff]
  %v5811 = vld [vmem:[%s2 + $0x120] sm:$0xff]
  %v5812 = vld [vmem:[%s2 + $0x128] sm:$0xff]
  %v5813 = vld [vmem:[%s2 + $0x130] sm:$0xff]
  %v5814 = vld [vmem:[%s2 + $0x138] sm:$0xff]
  %v5815 = vld [vmem:[%s2 + $0x140] sm:$0xff]
  %v5816 = vld [vmem:[%s2 + $0x148] sm:$0xff]
  %v5817 = vld [vmem:[%s2 + $0x150] sm:$0xff]
  %v5818 = vld [vmem:[%s2 + $0x158] sm:$0xff]
  %v5819 = vld [vmem:[%s2 + $0x160] sm:$0xff]
  %v5820 = vld [vmem:[%s2 + $0x168] sm:$0xff]
  %v5821 = vld [vmem:[%s2 + $0x170] sm:$0xff]
  %v5822 = vld [vmem:[%s2 + $0x178] sm:$0xff]
  %v5823 = vld [vmem:[%s2 + $0x180] sm:$0xff]
  %v5824 = vld [vmem:[%s2 + $0x188] sm:$0xff]
  %v5825 = vld [vmem:[%s2 + $0x190] sm:$0xff]
  %v5826 = vld [vmem:[%s2 + $0x198] sm:$0xff]
  %v5827 = vld [vmem:[%s2 + $0x1a0] sm:$0xff]
  %v5828 = vld [vmem:[%s2 + $0x1a8] sm:$0xff]
  %v5829 = vld [vmem:[%s2 + $0x1b0] sm:$0xff]
  %v5830 = vld [vmem:[%s2 + $0x1b8] sm:$0xff]
  %v5831 = vld [vmem:[%s2 + $0x1c0] sm:$0xff]
  %v5832 = vld [vmem:[%s2 + $0x1c8] sm:$0xff]
  %v5833 = vld [vmem:[%s2 + $0x1d0] sm:$0xff]
  %v5834 = vld [vmem:[%s2 + $0x1d8] sm:$0xff]
  %v5835 = vld [vmem:[%s2 + $0x1e0] sm:$0xff]
  %v5836 = vld [vmem:[%s2 + $0x1e8] sm:$0xff]
  %v5837 = vld [vmem:[%s2 + $0x1f0] sm:$0xff]
  %v5838 = vld [vmem:[%s2 + $0x1f8] sm:$0xff]
  %v5839 = vld [vmem:[%s2 + $0x200] sm:$0xff]
  %v5840 = vld [vmem:[%s2 + $0x208] sm:$0xff]
  %v5841 = vld [vmem:[%s2 + $0x210] sm:$0xff]
  %v5842 = vld [vmem:[%s2 + $0x218] sm:$0xff]
  %v5843 = vld [vmem:[%s2 + $0x220] sm:$0xff]
  %v5844 = vld [vmem:[%s2 + $0x228] sm:$0xff]
  %v5845 = vld [vmem:[%s2 + $0x230] sm:$0xff]
  %v5846 = vld [vmem:[%s2 + $0x238] sm:$0xff]
  %v5847 = vld [vmem:[%s2 + $0x240] sm:$0xff]
  %v5848 = vld [vmem:[%s2 + $0x248] sm:$0xff]
  %v5849 = vld [vmem:[%s2 + $0x250] sm:$0xff]
  %v5850 = vld [vmem:[%s2 + $0x258] sm:$0xff]
  %v5851 = vld [vmem:[%s2 + $0x260] sm:$0xff]
  %v5852 = vld [vmem:[%s2 + $0x268] sm:$0xff]
  %v5853 = vld [vmem:[%s2 + $0x270] sm:$0xff]
  %v5854 = vld [vmem:[%s2 + $0x278] sm:$0xff]
  %v5855 = vld [vmem:[%s2 + $0x280] sm:$0xff]
  %v5856 = vld [vmem:[%s2 + $0x288] sm:$0xff]
  %v5857 = vld [vmem:[%s2 + $0x290] sm:$0xff]
  %v5858 = vld [vmem:[%s2 + $0x298] sm:$0xff]
  %v5859 = vld [vmem:[%s2 + $0x2a0] sm:$0xff]
  %v5860 = vld [vmem:[%s2 + $0x2a8] sm:$0xff]
  %v5861 = vld [vmem:[%s2 + $0x2b0] sm:$0xff]
  %v5862 = vld [vmem:[%s2 + $0x2b8] sm:$0xff]
  %v5863 = vld [vmem:[%s2 + $0x2c0] sm:$0xff]
  %v5864 = vld [vmem:[%s2 + $0x2c8] sm:$0xff]
  %v5865 = vld [vmem:[%s2 + $0x2d0] sm:$0xff]
  %v5866 = vld [vmem:[%s2 + $0x2d8] sm:$0xff]
  %v5867 = vld [vmem:[%s2 + $0x2e0] sm:$0xff]
  %v5868 = vld [vmem:[%s2 + $0x2e8] sm:$0xff]
  %v5869 = vld [vmem:[%s2 + $0x2f0] sm:$0xff]
  %v5870 = vld [vmem:[%s2 + $0x2f8] sm:$0xff]
  %v5871 = vld [vmem:[%s2 + $0x300] sm:$0xff]
  %v5872 = vld [vmem:[%s2 + $0x308] sm:$0xff]
  %v5873 = vld [vmem:[%s2 + $0x310] sm:$0xff]
  %v5874 = vld [vmem:[%s2 + $0x318] sm:$0xff]
  %v5875 = vld [vmem:[%s12] sm:$0xff]
  %5877 = vset.pattern.permute.xlu0 0
  %5878 = vperm.xlu0 %5877, %v5875
  %v5879 = vpop.permute.xlu0 %5878
  %v5882 = vsel %vm96, %v5772, 0
  %5884 = vmatprep.subr.mxu0 0.0
  %5885 = vmatpush1.msra.mxu0 %v5775
  %5886 = vmatprep.subr.mxu0 0.0
  %5887 = vmatpush1.msra.mxu0 %v5776
  %5888 = vmatprep.subr.mxu0 0.0
  %5889 = vmatpush1.msra.mxu0 %v5777
  %5890 = vmatprep.subr.mxu0 0.0
  %5891 = vmatpush1.msra.mxu0 %v5778
  %5892 = vmatprep.subr.mxu0 0.0
  %5893 = vmatpush1.msra.mxu0 %v5779
  %5894 = vmatprep.subr.mxu0 0.0
  %5895 = vmatpush1.msra.mxu0 %v5780
  %5896 = vmatprep.subr.mxu0 0.0
  %5897 = vmatpush1.msra.mxu0 %v5781
  %5898 = vmatprep.subr.mxu0 0.0
  %5899 = vmatpush1.msra.mxu0 %v5782
  %5900 = vmatprep.subr.mxu0 0.0
  %5901 = vmatpush1.msra.mxu0 %v5783
  %5902 = vmatprep.subr.mxu0 0.0
  %5903 = vmatpush1.msra.mxu0 %v5784
  %5904 = vmatprep.subr.mxu0 0.0
  %5905 = vmatpush1.msra.mxu0 %v5785
  %5906 = vmatprep.subr.mxu0 0.0
  %5907 = vmatpush1.msra.mxu0 %v5786
  %5908 = vmatprep.subr.mxu0 0.0
  %5909 = vmatpush1.msra.mxu0 %v5787
  %5910 = vmatprep.subr.mxu0 0.0
  %5911 = vmatpush1.msra.mxu0 %v5788
  %5912 = vmatprep.subr.mxu0 0.0
  %5913 = vmatpush1.msra.mxu0 %v5789
  %5914 = vmatprep.subr.mxu0 0.0
  %5915 = vmatpush1.msra.mxu0 %v5790
  %5916 = vmatprep.subr.mxu0 0.0
  %5917 = vmatpush1.msra.mxu0 %v5791
  %5918 = vmatprep.subr.mxu0 0.0
  %5919 = vmatpush1.msra.mxu0 %v5792
  %5920 = vmatprep.subr.mxu0 0.0
  %5921 = vmatpush1.msra.mxu0 %v5793
  %5922 = vmatprep.subr.mxu0 0.0
  %5923 = vmatpush1.msra.mxu0 %v5794
  %5924 = vmatprep.subr.mxu0 0.0
  %5925 = vmatpush1.msra.mxu0 %v5795
  %5926 = vmatprep.subr.mxu0 0.0
  %5927 = vmatpush1.msra.mxu0 %v5796
  %5928 = vmatprep.subr.mxu0 0.0
  %5929 = vmatpush1.msra.mxu0 %v5797
  %5930 = vmatprep.subr.mxu0 0.0
  %5931 = vmatpush1.msra.mxu0 %v5798
  %5932 = vmatprep.subr.mxu0 0.0
  %5933 = vmatpush1.msra.mxu0 %v5799
  %5934 = vmatprep.subr.mxu0 0.0
  %5935 = vmatpush1.msra.mxu0 %v5800
  %5936 = vmatprep.subr.mxu0 0.0
  %5937 = vmatpush1.msra.mxu0 %v5801
  %5938 = vmatprep.subr.mxu0 0.0
  %5939 = vmatpush1.msra.mxu0 %v5802
  %5940 = vmatprep.subr.mxu0 0.0
  %5941 = vmatpush1.msra.mxu0 %v5803
  %5942 = vmatprep.subr.mxu0 0.0
  %5943 = vmatpush1.msra.mxu0 %v5804
  %5944 = vmatprep.subr.mxu0 0.0
  %5945 = vmatpush1.msra.mxu0 %v5805
  %5946 = vmatprep.subr.mxu0 0.0
  %5947 = vmatpush1.msra.mxu0 %v5806
  %5948 = vmatprep.mubr.f32.mxu0 %v5349
  %5949 = vmatmul.mubr.f32.gmra.mrb[0].mxu0 %v5347
  %v5950 = vpop.f32.mrb[0].mxu0
  %v5951 = vadd.f32 %v5879, %v5950
  %v5952 = vpop.f32.mrb[0].mxu0
  %5953 = vdwg.mxu0
  %5954 = vmatprep.subr.mxu0 0.0
  %5955 = vmatpush1.msra.mxu0 %v5807
  %5956 = vmatprep.subr.mxu0 0.0
  %5957 = vmatpush1.msra.mxu0 %v5808
  %5958 = vmatprep.subr.mxu0 0.0
  %5959 = vmatpush1.msra.mxu0 %v5809
  %5960 = vmatprep.subr.mxu0 0.0
  %5961 = vmatpush1.msra.mxu0 %v5810
  %5962 = vmatprep.subr.mxu0 0.0
  %5963 = vmatpush1.msra.mxu0 %v5811
  %5964 = vmatprep.subr.mxu0 0.0
  %5965 = vmatpush1.msra.mxu0 %v5812
  %5966 = vmatprep.subr.mxu0 0.0
  %5967 = vmatpush1.msra.mxu0 %v5813
  %5968 = vmatprep.subr.mxu0 0.0
  %5969 = vmatpush1.msra.mxu0 %v5814
  %5970 = vmatprep.subr.mxu0 0.0
  %5971 = vmatpush1.msra.mxu0 %v5815
  %5972 = vmatprep.subr.mxu0 0.0
  %5973 = vmatpush1.msra.mxu0 %v5816
  %5974 = vmatprep.subr.mxu0 0.0
  %5975 = vmatpush1.msra.mxu0 %v5817
  %5976 = vmatprep.subr.mxu0 0.0
  %5977 = vmatpush1.msra.mxu0 %v5818
  %5978 = vmatprep.subr.mxu0 0.0
  %5979 = vmatpush1.msra.mxu0 %v5819
  %5980 = vmatprep.subr.mxu0 0.0
  %5981 = vmatpush1.msra.mxu0 %v5820
  %5982 = vmatprep.subr.mxu0 0.0
  %5983 = vmatpush1.msra.mxu0 %v5821
  %5984 = vmatprep.subr.mxu0 0.0
  %5985 = vmatpush1.msra.mxu0 %v5822
  %5986 = vmatprep.subr.mxu0 0.0
  %5987 = vmatpush1.msra.mxu0 %v5823
  %5988 = vmatprep.subr.mxu0 0.0
  %5989 = vmatpush1.msra.mxu0 %v5824
  %5990 = vmatprep.subr.mxu0 0.0
  %5991 = vmatpush1.msra.mxu0 %v5825
  %5992 = vmatprep.subr.mxu0 0.0
  %5993 = vmatpush1.msra.mxu0 %v5826
  %5994 = vmatprep.subr.mxu0 0.0
  %5995 = vmatpush1.msra.mxu0 %v5827
  %5996 = vmatprep.subr.mxu0 0.0
  %5997 = vmatpush1.msra.mxu0 %v5828
  %5998 = vmatprep.subr.mxu0 0.0
  %5999 = vmatpush1.msra.mxu0 %v5829
  %6000 = vmatprep.subr.mxu0 0.0
  %6001 = vmatpush1.msra.mxu0 %v5830
  %6002 = vmatprep.subr.mxu0 0.0
  %6003 = vmatpush1.msra.mxu0 %v5831
  %6004 = vmatprep.subr.mxu0 0.0
  %6005 = vmatpush1.msra.mxu0 %v5832
  %6006 = vmatprep.subr.mxu0 0.0
  %6007 = vmatpush1.msra.mxu0 %v5833
  %6008 = vmatprep.subr.mxu0 0.0
  %6009 = vmatpush1.msra.mxu0 %v5834
  %6010 = vmatprep.subr.mxu0 0.0
  %6011 = vmatpush1.msra.mxu0 %v5835
  %6012 = vmatprep.subr.mxu0 0.0
  %6013 = vmatpush1.msra.mxu0 %v5836
  %6014 = vmatprep.subr.mxu0 0.0
  %6015 = vmatpush1.msra.mxu0 %v5837
  %6016 = vmatprep.subr.mxu0 0.0
  %6017 = vmatpush1.msra.mxu0 %v5838
  %6018 = vmatprep.mubr.f32.mxu0 %v5491
  %6019 = vmatmul.mubr.f32.gmra.mrb[0].mxu0 %v5489
  %v6020 = vpop.f32.mrb[0].mxu0
  %v6021 = vadd.f32 %v5951, %v6020
  %v6022 = vpop.f32.mrb[0].mxu0
  %6023 = vdwg.mxu0
  %6024 = vmatprep.subr.mxu0 0.0
  %6025 = vmatpush1.msra.mxu0 %v5839
  %6026 = vmatprep.subr.mxu0 0.0
  %6027 = vmatpush1.msra.mxu0 %v5840
  %6028 = vmatprep.subr.mxu0 0.0
  %6029 = vmatpush1.msra.mxu0 %v5841
  %6030 = vmatprep.subr.mxu0 0.0
  %6031 = vmatpush1.msra.mxu0 %v5842
  %6032 = vmatprep.subr.mxu0 0.0
  %6033 = vmatpush1.msra.mxu0 %v5843
  %6034 = vmatprep.subr.mxu0 0.0
  %6035 = vmatpush1.msra.mxu0 %v5844
  %6036 = vmatprep.subr.mxu0 0.0
  %6037 = vmatpush1.msra.mxu0 %v5845
  %6038 = vmatprep.subr.mxu0 0.0
  %6039 = vmatpush1.msra.mxu0 %v5846
  %6040 = vmatprep.subr.mxu0 0.0
  %6041 = vmatpush1.msra.mxu0 %v5847
  %6042 = vmatprep.subr.mxu0 0.0
  %6043 = vmatpush1.msra.mxu0 %v5848
  %6044 = vmatprep.subr.mxu0 0.0
  %6045 = vmatpush1.msra.mxu0 %v5849
  %6046 = vmatprep.subr.mxu0 0.0
  %6047 = vmatpush1.msra.mxu0 %v5850
  %6048 = vmatprep.subr.mxu0 0.0
  %6049 = vmatpush1.msra.mxu0 %v5851
  %6050 = vmatprep.subr.mxu0 0.0
  %6051 = vmatpush1.msra.mxu0 %v5852
  %6052 = vmatprep.subr.mxu0 0.0
  %6053 = vmatpush1.msra.mxu0 %v5853
  %6054 = vmatprep.subr.mxu0 0.0
  %6055 = vmatpush1.msra.mxu0 %v5854
  %6056 = vmatprep.subr.mxu0 0.0
  %6057 = vmatpush1.msra.mxu0 %v5855
  %6058 = vmatprep.subr.mxu0 0.0
  %6059 = vmatpush1.msra.mxu0 %v5856
  %6060 = vmatprep.subr.mxu0 0.0
  %6061 = vmatpush1.msra.mxu0 %v5857
  %6062 = vmatprep.subr.mxu0 0.0
  %6063 = vmatpush1.msra.mxu0 %v5858
  %6064 = vmatprep.subr.mxu0 0.0
  %6065 = vmatpush1.msra.mxu0 %v5859
  %6066 = vmatprep.subr.mxu0 0.0
  %6067 = vmatpush1.msra.mxu0 %v5860
  %6068 = vmatprep.subr.mxu0 0.0
  %6069 = vmatpush1.msra.mxu0 %v5861
  %6070 = vmatprep.subr.mxu0 0.0
  %6071 = vmatpush1.msra.mxu0 %v5862
  %6072 = vmatprep.subr.mxu0 0.0
  %6073 = vmatpush1.msra.mxu0 %v5863
  %6074 = vmatprep.subr.mxu0 0.0
  %6075 = vmatpush1.msra.mxu0 %v5864
  %6076 = vmatprep.subr.mxu0 0.0
  %6077 = vmatpush1.msra.mxu0 %v5865
  %6078 = vmatprep.subr.mxu0 0.0
  %6079 = vmatpush1.msra.mxu0 %v5866
  %6080 = vmatprep.subr.mxu0 0.0
  %6081 = vmatpush1.msra.mxu0 %v5867
  %6082 = vmatprep.subr.mxu0 0.0
  %6083 = vmatpush1.msra.mxu0 %v5868
  %6084 = vmatprep.subr.mxu0 0.0
  %6085 = vmatpush1.msra.mxu0 %v5869
  %6086 = vmatprep.subr.mxu0 0.0
  %6087 = vmatpush1.msra.mxu0 %v5870
  %6088 = vmatprep.mubr.f32.mxu0 %v5633
  %6089 = vmatmul.mubr.f32.gmra.mrb[0].mxu0 %v5631
  %v6090 = vpop.f32.mrb[0].mxu0
  %v6091 = vadd.f32 %v6021, %v6090
  %v6092 = vpop.f32.mrb[0].mxu0
  %6093 = vdwg.mxu0
  %6094 = vmatprep.subr.mxu0 0.0
  %6095 = vmatpush1.msra.mxu0 %v5871
  %6096 = vmatprep.subr.mxu0 0.0
  %6097 = vmatpush1.msra.mxu0 %v5872
  %6098 = vmatprep.subr.mxu0 0.0
  %6099 = vmatpush1.msra.mxu0 %v5873
  %6100 = vmatprep.subr.mxu0 0.0
  %6101 = vmatpush1.msra.mxu0 %v5874
  %6102 = vmatprep.subr.mxu0 0.0
  %6103 = vmatpush1.msra.mxu0 0.0
  %6104 = vmatprep.subr.mxu0 0.0
  %6105 = vmatpush1.msra.mxu0 0.0
  %6106 = vmatprep.subr.mxu0 0.0
  %6107 = vmatpush1.msra.mxu0 0.0
  %6108 = vmatprep.subr.mxu0 0.0
  %6109 = vmatpush1.msra.mxu0 0.0
  %6110 = vmatprep.subr.mxu0 0.0
  %6111 = vmatpush1.msra.mxu0 0.0
  %6112 = vmatprep.subr.mxu0 0.0
  %6113 = vmatpush1.msra.mxu0 0.0
  %6114 = vmatprep.subr.mxu0 0.0
  %6115 = vmatpush1.msra.mxu0 0.0
  %6116 = vmatprep.subr.mxu0 0.0
  %6117 = vmatpush1.msra.mxu0 0.0
  %6118 = vmatprep.subr.mxu0 0.0
  %6119 = vmatpush1.msra.mxu0 0.0
  %6120 = vmatprep.subr.mxu0 0.0
  %6121 = vmatpush1.msra.mxu0 0.0
  %6122 = vmatprep.subr.mxu0 0.0
  %6123 = vmatpush1.msra.mxu0 0.0
  %6124 = vmatprep.subr.mxu0 0.0
  %6125 = vmatpush1.msra.mxu0 0.0
  %6126 = vmatprep.subr.mxu0 0.0
  %6127 = vmatpush1.msra.mxu0 0.0
  %6128 = vmatprep.subr.mxu0 0.0
  %6129 = vmatpush1.msra.mxu0 0.0
  %6130 = vmatprep.subr.mxu0 0.0
  %6131 = vmatpush1.msra.mxu0 0.0
  %6132 = vmatprep.subr.mxu0 0.0
  %6133 = vmatpush1.msra.mxu0 0.0
  %6134 = vmatprep.subr.mxu0 0.0
  %6135 = vmatpush1.msra.mxu0 0.0
  %6136 = vmatprep.subr.mxu0 0.0
  %6137 = vmatpush1.msra.mxu0 0.0
  %6138 = vmatprep.subr.mxu0 0.0
  %6139 = vmatpush1.msra.mxu0 0.0
  %6140 = vmatprep.subr.mxu0 0.0
  %6141 = vmatpush1.msra.mxu0 0.0
  %6142 = vmatprep.subr.mxu0 0.0
  %6143 = vmatpush1.msra.mxu0 0.0
  %6144 = vmatprep.subr.mxu0 0.0
  %6145 = vmatpush1.msra.mxu0 0.0
  %6146 = vmatprep.subr.mxu0 0.0
  %6147 = vmatpush1.msra.mxu0 0.0
  %6148 = vmatprep.subr.mxu0 0.0
  %6149 = vmatpush1.msra.mxu0 0.0
  %6150 = vmatprep.subr.mxu0 0.0
  %6151 = vmatpush1.msra.mxu0 0.0
  %6152 = vmatprep.subr.mxu0 0.0
  %6153 = vmatpush1.msra.mxu0 0.0
  %6154 = vmatprep.subr.mxu0 0.0
  %6155 = vmatpush1.msra.mxu0 0.0
  %6156 = vmatprep.subr.mxu0 0.0
  %6157 = vmatpush1.msra.mxu0 0.0
  %6158 = vmatprep.mubr.f32.mxu0 0.0
  %6159 = vmatmul.mubr.f32.gmra.mrb[0].mxu0 %v5882
  %v6160 = vpop.f32.mrb[0].mxu0
  %v6161 = vadd.f32 %v6091, %v6160
  %v6162 = vpop.f32.mrb[0].mxu0
  %6163 = vdwg.mxu0
  %6164 = vst [vmem:[%s13] sm:$0xff] %v6161
  // Predicated region
  $region54: #{identity_block_forward.1} parent=0 // pred_check
    _
  $region55: #{identity_block_forward.1} parent=0 // pred_check_branch
    %6166 = sbr.rel (0) target = $region57
  $region56: #{identity_block_forward.1} parent=0 // pred_region
    _
  $region57: #{identity_block_forward.1} parent=0 // pred_fallthru
    _
  // Predicated region
  $region58: #{identity_block_forward.1} parent=0 // pred_check
    _
  $region59: #{identity_block_forward.1} parent=0 // pred_check_branch
    %6168 = sbr.rel (0) target = $region61
  $region60: #{identity_block_forward.1} parent=0 // pred_region
    _
  $region61: #{identity_block_forward.1} parent=0 // pred_fallthru
    _

</llo_original>
